<compile_context>
chip_gen: v7x
topology: tpu7x:2x2x1
jax: 0.10.0
libtpu: 0.0.40
codegen_flags: <defaults>
</compile_context>

<pallas_src>
import jax
import jax.numpy as jnp
import numpy as np
from jax.experimental import pallas as pl
from jax.experimental.pallas import tpu as pltpu

EPS = 1e-5  # torch.nn.BatchNorm2d default


def _bn_fused(y, gamma, beta, relu=True):
    """Training-mode batch norm over axis 0 of y:(M, C) f32, folded affine."""
    inv_m = 1.0 / y.shape[0]
    s = jnp.sum(y, axis=0, keepdims=True)
    ss = jnp.sum(y * y, axis=0, keepdims=True)
    mu = s * inv_m
    var = jnp.maximum(ss * inv_m - mu * mu, 0.0)   # clamp one-pass variance
    scale = gamma * jax.lax.rsqrt(var + EPS)       # fold gamma into one per-channel scale
    shift = beta - mu * scale                      # fold beta/mean into one per-channel shift
    y = y * scale + shift                          # single FMA per element
    if relu:
        y = jnp.maximum(y, 0.0)
    return y


def bottleneck_kernel(x_ref, w1_ref, w2_ref, w3_ref,
                      g1_ref, b1_ref, g2_ref, b2_ref, g3_ref, b3_ref,
                      out_ref, col_ref):
    N, H, W, Cin = x_ref.shape
    P = w1_ref.shape[1]
    Cout = w3_ref.shape[1]
    M = N * H * W

    # ---- conv1 (1x1) + bn1 + relu : bf16 MXU matmul, f32 accumulation ----
    xb = x_ref[...].reshape(M, Cin)                     # already bf16
    y1 = jnp.dot(xb, w1_ref[...], preferred_element_type=jnp.float32)
    y1 = _bn_fused(y1, g1_ref[...], b1_ref[...], relu=True)
    y1b = y1.astype(jnp.bfloat16).reshape(N, H, W, P)   # cast once

    # ---- conv2 (3x3, stride 1, pad 1) + bn2 + relu : single im2col matmul ----
    # Contiguous full-buffer zero supplies all halo zeros (no width-1 masked stores).
    col_ref[...] = jnp.zeros_like(col_ref)
    for dh in range(3):
        for dw in range(3):
            k = dh * 3 + dw
            hd0, hd1 = max(0, 1 - dh), H - max(0, dh - 1)   # dst valid range in H
            wd0, wd1 = max(0, 1 - dw), W - max(0, dw - 1)   # dst valid range in W
            hs0, ws0 = max(0, dh - 1), max(0, dw - 1)       # matching src origin
            col_ref[:, hd0:hd1, wd0:wd1, k * P:(k + 1) * P] = \
                y1b[:, hs0:hs0 + (hd1 - hd0), ws0:ws0 + (wd1 - wd0), :]

    # One wide-K matmul: (M, 9P) x (9P, P), K = 9*128 = 1152; MXU accumulates
    # internally — no f32 accumulator round-trips through VMEM.
    y2 = jnp.dot(col_ref[...].reshape(M, 9 * P), w2_ref[...],
                 preferred_element_type=jnp.float32)
    y2 = _bn_fused(y2, g2_ref[...], b2_ref[...], relu=True)

    # ---- conv3 (1x1) + bn3 ----
    y3 = jnp.dot(y2.astype(jnp.bfloat16), w3_ref[...],
                 preferred_element_type=jnp.float32)
    y3 = _bn_fused(y3, g3_ref[...], b3_ref[...], relu=False)

    # ---- identity residual + relu (x re-read late, f32 add) ----
    res = x_ref[...].reshape(M, Cout).astype(jnp.float32)
    out_ref[...] = jnp.maximum(y3 + res, 0.0).reshape(N, H, W, Cout)


def _round_up_128(n):
    return ((n + 127) // 128) * 128


def bottleneck_pallas(x_nchw, params):
    """params are PyTorch-shaped: w1(O,I,1,1), w2(O,I,3,3), w3(O,I,1,1), g/b (C,)."""
    w1, w2, w3, g1, b1, g2, b2, g3, b3 = params
    N, Cin, H, W = x_nchw.shape
    P = w1.shape[0]
    Cout = w3.shape[0]
    assert Cin == Cout, "identity residual requires inplanes == planes * expansion"

    Cin_p, P_p, Co_p = _round_up_128(Cin), _round_up_128(P), _round_up_128(Cout)
    assert Cin_p == Co_p

    # NCHW -> NHWC, pad channels to 128-lane width, cast to bf16 (XLA fuses these).
    x_nhwc = jnp.transpose(x_nchw, (0, 2, 3, 1))
    x_p = jnp.pad(x_nhwc, ((0, 0), (0, 0), (0, 0), (0, Cin_p - Cin))).astype(jnp.bfloat16)

    # torch OIHW -> matmul layouts; weights cast to bf16 for the MXU.
    w1m = jnp.pad(w1[:, :, 0, 0].T,
                  ((0, Cin_p - Cin), (0, P_p - P))).astype(jnp.bfloat16)
    # (kh, kw, cin, cout) padded then flattened so row index = (kh*3+kw)*P_p + cin,
    # matching the im2col column layout in the kernel.
    w2m = jnp.pad(jnp.transpose(w2, (2, 3, 1, 0)),
                  ((0, 0), (0, 0), (0, P_p - P), (0, P_p - P))
                  ).reshape(9 * P_p, P_p).astype(jnp.bfloat16)
    w3m = jnp.pad(w3[:, :, 0, 0].T,
                  ((0, P_p - P), (0, Co_p - Cout))).astype(jnp.bfloat16)

    def pad1(v, t):  # (C,) -> (1, t) f32, zero-padded (padded channels stay 0)
        return jnp.pad(v.reshape(1, -1), ((0, 0), (0, t - v.shape[0]))).astype(jnp.float32)

    g1p, b1p = pad1(g1, P_p), pad1(b1, P_p)
    g2p, b2p = pad1(g2, P_p), pad1(b2, P_p)
    g3p, b3p = pad1(g3, Co_p), pad1(b3, Co_p)

    vmem = pl.BlockSpec(memory_space=pltpu.MemorySpace.VMEM)
    out_p = pl.pallas_call(
        bottleneck_kernel,
        out_shape=jax.ShapeDtypeStruct((N, H, W, Co_p), jnp.float32),
        in_specs=[vmem] * 10,
        out_specs=vmem,
        scratch_shapes=[
            pltpu.VMEM((N, H, W, 9 * P_p), jnp.bfloat16),   # contiguous im2col buffer
        ],
        compiler_params=pltpu.CompilerParams(vmem_limit_bytes=32 * 1024 * 1024),
    )(x_p, w1m, w2m, w3m, g1p, b1p, g2p, b2p, g3p, b3p)

    # Drop channel padding, back to PyTorch NCHW layout.
    return jnp.transpose(out_p[..., :Cout], (0, 3, 1, 2))


def bottleneck_ref(x_nchw, params):
    """Pure-JAX reference in torch NCHW/OIHW layout (training-mode BN)."""
    w1, w2, w3, g1, b1, g2, b2, g3, b3 = params

    def bn(y, g, b):
        mu = jnp.mean(y, axis=(0, 2, 3), keepdims=True)
        var = jnp.mean((y - mu) ** 2, axis=(0, 2, 3), keepdims=True)
        return (y - mu) * jax.lax.rsqrt(var + EPS) * g.reshape(1, -1, 1, 1) \
            + b.reshape(1, -1, 1, 1)

    def conv(x, w, pad):
        return jax.lax.conv_general_dilated(
            x, w, window_strides=(1, 1), padding=pad,
            dimension_numbers=('NCHW', 'OIHW', 'NCHW'))

    out = jax.nn.relu(bn(conv(x_nchw, w1, ((0, 0), (0, 0))), g1, b1))
    out = jax.nn.relu(bn(conv(out, w2, ((1, 1), (1, 1))), g2, b2))
    out = bn(conv(out, w3, ((0, 0), (0, 0))), g3, b3)
    return jax.nn.relu(out + x_nchw)


if __name__ == "__main__":
    key = jax.random.PRNGKey(0)
    N, H, W = 2, 16, 16
    planes = 4
    inplanes = planes * 4            # expansion=4 -> identity residual works
    Cout = planes * 4

    keys = jax.random.split(key, 10)
    x = jax.random.normal(keys[0], (N, inplanes, H, W), jnp.float32)   # PyTorch NCHW
    w1 = 0.2 * jax.random.normal(keys[1], (planes, inplanes, 1, 1), jnp.float32)
    w2 = 0.2 * jax.random.normal(keys[2], (planes, planes, 3, 3), jnp.float32)
    w3 = 0.2 * jax.random.normal(keys[3], (Cout, planes, 1, 1), jnp.float32)
    g1 = 1.0 + 0.1 * jax.random.normal(keys[4], (planes,), jnp.float32)
    b1 = 0.1 * jax.random.normal(keys[5], (planes,), jnp.float32)
    g2 = 1.0 + 0.1 * jax.random.normal(keys[6], (planes,), jnp.float32)
    b2 = 0.1 * jax.random.normal(keys[7], (planes,), jnp.float32)
    g3 = 1.0 + 0.1 * jax.random.normal(keys[8], (Cout,), jnp.float32)
    b3 = 0.1 * jax.random.normal(keys[9], (Cout,), jnp.float32)
    params = (w1, w2, w3, g1, b1, g2, b2, g3, b3)

    out = jax.block_until_ready(jax.jit(bottleneck_pallas)(x, params))
    ref = jax.block_until_ready(bottleneck_ref(x, params))

    assert out.shape == x.shape
    np.testing.assert_allclose(np.asarray(out), np.asarray(ref), rtol=2e-2, atol=3e-2)
    print("KERNEL_OK")
</pallas_src>

<mosaic_0001>
module attributes {stable_mosaic.version = 11 : i64} {
  func.func @bottleneck_kernel(%arg0: memref<2x16x16x128xbf16, #tpu.memory_space<vmem>>, %arg1: memref<128x128xbf16, #tpu.memory_space<vmem>>, %arg2: memref<1152x128xbf16, #tpu.memory_space<vmem>>, %arg3: memref<128x128xbf16, #tpu.memory_space<vmem>>, %arg4: memref<1x128xf32, #tpu.memory_space<vmem>>, %arg5: memref<1x128xf32, #tpu.memory_space<vmem>>, %arg6: memref<1x128xf32, #tpu.memory_space<vmem>>, %arg7: memref<1x128xf32, #tpu.memory_space<vmem>>, %arg8: memref<1x128xf32, #tpu.memory_space<vmem>>, %arg9: memref<1x128xf32, #tpu.memory_space<vmem>>, %arg10: memref<2x16x16x128xf32, #tpu.memory_space<vmem>>, %arg11: memref<2x16x16x1152xbf16, #tpu.memory_space<vmem>>) attributes {dimension_semantics = [], scalar_prefetch = 0 : i64, scratch_operands = 1 : i64, tpu.core_type = #tpu.core_type<tc>} {
    %c0 = arith.constant 0 : index
    %c0_0 = arith.constant 0 : index
    %c0_1 = arith.constant 0 : index
    %c0_2 = arith.constant 0 : index
    %0 = vector.load %arg0[%c0, %c0_0, %c0_1, %c0_2] : memref<2x16x16x128xbf16, #tpu.memory_space<vmem>>, vector<2x16x16x128xbf16>
    %1 = vector.shape_cast %0 : vector<2x16x16x128xbf16> to vector<512x128xbf16>
    %c0_3 = arith.constant 0 : index
    %c0_4 = arith.constant 0 : index
    %2 = vector.load %arg1[%c0_3, %c0_4] : memref<128x128xbf16, #tpu.memory_space<vmem>>, vector<128x128xbf16>
    %cst = arith.constant dense<0.000000e+00> : vector<512x128xf32>
    %3 = tpu.matmul %1, %2, %cst {dimension_numbers = #tpu.dot_dimension_numbers<[1], [0], [0], [1], [0, 0, 1, 1], [], []>} : vector<512x128xbf16>, vector<128x128xbf16>, vector<512x128xf32> -> vector<512x128xf32>
    %c0_5 = arith.constant 0 : index
    %c0_6 = arith.constant 0 : index
    %4 = vector.load %arg4[%c0_5, %c0_6] : memref<1x128xf32, #tpu.memory_space<vmem>>, vector<1x128xf32>
    %c0_7 = arith.constant 0 : index
    %c0_8 = arith.constant 0 : index
    %5 = vector.load %arg5[%c0_7, %c0_8] : memref<1x128xf32, #tpu.memory_space<vmem>>, vector<1x128xf32>
    %cst_9 = arith.constant dense<0.000000e+00> : vector<128xf32>
    %6 = vector.multi_reduction <add>, %3, %cst_9 [0] : vector<512x128xf32> to vector<128xf32>
    %7 = vector.shape_cast %6 : vector<128xf32> to vector<1x128xf32>
    %8 = arith.mulf %3, %3 : vector<512x128xf32>
    %cst_10 = arith.constant dense<0.000000e+00> : vector<128xf32>
    %9 = vector.multi_reduction <add>, %8, %cst_10 [0] : vector<512x128xf32> to vector<128xf32>
    %10 = vector.shape_cast %9 : vector<128xf32> to vector<1x128xf32>
    %cst_11 = arith.constant 0.001953125 : f32
    %11 = vector.broadcast %cst_11 : f32 to vector<1x128xf32>
    %12 = arith.mulf %7, %11 : vector<1x128xf32>
    %cst_12 = arith.constant 0.001953125 : f32
    %13 = vector.broadcast %cst_12 : f32 to vector<1x128xf32>
    %14 = arith.mulf %10, %13 : vector<1x128xf32>
    %15 = arith.mulf %12, %12 : vector<1x128xf32>
    %16 = arith.subf %14, %15 : vector<1x128xf32>
    %cst_13 = arith.constant 0.000000e+00 : f32
    %17 = vector.broadcast %cst_13 : f32 to vector<1x128xf32>
    %18 = arith.maximumf %16, %17 : vector<1x128xf32>
    %cst_14 = arith.constant 9.99999974E-6 : f32
    %19 = vector.broadcast %cst_14 : f32 to vector<1x128xf32>
    %20 = arith.addf %18, %19 : vector<1x128xf32>
    %21 = math.rsqrt %20 : vector<1x128xf32>
    %22 = arith.mulf %4, %21 : vector<1x128xf32>
    %23 = arith.mulf %12, %22 : vector<1x128xf32>
    %24 = arith.subf %5, %23 : vector<1x128xf32>
    %25 = vector.broadcast %22 : vector<1x128xf32> to vector<512x128xf32>
    %26 = arith.mulf %3, %25 : vector<512x128xf32>
    %27 = vector.broadcast %24 : vector<1x128xf32> to vector<512x128xf32>
    %28 = arith.addf %26, %27 : vector<512x128xf32>
    %cst_15 = arith.constant 0.000000e+00 : f32
    %29 = vector.broadcast %cst_15 : f32 to vector<512x128xf32>
    %30 = arith.maximumf %28, %29 : vector<512x128xf32>
    %31 = arith.truncf %30 : vector<512x128xf32> to vector<512x128xbf16>
    %32 = vector.shape_cast %31 : vector<512x128xbf16> to vector<2x16x16x128xbf16>
    %cst_16 = arith.constant 0.000000e+00 : bf16
    %33 = vector.broadcast %cst_16 : bf16 to vector<2x16x16x1152xbf16>
    %c0_17 = arith.constant 0 : index
    %c0_18 = arith.constant 0 : index
    %c0_19 = arith.constant 0 : index
    %c0_20 = arith.constant 0 : index
    %34 = vector.load %arg11[%c0_17, %c0_18, %c0_19, %c0_20] : memref<2x16x16x1152xbf16, #tpu.memory_space<vmem>>, vector<2x16x16x1152xbf16>
    tpu.vector_store %arg11[%c0_17, %c0_18, %c0_19, %c0_20], %33 {strides = array<i32>} : memref<2x16x16x1152xbf16, #tpu.memory_space<vmem>>, vector<2x16x16x1152xbf16>,
    %35 = vector.extract_strided_slice %32 {offsets = [0, 0, 0, 0], sizes = [2, 15, 15, 128], strides = [1, 1, 1, 1]} : vector<2x16x16x128xbf16> to vector<2x15x15x128xbf16>
    %c0_21 = arith.constant 0 : index
    %c1 = arith.constant 1 : index
    %c1_22 = arith.constant 1 : index
    %c0_23 = arith.constant 0 : index
    %36 = vector.load %arg11[%c0_21, %c1, %c1_22, %c0_23] : memref<2x16x16x1152xbf16, #tpu.memory_space<vmem>>, vector<2x15x15x128xbf16>
    tpu.vector_store %arg11[%c0_21, %c1, %c1_22, %c0_23], %35 {strides = array<i32>} : memref<2x16x16x1152xbf16, #tpu.memory_space<vmem>>, vector<2x15x15x128xbf16>,
    %37 = vector.extract_strided_slice %32 {offsets = [0, 0, 0, 0], sizes = [2, 15, 16, 128], strides = [1, 1, 1, 1]} : vector<2x16x16x128xbf16> to vector<2x15x16x128xbf16>
    %c0_24 = arith.constant 0 : index
    %c1_25 = arith.constant 1 : index
    %c0_26 = arith.constant 0 : index
    %c128 = arith.constant 128 : index
    %38 = vector.load %arg11[%c0_24, %c1_25, %c0_26, %c128] : memref<2x16x16x1152xbf16, #tpu.memory_space<vmem>>, vector<2x15x16x128xbf16>
    tpu.vector_store %arg11[%c0_24, %c1_25, %c0_26, %c128], %37 {strides = array<i32>} : memref<2x16x16x1152xbf16, #tpu.memory_space<vmem>>, vector<2x15x16x128xbf16>,
    %39 = vector.extract_strided_slice %32 {offsets = [0, 0, 1, 0], sizes = [2, 15, 15, 128], strides = [1, 1, 1, 1]} : vector<2x16x16x128xbf16> to vector<2x15x15x128xbf16>
    %c0_27 = arith.constant 0 : index
    %c1_28 = arith.constant 1 : index
    %c0_29 = arith.constant 0 : index
    %c256 = arith.constant 256 : index
    %40 = vector.load %arg11[%c0_27, %c1_28, %c0_29, %c256] : memref<2x16x16x1152xbf16, #tpu.memory_space<vmem>>, vector<2x15x15x128xbf16>
    tpu.vector_store %arg11[%c0_27, %c1_28, %c0_29, %c256], %39 {strides = array<i32>} : memref<2x16x16x1152xbf16, #tpu.memory_space<vmem>>, vector<2x15x15x128xbf16>,
    %41 = vector.extract_strided_slice %32 {offsets = [0, 0, 0, 0], sizes = [2, 16, 15, 128], strides = [1, 1, 1, 1]} : vector<2x16x16x128xbf16> to vector<2x16x15x128xbf16>
    %c0_30 = arith.constant 0 : index
    %c0_31 = arith.constant 0 : index
    %c1_32 = arith.constant 1 : index
    %c384 = arith.constant 384 : index
    %42 = vector.load %arg11[%c0_30, %c0_31, %c1_32, %c384] : memref<2x16x16x1152xbf16, #tpu.memory_space<vmem>>, vector<2x16x15x128xbf16>
    tpu.vector_store %arg11[%c0_30, %c0_31, %c1_32, %c384], %41 {strides = array<i32>} : memref<2x16x16x1152xbf16, #tpu.memory_space<vmem>>, vector<2x16x15x128xbf16>,
    %c0_33 = arith.constant 0 : index
    %c0_34 = arith.constant 0 : index
    %c0_35 = arith.constant 0 : index
    %c512 = arith.constant 512 : index
    %43 = vector.load %arg11[%c0_33, %c0_34, %c0_35, %c512] : memref<2x16x16x1152xbf16, #tpu.memory_space<vmem>>, vector<2x16x16x128xbf16>
    tpu.vector_store %arg11[%c0_33, %c0_34, %c0_35, %c512], %32 {strides = array<i32>} : memref<2x16x16x1152xbf16, #tpu.memory_space<vmem>>, vector<2x16x16x128xbf16>,
    %44 = vector.extract_strided_slice %32 {offsets = [0, 0, 1, 0], sizes = [2, 16, 15, 128], strides = [1, 1, 1, 1]} : vector<2x16x16x128xbf16> to vector<2x16x15x128xbf16>
    %c0_36 = arith.constant 0 : index
    %c0_37 = arith.constant 0 : index
    %c0_38 = arith.constant 0 : index
    %c640 = arith.constant 640 : index
    %45 = vector.load %arg11[%c0_36, %c0_37, %c0_38, %c640] : memref<2x16x16x1152xbf16, #tpu.memory_space<vmem>>, vector<2x16x15x128xbf16>
    tpu.vector_store %arg11[%c0_36, %c0_37, %c0_38, %c640], %44 {strides = array<i32>} : memref<2x16x16x1152xbf16, #tpu.memory_space<vmem>>, vector<2x16x15x128xbf16>,
    %46 = vector.extract_strided_slice %32 {offsets = [0, 1, 0, 0], sizes = [2, 15, 15, 128], strides = [1, 1, 1, 1]} : vector<2x16x16x128xbf16> to vector<2x15x15x128xbf16>
    %c0_39 = arith.constant 0 : index
    %c0_40 = arith.constant 0 : index
    %c1_41 = arith.constant 1 : index
    %c768 = arith.constant 768 : index
    %47 = vector.load %arg11[%c0_39, %c0_40, %c1_41, %c768] : memref<2x16x16x1152xbf16, #tpu.memory_space<vmem>>, vector<2x15x15x128xbf16>
    tpu.vector_store %arg11[%c0_39, %c0_40, %c1_41, %c768], %46 {strides = array<i32>} : memref<2x16x16x1152xbf16, #tpu.memory_space<vmem>>, vector<2x15x15x128xbf16>,
    %48 = vector.extract_strided_slice %32 {offsets = [0, 1, 0, 0], sizes = [2, 15, 16, 128], strides = [1, 1, 1, 1]} : vector<2x16x16x128xbf16> to vector<2x15x16x128xbf16>
    %c0_42 = arith.constant 0 : index
    %c0_43 = arith.constant 0 : index
    %c0_44 = arith.constant 0 : index
    %c896 = arith.constant 896 : index
    %49 = vector.load %arg11[%c0_42, %c0_43, %c0_44, %c896] : memref<2x16x16x1152xbf16, #tpu.memory_space<vmem>>, vector<2x15x16x128xbf16>
    tpu.vector_store %arg11[%c0_42, %c0_43, %c0_44, %c896], %48 {strides = array<i32>} : memref<2x16x16x1152xbf16, #tpu.memory_space<vmem>>, vector<2x15x16x128xbf16>,
    %50 = vector.extract_strided_slice %32 {offsets = [0, 1, 1, 0], sizes = [2, 15, 15, 128], strides = [1, 1, 1, 1]} : vector<2x16x16x128xbf16> to vector<2x15x15x128xbf16>
    %c0_45 = arith.constant 0 : index
    %c0_46 = arith.constant 0 : index
    %c0_47 = arith.constant 0 : index
    %c1024 = arith.constant 1024 : index
    %51 = vector.load %arg11[%c0_45, %c0_46, %c0_47, %c1024] : memref<2x16x16x1152xbf16, #tpu.memory_space<vmem>>, vector<2x15x15x128xbf16>
    tpu.vector_store %arg11[%c0_45, %c0_46, %c0_47, %c1024], %50 {strides = array<i32>} : memref<2x16x16x1152xbf16, #tpu.memory_space<vmem>>, vector<2x15x15x128xbf16>,
    %c0_48 = arith.constant 0 : index
    %c0_49 = arith.constant 0 : index
    %c0_50 = arith.constant 0 : index
    %c0_51 = arith.constant 0 : index
    %52 = vector.load %arg11[%c0_48, %c0_49, %c0_50, %c0_51] : memref<2x16x16x1152xbf16, #tpu.memory_space<vmem>>, vector<2x16x16x1152xbf16>
    %53 = vector.shape_cast %52 : vector<2x16x16x1152xbf16> to vector<512x1152xbf16>
    %c0_52 = arith.constant 0 : index
    %c0_53 = arith.constant 0 : index
    %54 = vector.load %arg2[%c0_52, %c0_53] : memref<1152x128xbf16, #tpu.memory_space<vmem>>, vector<1152x128xbf16>
    %cst_54 = arith.constant dense<0.000000e+00> : vector<512x128xf32>
    %55 = tpu.matmul %53, %54, %cst_54 {dimension_numbers = #tpu.dot_dimension_numbers<[1], [0], [0], [1], [0, 0, 1, 1], [], []>} : vector<512x1152xbf16>, vector<1152x128xbf16>, vector<512x128xf32> -> vector<512x128xf32>
    %c0_55 = arith.constant 0 : index
    %c0_56 = arith.constant 0 : index
    %56 = vector.load %arg6[%c0_55, %c0_56] : memref<1x128xf32, #tpu.memory_space<vmem>>, vector<1x128xf32>
    %c0_57 = arith.constant 0 : index
    %c0_58 = arith.constant 0 : index
    %57 = vector.load %arg7[%c0_57, %c0_58] : memref<1x128xf32, #tpu.memory_space<vmem>>, vector<1x128xf32>
    %cst_59 = arith.constant dense<0.000000e+00> : vector<128xf32>
    %58 = vector.multi_reduction <add>, %55, %cst_59 [0] : vector<512x128xf32> to vector<128xf32>
    %59 = vector.shape_cast %58 : vector<128xf32> to vector<1x128xf32>
    %60 = arith.mulf %55, %55 : vector<512x128xf32>
    %cst_60 = arith.constant dense<0.000000e+00> : vector<128xf32>
    %61 = vector.multi_reduction <add>, %60, %cst_60 [0] : vector<512x128xf32> to vector<128xf32>
    %62 = vector.shape_cast %61 : vector<128xf32> to vector<1x128xf32>
    %cst_61 = arith.constant 0.001953125 : f32
    %63 = vector.broadcast %cst_61 : f32 to vector<1x128xf32>
    %64 = arith.mulf %59, %63 : vector<1x128xf32>
    %cst_62 = arith.constant 0.001953125 : f32
    %65 = vector.broadcast %cst_62 : f32 to vector<1x128xf32>
    %66 = arith.mulf %62, %65 : vector<1x128xf32>
    %67 = arith.mulf %64, %64 : vector<1x128xf32>
    %68 = arith.subf %66, %67 : vector<1x128xf32>
    %cst_63 = arith.constant 0.000000e+00 : f32
    %69 = vector.broadcast %cst_63 : f32 to vector<1x128xf32>
    %70 = arith.maximumf %68, %69 : vector<1x128xf32>
    %cst_64 = arith.constant 9.99999974E-6 : f32
    %71 = vector.broadcast %cst_64 : f32 to vector<1x128xf32>
    %72 = arith.addf %70, %71 : vector<1x128xf32>
    %73 = math.rsqrt %72 : vector<1x128xf32>
    %74 = arith.mulf %56, %73 : vector<1x128xf32>
    %75 = arith.mulf %64, %74 : vector<1x128xf32>
    %76 = arith.subf %57, %75 : vector<1x128xf32>
    %77 = vector.broadcast %74 : vector<1x128xf32> to vector<512x128xf32>
    %78 = arith.mulf %55, %77 : vector<512x128xf32>
    %79 = vector.broadcast %76 : vector<1x128xf32> to vector<512x128xf32>
    %80 = arith.addf %78, %79 : vector<512x128xf32>
    %cst_65 = arith.constant 0.000000e+00 : f32
    %81 = vector.broadcast %cst_65 : f32 to vector<512x128xf32>
    %82 = arith.maximumf %80, %81 : vector<512x128xf32>
    %83 = arith.truncf %82 : vector<512x128xf32> to vector<512x128xbf16>
    %c0_66 = arith.constant 0 : index
    %c0_67 = arith.constant 0 : index
    %84 = vector.load %arg3[%c0_66, %c0_67] : memref<128x128xbf16, #tpu.memory_space<vmem>>, vector<128x128xbf16>
    %cst_68 = arith.constant dense<0.000000e+00> : vector<512x128xf32>
    %85 = tpu.matmul %83, %84, %cst_68 {dimension_numbers = #tpu.dot_dimension_numbers<[1], [0], [0], [1], [0, 0, 1, 1], [], []>} : vector<512x128xbf16>, vector<128x128xbf16>, vector<512x128xf32> -> vector<512x128xf32>
    %c0_69 = arith.constant 0 : index
    %c0_70 = arith.constant 0 : index
    %86 = vector.load %arg8[%c0_69, %c0_70] : memref<1x128xf32, #tpu.memory_space<vmem>>, vector<1x128xf32>
    %c0_71 = arith.constant 0 : index
    %c0_72 = arith.constant 0 : index
    %87 = vector.load %arg9[%c0_71, %c0_72] : memref<1x128xf32, #tpu.memory_space<vmem>>, vector<1x128xf32>
    %cst_73 = arith.constant dense<0.000000e+00> : vector<128xf32>
    %88 = vector.multi_reduction <add>, %85, %cst_73 [0] : vector<512x128xf32> to vector<128xf32>
    %89 = vector.shape_cast %88 : vector<128xf32> to vector<1x128xf32>
    %90 = arith.mulf %85, %85 : vector<512x128xf32>
    %cst_74 = arith.constant dense<0.000000e+00> : vector<128xf32>
    %91 = vector.multi_reduction <add>, %90, %cst_74 [0] : vector<512x128xf32> to vector<128xf32>
    %92 = vector.shape_cast %91 : vector<128xf32> to vector<1x128xf32>
    %cst_75 = arith.constant 0.001953125 : f32
    %93 = vector.broadcast %cst_75 : f32 to vector<1x128xf32>
    %94 = arith.mulf %89, %93 : vector<1x128xf32>
    %cst_76 = arith.constant 0.001953125 : f32
    %95 = vector.broadcast %cst_76 : f32 to vector<1x128xf32>
    %96 = arith.mulf %92, %95 : vector<1x128xf32>
    %97 = arith.mulf %94, %94 : vector<1x128xf32>
    %98 = arith.subf %96, %97 : vector<1x128xf32>
    %cst_77 = arith.constant 0.000000e+00 : f32
    %99 = vector.broadcast %cst_77 : f32 to vector<1x128xf32>
    %100 = arith.maximumf %98, %99 : vector<1x128xf32>
    %cst_78 = arith.constant 9.99999974E-6 : f32
    %101 = vector.broadcast %cst_78 : f32 to vector<1x128xf32>
    %102 = arith.addf %100, %101 : vector<1x128xf32>
    %103 = math.rsqrt %102 : vector<1x128xf32>
    %104 = arith.mulf %86, %103 : vector<1x128xf32>
    %105 = arith.mulf %94, %104 : vector<1x128xf32>
    %106 = arith.subf %87, %105 : vector<1x128xf32>
    %107 = vector.broadcast %104 : vector<1x128xf32> to vector<512x128xf32>
    %108 = arith.mulf %85, %107 : vector<512x128xf32>
    %109 = vector.broadcast %106 : vector<1x128xf32> to vector<512x128xf32>
    %110 = arith.addf %108, %109 : vector<512x128xf32>
    %c0_79 = arith.constant 0 : index
    %c0_80 = arith.constant 0 : index
    %c0_81 = arith.constant 0 : index
    %c0_82 = arith.constant 0 : index
    %111 = vector.load %arg0[%c0_79, %c0_80, %c0_81, %c0_82] : memref<2x16x16x128xbf16, #tpu.memory_space<vmem>>, vector<2x16x16x128xbf16>
    %112 = vector.shape_cast %111 : vector<2x16x16x128xbf16> to vector<512x128xbf16>
    %113 = arith.extf %112 : vector<512x128xbf16> to vector<512x128xf32>
    %114 = arith.addf %110, %113 : vector<512x128xf32>
    %cst_83 = arith.constant 0.000000e+00 : f32
    %115 = vector.broadcast %cst_83 : f32 to vector<512x128xf32>
    %116 = arith.maximumf %114, %115 : vector<512x128xf32>
    %117 = vector.shape_cast %116 : vector<512x128xf32> to vector<2x16x16x128xf32>
    %c0_84 = arith.constant 0 : index
    %c0_85 = arith.constant 0 : index
    %c0_86 = arith.constant 0 : index
    %c0_87 = arith.constant 0 : index
    %118 = vector.load %arg10[%c0_84, %c0_85, %c0_86, %c0_87] : memref<2x16x16x128xf32, #tpu.memory_space<vmem>>, vector<2x16x16x128xf32>
    tpu.vector_store %arg10[%c0_84, %c0_85, %c0_86, %c0_87], %117 {strides = array<i32>} : memref<2x16x16x128xf32, #tpu.memory_space<vmem>>, vector<2x16x16x128xf32>,
    return
  }
}

</mosaic_0001>

<llo_original>
// kernel: bottleneck_pallas.1
$region0: #{bottleneck_pallas.1}
  #allocation0 [shape = 'u32[]', space=smem, size = 0x4, offset = 0x4, fixed_abs, tag = 'smem constant byte address 0x4 - core index']
  #allocation1 [shape = 'u32[144,128]{1,0:T(1,128)}', space=vmem, size = 0x12000, scoped, tag = 'internal scratch']
  #allocation2 [shape = 'bf16[2,16,16,1152]{3,2,1,0:T(16,128)(2,1)}', space=vmem, size = 0x120000, scoped, tag = 'scratch operand']
  %s0 = inlined_call_operand.vmem [shape: bf16[2,16,16,128], index: 0, kind: input, shape index: {}]
  %s1 = inlined_call_operand.vmem [shape: bf16[128,128], index: 1, kind: input, shape index: {}]
  %s2 = inlined_call_operand.vmem [shape: bf16[1152,128], index: 2, kind: input, shape index: {}]
  %s3 = inlined_call_operand.vmem [shape: bf16[128,128], index: 3, kind: input, shape index: {}]
  %s4 = inlined_call_operand.vmem [shape: f32[1,128], index: 4, kind: input, shape index: {}]
  %s5 = inlined_call_operand.vmem [shape: f32[1,128], index: 5, kind: input, shape index: {}]
  %s6 = inlined_call_operand.vmem [shape: f32[1,128], index: 6, kind: input, shape index: {}]
  %s7 = inlined_call_operand.vmem [shape: f32[1,128], index: 7, kind: input, shape index: {}]
  %s8 = inlined_call_operand.vmem [shape: f32[1,128], index: 8, kind: input, shape index: {}]
  %s9 = inlined_call_operand.vmem [shape: f32[1,128], index: 9, kind: input, shape index: {}]
  %s10 = inlined_call_operand.vmem [shape: f32[2,16,16,128], index: 10, kind: output, shape index: {}]
  %s11 = sld [smem:[#allocation0]]
  $region50: #{bottleneck_pallas.1} parent=0
    _
  %s13 = ssub.s32 1, %s11
  %s14 = scalar_select 0, %s13, %s11
  // Predicated region
  $region2: #{bottleneck_pallas.1} parent=0 // pred_check
    _
  $region3: #{bottleneck_pallas.1} parent=0 // pred_check_branch
    %16 = sbr.rel (0) target = $region5
  $region4: #{bottleneck_pallas.1} parent=0 // pred_region
    _
  $region5: #{bottleneck_pallas.1} parent=0 // pred_fallthru
    _
  // Predicated region
  $region6: #{bottleneck_pallas.1} parent=0 // pred_check
    _
  $region7: #{bottleneck_pallas.1} parent=0 // pred_check_branch
    %18 = sbr.rel (0) target = $region9
  $region8: #{bottleneck_pallas.1} parent=0 // pred_region
    _
  $region9: #{bottleneck_pallas.1} parent=0 // pred_fallthru
    _
  // Predicated region
  $region10: #{bottleneck_pallas.1} parent=0 // pred_check
    _
  $region11: #{bottleneck_pallas.1} parent=0 // pred_check_branch
    %20 = sbr.rel (0) target = $region13
  $region12: #{bottleneck_pallas.1} parent=0 // pred_region
    _
  $region13: #{bottleneck_pallas.1} parent=0 // pred_fallthru
    _
  // Predicated region
  $region14: #{bottleneck_pallas.1} parent=0 // pred_check
    _
  $region15: #{bottleneck_pallas.1} parent=0 // pred_check_branch
    %22 = sbr.rel (0) target = $region17
  $region16: #{bottleneck_pallas.1} parent=0 // pred_region
    _
  $region17: #{bottleneck_pallas.1} parent=0 // pred_fallthru
    _
  // Predicated region
  $region18: #{bottleneck_pallas.1} parent=0 // pred_check
    _
  $region19: #{bottleneck_pallas.1} parent=0 // pred_check_branch
    %24 = sbr.rel (0) target = $region21
  $region20: #{bottleneck_pallas.1} parent=0 // pred_region
    _
  $region21: #{bottleneck_pallas.1} parent=0 // pred_fallthru
    _
  // Predicated region
  $region22: #{bottleneck_pallas.1} parent=0 // pred_check
    _
  $region23: #{bottleneck_pallas.1} parent=0 // pred_check_branch
    %26 = sbr.rel (0) target = $region25
  $region24: #{bottleneck_pallas.1} parent=0 // pred_region
    _
  $region25: #{bottleneck_pallas.1} parent=0 // pred_fallthru
    _
  // Predicated region
  $region26: #{bottleneck_pallas.1} parent=0 // pred_check
    _
  $region27: #{bottleneck_pallas.1} parent=0 // pred_check_branch
    %28 = sbr.rel (0) target = $region29
  $region28: #{bottleneck_pallas.1} parent=0 // pred_region
    _
  $region29: #{bottleneck_pallas.1} parent=0 // pred_fallthru
    _
  // Predicated region
  $region30: #{bottleneck_pallas.1} parent=0 // pred_check
    _
  $region31: #{bottleneck_pallas.1} parent=0 // pred_check_branch
    %30 = sbr.rel (0) target = $region33
  $region32: #{bottleneck_pallas.1} parent=0 // pred_region
    _
  $region33: #{bottleneck_pallas.1} parent=0 // pred_fallthru
    _
  // Predicated region
  $region34: #{bottleneck_pallas.1} parent=0 // pred_check
    _
  $region35: #{bottleneck_pallas.1} parent=0 // pred_check_branch
    %32 = sbr.rel (0) target = $region37
  $region36: #{bottleneck_pallas.1} parent=0 // pred_region
    _
  $region37: #{bottleneck_pallas.1} parent=0 // pred_fallthru
    _
  // Predicated region
  $region38: #{bottleneck_pallas.1} parent=0 // pred_check
    _
  $region39: #{bottleneck_pallas.1} parent=0 // pred_check_branch
    %34 = sbr.rel (0) target = $region41
  $region40: #{bottleneck_pallas.1} parent=0 // pred_region
    _
  $region41: #{bottleneck_pallas.1} parent=0 // pred_fallthru
    _
  %v36 = vld [vmem:[%s0] sm:$0xf]
  %v37 = vld [vmem:[%s0 + $0x4] sm:$0xf]
  %v38 = vld [vmem:[%s0 + $0x8] sm:$0xf]
  %v39 = vld [vmem:[%s0 + $0xc] sm:$0xf]
  %v40 = vld [vmem:[%s0 + $0x10] sm:$0xf]
  %v41 = vld [vmem:[%s0 + $0x14] sm:$0xf]
  %v42 = vld [vmem:[%s0 + $0x18] sm:$0xf]
  %v43 = vld [vmem:[%s0 + $0x1c] sm:$0xf]
  %v44 = vld [vmem:[%s0 + $0x20] sm:$0xf]
  %v45 = vld [vmem:[%s0 + $0x24] sm:$0xf]
  %v46 = vld [vmem:[%s0 + $0x28] sm:$0xf]
  %v47 = vld [vmem:[%s0 + $0x2c] sm:$0xf]
  %v48 = vld [vmem:[%s0 + $0x30] sm:$0xf]
  %v49 = vld [vmem:[%s0 + $0x34] sm:$0xf]
  %v50 = vld [vmem:[%s0 + $0x38] sm:$0xf]
  %v51 = vld [vmem:[%s0 + $0x3c] sm:$0xf]
  %v52 = vld [vmem:[%s0 + $0x40] sm:$0xf]
  %v53 = vld [vmem:[%s0 + $0x44] sm:$0xf]
  %v54 = vld [vmem:[%s0 + $0x48] sm:$0xf]
  %v55 = vld [vmem:[%s0 + $0x4c] sm:$0xf]
  %v56 = vld [vmem:[%s0 + $0x50] sm:$0xf]
  %v57 = vld [vmem:[%s0 + $0x54] sm:$0xf]
  %v58 = vld [vmem:[%s0 + $0x58] sm:$0xf]
  %v59 = vld [vmem:[%s0 + $0x5c] sm:$0xf]
  %v60 = vld [vmem:[%s0 + $0x60] sm:$0xf]
  %v61 = vld [vmem:[%s0 + $0x64] sm:$0xf]
  %v62 = vld [vmem:[%s0 + $0x68] sm:$0xf]
  %v63 = vld [vmem:[%s0 + $0x6c] sm:$0xf]
  %v64 = vld [vmem:[%s0 + $0x70] sm:$0xf]
  %v65 = vld [vmem:[%s0 + $0x74] sm:$0xf]
  %v66 = vld [vmem:[%s0 + $0x78] sm:$0xf]
  %v67 = vld [vmem:[%s0 + $0x7c] sm:$0xf]
  %v68 = vld [vmem:[%s0 + $0x80] sm:$0xf]
  %v69 = vld [vmem:[%s0 + $0x84] sm:$0xf]
  %v70 = vld [vmem:[%s0 + $0x88] sm:$0xf]
  %v71 = vld [vmem:[%s0 + $0x8c] sm:$0xf]
  %v72 = vld [vmem:[%s0 + $0x90] sm:$0xf]
  %v73 = vld [vmem:[%s0 + $0x94] sm:$0xf]
  %v74 = vld [vmem:[%s0 + $0x98] sm:$0xf]
  %v75 = vld [vmem:[%s0 + $0x9c] sm:$0xf]
  %v76 = vld [vmem:[%s0 + $0xa0] sm:$0xf]
  %v77 = vld [vmem:[%s0 + $0xa4] sm:$0xf]
  %v78 = vld [vmem:[%s0 + $0xa8] sm:$0xf]
  %v79 = vld [vmem:[%s0 + $0xac] sm:$0xf]
  %v80 = vld [vmem:[%s0 + $0xb0] sm:$0xf]
  %v81 = vld [vmem:[%s0 + $0xb4] sm:$0xf]
  %v82 = vld [vmem:[%s0 + $0xb8] sm:$0xf]
  %v83 = vld [vmem:[%s0 + $0xbc] sm:$0xf]
  %v84 = vld [vmem:[%s0 + $0xc0] sm:$0xf]
  %v85 = vld [vmem:[%s0 + $0xc4] sm:$0xf]
  %v86 = vld [vmem:[%s0 + $0xc8] sm:$0xf]
  %v87 = vld [vmem:[%s0 + $0xcc] sm:$0xf]
  %v88 = vld [vmem:[%s0 + $0xd0] sm:$0xf]
  %v89 = vld [vmem:[%s0 + $0xd4] sm:$0xf]
  %v90 = vld [vmem:[%s0 + $0xd8] sm:$0xf]
  %v91 = vld [vmem:[%s0 + $0xdc] sm:$0xf]
  %v92 = vld [vmem:[%s0 + $0xe0] sm:$0xf]
  %v93 = vld [vmem:[%s0 + $0xe4] sm:$0xf]
  %v94 = vld [vmem:[%s0 + $0xe8] sm:$0xf]
  %v95 = vld [vmem:[%s0 + $0xec] sm:$0xf]
  %v96 = vld [vmem:[%s0 + $0xf0] sm:$0xf]
  %v97 = vld [vmem:[%s0 + $0xf4] sm:$0xf]
  %v98 = vld [vmem:[%s0 + $0xf8] sm:$0xf]
  %v99 = vld [vmem:[%s0 + $0xfc] sm:$0xf]
  %v100 = vld [vmem:[%s1] sm:$0xf]
  %v101 = vld [vmem:[%s1 + $0x4] sm:$0xf]
  %v102 = vld [vmem:[%s1 + $0x8] sm:$0xf]
  %v103 = vld [vmem:[%s1 + $0xc] sm:$0xf]
  %v104 = vld [vmem:[%s1 + $0x10] sm:$0xf]
  %v105 = vld [vmem:[%s1 + $0x14] sm:$0xf]
  %v106 = vld [vmem:[%s1 + $0x18] sm:$0xf]
  %v107 = vld [vmem:[%s1 + $0x1c] sm:$0xf]
  %v108 = vld [vmem:[%s1 + $0x20] sm:$0xf]
  %v109 = vld [vmem:[%s1 + $0x24] sm:$0xf]
  %v110 = vld [vmem:[%s1 + $0x28] sm:$0xf]
  %v111 = vld [vmem:[%s1 + $0x2c] sm:$0xf]
  %v112 = vld [vmem:[%s1 + $0x30] sm:$0xf]
  %v113 = vld [vmem:[%s1 + $0x34] sm:$0xf]
  %v114 = vld [vmem:[%s1 + $0x38] sm:$0xf]
  %v115 = vld [vmem:[%s1 + $0x3c] sm:$0xf]
  %v180 = vunpack.c.l.b16 %v36
  %v181 = vunpack.c.l.b16 %v37
  %v182 = vunpack.c.l.b16 %v38
  %v183 = vunpack.c.l.b16 %v39
  %v184 = vunpack.c.l.b16 %v40
  %v185 = vunpack.c.l.b16 %v41
  %v186 = vunpack.c.l.b16 %v42
  %v187 = vunpack.c.l.b16 %v43
  %v188 = vunpack.c.l.b16 %v44
  %v189 = vunpack.c.l.b16 %v45
  %v190 = vunpack.c.l.b16 %v46
  %v191 = vunpack.c.l.b16 %v47
  %v192 = vunpack.c.l.b16 %v48
  %v193 = vunpack.c.l.b16 %v49
  %v194 = vunpack.c.l.b16 %v50
  %v195 = vunpack.c.l.b16 %v51
  %v196 = vunpack.c.l.b16 %v52
  %v197 = vunpack.c.l.b16 %v53
  %v198 = vunpack.c.l.b16 %v54
  %v199 = vunpack.c.l.b16 %v55
  %v200 = vunpack.c.l.b16 %v56
  %v201 = vunpack.c.l.b16 %v57
  %v202 = vunpack.c.l.b16 %v58
  %v203 = vunpack.c.l.b16 %v59
  %v204 = vunpack.c.l.b16 %v60
  %v205 = vunpack.c.l.b16 %v61
  %v206 = vunpack.c.l.b16 %v62
  %v207 = vunpack.c.l.b16 %v63
  %v208 = vunpack.c.l.b16 %v64
  %v209 = vunpack.c.l.b16 %v65
  %v210 = vunpack.c.l.b16 %v66
  %v211 = vunpack.c.l.b16 %v67
  %v212 = vunpack.c.l.b16 %v68
  %v213 = vunpack.c.l.b16 %v69
  %v214 = vunpack.c.l.b16 %v70
  %v215 = vunpack.c.l.b16 %v71
  %v216 = vunpack.c.l.b16 %v72
  %v217 = vunpack.c.l.b16 %v73
  %v218 = vunpack.c.l.b16 %v74
  %v219 = vunpack.c.l.b16 %v75
  %v220 = vunpack.c.l.b16 %v76
  %v221 = vunpack.c.l.b16 %v77
  %v222 = vunpack.c.l.b16 %v78
  %v223 = vunpack.c.l.b16 %v79
  %v224 = vunpack.c.l.b16 %v80
  %v225 = vunpack.c.l.b16 %v81
  %v226 = vunpack.c.l.b16 %v82
  %v227 = vunpack.c.l.b16 %v83
  %v228 = vunpack.c.l.b16 %v84
  %v229 = vunpack.c.l.b16 %v85
  %v230 = vunpack.c.l.b16 %v86
  %v231 = vunpack.c.l.b16 %v87
  %v232 = vunpack.c.l.b16 %v88
  %v233 = vunpack.c.l.b16 %v89
  %v234 = vunpack.c.l.b16 %v90
  %v235 = vunpack.c.l.b16 %v91
  %v236 = vunpack.c.l.b16 %v92
  %v237 = vunpack.c.l.b16 %v93
  %v238 = vunpack.c.l.b16 %v94
  %v239 = vunpack.c.l.b16 %v95
  %v240 = vunpack.c.l.b16 %v96
  %v241 = vunpack.c.l.b16 %v97
  %v242 = vunpack.c.l.b16 %v98
  %v243 = vunpack.c.l.b16 %v99
  %v244 = vpack.c.b16 %v181, %v180
  %v245 = vpack.c.b16 %v183, %v182
  %v246 = vpack.c.b16 %v185, %v184
  %v247 = vpack.c.b16 %v187, %v186
  %v248 = vpack.c.b16 %v189, %v188
  %v249 = vpack.c.b16 %v191, %v190
  %v250 = vpack.c.b16 %v193, %v192
  %v251 = vpack.c.b16 %v195, %v194
  %v252 = vpack.c.b16 %v197, %v196
  %v253 = vpack.c.b16 %v199, %v198
  %v254 = vpack.c.b16 %v201, %v200
  %v255 = vpack.c.b16 %v203, %v202
  %v256 = vpack.c.b16 %v205, %v204
  %v257 = vpack.c.b16 %v207, %v206
  %v258 = vpack.c.b16 %v209, %v208
  %v259 = vpack.c.b16 %v211, %v210
  %v260 = vpack.c.b16 %v213, %v212
  %v261 = vpack.c.b16 %v215, %v214
  %v262 = vpack.c.b16 %v217, %v216
  %v263 = vpack.c.b16 %v219, %v218
  %v264 = vpack.c.b16 %v221, %v220
  %v265 = vpack.c.b16 %v223, %v222
  %v266 = vpack.c.b16 %v225, %v224
  %v267 = vpack.c.b16 %v227, %v226
  %v268 = vpack.c.b16 %v229, %v228
  %v269 = vpack.c.b16 %v231, %v230
  %v270 = vpack.c.b16 %v233, %v232
  %v271 = vpack.c.b16 %v235, %v234
  %v272 = vpack.c.b16 %v237, %v236
  %v273 = vpack.c.b16 %v239, %v238
  %v274 = vpack.c.b16 %v241, %v240
  %v275 = vpack.c.b16 %v243, %v242
  %v324 = vunpack.c.l.b16 %v100
  %v325 = vunpack.c.l.b16 %v101
  %v326 = vunpack.c.l.b16 %v102
  %v327 = vunpack.c.l.b16 %v103
  %v328 = vunpack.c.l.b16 %v104
  %v329 = vunpack.c.l.b16 %v105
  %v330 = vunpack.c.l.b16 %v106
  %v331 = vunpack.c.l.b16 %v107
  %v332 = vunpack.c.l.b16 %v108
  %v333 = vunpack.c.l.b16 %v109
  %v334 = vunpack.c.l.b16 %v110
  %v335 = vunpack.c.l.b16 %v111
  %v336 = vunpack.c.l.b16 %v112
  %v337 = vunpack.c.l.b16 %v113
  %v338 = vunpack.c.l.b16 %v114
  %v339 = vunpack.c.l.b16 %v115
  %v340 = vpack.c.b16 %v325, %v324
  %v341 = vpack.c.b16 %v327, %v326
  %v342 = vpack.c.b16 %v329, %v328
  %v343 = vpack.c.b16 %v331, %v330
  %v344 = vpack.c.b16 %v333, %v332
  %v345 = vpack.c.b16 %v335, %v334
  %v346 = vpack.c.b16 %v337, %v336
  %v347 = vpack.c.b16 %v339, %v338
  %356 = vmatprep.subr.bf16.mxu0 0
  %357 = vmatpush1.bf16.msra.mxu0 %v340
  %358 = vmatprep.subr.bf16.mxu0 0
  %359 = vmatpush1.bf16.msra.mxu0 %v341
  %360 = vmatprep.subr.bf16.mxu0 0
  %361 = vmatpush1.bf16.msra.mxu0 %v342
  %362 = vmatprep.subr.bf16.mxu0 0
  %363 = vmatpush1.bf16.msra.mxu0 %v343
  %364 = vmatprep.subr.bf16.mxu0 0
  %365 = vmatpush1.bf16.msra.mxu0 %v344
  %366 = vmatprep.subr.bf16.mxu0 0
  %367 = vmatpush1.bf16.msra.mxu0 %v345
  %368 = vmatprep.subr.bf16.mxu0 0
  %369 = vmatpush1.bf16.msra.mxu0 %v346
  %370 = vmatprep.subr.bf16.mxu0 0
  %371 = vmatpush1.bf16.msra.mxu0 %v347
  %372 = vmatprep.subr.bf16.mxu0 0
  %373 = vmatpush1.bf16.msra.mxu0 0
  %374 = vmatprep.subr.bf16.mxu0 0
  %375 = vmatpush1.bf16.msra.mxu0 0
  %376 = vmatprep.subr.bf16.mxu0 0
  %377 = vmatpush1.bf16.msra.mxu0 0
  %378 = vmatprep.subr.bf16.mxu0 0
  %379 = vmatpush1.bf16.msra.mxu0 0
  %380 = vmatprep.subr.bf16.mxu0 0
  %381 = vmatpush1.bf16.msra.mxu0 0
  %382 = vmatprep.subr.bf16.mxu0 0
  %383 = vmatpush1.bf16.msra.mxu0 0
  %384 = vmatprep.subr.bf16.mxu0 0
  %385 = vmatpush1.bf16.msra.mxu0 0
  %386 = vmatprep.subr.bf16.mxu0 0
  %387 = vmatpush1.bf16.msra.mxu0 0
  %388 = vmatprep.mubr.bf16.mxu0 0
  %389 = vmatmul.mubr.bf16.gmra.mrb[0].mxu0 %v244
  %v390 = vpop.f32.mrb[0].mxu0
  %v391 = vadd.f32 0.0, %v390
  %v392 = vpop.f32.mrb[0].mxu0
  %v393 = vpop.f32.mrb[0].mxu0
  %v394 = vadd.f32 0.0, %v393
  %v395 = vpop.f32.mrb[0].mxu0
  %396 = vmatprep.mubr.bf16.mxu0 0
  %397 = vmatmul.mubr.bf16.gmra.mrb[0].mxu0 %v245
  %v398 = vpop.f32.mrb[0].mxu0
  %v399 = vadd.f32 0.0, %v398
  %v400 = vpop.f32.mrb[0].mxu0
  %v401 = vpop.f32.mrb[0].mxu0
  %v402 = vadd.f32 0.0, %v401
  %v403 = vpop.f32.mrb[0].mxu0
  %404 = vmatprep.mubr.bf16.mxu0 0
  %405 = vmatmul.mubr.bf16.gmra.mrb[0].mxu0 %v246
  %v406 = vpop.f32.mrb[0].mxu0
  %v407 = vadd.f32 0.0, %v406
  %v408 = vpop.f32.mrb[0].mxu0
  %v409 = vpop.f32.mrb[0].mxu0
  %v410 = vadd.f32 0.0, %v409
  %v411 = vpop.f32.mrb[0].mxu0
  %412 = vmatprep.mubr.bf16.mxu0 0
  %413 = vmatmul.mubr.bf16.gmra.mrb[0].mxu0 %v247
  %v414 = vpop.f32.mrb[0].mxu0
  %v415 = vadd.f32 0.0, %v414
  %v416 = vpop.f32.mrb[0].mxu0
  %v417 = vpop.f32.mrb[0].mxu0
  %v418 = vadd.f32 0.0, %v417
  %v419 = vpop.f32.mrb[0].mxu0
  %420 = vmatprep.mubr.bf16.mxu0 0
  %421 = vmatmul.mubr.bf16.gmra.mrb[0].mxu0 %v248
  %v422 = vpop.f32.mrb[0].mxu0
  %v423 = vadd.f32 0.0, %v422
  %v424 = vpop.f32.mrb[0].mxu0
  %v425 = vpop.f32.mrb[0].mxu0
  %v426 = vadd.f32 0.0, %v425
  %v427 = vpop.f32.mrb[0].mxu0
  %428 = vmatprep.mubr.bf16.mxu0 0
  %429 = vmatmul.mubr.bf16.gmra.mrb[0].mxu0 %v249
  %v430 = vpop.f32.mrb[0].mxu0
  %v431 = vadd.f32 0.0, %v430
  %v432 = vpop.f32.mrb[0].mxu0
  %v433 = vpop.f32.mrb[0].mxu0
  %v434 = vadd.f32 0.0, %v433
  %v435 = vpop.f32.mrb[0].mxu0
  %436 = vmatprep.mubr.bf16.mxu0 0
  %437 = vmatmul.mubr.bf16.gmra.mrb[0].mxu0 %v250
  %v438 = vpop.f32.mrb[0].mxu0
  %v439 = vadd.f32 0.0, %v438
  %v440 = vpop.f32.mrb[0].mxu0
  %v441 = vpop.f32.mrb[0].mxu0
  %v442 = vadd.f32 0.0, %v441
  %v443 = vpop.f32.mrb[0].mxu0
  %444 = vmatprep.mubr.bf16.mxu0 0
  %445 = vmatmul.mubr.bf16.gmra.mrb[0].mxu0 %v251
  %v446 = vpop.f32.mrb[0].mxu0
  %v447 = vadd.f32 0.0, %v446
  %v448 = vpop.f32.mrb[0].mxu0
  %v449 = vpop.f32.mrb[0].mxu0
  %v450 = vadd.f32 0.0, %v449
  %v451 = vpop.f32.mrb[0].mxu0
  %452 = vmatprep.mubr.bf16.mxu0 0
  %453 = vmatmul.mubr.bf16.gmra.mrb[0].mxu0 %v252
  %v454 = vpop.f32.mrb[0].mxu0
  %v455 = vadd.f32 0.0, %v454
  %v456 = vpop.f32.mrb[0].mxu0
  %v457 = vpop.f32.mrb[0].mxu0
  %v458 = vadd.f32 0.0, %v457
  %v459 = vpop.f32.mrb[0].mxu0
  %460 = vmatprep.mubr.bf16.mxu0 0
  %461 = vmatmul.mubr.bf16.gmra.mrb[0].mxu0 %v253
  %v462 = vpop.f32.mrb[0].mxu0
  %v463 = vadd.f32 0.0, %v462
  %v464 = vpop.f32.mrb[0].mxu0
  %v465 = vpop.f32.mrb[0].mxu0
  %v466 = vadd.f32 0.0, %v465
  %v467 = vpop.f32.mrb[0].mxu0
  %468 = vmatprep.mubr.bf16.mxu0 0
  %469 = vmatmul.mubr.bf16.gmra.mrb[0].mxu0 %v254
  %v470 = vpop.f32.mrb[0].mxu0
  %v471 = vadd.f32 0.0, %v470
  %v472 = vpop.f32.mrb[0].mxu0
  %v473 = vpop.f32.mrb[0].mxu0
  %v474 = vadd.f32 0.0, %v473
  %v475 = vpop.f32.mrb[0].mxu0
  %476 = vmatprep.mubr.bf16.mxu0 0
  %477 = vmatmul.mubr.bf16.gmra.mrb[0].mxu0 %v255
  %v478 = vpop.f32.mrb[0].mxu0
  %v479 = vadd.f32 0.0, %v478
  %v480 = vpop.f32.mrb[0].mxu0
  %v481 = vpop.f32.mrb[0].mxu0
  %v482 = vadd.f32 0.0, %v481
  %v483 = vpop.f32.mrb[0].mxu0
  %484 = vmatprep.mubr.bf16.mxu0 0
  %485 = vmatmul.mubr.bf16.gmra.mrb[0].mxu0 %v256
  %v486 = vpop.f32.mrb[0].mxu0
  %v487 = vadd.f32 0.0, %v486
  %v488 = vpop.f32.mrb[0].mxu0
  %v489 = vpop.f32.mrb[0].mxu0
  %v490 = vadd.f32 0.0, %v489
  %v491 = vpop.f32.mrb[0].mxu0
  %492 = vmatprep.mubr.bf16.mxu0 0
  %493 = vmatmul.mubr.bf16.gmra.mrb[0].mxu0 %v257
  %v494 = vpop.f32.mrb[0].mxu0
  %v495 = vadd.f32 0.0, %v494
  %v496 = vpop.f32.mrb[0].mxu0
  %v497 = vpop.f32.mrb[0].mxu0
  %v498 = vadd.f32 0.0, %v497
  %v499 = vpop.f32.mrb[0].mxu0
  %500 = vmatprep.mubr.bf16.mxu0 0
  %501 = vmatmul.mubr.bf16.gmra.mrb[0].mxu0 %v258
  %v502 = vpop.f32.mrb[0].mxu0
  %v503 = vadd.f32 0.0, %v502
  %v504 = vpop.f32.mrb[0].mxu0
  %v505 = vpop.f32.mrb[0].mxu0
  %v506 = vadd.f32 0.0, %v505
  %v507 = vpop.f32.mrb[0].mxu0
  %508 = vmatprep.mubr.bf16.mxu0 0
  %509 = vmatmul.mubr.bf16.gmra.mrb[0].mxu0 %v259
  %v510 = vpop.f32.mrb[0].mxu0
  %v511 = vadd.f32 0.0, %v510
  %v512 = vpop.f32.mrb[0].mxu0
  %v513 = vpop.f32.mrb[0].mxu0
  %v514 = vadd.f32 0.0, %v513
  %v515 = vpop.f32.mrb[0].mxu0
  %516 = vmatprep.mubr.bf16.mxu0 0
  %517 = vmatmul.mubr.bf16.gmra.mrb[0].mxu0 %v260
  %v518 = vpop.f32.mrb[0].mxu0
  %v519 = vadd.f32 0.0, %v518
  %v520 = vpop.f32.mrb[0].mxu0
  %v521 = vpop.f32.mrb[0].mxu0
  %v522 = vadd.f32 0.0, %v521
  %v523 = vpop.f32.mrb[0].mxu0
  %524 = vmatprep.mubr.bf16.mxu0 0
  %525 = vmatmul.mubr.bf16.gmra.mrb[0].mxu0 %v261
  %v526 = vpop.f32.mrb[0].mxu0
  %v527 = vadd.f32 0.0, %v526
  %v528 = vpop.f32.mrb[0].mxu0
  %v529 = vpop.f32.mrb[0].mxu0
  %v530 = vadd.f32 0.0, %v529
  %v531 = vpop.f32.mrb[0].mxu0
  %532 = vmatprep.mubr.bf16.mxu0 0
  %533 = vmatmul.mubr.bf16.gmra.mrb[0].mxu0 %v262
  %v534 = vpop.f32.mrb[0].mxu0
  %v535 = vadd.f32 0.0, %v534
  %v536 = vpop.f32.mrb[0].mxu0
  %v537 = vpop.f32.mrb[0].mxu0
  %v538 = vadd.f32 0.0, %v537
  %v539 = vpop.f32.mrb[0].mxu0
  %540 = vmatprep.mubr.bf16.mxu0 0
  %541 = vmatmul.mubr.bf16.gmra.mrb[0].mxu0 %v263
  %v542 = vpop.f32.mrb[0].mxu0
  %v543 = vadd.f32 0.0, %v542
  %v544 = vpop.f32.mrb[0].mxu0
  %v545 = vpop.f32.mrb[0].mxu0
  %v546 = vadd.f32 0.0, %v545
  %v547 = vpop.f32.mrb[0].mxu0
  %548 = vmatprep.mubr.bf16.mxu0 0
  %549 = vmatmul.mubr.bf16.gmra.mrb[0].mxu0 %v264
  %v550 = vpop.f32.mrb[0].mxu0
  %v551 = vadd.f32 0.0, %v550
  %v552 = vpop.f32.mrb[0].mxu0
  %v553 = vpop.f32.mrb[0].mxu0
  %v554 = vadd.f32 0.0, %v553
  %v555 = vpop.f32.mrb[0].mxu0
  %556 = vmatprep.mubr.bf16.mxu0 0
  %557 = vmatmul.mubr.bf16.gmra.mrb[0].mxu0 %v265
  %v558 = vpop.f32.mrb[0].mxu0
  %v559 = vadd.f32 0.0, %v558
  %v560 = vpop.f32.mrb[0].mxu0
  %v561 = vpop.f32.mrb[0].mxu0
  %v562 = vadd.f32 0.0, %v561
  %v563 = vpop.f32.mrb[0].mxu0
  %564 = vmatprep.mubr.bf16.mxu0 0
  %565 = vmatmul.mubr.bf16.gmra.mrb[0].mxu0 %v266
  %v566 = vpop.f32.mrb[0].mxu0
  %v567 = vadd.f32 0.0, %v566
  %v568 = vpop.f32.mrb[0].mxu0
  %v569 = vpop.f32.mrb[0].mxu0
  %v570 = vadd.f32 0.0, %v569
  %v571 = vpop.f32.mrb[0].mxu0
  %572 = vmatprep.mubr.bf16.mxu0 0
  %573 = vmatmul.mubr.bf16.gmra.mrb[0].mxu0 %v267
  %v574 = vpop.f32.mrb[0].mxu0
  %v575 = vadd.f32 0.0, %v574
  %v576 = vpop.f32.mrb[0].mxu0
  %v577 = vpop.f32.mrb[0].mxu0
  %v578 = vadd.f32 0.0, %v577
  %v579 = vpop.f32.mrb[0].mxu0
  %580 = vmatprep.mubr.bf16.mxu0 0
  %581 = vmatmul.mubr.bf16.gmra.mrb[0].mxu0 %v268
  %v582 = vpop.f32.mrb[0].mxu0
  %v583 = vadd.f32 0.0, %v582
  %v584 = vpop.f32.mrb[0].mxu0
  %v585 = vpop.f32.mrb[0].mxu0
  %v586 = vadd.f32 0.0, %v585
  %v587 = vpop.f32.mrb[0].mxu0
  %588 = vmatprep.mubr.bf16.mxu0 0
  %589 = vmatmul.mubr.bf16.gmra.mrb[0].mxu0 %v269
  %v590 = vpop.f32.mrb[0].mxu0
  %v591 = vadd.f32 0.0, %v590
  %v592 = vpop.f32.mrb[0].mxu0
  %v593 = vpop.f32.mrb[0].mxu0
  %v594 = vadd.f32 0.0, %v593
  %v595 = vpop.f32.mrb[0].mxu0
  %596 = vmatprep.mubr.bf16.mxu0 0
  %597 = vmatmul.mubr.bf16.gmra.mrb[0].mxu0 %v270
  %v598 = vpop.f32.mrb[0].mxu0
  %v599 = vadd.f32 0.0, %v598
  %v600 = vpop.f32.mrb[0].mxu0
  %v601 = vpop.f32.mrb[0].mxu0
  %v602 = vadd.f32 0.0, %v601
  %v603 = vpop.f32.mrb[0].mxu0
  %604 = vmatprep.mubr.bf16.mxu0 0
  %605 = vmatmul.mubr.bf16.gmra.mrb[0].mxu0 %v271
  %v606 = vpop.f32.mrb[0].mxu0
  %v607 = vadd.f32 0.0, %v606
  %v608 = vpop.f32.mrb[0].mxu0
  %v609 = vpop.f32.mrb[0].mxu0
  %v610 = vadd.f32 0.0, %v609
  %v611 = vpop.f32.mrb[0].mxu0
  %612 = vmatprep.mubr.bf16.mxu0 0
  %613 = vmatmul.mubr.bf16.gmra.mrb[0].mxu0 %v272
  %v614 = vpop.f32.mrb[0].mxu0
  %v615 = vadd.f32 0.0, %v614
  %v616 = vpop.f32.mrb[0].mxu0
  %v617 = vpop.f32.mrb[0].mxu0
  %v618 = vadd.f32 0.0, %v617
  %v619 = vpop.f32.mrb[0].mxu0
  %620 = vmatprep.mubr.bf16.mxu0 0
  %621 = vmatmul.mubr.bf16.gmra.mrb[0].mxu0 %v273
  %v622 = vpop.f32.mrb[0].mxu0
  %v623 = vadd.f32 0.0, %v622
  %v624 = vpop.f32.mrb[0].mxu0
  %v625 = vpop.f32.mrb[0].mxu0
  %v626 = vadd.f32 0.0, %v625
  %v627 = vpop.f32.mrb[0].mxu0
  %628 = vmatprep.mubr.bf16.mxu0 0
  %629 = vmatmul.mubr.bf16.gmra.mrb[0].mxu0 %v274
  %v630 = vpop.f32.mrb[0].mxu0
  %v631 = vadd.f32 0.0, %v630
  %v632 = vpop.f32.mrb[0].mxu0
  %v633 = vpop.f32.mrb[0].mxu0
  %v634 = vadd.f32 0.0, %v633
  %v635 = vpop.f32.mrb[0].mxu0
  %636 = vmatprep.mubr.bf16.mxu0 0
  %637 = vmatmul.mubr.bf16.gmra.mrb[0].mxu0 %v275
  %v638 = vpop.f32.mrb[0].mxu0
  %v639 = vadd.f32 0.0, %v638
  %v640 = vpop.f32.mrb[0].mxu0
  %v641 = vpop.f32.mrb[0].mxu0
  %v642 = vadd.f32 0.0, %v641
  %v643 = vpop.f32.mrb[0].mxu0
  %644 = vdwg.mxu0
  %v645 = vld [vmem:[%s4] sm:$0x1]
  %v646 = vld [vmem:[%s5] sm:$0x1]
  %v647 = vadd.f32 %v391, %v394
  %v648 = vadd.f32 %v647, %v399
  %v649 = vadd.f32 %v648, %v402
  %v650 = vadd.f32 %v649, %v407
  %v651 = vadd.f32 %v650, %v410
  %v652 = vadd.f32 %v651, %v415
  %v653 = vadd.f32 %v652, %v418
  %v654 = vadd.f32 %v653, %v423
  %v655 = vadd.f32 %v654, %v426
  %v656 = vadd.f32 %v655, %v431
  %v657 = vadd.f32 %v656, %v434
  %v658 = vadd.f32 %v657, %v439
  %v659 = vadd.f32 %v658, %v442
  %v660 = vadd.f32 %v659, %v447
  %v661 = vadd.f32 %v660, %v450
  %v662 = vadd.f32 %v661, %v455
  %v663 = vadd.f32 %v662, %v458
  %v664 = vadd.f32 %v663, %v463
  %v665 = vadd.f32 %v664, %v466
  %v666 = vadd.f32 %v665, %v471
  %v667 = vadd.f32 %v666, %v474
  %v668 = vadd.f32 %v667, %v479
  %v669 = vadd.f32 %v668, %v482
  %v670 = vadd.f32 %v669, %v487
  %v671 = vadd.f32 %v670, %v490
  %v672 = vadd.f32 %v671, %v495
  %v673 = vadd.f32 %v672, %v498
  %v674 = vadd.f32 %v673, %v503
  %v675 = vadd.f32 %v674, %v506
  %v676 = vadd.f32 %v675, %v511
  %v677 = vadd.f32 %v676, %v514
  %v678 = vadd.f32 %v677, %v519
  %v679 = vadd.f32 %v678, %v522
  %v680 = vadd.f32 %v679, %v527
  %v681 = vadd.f32 %v680, %v530
  %v682 = vadd.f32 %v681, %v535
  %v683 = vadd.f32 %v682, %v538
  %v684 = vadd.f32 %v683, %v543
  %v685 = vadd.f32 %v684, %v546
  %v686 = vadd.f32 %v685, %v551
  %v687 = vadd.f32 %v686, %v554
  %v688 = vadd.f32 %v687, %v559
  %v689 = vadd.f32 %v688, %v562
  %v690 = vadd.f32 %v689, %v567
  %v691 = vadd.f32 %v690, %v570
  %v692 = vadd.f32 %v691, %v575
  %v693 = vadd.f32 %v692, %v578
  %v694 = vadd.f32 %v693, %v583
  %v695 = vadd.f32 %v694, %v586
  %v696 = vadd.f32 %v695, %v591
  %v697 = vadd.f32 %v696, %v594
  %v698 = vadd.f32 %v697, %v599
  %v699 = vadd.f32 %v698, %v602
  %v700 = vadd.f32 %v699, %v607
  %v701 = vadd.f32 %v700, %v610
  %v702 = vadd.f32 %v701, %v615
  %v703 = vadd.f32 %v702, %v618
  %v704 = vadd.f32 %v703, %v623
  %v705 = vadd.f32 %v704, %v626
  %v706 = vadd.f32 %v705, %v631
  %v707 = vadd.f32 %v706, %v634
  %v708 = vadd.f32 %v707, %v639
  %v709 = vadd.f32 %v708, %v642
  %v710 = vrot.slane %v709, 4
  %v711 = vadd.f32 %v709, %v710
  %v712 = vrot.slane %v711, 2
  %v713 = vadd.f32 %v711, %v712
  %v714 = vrot.slane %v713, 1
  %v715 = vadd.f32 %v713, %v714
  %v716 = vmul.f32 %v391, %v391
  %v717 = vmul.f32 %v394, %v394
  %v718 = vmul.f32 %v399, %v399
  %v719 = vmul.f32 %v402, %v402
  %v720 = vmul.f32 %v407, %v407
  %v721 = vmul.f32 %v410, %v410
  %v722 = vmul.f32 %v415, %v415
  %v723 = vmul.f32 %v418, %v418
  %v724 = vmul.f32 %v423, %v423
  %v725 = vmul.f32 %v426, %v426
  %v726 = vmul.f32 %v431, %v431
  %v727 = vmul.f32 %v434, %v434
  %v728 = vmul.f32 %v439, %v439
  %v729 = vmul.f32 %v442, %v442
  %v730 = vmul.f32 %v447, %v447
  %v731 = vmul.f32 %v450, %v450
  %v732 = vmul.f32 %v455, %v455
  %v733 = vmul.f32 %v458, %v458
  %v734 = vmul.f32 %v463, %v463
  %v735 = vmul.f32 %v466, %v466
  %v736 = vmul.f32 %v471, %v471
  %v737 = vmul.f32 %v474, %v474
  %v738 = vmul.f32 %v479, %v479
  %v739 = vmul.f32 %v482, %v482
  %v740 = vmul.f32 %v487, %v487
  %v741 = vmul.f32 %v490, %v490
  %v742 = vmul.f32 %v495, %v495
  %v743 = vmul.f32 %v498, %v498
  %v744 = vmul.f32 %v503, %v503
  %v745 = vmul.f32 %v506, %v506
  %v746 = vmul.f32 %v511, %v511
  %v747 = vmul.f32 %v514, %v514
  %v748 = vmul.f32 %v519, %v519
  %v749 = vmul.f32 %v522, %v522
  %v750 = vmul.f32 %v527, %v527
  %v751 = vmul.f32 %v530, %v530
  %v752 = vmul.f32 %v535, %v535
  %v753 = vmul.f32 %v538, %v538
  %v754 = vmul.f32 %v543, %v543
  %v755 = vmul.f32 %v546, %v546
  %v756 = vmul.f32 %v551, %v551
  %v757 = vmul.f32 %v554, %v554
  %v758 = vmul.f32 %v559, %v559
  %v759 = vmul.f32 %v562, %v562
  %v760 = vmul.f32 %v567, %v567
  %v761 = vmul.f32 %v570, %v570
  %v762 = vmul.f32 %v575, %v575
  %v763 = vmul.f32 %v578, %v578
  %v764 = vmul.f32 %v583, %v583
  %v765 = vmul.f32 %v586, %v586
  %v766 = vmul.f32 %v591, %v591
  %v767 = vmul.f32 %v594, %v594
  %v768 = vmul.f32 %v599, %v599
  %v769 = vmul.f32 %v602, %v602
  %v770 = vmul.f32 %v607, %v607
  %v771 = vmul.f32 %v610, %v610
  %v772 = vmul.f32 %v615, %v615
  %v773 = vmul.f32 %v618, %v618
  %v774 = vmul.f32 %v623, %v623
  %v775 = vmul.f32 %v626, %v626
  %v776 = vmul.f32 %v631, %v631
  %v777 = vmul.f32 %v634, %v634
  %v778 = vmul.f32 %v639, %v639
  %v779 = vmul.f32 %v642, %v642
  %v780 = vadd.f32 %v716, %v717
  %v781 = vadd.f32 %v780, %v718
  %v782 = vadd.f32 %v781, %v719
  %v783 = vadd.f32 %v782, %v720
  %v784 = vadd.f32 %v783, %v721
  %v785 = vadd.f32 %v784, %v722
  %v786 = vadd.f32 %v785, %v723
  %v787 = vadd.f32 %v786, %v724
  %v788 = vadd.f32 %v787, %v725
  %v789 = vadd.f32 %v788, %v726
  %v790 = vadd.f32 %v789, %v727
  %v791 = vadd.f32 %v790, %v728
  %v792 = vadd.f32 %v791, %v729
  %v793 = vadd.f32 %v792, %v730
  %v794 = vadd.f32 %v793, %v731
  %v795 = vadd.f32 %v794, %v732
  %v796 = vadd.f32 %v795, %v733
  %v797 = vadd.f32 %v796, %v734
  %v798 = vadd.f32 %v797, %v735
  %v799 = vadd.f32 %v798, %v736
  %v800 = vadd.f32 %v799, %v737
  %v801 = vadd.f32 %v800, %v738
  %v802 = vadd.f32 %v801, %v739
  %v803 = vadd.f32 %v802, %v740
  %v804 = vadd.f32 %v803, %v741
  %v805 = vadd.f32 %v804, %v742
  %v806 = vadd.f32 %v805, %v743
  %v807 = vadd.f32 %v806, %v744
  %v808 = vadd.f32 %v807, %v745
  %v809 = vadd.f32 %v808, %v746
  %v810 = vadd.f32 %v809, %v747
  %v811 = vadd.f32 %v810, %v748
  %v812 = vadd.f32 %v811, %v749
  %v813 = vadd.f32 %v812, %v750
  %v814 = vadd.f32 %v813, %v751
  %v815 = vadd.f32 %v814, %v752
  %v816 = vadd.f32 %v815, %v753
  %v817 = vadd.f32 %v816, %v754
  %v818 = vadd.f32 %v817, %v755
  %v819 = vadd.f32 %v818, %v756
  %v820 = vadd.f32 %v819, %v757
  %v821 = vadd.f32 %v820, %v758
  %v822 = vadd.f32 %v821, %v759
  %v823 = vadd.f32 %v822, %v760
  %v824 = vadd.f32 %v823, %v761
  %v825 = vadd.f32 %v824, %v762
  %v826 = vadd.f32 %v825, %v763
  %v827 = vadd.f32 %v826, %v764
  %v828 = vadd.f32 %v827, %v765
  %v829 = vadd.f32 %v828, %v766
  %v830 = vadd.f32 %v829, %v767
  %v831 = vadd.f32 %v830, %v768
  %v832 = vadd.f32 %v831, %v769
  %v833 = vadd.f32 %v832, %v770
  %v834 = vadd.f32 %v833, %v771
  %v835 = vadd.f32 %v834, %v772
  %v836 = vadd.f32 %v835, %v773
  %v837 = vadd.f32 %v836, %v774
  %v838 = vadd.f32 %v837, %v775
  %v839 = vadd.f32 %v838, %v776
  %v840 = vadd.f32 %v839, %v777
  %v841 = vadd.f32 %v840, %v778
  %v842 = vadd.f32 %v841, %v779
  %v843 = vrot.slane %v842, 4
  %v844 = vadd.f32 %v842, %v843
  %v845 = vrot.slane %v844, 2
  %v846 = vadd.f32 %v844, %v845
  %v847 = vrot.slane %v846, 1
  %v848 = vadd.f32 %v846, %v847
  %v849 = vmul.f32 %v715, 0.001953125
  %v850 = vmul.f32 %v848, 0.001953125
  %v851 = vmul.f32 %v849, %v849
  %v852 = vsub.f32 %v850, %v851
  %v853 = vmax.f32 %v852, 0.0
  %v854 = vadd.f32 %v853, 1e-05
  %v855 = vrsqrt.pop %v854
  %v856 = vmul.f32 %v645, %v855
  %v857 = vmul.f32 %v849, %v856
  %v858 = vsub.f32 %v646, %v857
  %v860 = vlaneseq
  %v861 = vshrl.u32 %v860, 7
  %v862 = vsub.s32 0, %v861
  %v863 = vrot.slane %v856, %v862
  %v865 = vmul.f32 %v391, %v863
  %v866 = vmul.f32 %v394, %v863
  %v867 = vmul.f32 %v399, %v863
  %v868 = vmul.f32 %v402, %v863
  %v869 = vmul.f32 %v407, %v863
  %v870 = vmul.f32 %v410, %v863
  %v871 = vmul.f32 %v415, %v863
  %v872 = vmul.f32 %v418, %v863
  %v873 = vmul.f32 %v423, %v863
  %v874 = vmul.f32 %v426, %v863
  %v875 = vmul.f32 %v431, %v863
  %v876 = vmul.f32 %v434, %v863
  %v877 = vmul.f32 %v439, %v863
  %v878 = vmul.f32 %v442, %v863
  %v879 = vmul.f32 %v447, %v863
  %v880 = vmul.f32 %v450, %v863
  %v881 = vmul.f32 %v455, %v863
  %v882 = vmul.f32 %v458, %v863
  %v883 = vmul.f32 %v463, %v863
  %v884 = vmul.f32 %v466, %v863
  %v885 = vmul.f32 %v471, %v863
  %v886 = vmul.f32 %v474, %v863
  %v887 = vmul.f32 %v479, %v863
  %v888 = vmul.f32 %v482, %v863
  %v889 = vmul.f32 %v487, %v863
  %v890 = vmul.f32 %v490, %v863
  %v891 = vmul.f32 %v495, %v863
  %v892 = vmul.f32 %v498, %v863
  %v893 = vmul.f32 %v503, %v863
  %v894 = vmul.f32 %v506, %v863
  %v895 = vmul.f32 %v511, %v863
  %v896 = vmul.f32 %v514, %v863
  %v897 = vmul.f32 %v519, %v863
  %v898 = vmul.f32 %v522, %v863
  %v899 = vmul.f32 %v527, %v863
  %v900 = vmul.f32 %v530, %v863
  %v901 = vmul.f32 %v535, %v863
  %v902 = vmul.f32 %v538, %v863
  %v903 = vmul.f32 %v543, %v863
  %v904 = vmul.f32 %v546, %v863
  %v905 = vmul.f32 %v551, %v863
  %v906 = vmul.f32 %v554, %v863
  %v907 = vmul.f32 %v559, %v863
  %v908 = vmul.f32 %v562, %v863
  %v909 = vmul.f32 %v567, %v863
  %v910 = vmul.f32 %v570, %v863
  %v911 = vmul.f32 %v575, %v863
  %v912 = vmul.f32 %v578, %v863
  %v913 = vmul.f32 %v583, %v863
  %v914 = vmul.f32 %v586, %v863
  %v915 = vmul.f32 %v591, %v863
  %v916 = vmul.f32 %v594, %v863
  %v917 = vmul.f32 %v599, %v863
  %v918 = vmul.f32 %v602, %v863
  %v919 = vmul.f32 %v607, %v863
  %v920 = vmul.f32 %v610, %v863
  %v921 = vmul.f32 %v615, %v863
  %v922 = vmul.f32 %v618, %v863
  %v923 = vmul.f32 %v623, %v863
  %v924 = vmul.f32 %v626, %v863
  %v925 = vmul.f32 %v631, %v863
  %v926 = vmul.f32 %v634, %v863
  %v927 = vmul.f32 %v639, %v863
  %v928 = vmul.f32 %v642, %v863
  %v930 = vlaneseq
  %v931 = vshrl.u32 %v930, 7
  %v932 = vsub.s32 0, %v931
  %v933 = vrot.slane %v858, %v932
  %v935 = vadd.f32 %v865, %v933
  %v936 = vadd.f32 %v866, %v933
  %v937 = vadd.f32 %v867, %v933
  %v938 = vadd.f32 %v868, %v933
  %v939 = vadd.f32 %v869, %v933
  %v940 = vadd.f32 %v870, %v933
  %v941 = vadd.f32 %v871, %v933
  %v942 = vadd.f32 %v872, %v933
  %v943 = vadd.f32 %v873, %v933
  %v944 = vadd.f32 %v874, %v933
  %v945 = vadd.f32 %v875, %v933
  %v946 = vadd.f32 %v876, %v933
  %v947 = vadd.f32 %v877, %v933
  %v948 = vadd.f32 %v878, %v933
  %v949 = vadd.f32 %v879, %v933
  %v950 = vadd.f32 %v880, %v933
  %v951 = vadd.f32 %v881, %v933
  %v952 = vadd.f32 %v882, %v933
  %v953 = vadd.f32 %v883, %v933
  %v954 = vadd.f32 %v884, %v933
  %v955 = vadd.f32 %v885, %v933
  %v956 = vadd.f32 %v886, %v933
  %v957 = vadd.f32 %v887, %v933
  %v958 = vadd.f32 %v888, %v933
  %v959 = vadd.f32 %v889, %v933
  %v960 = vadd.f32 %v890, %v933
  %v961 = vadd.f32 %v891, %v933
  %v962 = vadd.f32 %v892, %v933
  %v963 = vadd.f32 %v893, %v933
  %v964 = vadd.f32 %v894, %v933
  %v965 = vadd.f32 %v895, %v933
  %v966 = vadd.f32 %v896, %v933
  %v967 = vadd.f32 %v897, %v933
  %v968 = vadd.f32 %v898, %v933
  %v969 = vadd.f32 %v899, %v933
  %v970 = vadd.f32 %v900, %v933
  %v971 = vadd.f32 %v901, %v933
  %v972 = vadd.f32 %v902, %v933
  %v973 = vadd.f32 %v903, %v933
  %v974 = vadd.f32 %v904, %v933
  %v975 = vadd.f32 %v905, %v933
  %v976 = vadd.f32 %v906, %v933
  %v977 = vadd.f32 %v907, %v933
  %v978 = vadd.f32 %v908, %v933
  %v979 = vadd.f32 %v909, %v933
  %v980 = vadd.f32 %v910, %v933
  %v981 = vadd.f32 %v911, %v933
  %v982 = vadd.f32 %v912, %v933
  %v983 = vadd.f32 %v913, %v933
  %v984 = vadd.f32 %v914, %v933
  %v985 = vadd.f32 %v915, %v933
  %v986 = vadd.f32 %v916, %v933
  %v987 = vadd.f32 %v917, %v933
  %v988 = vadd.f32 %v918, %v933
  %v989 = vadd.f32 %v919, %v933
  %v990 = vadd.f32 %v920, %v933
  %v991 = vadd.f32 %v921, %v933
  %v992 = vadd.f32 %v922, %v933
  %v993 = vadd.f32 %v923, %v933
  %v994 = vadd.f32 %v924, %v933
  %v995 = vadd.f32 %v925, %v933
  %v996 = vadd.f32 %v926, %v933
  %v997 = vadd.f32 %v927, %v933
  %v998 = vadd.f32 %v928, %v933
  %v999 = vmax.f32 %v935, 0.0
  %v1000 = vmax.f32 %v936, 0.0
  %v1001 = vmax.f32 %v937, 0.0
  %v1002 = vmax.f32 %v938, 0.0
  %v1003 = vmax.f32 %v939, 0.0
  %v1004 = vmax.f32 %v940, 0.0
  %v1005 = vmax.f32 %v941, 0.0
  %v1006 = vmax.f32 %v942, 0.0
  %v1007 = vmax.f32 %v943, 0.0
  %v1008 = vmax.f32 %v944, 0.0
  %v1009 = vmax.f32 %v945, 0.0
  %v1010 = vmax.f32 %v946, 0.0
  %v1011 = vmax.f32 %v947, 0.0
  %v1012 = vmax.f32 %v948, 0.0
  %v1013 = vmax.f32 %v949, 0.0
  %v1014 = vmax.f32 %v950, 0.0
  %v1015 = vmax.f32 %v951, 0.0
  %v1016 = vmax.f32 %v952, 0.0
  %v1017 = vmax.f32 %v953, 0.0
  %v1018 = vmax.f32 %v954, 0.0
  %v1019 = vmax.f32 %v955, 0.0
  %v1020 = vmax.f32 %v956, 0.0
  %v1021 = vmax.f32 %v957, 0.0
  %v1022 = vmax.f32 %v958, 0.0
  %v1023 = vmax.f32 %v959, 0.0
  %v1024 = vmax.f32 %v960, 0.0
  %v1025 = vmax.f32 %v961, 0.0
  %v1026 = vmax.f32 %v962, 0.0
  %v1027 = vmax.f32 %v963, 0.0
  %v1028 = vmax.f32 %v964, 0.0
  %v1029 = vmax.f32 %v965, 0.0
  %v1030 = vmax.f32 %v966, 0.0
  %v1031 = vmax.f32 %v967, 0.0
  %v1032 = vmax.f32 %v968, 0.0
  %v1033 = vmax.f32 %v969, 0.0
  %v1034 = vmax.f32 %v970, 0.0
  %v1035 = vmax.f32 %v971, 0.0
  %v1036 = vmax.f32 %v972, 0.0
  %v1037 = vmax.f32 %v973, 0.0
  %v1038 = vmax.f32 %v974, 0.0
  %v1039 = vmax.f32 %v975, 0.0
  %v1040 = vmax.f32 %v976, 0.0
  %v1041 = vmax.f32 %v977, 0.0
  %v1042 = vmax.f32 %v978, 0.0
  %v1043 = vmax.f32 %v979, 0.0
  %v1044 = vmax.f32 %v980, 0.0
  %v1045 = vmax.f32 %v981, 0.0
  %v1046 = vmax.f32 %v982, 0.0
  %v1047 = vmax.f32 %v983, 0.0
  %v1048 = vmax.f32 %v984, 0.0
  %v1049 = vmax.f32 %v985, 0.0
  %v1050 = vmax.f32 %v986, 0.0
  %v1051 = vmax.f32 %v987, 0.0
  %v1052 = vmax.f32 %v988, 0.0
  %v1053 = vmax.f32 %v989, 0.0
  %v1054 = vmax.f32 %v990, 0.0
  %v1055 = vmax.f32 %v991, 0.0
  %v1056 = vmax.f32 %v992, 0.0
  %v1057 = vmax.f32 %v993, 0.0
  %v1058 = vmax.f32 %v994, 0.0
  %v1059 = vmax.f32 %v995, 0.0
  %v1060 = vmax.f32 %v996, 0.0
  %v1061 = vmax.f32 %v997, 0.0
  %v1062 = vmax.f32 %v998, 0.0
  %v1063 = vpack.c.bf16 %v1000, %v999
  %v1064 = vpack.c.bf16 %v1002, %v1001
  %v1065 = vpack.c.bf16 %v1004, %v1003
  %v1066 = vpack.c.bf16 %v1006, %v1005
  %v1067 = vpack.c.bf16 %v1008, %v1007
  %v1068 = vpack.c.bf16 %v1010, %v1009
  %v1069 = vpack.c.bf16 %v1012, %v1011
  %v1070 = vpack.c.bf16 %v1014, %v1013
  %v1071 = vpack.c.bf16 %v1016, %v1015
  %v1072 = vpack.c.bf16 %v1018, %v1017
  %v1073 = vpack.c.bf16 %v1020, %v1019
  %v1074 = vpack.c.bf16 %v1022, %v1021
  %v1075 = vpack.c.bf16 %v1024, %v1023
  %v1076 = vpack.c.bf16 %v1026, %v1025
  %v1077 = vpack.c.bf16 %v1028, %v1027
  %v1078 = vpack.c.bf16 %v1030, %v1029
  %v1079 = vpack.c.bf16 %v1032, %v1031
  %v1080 = vpack.c.bf16 %v1034, %v1033
  %v1081 = vpack.c.bf16 %v1036, %v1035
  %v1082 = vpack.c.bf16 %v1038, %v1037
  %v1083 = vpack.c.bf16 %v1040, %v1039
  %v1084 = vpack.c.bf16 %v1042, %v1041
  %v1085 = vpack.c.bf16 %v1044, %v1043
  %v1086 = vpack.c.bf16 %v1046, %v1045
  %v1087 = vpack.c.bf16 %v1048, %v1047
  %v1088 = vpack.c.bf16 %v1050, %v1049
  %v1089 = vpack.c.bf16 %v1052, %v1051
  %v1090 = vpack.c.bf16 %v1054, %v1053
  %v1091 = vpack.c.bf16 %v1056, %v1055
  %v1092 = vpack.c.bf16 %v1058, %v1057
  %v1093 = vpack.c.bf16 %v1060, %v1059
  %v1094 = vpack.c.bf16 %v1062, %v1061
  %1095 = vst [vmem:[#allocation2] sm:$0xff] 0
  %1096 = vst [vmem:[#allocation2 + $0x8] sm:$0xff] 0
  %1097 = vst [vmem:[#allocation2 + $0x10] sm:$0xff] 0
  %1098 = vst [vmem:[#allocation2 + $0x18] sm:$0xff] 0
  %1099 = vst [vmem:[#allocation2 + $0x20] sm:$0xff] 0
  %1100 = vst [vmem:[#allocation2 + $0x28] sm:$0xff] 0
  %1101 = vst [vmem:[#allocation2 + $0x30] sm:$0xff] 0
  %1102 = vst [vmem:[#allocation2 + $0x38] sm:$0xff] 0
  %1103 = vst [vmem:[#allocation2 + $0x40] sm:$0xff] 0
  %1104 = vst [vmem:[#allocation2 + $0x48] sm:$0xff] 0
  %1105 = vst [vmem:[#allocation2 + $0x50] sm:$0xff] 0
  %1106 = vst [vmem:[#allocation2 + $0x58] sm:$0xff] 0
  %1107 = vst [vmem:[#allocation2 + $0x60] sm:$0xff] 0
  %1108 = vst [vmem:[#allocation2 + $0x68] sm:$0xff] 0
  %1109 = vst [vmem:[#allocation2 + $0x70] sm:$0xff] 0
  %1110 = vst [vmem:[#allocation2 + $0x78] sm:$0xff] 0
  %1111 = vst [vmem:[#allocation2 + $0x80] sm:$0xff] 0
  %1112 = vst [vmem:[#allocation2 + $0x88] sm:$0xff] 0
  %1113 = vst [vmem:[#allocation2 + $0x90] sm:$0xff] 0
  %1114 = vst [vmem:[#allocation2 + $0x98] sm:$0xff] 0
  %1115 = vst [vmem:[#allocation2 + $0xa0] sm:$0xff] 0
  %1116 = vst [vmem:[#allocation2 + $0xa8] sm:$0xff] 0
  %1117 = vst [vmem:[#allocation2 + $0xb0] sm:$0xff] 0
  %1118 = vst [vmem:[#allocation2 + $0xb8] sm:$0xff] 0
  %1119 = vst [vmem:[#allocation2 + $0xc0] sm:$0xff] 0
  %1120 = vst [vmem:[#allocation2 + $0xc8] sm:$0xff] 0
  %1121 = vst [vmem:[#allocation2 + $0xd0] sm:$0xff] 0
  %1122 = vst [vmem:[#allocation2 + $0xd8] sm:$0xff] 0
  %1123 = vst [vmem:[#allocation2 + $0xe0] sm:$0xff] 0
  %1124 = vst [vmem:[#allocation2 + $0xe8] sm:$0xff] 0
  %1125 = vst [vmem:[#allocation2 + $0xf0] sm:$0xff] 0
  %1126 = vst [vmem:[#allocation2 + $0xf8] sm:$0xff] 0
  %1127 = vst [vmem:[#allocation2 + $0x100] sm:$0xff] 0
  %1128 = vst [vmem:[#allocation2 + $0x108] sm:$0xff] 0
  %1129 = vst [vmem:[#allocation2 + $0x110] sm:$0xff] 0
  %1130 = vst [vmem:[#allocation2 + $0x118] sm:$0xff] 0
  %1131 = vst [vmem:[#allocation2 + $0x120] sm:$0xff] 0
  %1132 = vst [vmem:[#allocation2 + $0x128] sm:$0xff] 0
  %1133 = vst [vmem:[#allocation2 + $0x130] sm:$0xff] 0
  %1134 = vst [vmem:[#allocation2 + $0x138] sm:$0xff] 0
  %1135 = vst [vmem:[#allocation2 + $0x140] sm:$0xff] 0
  %1136 = vst [vmem:[#allocation2 + $0x148] sm:$0xff] 0
  %1137 = vst [vmem:[#allocation2 + $0x150] sm:$0xff] 0
  %1138 = vst [vmem:[#allocation2 + $0x158] sm:$0xff] 0
  %1139 = vst [vmem:[#allocation2 + $0x160] sm:$0xff] 0
  %1140 = vst [vmem:[#allocation2 + $0x168] sm:$0xff] 0
  %1141 = vst [vmem:[#allocation2 + $0x170] sm:$0xff] 0
  %1142 = vst [vmem:[#allocation2 + $0x178] sm:$0xff] 0
  %1143 = vst [vmem:[#allocation2 + $0x180] sm:$0xff] 0
  %1144 = vst [vmem:[#allocation2 + $0x188] sm:$0xff] 0
  %1145 = vst [vmem:[#allocation2 + $0x190] sm:$0xff] 0
  %1146 = vst [vmem:[#allocation2 + $0x198] sm:$0xff] 0
  %1147 = vst [vmem:[#allocation2 + $0x1a0] sm:$0xff] 0
  %1148 = vst [vmem:[#allocation2 + $0x1a8] sm:$0xff] 0
  %1149 = vst [vmem:[#allocation2 + $0x1b0] sm:$0xff] 0
  %1150 = vst [vmem:[#allocation2 + $0x1b8] sm:$0xff] 0
  %1151 = vst [vmem:[#allocation2 + $0x1c0] sm:$0xff] 0
  %1152 = vst [vmem:[#allocation2 + $0x1c8] sm:$0xff] 0
  %1153 = vst [vmem:[#allocation2 + $0x1d0] sm:$0xff] 0
  %1154 = vst [vmem:[#allocation2 + $0x1d8] sm:$0xff] 0
  %1155 = vst [vmem:[#allocation2 + $0x1e0] sm:$0xff] 0
  %1156 = vst [vmem:[#allocation2 + $0x1e8] sm:$0xff] 0
  %1157 = vst [vmem:[#allocation2 + $0x1f0] sm:$0xff] 0
  %1158 = vst [vmem:[#allocation2 + $0x1f8] sm:$0xff] 0
  %1159 = vst [vmem:[#allocation2 + $0x200] sm:$0xff] 0
  %1160 = vst [vmem:[#allocation2 + $0x208] sm:$0xff] 0
  %1161 = vst [vmem:[#allocation2 + $0x210] sm:$0xff] 0
  %1162 = vst [vmem:[#allocation2 + $0x218] sm:$0xff] 0
  %1163 = vst [vmem:[#allocation2 + $0x220] sm:$0xff] 0
  %1164 = vst [vmem:[#allocation2 + $0x228] sm:$0xff] 0
  %1165 = vst [vmem:[#allocation2 + $0x230] sm:$0xff] 0
  %1166 = vst [vmem:[#allocation2 + $0x238] sm:$0xff] 0
  %1167 = vst [vmem:[#allocation2 + $0x240] sm:$0xff] 0
  %1168 = vst [vmem:[#allocation2 + $0x248] sm:$0xff] 0
  %1169 = vst [vmem:[#allocation2 + $0x250] sm:$0xff] 0
  %1170 = vst [vmem:[#allocation2 + $0x258] sm:$0xff] 0
  %1171 = vst [vmem:[#allocation2 + $0x260] sm:$0xff] 0
  %1172 = vst [vmem:[#allocation2 + $0x268] sm:$0xff] 0
  %1173 = vst [vmem:[#allocation2 + $0x270] sm:$0xff] 0
  %1174 = vst [vmem:[#allocation2 + $0x278] sm:$0xff] 0
  %1175 = vst [vmem:[#allocation2 + $0x280] sm:$0xff] 0
  %1176 = vst [vmem:[#allocation2 + $0x288] sm:$0xff] 0
  %1177 = vst [vmem:[#allocation2 + $0x290] sm:$0xff] 0
  %1178 = vst [vmem:[#allocation2 + $0x298] sm:$0xff] 0
  %1179 = vst [vmem:[#allocation2 + $0x2a0] sm:$0xff] 0
  %1180 = vst [vmem:[#allocation2 + $0x2a8] sm:$0xff] 0
  %1181 = vst [vmem:[#allocation2 + $0x2b0] sm:$0xff] 0
  %1182 = vst [vmem:[#allocation2 + $0x2b8] sm:$0xff] 0
  %1183 = vst [vmem:[#allocation2 + $0x2c0] sm:$0xff] 0
  %1184 = vst [vmem:[#allocation2 + $0x2c8] sm:$0xff] 0
  %1185 = vst [vmem:[#allocation2 + $0x2d0] sm:$0xff] 0
  %1186 = vst [vmem:[#allocation2 + $0x2d8] sm:$0xff] 0
  %1187 = vst [vmem:[#allocation2 + $0x2e0] sm:$0xff] 0
  %1188 = vst [vmem:[#allocation2 + $0x2e8] sm:$0xff] 0
  %1189 = vst [vmem:[#allocation2 + $0x2f0] sm:$0xff] 0
  %1190 = vst [vmem:[#allocation2 + $0x2f8] sm:$0xff] 0
  %1191 = vst [vmem:[#allocation2 + $0x300] sm:$0xff] 0
  %1192 = vst [vmem:[#allocation2 + $0x308] sm:$0xff] 0
  %1193 = vst [vmem:[#allocation2 + $0x310] sm:$0xff] 0
  %1194 = vst [vmem:[#allocation2 + $0x318] sm:$0xff] 0
  %1195 = vst [vmem:[#allocation2 + $0x320] sm:$0xff] 0
  %1196 = vst [vmem:[#allocation2 + $0x328] sm:$0xff] 0
  %1197 = vst [vmem:[#allocation2 + $0x330] sm:$0xff] 0
  %1198 = vst [vmem:[#allocation2 + $0x338] sm:$0xff] 0
  %1199 = vst [vmem:[#allocation2 + $0x340] sm:$0xff] 0
  %1200 = vst [vmem:[#allocation2 + $0x348] sm:$0xff] 0
  %1201 = vst [vmem:[#allocation2 + $0x350] sm:$0xff] 0
  %1202 = vst [vmem:[#allocation2 + $0x358] sm:$0xff] 0
  %1203 = vst [vmem:[#allocation2 + $0x360] sm:$0xff] 0
  %1204 = vst [vmem:[#allocation2 + $0x368] sm:$0xff] 0
  %1205 = vst [vmem:[#allocation2 + $0x370] sm:$0xff] 0
  %1206 = vst [vmem:[#allocation2 + $0x378] sm:$0xff] 0
  %1207 = vst [vmem:[#allocation2 + $0x380] sm:$0xff] 0
  %1208 = vst [vmem:[#allocation2 + $0x388] sm:$0xff] 0
  %1209 = vst [vmem:[#allocation2 + $0x390] sm:$0xff] 0
  %1210 = vst [vmem:[#allocation2 + $0x398] sm:$0xff] 0
  %1211 = vst [vmem:[#allocation2 + $0x3a0] sm:$0xff] 0
  %1212 = vst [vmem:[#allocation2 + $0x3a8] sm:$0xff] 0
  %1213 = vst [vmem:[#allocation2 + $0x3b0] sm:$0xff] 0
  %1214 = vst [vmem:[#allocation2 + $0x3b8] sm:$0xff] 0
  %1215 = vst [vmem:[#allocation2 + $0x3c0] sm:$0xff] 0
  %1216 = vst [vmem:[#allocation2 + $0x3c8] sm:$0xff] 0
  %1217 = vst [vmem:[#allocation2 + $0x3d0] sm:$0xff] 0
  %1218 = vst [vmem:[#allocation2 + $0x3d8] sm:$0xff] 0
  %1219 = vst [vmem:[#allocation2 + $0x3e0] sm:$0xff] 0
  %1220 = vst [vmem:[#allocation2 + $0x3e8] sm:$0xff] 0
  %1221 = vst [vmem:[#allocation2 + $0x3f0] sm:$0xff] 0
  %1222 = vst [vmem:[#allocation2 + $0x3f8] sm:$0xff] 0
  %1223 = vst [vmem:[#allocation2 + $0x400] sm:$0xff] 0
  %1224 = vst [vmem:[#allocation2 + $0x408] sm:$0xff] 0
  %1225 = vst [vmem:[#allocation2 + $0x410] sm:$0xff] 0
  %1226 = vst [vmem:[#allocation2 + $0x418] sm:$0xff] 0
  %1227 = vst [vmem:[#allocation2 + $0x420] sm:$0xff] 0
  %1228 = vst [vmem:[#allocation2 + $0x428] sm:$0xff] 0
  %1229 = vst [vmem:[#allocation2 + $0x430] sm:$0xff] 0
  %1230 = vst [vmem:[#allocation2 + $0x438] sm:$0xff] 0
  %1231 = vst [vmem:[#allocation2 + $0x440] sm:$0xff] 0
  %1232 = vst [vmem:[#allocation2 + $0x448] sm:$0xff] 0
  %1233 = vst [vmem:[#allocation2 + $0x450] sm:$0xff] 0
  %1234 = vst [vmem:[#allocation2 + $0x458] sm:$0xff] 0
  %1235 = vst [vmem:[#allocation2 + $0x460] sm:$0xff] 0
  %1236 = vst [vmem:[#allocation2 + $0x468] sm:$0xff] 0
  %1237 = vst [vmem:[#allocation2 + $0x470] sm:$0xff] 0
  %1238 = vst [vmem:[#allocation2 + $0x478] sm:$0xff] 0
  %1239 = vst [vmem:[#allocation2 + $0x480] sm:$0xff] 0
  %1240 = vst [vmem:[#allocation2 + $0x488] sm:$0xff] 0
  %1241 = vst [vmem:[#allocation2 + $0x490] sm:$0xff] 0
  %1242 = vst [vmem:[#allocation2 + $0x498] sm:$0xff] 0
  %1243 = vst [vmem:[#allocation2 + $0x4a0] sm:$0xff] 0
  %1244 = vst [vmem:[#allocation2 + $0x4a8] sm:$0xff] 0
  %1245 = vst [vmem:[#allocation2 + $0x4b0] sm:$0xff] 0
  %1246 = vst [vmem:[#allocation2 + $0x4b8] sm:$0xff] 0
  %1247 = vst [vmem:[#allocation2 + $0x4c0] sm:$0xff] 0
  %1248 = vst [vmem:[#allocation2 + $0x4c8] sm:$0xff] 0
  %1249 = vst [vmem:[#allocation2 + $0x4d0] sm:$0xff] 0
  %1250 = vst [vmem:[#allocation2 + $0x4d8] sm:$0xff] 0
  %1251 = vst [vmem:[#allocation2 + $0x4e0] sm:$0xff] 0
  %1252 = vst [vmem:[#allocation2 + $0x4e8] sm:$0xff] 0
  %1253 = vst [vmem:[#allocation2 + $0x4f0] sm:$0xff] 0
  %1254 = vst [vmem:[#allocation2 + $0x4f8] sm:$0xff] 0
  %1255 = vst [vmem:[#allocation2 + $0x500] sm:$0xff] 0
  %1256 = vst [vmem:[#allocation2 + $0x508] sm:$0xff] 0
  %1257 = vst [vmem:[#allocation2 + $0x510] sm:$0xff] 0
  %1258 = vst [vmem:[#allocation2 + $0x518] sm:$0xff] 0
  %1259 = vst [vmem:[#allocation2 + $0x520] sm:$0xff] 0
  %1260 = vst [vmem:[#allocation2 + $0x528] sm:$0xff] 0
  %1261 = vst [vmem:[#allocation2 + $0x530] sm:$0xff] 0
  %1262 = vst [vmem:[#allocation2 + $0x538] sm:$0xff] 0
  %1263 = vst [vmem:[#allocation2 + $0x540] sm:$0xff] 0
  %1264 = vst [vmem:[#allocation2 + $0x548] sm:$0xff] 0
  %1265 = vst [vmem:[#allocation2 + $0x550] sm:$0xff] 0
  %1266 = vst [vmem:[#allocation2 + $0x558] sm:$0xff] 0
  %1267 = vst [vmem:[#allocation2 + $0x560] sm:$0xff] 0
  %1268 = vst [vmem:[#allocation2 + $0x568] sm:$0xff] 0
  %1269 = vst [vmem:[#allocation2 + $0x570] sm:$0xff] 0
  %1270 = vst [vmem:[#allocation2 + $0x578] sm:$0xff] 0
  %1271 = vst [vmem:[#allocation2 + $0x580] sm:$0xff] 0
  %1272 = vst [vmem:[#allocation2 + $0x588] sm:$0xff] 0
  %1273 = vst [vmem:[#allocation2 + $0x590] sm:$0xff] 0
  %1274 = vst [vmem:[#allocation2 + $0x598] sm:$0xff] 0
  %1275 = vst [vmem:[#allocation2 + $0x5a0] sm:$0xff] 0
  %1276 = vst [vmem:[#allocation2 + $0x5a8] sm:$0xff] 0
  %1277 = vst [vmem:[#allocation2 + $0x5b0] sm:$0xff] 0
  %1278 = vst [vmem:[#allocation2 + $0x5b8] sm:$0xff] 0
  %1279 = vst [vmem:[#allocation2 + $0x5c0] sm:$0xff] 0
  %1280 = vst [vmem:[#allocation2 + $0x5c8] sm:$0xff] 0
  %1281 = vst [vmem:[#allocation2 + $0x5d0] sm:$0xff] 0
  %1282 = vst [vmem:[#allocation2 + $0x5d8] sm:$0xff] 0
  %1283 = vst [vmem:[#allocation2 + $0x5e0] sm:$0xff] 0
  %1284 = vst [vmem:[#allocation2 + $0x5e8] sm:$0xff] 0
  %1285 = vst [vmem:[#allocation2 + $0x5f0] sm:$0xff] 0
  %1286 = vst [vmem:[#allocation2 + $0x5f8] sm:$0xff] 0
  %1287 = vst [vmem:[#allocation2 + $0x600] sm:$0xff] 0
  %1288 = vst [vmem:[#allocation2 + $0x608] sm:$0xff] 0
  %1289 = vst [vmem:[#allocation2 + $0x610] sm:$0xff] 0
  %1290 = vst [vmem:[#allocation2 + $0x618] sm:$0xff] 0
  %1291 = vst [vmem:[#allocation2 + $0x620] sm:$0xff] 0
  %1292 = vst [vmem:[#allocation2 + $0x628] sm:$0xff] 0
  %1293 = vst [vmem:[#allocation2 + $0x630] sm:$0xff] 0
  %1294 = vst [vmem:[#allocation2 + $0x638] sm:$0xff] 0
  %1295 = vst [vmem:[#allocation2 + $0x640] sm:$0xff] 0
  %1296 = vst [vmem:[#allocation2 + $0x648] sm:$0xff] 0
  %1297 = vst [vmem:[#allocation2 + $0x650] sm:$0xff] 0
  %1298 = vst [vmem:[#allocation2 + $0x658] sm:$0xff] 0
  %1299 = vst [vmem:[#allocation2 + $0x660] sm:$0xff] 0
  %1300 = vst [vmem:[#allocation2 + $0x668] sm:$0xff] 0
  %1301 = vst [vmem:[#allocation2 + $0x670] sm:$0xff] 0
  %1302 = vst [vmem:[#allocation2 + $0x678] sm:$0xff] 0
  %1303 = vst [vmem:[#allocation2 + $0x680] sm:$0xff] 0
  %1304 = vst [vmem:[#allocation2 + $0x688] sm:$0xff] 0
  %1305 = vst [vmem:[#allocation2 + $0x690] sm:$0xff] 0
  %1306 = vst [vmem:[#allocation2 + $0x698] sm:$0xff] 0
  %1307 = vst [vmem:[#allocation2 + $0x6a0] sm:$0xff] 0
  %1308 = vst [vmem:[#allocation2 + $0x6a8] sm:$0xff] 0
  %1309 = vst [vmem:[#allocation2 + $0x6b0] sm:$0xff] 0
  %1310 = vst [vmem:[#allocation2 + $0x6b8] sm:$0xff] 0
  %1311 = vst [vmem:[#allocation2 + $0x6c0] sm:$0xff] 0
  %1312 = vst [vmem:[#allocation2 + $0x6c8] sm:$0xff] 0
  %1313 = vst [vmem:[#allocation2 + $0x6d0] sm:$0xff] 0
  %1314 = vst [vmem:[#allocation2 + $0x6d8] sm:$0xff] 0
  %1315 = vst [vmem:[#allocation2 + $0x6e0] sm:$0xff] 0
  %1316 = vst [vmem:[#allocation2 + $0x6e8] sm:$0xff] 0
  %1317 = vst [vmem:[#allocation2 + $0x6f0] sm:$0xff] 0
  %1318 = vst [vmem:[#allocation2 + $0x6f8] sm:$0xff] 0
  %1319 = vst [vmem:[#allocation2 + $0x700] sm:$0xff] 0
  %1320 = vst [vmem:[#allocation2 + $0x708] sm:$0xff] 0
  %1321 = vst [vmem:[#allocation2 + $0x710] sm:$0xff] 0
  %1322 = vst [vmem:[#allocation2 + $0x718] sm:$0xff] 0
  %1323 = vst [vmem:[#allocation2 + $0x720] sm:$0xff] 0
  %1324 = vst [vmem:[#allocation2 + $0x728] sm:$0xff] 0
  %1325 = vst [vmem:[#allocation2 + $0x730] sm:$0xff] 0
  %1326 = vst [vmem:[#allocation2 + $0x738] sm:$0xff] 0
  %1327 = vst [vmem:[#allocation2 + $0x740] sm:$0xff] 0
  %1328 = vst [vmem:[#allocation2 + $0x748] sm:$0xff] 0
  %1329 = vst [vmem:[#allocation2 + $0x750] sm:$0xff] 0
  %1330 = vst [vmem:[#allocation2 + $0x758] sm:$0xff] 0
  %1331 = vst [vmem:[#allocation2 + $0x760] sm:$0xff] 0
  %1332 = vst [vmem:[#allocation2 + $0x768] sm:$0xff] 0
  %1333 = vst [vmem:[#allocation2 + $0x770] sm:$0xff] 0
  %1334 = vst [vmem:[#allocation2 + $0x778] sm:$0xff] 0
  %1335 = vst [vmem:[#allocation2 + $0x780] sm:$0xff] 0
  %1336 = vst [vmem:[#allocation2 + $0x788] sm:$0xff] 0
  %1337 = vst [vmem:[#allocation2 + $0x790] sm:$0xff] 0
  %1338 = vst [vmem:[#allocation2 + $0x798] sm:$0xff] 0
  %1339 = vst [vmem:[#allocation2 + $0x7a0] sm:$0xff] 0
  %1340 = vst [vmem:[#allocation2 + $0x7a8] sm:$0xff] 0
  %1341 = vst [vmem:[#allocation2 + $0x7b0] sm:$0xff] 0
  %1342 = vst [vmem:[#allocation2 + $0x7b8] sm:$0xff] 0
  %1343 = vst [vmem:[#allocation2 + $0x7c0] sm:$0xff] 0
  %1344 = vst [vmem:[#allocation2 + $0x7c8] sm:$0xff] 0
  %1345 = vst [vmem:[#allocation2 + $0x7d0] sm:$0xff] 0
  %1346 = vst [vmem:[#allocation2 + $0x7d8] sm:$0xff] 0
  %1347 = vst [vmem:[#allocation2 + $0x7e0] sm:$0xff] 0
  %1348 = vst [vmem:[#allocation2 + $0x7e8] sm:$0xff] 0
  %1349 = vst [vmem:[#allocation2 + $0x7f0] sm:$0xff] 0
  %1350 = vst [vmem:[#allocation2 + $0x7f8] sm:$0xff] 0
  %1351 = vst [vmem:[#allocation2 + $0x800] sm:$0xff] 0
  %1352 = vst [vmem:[#allocation2 + $0x808] sm:$0xff] 0
  %1353 = vst [vmem:[#allocation2 + $0x810] sm:$0xff] 0
  %1354 = vst [vmem:[#allocation2 + $0x818] sm:$0xff] 0
  %1355 = vst [vmem:[#allocation2 + $0x820] sm:$0xff] 0
  %1356 = vst [vmem:[#allocation2 + $0x828] sm:$0xff] 0
  %1357 = vst [vmem:[#allocation2 + $0x830] sm:$0xff] 0
  %1358 = vst [vmem:[#allocation2 + $0x838] sm:$0xff] 0
  %1359 = vst [vmem:[#allocation2 + $0x840] sm:$0xff] 0
  %1360 = vst [vmem:[#allocation2 + $0x848] sm:$0xff] 0
  %1361 = vst [vmem:[#allocation2 + $0x850] sm:$0xff] 0
  %1362 = vst [vmem:[#allocation2 + $0x858] sm:$0xff] 0
  %1363 = vst [vmem:[#allocation2 + $0x860] sm:$0xff] 0
  %1364 = vst [vmem:[#allocation2 + $0x868] sm:$0xff] 0
  %1365 = vst [vmem:[#allocation2 + $0x870] sm:$0xff] 0
  %1366 = vst [vmem:[#allocation2 + $0x878] sm:$0xff] 0
  %1367 = vst [vmem:[#allocation2 + $0x880] sm:$0xff] 0
  %1368 = vst [vmem:[#allocation2 + $0x888] sm:$0xff] 0
  %1369 = vst [vmem:[#allocation2 + $0x890] sm:$0xff] 0
  %1370 = vst [vmem:[#allocation2 + $0x898] sm:$0xff] 0
  %1371 = vst [vmem:[#allocation2 + $0x8a0] sm:$0xff] 0
  %1372 = vst [vmem:[#allocation2 + $0x8a8] sm:$0xff] 0
  %1373 = vst [vmem:[#allocation2 + $0x8b0] sm:$0xff] 0
  %1374 = vst [vmem:[#allocation2 + $0x8b8] sm:$0xff] 0
  %1375 = vst [vmem:[#allocation2 + $0x8c0] sm:$0xff] 0
  %1376 = vst [vmem:[#allocation2 + $0x8c8] sm:$0xff] 0
  %1377 = vst [vmem:[#allocation2 + $0x8d0] sm:$0xff] 0
  %1378 = vst [vmem:[#allocation2 + $0x8d8] sm:$0xff] 0
  %1379 = vst [vmem:[#allocation2 + $0x8e0] sm:$0xff] 0
  %1380 = vst [vmem:[#allocation2 + $0x8e8] sm:$0xff] 0
  %1381 = vst [vmem:[#allocation2 + $0x8f0] sm:$0xff] 0
  %1382 = vst [vmem:[#allocation2 + $0x8f8] sm:$0xff] 0
  %v1384 = vshrl.u32 %v1063, 16
  %v1386 = vrot.slane %v1384, 7
  %v1387 = vshll.u32 %v1063, 16
  %v1389 = vor.u32 %v1386, %v1387
  %v1391 = vshrl.u32 %v1064, 16
  %v1393 = vrot.slane %v1391, 7
  %v1394 = vshll.u32 %v1064, 16
  %v1396 = vor.u32 %v1393, %v1394
  %v1398 = vshrl.u32 %v1065, 16
  %v1400 = vrot.slane %v1398, 7
  %v1401 = vshll.u32 %v1065, 16
  %v1403 = vor.u32 %v1400, %v1401
  %v1405 = vshrl.u32 %v1066, 16
  %v1407 = vrot.slane %v1405, 7
  %v1408 = vshll.u32 %v1066, 16
  %v1410 = vor.u32 %v1407, %v1408
  %v1412 = vshrl.u32 %v1067, 16
  %v1414 = vrot.slane %v1412, 7
  %v1415 = vshll.u32 %v1067, 16
  %v1417 = vor.u32 %v1414, %v1415
  %v1419 = vshrl.u32 %v1068, 16
  %v1421 = vrot.slane %v1419, 7
  %v1422 = vshll.u32 %v1068, 16
  %v1424 = vor.u32 %v1421, %v1422
  %v1426 = vshrl.u32 %v1069, 16
  %v1428 = vrot.slane %v1426, 7
  %v1429 = vshll.u32 %v1069, 16
  %v1431 = vor.u32 %v1428, %v1429
  %v1433 = vshrl.u32 %v1070, 16
  %v1435 = vrot.slane %v1433, 7
  %v1436 = vshll.u32 %v1070, 16
  %v1438 = vor.u32 %v1435, %v1436
  %v1440 = vshrl.u32 %v1071, 16
  %v1442 = vrot.slane %v1440, 7
  %v1443 = vshll.u32 %v1071, 16
  %v1445 = vor.u32 %v1442, %v1443
  %v1447 = vshrl.u32 %v1072, 16
  %v1449 = vrot.slane %v1447, 7
  %v1450 = vshll.u32 %v1072, 16
  %v1452 = vor.u32 %v1449, %v1450
  %v1454 = vshrl.u32 %v1073, 16
  %v1456 = vrot.slane %v1454, 7
  %v1457 = vshll.u32 %v1073, 16
  %v1459 = vor.u32 %v1456, %v1457
  %v1461 = vshrl.u32 %v1074, 16
  %v1463 = vrot.slane %v1461, 7
  %v1464 = vshll.u32 %v1074, 16
  %v1466 = vor.u32 %v1463, %v1464
  %v1468 = vshrl.u32 %v1075, 16
  %v1470 = vrot.slane %v1468, 7
  %v1471 = vshll.u32 %v1075, 16
  %v1473 = vor.u32 %v1470, %v1471
  %v1475 = vshrl.u32 %v1076, 16
  %v1477 = vrot.slane %v1475, 7
  %v1478 = vshll.u32 %v1076, 16
  %v1480 = vor.u32 %v1477, %v1478
  %v1482 = vshrl.u32 %v1077, 16
  %v1484 = vrot.slane %v1482, 7
  %v1485 = vshll.u32 %v1077, 16
  %v1487 = vor.u32 %v1484, %v1485
  %v1489 = vshrl.u32 %v1079, 16
  %v1491 = vrot.slane %v1489, 7
  %v1492 = vshll.u32 %v1079, 16
  %v1494 = vor.u32 %v1491, %v1492
  %v1496 = vshrl.u32 %v1080, 16
  %v1498 = vrot.slane %v1496, 7
  %v1499 = vshll.u32 %v1080, 16
  %v1501 = vor.u32 %v1498, %v1499
  %v1503 = vshrl.u32 %v1081, 16
  %v1505 = vrot.slane %v1503, 7
  %v1506 = vshll.u32 %v1081, 16
  %v1508 = vor.u32 %v1505, %v1506
  %v1510 = vshrl.u32 %v1082, 16
  %v1512 = vrot.slane %v1510, 7
  %v1513 = vshll.u32 %v1082, 16
  %v1515 = vor.u32 %v1512, %v1513
  %v1517 = vshrl.u32 %v1083, 16
  %v1519 = vrot.slane %v1517, 7
  %v1520 = vshll.u32 %v1083, 16
  %v1522 = vor.u32 %v1519, %v1520
  %v1524 = vshrl.u32 %v1084, 16
  %v1526 = vrot.slane %v1524, 7
  %v1527 = vshll.u32 %v1084, 16
  %v1529 = vor.u32 %v1526, %v1527
  %v1531 = vshrl.u32 %v1085, 16
  %v1533 = vrot.slane %v1531, 7
  %v1534 = vshll.u32 %v1085, 16
  %v1536 = vor.u32 %v1533, %v1534
  %v1538 = vshrl.u32 %v1086, 16
  %v1540 = vrot.slane %v1538, 7
  %v1541 = vshll.u32 %v1086, 16
  %v1543 = vor.u32 %v1540, %v1541
  %v1545 = vshrl.u32 %v1087, 16
  %v1547 = vrot.slane %v1545, 7
  %v1548 = vshll.u32 %v1087, 16
  %v1550 = vor.u32 %v1547, %v1548
  %v1552 = vshrl.u32 %v1088, 16
  %v1554 = vrot.slane %v1552, 7
  %v1555 = vshll.u32 %v1088, 16
  %v1557 = vor.u32 %v1554, %v1555
  %v1559 = vshrl.u32 %v1089, 16
  %v1561 = vrot.slane %v1559, 7
  %v1562 = vshll.u32 %v1089, 16
  %v1564 = vor.u32 %v1561, %v1562
  %v1566 = vshrl.u32 %v1090, 16
  %v1568 = vrot.slane %v1566, 7
  %v1569 = vshll.u32 %v1090, 16
  %v1571 = vor.u32 %v1568, %v1569
  %v1573 = vshrl.u32 %v1091, 16
  %v1575 = vrot.slane %v1573, 7
  %v1576 = vshll.u32 %v1091, 16
  %v1578 = vor.u32 %v1575, %v1576
  %v1580 = vshrl.u32 %v1092, 16
  %v1582 = vrot.slane %v1580, 7
  %v1583 = vshll.u32 %v1092, 16
  %v1585 = vor.u32 %v1582, %v1583
  %v1587 = vshrl.u32 %v1093, 16
  %v1589 = vrot.slane %v1587, 7
  %v1590 = vshll.u32 %v1093, 16
  %v1592 = vor.u32 %v1589, %v1590
  %s1623 = scalar_lea.vmem [#allocation2], 72
  %vm1624 = vcmask 1047552
  %vm1625 = vsmask.f32 7938
  %vm1626 = vmand %vm1624, %vm1625
  %v1627 = vld [vmem:[%s1623] sm:$0xff]
  %v1628 = vsel %vm1626, %v1389, %v1627
  %1629 = vst [vmem:[%s1623] sm:$0xff] %v1628
  %v1630 = vld [vmem:[%s1623 + $0x48] sm:$0xff]
  %v1631 = vsel %vm1626, %v1396, %v1630
  %1632 = vst [vmem:[%s1623 + $0x48] sm:$0xff] %v1631
  %v1633 = vld [vmem:[%s1623 + $0x90] sm:$0xff]
  %v1634 = vsel %vm1626, %v1403, %v1633
  %1635 = vst [vmem:[%s1623 + $0x90] sm:$0xff] %v1634
  %v1636 = vld [vmem:[%s1623 + $0xd8] sm:$0xff]
  %v1637 = vsel %vm1626, %v1410, %v1636
  %1638 = vst [vmem:[%s1623 + $0xd8] sm:$0xff] %v1637
  %v1639 = vld [vmem:[%s1623 + $0x120] sm:$0xff]
  %v1640 = vsel %vm1626, %v1417, %v1639
  %1641 = vst [vmem:[%s1623 + $0x120] sm:$0xff] %v1640
  %v1642 = vld [vmem:[%s1623 + $0x168] sm:$0xff]
  %v1643 = vsel %vm1626, %v1424, %v1642
  %1644 = vst [vmem:[%s1623 + $0x168] sm:$0xff] %v1643
  %v1645 = vld [vmem:[%s1623 + $0x1b0] sm:$0xff]
  %v1646 = vsel %vm1626, %v1431, %v1645
  %1647 = vst [vmem:[%s1623 + $0x1b0] sm:$0xff] %v1646
  %v1648 = vld [vmem:[%s1623 + $0x1f8] sm:$0xff]
  %v1649 = vsel %vm1626, %v1438, %v1648
  %1650 = vst [vmem:[%s1623 + $0x1f8] sm:$0xff] %v1649
  %v1651 = vld [vmem:[%s1623 + $0x240] sm:$0xff]
  %v1652 = vsel %vm1626, %v1445, %v1651
  %1653 = vst [vmem:[%s1623 + $0x240] sm:$0xff] %v1652
  %v1654 = vld [vmem:[%s1623 + $0x288] sm:$0xff]
  %v1655 = vsel %vm1626, %v1452, %v1654
  %1656 = vst [vmem:[%s1623 + $0x288] sm:$0xff] %v1655
  %v1657 = vld [vmem:[%s1623 + $0x2d0] sm:$0xff]
  %v1658 = vsel %vm1626, %v1459, %v1657
  %1659 = vst [vmem:[%s1623 + $0x2d0] sm:$0xff] %v1658
  %v1660 = vld [vmem:[%s1623 + $0x318] sm:$0xff]
  %v1661 = vsel %vm1626, %v1466, %v1660
  %1662 = vst [vmem:[%s1623 + $0x318] sm:$0xff] %v1661
  %v1663 = vld [vmem:[%s1623 + $0x360] sm:$0xff]
  %v1664 = vsel %vm1626, %v1473, %v1663
  %1665 = vst [vmem:[%s1623 + $0x360] sm:$0xff] %v1664
  %v1666 = vld [vmem:[%s1623 + $0x3a8] sm:$0xff]
  %v1667 = vsel %vm1626, %v1480, %v1666
  %1668 = vst [vmem:[%s1623 + $0x3a8] sm:$0xff] %v1667
  %v1669 = vld [vmem:[%s1623 + $0x3f0] sm:$0xff]
  %v1670 = vsel %vm1626, %v1487, %v1669
  %1671 = vst [vmem:[%s1623 + $0x3f0] sm:$0xff] %v1670
  %v1672 = vld [vmem:[%s1623 + $0x480] sm:$0xff]
  %v1673 = vsel %vm1626, %v1494, %v1672
  %1674 = vst [vmem:[%s1623 + $0x480] sm:$0xff] %v1673
  %v1675 = vld [vmem:[%s1623 + $0x4c8] sm:$0xff]
  %v1676 = vsel %vm1626, %v1501, %v1675
  %1677 = vst [vmem:[%s1623 + $0x4c8] sm:$0xff] %v1676
  %v1678 = vld [vmem:[%s1623 + $0x510] sm:$0xff]
  %v1679 = vsel %vm1626, %v1508, %v1678
  %1680 = vst [vmem:[%s1623 + $0x510] sm:$0xff] %v1679
  %v1681 = vld [vmem:[%s1623 + $0x558] sm:$0xff]
  %v1682 = vsel %vm1626, %v1515, %v1681
  %1683 = vst [vmem:[%s1623 + $0x558] sm:$0xff] %v1682
  %v1684 = vld [vmem:[%s1623 + $0x5a0] sm:$0xff]
  %v1685 = vsel %vm1626, %v1522, %v1684
  %1686 = vst [vmem:[%s1623 + $0x5a0] sm:$0xff] %v1685
  %v1687 = vld [vmem:[%s1623 + $0x5e8] sm:$0xff]
  %v1688 = vsel %vm1626, %v1529, %v1687
  %1689 = vst [vmem:[%s1623 + $0x5e8] sm:$0xff] %v1688
  %v1690 = vld [vmem:[%s1623 + $0x630] sm:$0xff]
  %v1691 = vsel %vm1626, %v1536, %v1690
  %1692 = vst [vmem:[%s1623 + $0x630] sm:$0xff] %v1691
  %v1693 = vld [vmem:[%s1623 + $0x678] sm:$0xff]
  %v1694 = vsel %vm1626, %v1543, %v1693
  %1695 = vst [vmem:[%s1623 + $0x678] sm:$0xff] %v1694
  %v1696 = vld [vmem:[%s1623 + $0x6c0] sm:$0xff]
  %v1697 = vsel %vm1626, %v1550, %v1696
  %1698 = vst [vmem:[%s1623 + $0x6c0] sm:$0xff] %v1697
  %v1699 = vld [vmem:[%s1623 + $0x708] sm:$0xff]
  %v1700 = vsel %vm1626, %v1557, %v1699
  %1701 = vst [vmem:[%s1623 + $0x708] sm:$0xff] %v1700
  %v1702 = vld [vmem:[%s1623 + $0x750] sm:$0xff]
  %v1703 = vsel %vm1626, %v1564, %v1702
  %1704 = vst [vmem:[%s1623 + $0x750] sm:$0xff] %v1703
  %v1705 = vld [vmem:[%s1623 + $0x798] sm:$0xff]
  %v1706 = vsel %vm1626, %v1571, %v1705
  %1707 = vst [vmem:[%s1623 + $0x798] sm:$0xff] %v1706
  %v1708 = vld [vmem:[%s1623 + $0x7e0] sm:$0xff]
  %v1709 = vsel %vm1626, %v1578, %v1708
  %1710 = vst [vmem:[%s1623 + $0x7e0] sm:$0xff] %v1709
  %v1711 = vld [vmem:[%s1623 + $0x828] sm:$0xff]
  %v1712 = vsel %vm1626, %v1585, %v1711
  %1713 = vst [vmem:[%s1623 + $0x828] sm:$0xff] %v1712
  %v1714 = vld [vmem:[%s1623 + $0x870] sm:$0xff]
  %v1715 = vsel %vm1626, %v1592, %v1714
  %1716 = vst [vmem:[%s1623 + $0x870] sm:$0xff] %v1715
  %1717 = vst [vmem:[%s1623 + $0x8] sm:$0xff] %v1063
  %1718 = vst [vmem:[%s1623 + $0x50] sm:$0xff] %v1064
  %1719 = vst [vmem:[%s1623 + $0x98] sm:$0xff] %v1065
  %1720 = vst [vmem:[%s1623 + $0xe0] sm:$0xff] %v1066
  %1721 = vst [vmem:[%s1623 + $0x128] sm:$0xff] %v1067
  %1722 = vst [vmem:[%s1623 + $0x170] sm:$0xff] %v1068
  %1723 = vst [vmem:[%s1623 + $0x1b8] sm:$0xff] %v1069
  %1724 = vst [vmem:[%s1623 + $0x200] sm:$0xff] %v1070
  %1725 = vst [vmem:[%s1623 + $0x248] sm:$0xff] %v1071
  %1726 = vst [vmem:[%s1623 + $0x290] sm:$0xff] %v1072
  %1727 = vst [vmem:[%s1623 + $0x2d8] sm:$0xff] %v1073
  %1728 = vst [vmem:[%s1623 + $0x320] sm:$0xff] %v1074
  %1729 = vst [vmem:[%s1623 + $0x368] sm:$0xff] %v1075
  %1730 = vst [vmem:[%s1623 + $0x3b0] sm:$0xff] %v1076
  %1731 = vst [vmem:[%s1623 + $0x3f8] sm:$0xff] %v1077
  %1732 = vst [vmem:[%s1623 + $0x488] sm:$0xff] %v1079
  %1733 = vst [vmem:[%s1623 + $0x4d0] sm:$0xff] %v1080
  %1734 = vst [vmem:[%s1623 + $0x518] sm:$0xff] %v1081
  %1735 = vst [vmem:[%s1623 + $0x560] sm:$0xff] %v1082
  %1736 = vst [vmem:[%s1623 + $0x5a8] sm:$0xff] %v1083
  %1737 = vst [vmem:[%s1623 + $0x5f0] sm:$0xff] %v1084
  %1738 = vst [vmem:[%s1623 + $0x638] sm:$0xff] %v1085
  %1739 = vst [vmem:[%s1623 + $0x680] sm:$0xff] %v1086
  %1740 = vst [vmem:[%s1623 + $0x6c8] sm:$0xff] %v1087
  %1741 = vst [vmem:[%s1623 + $0x710] sm:$0xff] %v1088
  %1742 = vst [vmem:[%s1623 + $0x758] sm:$0xff] %v1089
  %1743 = vst [vmem:[%s1623 + $0x7a0] sm:$0xff] %v1090
  %1744 = vst [vmem:[%s1623 + $0x7e8] sm:$0xff] %v1091
  %1745 = vst [vmem:[%s1623 + $0x830] sm:$0xff] %v1092
  %1746 = vst [vmem:[%s1623 + $0x878] sm:$0xff] %v1093
  %v1747 = vrot.slane %v1387, 1
  %v1748 = vor.u32 %v1384, %v1747
  %v1749 = vrot.slane %v1394, 1
  %v1750 = vor.u32 %v1391, %v1749
  %v1751 = vrot.slane %v1401, 1
  %v1752 = vor.u32 %v1398, %v1751
  %v1753 = vrot.slane %v1408, 1
  %v1754 = vor.u32 %v1405, %v1753
  %v1755 = vrot.slane %v1415, 1
  %v1756 = vor.u32 %v1412, %v1755
  %v1757 = vrot.slane %v1422, 1
  %v1758 = vor.u32 %v1419, %v1757
  %v1759 = vrot.slane %v1429, 1
  %v1760 = vor.u32 %v1426, %v1759
  %v1761 = vrot.slane %v1436, 1
  %v1762 = vor.u32 %v1433, %v1761
  %v1763 = vrot.slane %v1443, 1
  %v1764 = vor.u32 %v1440, %v1763
  %v1765 = vrot.slane %v1450, 1
  %v1766 = vor.u32 %v1447, %v1765
  %v1767 = vrot.slane %v1457, 1
  %v1768 = vor.u32 %v1454, %v1767
  %v1769 = vrot.slane %v1464, 1
  %v1770 = vor.u32 %v1461, %v1769
  %v1771 = vrot.slane %v1471, 1
  %v1772 = vor.u32 %v1468, %v1771
  %v1773 = vrot.slane %v1478, 1
  %v1774 = vor.u32 %v1475, %v1773
  %v1775 = vrot.slane %v1485, 1
  %v1776 = vor.u32 %v1482, %v1775
  %v1777 = vrot.slane %v1492, 1
  %v1778 = vor.u32 %v1489, %v1777
  %v1779 = vrot.slane %v1499, 1
  %v1780 = vor.u32 %v1496, %v1779
  %v1781 = vrot.slane %v1506, 1
  %v1782 = vor.u32 %v1503, %v1781
  %v1783 = vrot.slane %v1513, 1
  %v1784 = vor.u32 %v1510, %v1783
  %v1785 = vrot.slane %v1520, 1
  %v1786 = vor.u32 %v1517, %v1785
  %v1787 = vrot.slane %v1527, 1
  %v1788 = vor.u32 %v1524, %v1787
  %v1789 = vrot.slane %v1534, 1
  %v1790 = vor.u32 %v1531, %v1789
  %v1791 = vrot.slane %v1541, 1
  %v1792 = vor.u32 %v1538, %v1791
  %v1793 = vrot.slane %v1548, 1
  %v1794 = vor.u32 %v1545, %v1793
  %v1795 = vrot.slane %v1555, 1
  %v1796 = vor.u32 %v1552, %v1795
  %v1797 = vrot.slane %v1562, 1
  %v1798 = vor.u32 %v1559, %v1797
  %v1799 = vrot.slane %v1569, 1
  %v1800 = vor.u32 %v1566, %v1799
  %v1801 = vrot.slane %v1576, 1
  %v1802 = vor.u32 %v1573, %v1801
  %v1803 = vrot.slane %v1583, 1
  %v1804 = vor.u32 %v1580, %v1803
  %v1805 = vrot.slane %v1590, 1
  %v1806 = vor.u32 %v1587, %v1805
  %vm1837 = vsmask.f32 7424
  %vm1838 = vmand %vm1624, %vm1837
  %v1839 = vld [vmem:[%s1623 + $0x10] sm:$0xff]
  %v1840 = vsel %vm1838, %v1748, %v1839
  %1841 = vst [vmem:[%s1623 + $0x10] sm:$0xff] %v1840
  %v1842 = vld [vmem:[%s1623 + $0x58] sm:$0xff]
  %v1843 = vsel %vm1838, %v1750, %v1842
  %1844 = vst [vmem:[%s1623 + $0x58] sm:$0xff] %v1843
  %v1845 = vld [vmem:[%s1623 + $0xa0] sm:$0xff]
  %v1846 = vsel %vm1838, %v1752, %v1845
  %1847 = vst [vmem:[%s1623 + $0xa0] sm:$0xff] %v1846
  %v1848 = vld [vmem:[%s1623 + $0xe8] sm:$0xff]
  %v1849 = vsel %vm1838, %v1754, %v1848
  %1850 = vst [vmem:[%s1623 + $0xe8] sm:$0xff] %v1849
  %v1851 = vld [vmem:[%s1623 + $0x130] sm:$0xff]
  %v1852 = vsel %vm1838, %v1756, %v1851
  %1853 = vst [vmem:[%s1623 + $0x130] sm:$0xff] %v1852
  %v1854 = vld [vmem:[%s1623 + $0x178] sm:$0xff]
  %v1855 = vsel %vm1838, %v1758, %v1854
  %1856 = vst [vmem:[%s1623 + $0x178] sm:$0xff] %v1855
  %v1857 = vld [vmem:[%s1623 + $0x1c0] sm:$0xff]
  %v1858 = vsel %vm1838, %v1760, %v1857
  %1859 = vst [vmem:[%s1623 + $0x1c0] sm:$0xff] %v1858
  %v1860 = vld [vmem:[%s1623 + $0x208] sm:$0xff]
  %v1861 = vsel %vm1838, %v1762, %v1860
  %1862 = vst [vmem:[%s1623 + $0x208] sm:$0xff] %v1861
  %v1863 = vld [vmem:[%s1623 + $0x250] sm:$0xff]
  %v1864 = vsel %vm1838, %v1764, %v1863
  %1865 = vst [vmem:[%s1623 + $0x250] sm:$0xff] %v1864
  %v1866 = vld [vmem:[%s1623 + $0x298] sm:$0xff]
  %v1867 = vsel %vm1838, %v1766, %v1866
  %1868 = vst [vmem:[%s1623 + $0x298] sm:$0xff] %v1867
  %v1869 = vld [vmem:[%s1623 + $0x2e0] sm:$0xff]
  %v1870 = vsel %vm1838, %v1768, %v1869
  %1871 = vst [vmem:[%s1623 + $0x2e0] sm:$0xff] %v1870
  %v1872 = vld [vmem:[%s1623 + $0x328] sm:$0xff]
  %v1873 = vsel %vm1838, %v1770, %v1872
  %1874 = vst [vmem:[%s1623 + $0x328] sm:$0xff] %v1873
  %v1875 = vld [vmem:[%s1623 + $0x370] sm:$0xff]
  %v1876 = vsel %vm1838, %v1772, %v1875
  %1877 = vst [vmem:[%s1623 + $0x370] sm:$0xff] %v1876
  %v1878 = vld [vmem:[%s1623 + $0x3b8] sm:$0xff]
  %v1879 = vsel %vm1838, %v1774, %v1878
  %1880 = vst [vmem:[%s1623 + $0x3b8] sm:$0xff] %v1879
  %v1881 = vld [vmem:[%s1623 + $0x400] sm:$0xff]
  %v1882 = vsel %vm1838, %v1776, %v1881
  %1883 = vst [vmem:[%s1623 + $0x400] sm:$0xff] %v1882
  %v1884 = vld [vmem:[%s1623 + $0x490] sm:$0xff]
  %v1885 = vsel %vm1838, %v1778, %v1884
  %1886 = vst [vmem:[%s1623 + $0x490] sm:$0xff] %v1885
  %v1887 = vld [vmem:[%s1623 + $0x4d8] sm:$0xff]
  %v1888 = vsel %vm1838, %v1780, %v1887
  %1889 = vst [vmem:[%s1623 + $0x4d8] sm:$0xff] %v1888
  %v1890 = vld [vmem:[%s1623 + $0x520] sm:$0xff]
  %v1891 = vsel %vm1838, %v1782, %v1890
  %1892 = vst [vmem:[%s1623 + $0x520] sm:$0xff] %v1891
  %v1893 = vld [vmem:[%s1623 + $0x568] sm:$0xff]
  %v1894 = vsel %vm1838, %v1784, %v1893
  %1895 = vst [vmem:[%s1623 + $0x568] sm:$0xff] %v1894
  %v1896 = vld [vmem:[%s1623 + $0x5b0] sm:$0xff]
  %v1897 = vsel %vm1838, %v1786, %v1896
  %1898 = vst [vmem:[%s1623 + $0x5b0] sm:$0xff] %v1897
  %v1899 = vld [vmem:[%s1623 + $0x5f8] sm:$0xff]
  %v1900 = vsel %vm1838, %v1788, %v1899
  %1901 = vst [vmem:[%s1623 + $0x5f8] sm:$0xff] %v1900
  %v1902 = vld [vmem:[%s1623 + $0x640] sm:$0xff]
  %v1903 = vsel %vm1838, %v1790, %v1902
  %1904 = vst [vmem:[%s1623 + $0x640] sm:$0xff] %v1903
  %v1905 = vld [vmem:[%s1623 + $0x688] sm:$0xff]
  %v1906 = vsel %vm1838, %v1792, %v1905
  %1907 = vst [vmem:[%s1623 + $0x688] sm:$0xff] %v1906
  %v1908 = vld [vmem:[%s1623 + $0x6d0] sm:$0xff]
  %v1909 = vsel %vm1838, %v1794, %v1908
  %1910 = vst [vmem:[%s1623 + $0x6d0] sm:$0xff] %v1909
  %v1911 = vld [vmem:[%s1623 + $0x718] sm:$0xff]
  %v1912 = vsel %vm1838, %v1796, %v1911
  %1913 = vst [vmem:[%s1623 + $0x718] sm:$0xff] %v1912
  %v1914 = vld [vmem:[%s1623 + $0x760] sm:$0xff]
  %v1915 = vsel %vm1838, %v1798, %v1914
  %1916 = vst [vmem:[%s1623 + $0x760] sm:$0xff] %v1915
  %v1917 = vld [vmem:[%s1623 + $0x7a8] sm:$0xff]
  %v1918 = vsel %vm1838, %v1800, %v1917
  %1919 = vst [vmem:[%s1623 + $0x7a8] sm:$0xff] %v1918
  %v1920 = vld [vmem:[%s1623 + $0x7f0] sm:$0xff]
  %v1921 = vsel %vm1838, %v1802, %v1920
  %1922 = vst [vmem:[%s1623 + $0x7f0] sm:$0xff] %v1921
  %v1923 = vld [vmem:[%s1623 + $0x838] sm:$0xff]
  %v1924 = vsel %vm1838, %v1804, %v1923
  %1925 = vst [vmem:[%s1623 + $0x838] sm:$0xff] %v1924
  %v1926 = vld [vmem:[%s1623 + $0x880] sm:$0xff]
  %v1927 = vsel %vm1838, %v1806, %v1926
  %1928 = vst [vmem:[%s1623 + $0x880] sm:$0xff] %v1927
  %v1930 = vshrl.u32 %v1078, 16
  %v1932 = vrot.slane %v1930, 7
  %v1933 = vshll.u32 %v1078, 16
  %v1935 = vor.u32 %v1932, %v1933
  %v1937 = vshrl.u32 %v1094, 16
  %v1939 = vrot.slane %v1937, 7
  %v1940 = vshll.u32 %v1094, 16
  %v1942 = vor.u32 %v1939, %v1940
  %v1945 = vld [vmem:[#allocation2 + $0x18] sm:$0xff]
  %v1946 = vsel %vm1626, %v1389, %v1945
  %1947 = vst [vmem:[#allocation2 + $0x18] sm:$0xff] %v1946
  %v1948 = vld [vmem:[#allocation2 + $0x60] sm:$0xff]
  %v1949 = vsel %vm1626, %v1396, %v1948
  %1950 = vst [vmem:[#allocation2 + $0x60] sm:$0xff] %v1949
  %v1951 = vld [vmem:[#allocation2 + $0xa8] sm:$0xff]
  %v1952 = vsel %vm1626, %v1403, %v1951
  %1953 = vst [vmem:[#allocation2 + $0xa8] sm:$0xff] %v1952
  %v1954 = vld [vmem:[#allocation2 + $0xf0] sm:$0xff]
  %v1955 = vsel %vm1626, %v1410, %v1954
  %1956 = vst [vmem:[#allocation2 + $0xf0] sm:$0xff] %v1955
  %v1957 = vld [vmem:[#allocation2 + $0x138] sm:$0xff]
  %v1958 = vsel %vm1626, %v1417, %v1957
  %1959 = vst [vmem:[#allocation2 + $0x138] sm:$0xff] %v1958
  %v1960 = vld [vmem:[#allocation2 + $0x180] sm:$0xff]
  %v1961 = vsel %vm1626, %v1424, %v1960
  %1962 = vst [vmem:[#allocation2 + $0x180] sm:$0xff] %v1961
  %v1963 = vld [vmem:[#allocation2 + $0x1c8] sm:$0xff]
  %v1964 = vsel %vm1626, %v1431, %v1963
  %1965 = vst [vmem:[#allocation2 + $0x1c8] sm:$0xff] %v1964
  %v1966 = vld [vmem:[#allocation2 + $0x210] sm:$0xff]
  %v1967 = vsel %vm1626, %v1438, %v1966
  %1968 = vst [vmem:[#allocation2 + $0x210] sm:$0xff] %v1967
  %v1969 = vld [vmem:[#allocation2 + $0x258] sm:$0xff]
  %v1970 = vsel %vm1626, %v1445, %v1969
  %1971 = vst [vmem:[#allocation2 + $0x258] sm:$0xff] %v1970
  %v1972 = vld [vmem:[#allocation2 + $0x2a0] sm:$0xff]
  %v1973 = vsel %vm1626, %v1452, %v1972
  %1974 = vst [vmem:[#allocation2 + $0x2a0] sm:$0xff] %v1973
  %v1975 = vld [vmem:[#allocation2 + $0x2e8] sm:$0xff]
  %v1976 = vsel %vm1626, %v1459, %v1975
  %1977 = vst [vmem:[#allocation2 + $0x2e8] sm:$0xff] %v1976
  %v1978 = vld [vmem:[#allocation2 + $0x330] sm:$0xff]
  %v1979 = vsel %vm1626, %v1466, %v1978
  %1980 = vst [vmem:[#allocation2 + $0x330] sm:$0xff] %v1979
  %v1981 = vld [vmem:[#allocation2 + $0x378] sm:$0xff]
  %v1982 = vsel %vm1626, %v1473, %v1981
  %1983 = vst [vmem:[#allocation2 + $0x378] sm:$0xff] %v1982
  %v1984 = vld [vmem:[#allocation2 + $0x3c0] sm:$0xff]
  %v1985 = vsel %vm1626, %v1480, %v1984
  %1986 = vst [vmem:[#allocation2 + $0x3c0] sm:$0xff] %v1985
  %v1987 = vld [vmem:[#allocation2 + $0x408] sm:$0xff]
  %v1988 = vsel %vm1626, %v1487, %v1987
  %1989 = vst [vmem:[#allocation2 + $0x408] sm:$0xff] %v1988
  %v1990 = vld [vmem:[#allocation2 + $0x450] sm:$0xff]
  %v1991 = vsel %vm1626, %v1935, %v1990
  %1992 = vst [vmem:[#allocation2 + $0x450] sm:$0xff] %v1991
  %v1993 = vld [vmem:[#allocation2 + $0x498] sm:$0xff]
  %v1994 = vsel %vm1626, %v1494, %v1993
  %1995 = vst [vmem:[#allocation2 + $0x498] sm:$0xff] %v1994
  %v1996 = vld [vmem:[#allocation2 + $0x4e0] sm:$0xff]
  %v1997 = vsel %vm1626, %v1501, %v1996
  %1998 = vst [vmem:[#allocation2 + $0x4e0] sm:$0xff] %v1997
  %v1999 = vld [vmem:[#allocation2 + $0x528] sm:$0xff]
  %v2000 = vsel %vm1626, %v1508, %v1999
  %2001 = vst [vmem:[#allocation2 + $0x528] sm:$0xff] %v2000
  %v2002 = vld [vmem:[#allocation2 + $0x570] sm:$0xff]
  %v2003 = vsel %vm1626, %v1515, %v2002
  %2004 = vst [vmem:[#allocation2 + $0x570] sm:$0xff] %v2003
  %v2005 = vld [vmem:[#allocation2 + $0x5b8] sm:$0xff]
  %v2006 = vsel %vm1626, %v1522, %v2005
  %2007 = vst [vmem:[#allocation2 + $0x5b8] sm:$0xff] %v2006
  %v2008 = vld [vmem:[#allocation2 + $0x600] sm:$0xff]
  %v2009 = vsel %vm1626, %v1529, %v2008
  %2010 = vst [vmem:[#allocation2 + $0x600] sm:$0xff] %v2009
  %v2011 = vld [vmem:[#allocation2 + $0x648] sm:$0xff]
  %v2012 = vsel %vm1626, %v1536, %v2011
  %2013 = vst [vmem:[#allocation2 + $0x648] sm:$0xff] %v2012
  %v2014 = vld [vmem:[#allocation2 + $0x690] sm:$0xff]
  %v2015 = vsel %vm1626, %v1543, %v2014
  %2016 = vst [vmem:[#allocation2 + $0x690] sm:$0xff] %v2015
  %v2017 = vld [vmem:[#allocation2 + $0x6d8] sm:$0xff]
  %v2018 = vsel %vm1626, %v1550, %v2017
  %2019 = vst [vmem:[#allocation2 + $0x6d8] sm:$0xff] %v2018
  %v2020 = vld [vmem:[#allocation2 + $0x720] sm:$0xff]
  %v2021 = vsel %vm1626, %v1557, %v2020
  %2022 = vst [vmem:[#allocation2 + $0x720] sm:$0xff] %v2021
  %v2023 = vld [vmem:[#allocation2 + $0x768] sm:$0xff]
  %v2024 = vsel %vm1626, %v1564, %v2023
  %2025 = vst [vmem:[#allocation2 + $0x768] sm:$0xff] %v2024
  %v2026 = vld [vmem:[#allocation2 + $0x7b0] sm:$0xff]
  %v2027 = vsel %vm1626, %v1571, %v2026
  %2028 = vst [vmem:[#allocation2 + $0x7b0] sm:$0xff] %v2027
  %v2029 = vld [vmem:[#allocation2 + $0x7f8] sm:$0xff]
  %v2030 = vsel %vm1626, %v1578, %v2029
  %2031 = vst [vmem:[#allocation2 + $0x7f8] sm:$0xff] %v2030
  %v2032 = vld [vmem:[#allocation2 + $0x840] sm:$0xff]
  %v2033 = vsel %vm1626, %v1585, %v2032
  %2034 = vst [vmem:[#allocation2 + $0x840] sm:$0xff] %v2033
  %v2035 = vld [vmem:[#allocation2 + $0x888] sm:$0xff]
  %v2036 = vsel %vm1626, %v1592, %v2035
  %2037 = vst [vmem:[#allocation2 + $0x888] sm:$0xff] %v2036
  %v2038 = vld [vmem:[#allocation2 + $0x8d0] sm:$0xff]
  %v2039 = vsel %vm1626, %v1942, %v2038
  %2040 = vst [vmem:[#allocation2 + $0x8d0] sm:$0xff] %v2039
  %2041 = vst [vmem:[#allocation2 + $0x20] sm:$0xff] %v1063
  %2042 = vst [vmem:[#allocation2 + $0x68] sm:$0xff] %v1064
  %2043 = vst [vmem:[#allocation2 + $0xb0] sm:$0xff] %v1065
  %2044 = vst [vmem:[#allocation2 + $0xf8] sm:$0xff] %v1066
  %2045 = vst [vmem:[#allocation2 + $0x140] sm:$0xff] %v1067
  %2046 = vst [vmem:[#allocation2 + $0x188] sm:$0xff] %v1068
  %2047 = vst [vmem:[#allocation2 + $0x1d0] sm:$0xff] %v1069
  %2048 = vst [vmem:[#allocation2 + $0x218] sm:$0xff] %v1070
  %2049 = vst [vmem:[#allocation2 + $0x260] sm:$0xff] %v1071
  %2050 = vst [vmem:[#allocation2 + $0x2a8] sm:$0xff] %v1072
  %2051 = vst [vmem:[#allocation2 + $0x2f0] sm:$0xff] %v1073
  %2052 = vst [vmem:[#allocation2 + $0x338] sm:$0xff] %v1074
  %2053 = vst [vmem:[#allocation2 + $0x380] sm:$0xff] %v1075
  %2054 = vst [vmem:[#allocation2 + $0x3c8] sm:$0xff] %v1076
  %2055 = vst [vmem:[#allocation2 + $0x410] sm:$0xff] %v1077
  %2056 = vst [vmem:[#allocation2 + $0x458] sm:$0xff] %v1078
  %2057 = vst [vmem:[#allocation2 + $0x4a0] sm:$0xff] %v1079
  %2058 = vst [vmem:[#allocation2 + $0x4e8] sm:$0xff] %v1080
  %2059 = vst [vmem:[#allocation2 + $0x530] sm:$0xff] %v1081
  %2060 = vst [vmem:[#allocation2 + $0x578] sm:$0xff] %v1082
  %2061 = vst [vmem:[#allocation2 + $0x5c0] sm:$0xff] %v1083
  %2062 = vst [vmem:[#allocation2 + $0x608] sm:$0xff] %v1084
  %2063 = vst [vmem:[#allocation2 + $0x650] sm:$0xff] %v1085
  %2064 = vst [vmem:[#allocation2 + $0x698] sm:$0xff] %v1086
  %2065 = vst [vmem:[#allocation2 + $0x6e0] sm:$0xff] %v1087
  %2066 = vst [vmem:[#allocation2 + $0x728] sm:$0xff] %v1088
  %2067 = vst [vmem:[#allocation2 + $0x770] sm:$0xff] %v1089
  %2068 = vst [vmem:[#allocation2 + $0x7b8] sm:$0xff] %v1090
  %2069 = vst [vmem:[#allocation2 + $0x800] sm:$0xff] %v1091
  %2070 = vst [vmem:[#allocation2 + $0x848] sm:$0xff] %v1092
  %2071 = vst [vmem:[#allocation2 + $0x890] sm:$0xff] %v1093
  %2072 = vst [vmem:[#allocation2 + $0x8d8] sm:$0xff] %v1094
  %v2073 = vrot.slane %v1933, 1
  %v2074 = vor.u32 %v1930, %v2073
  %v2075 = vrot.slane %v1940, 1
  %v2076 = vor.u32 %v1937, %v2075
  %v2079 = vld [vmem:[#allocation2 + $0x28] sm:$0xff]
  %v2080 = vsel %vm1838, %v1748, %v2079
  %2081 = vst [vmem:[#allocation2 + $0x28] sm:$0xff] %v2080
  %v2082 = vld [vmem:[#allocation2 + $0x70] sm:$0xff]
  %v2083 = vsel %vm1838, %v1750, %v2082
  %2084 = vst [vmem:[#allocation2 + $0x70] sm:$0xff] %v2083
  %v2085 = vld [vmem:[#allocation2 + $0xb8] sm:$0xff]
  %v2086 = vsel %vm1838, %v1752, %v2085
  %2087 = vst [vmem:[#allocation2 + $0xb8] sm:$0xff] %v2086
  %v2088 = vld [vmem:[#allocation2 + $0x100] sm:$0xff]
  %v2089 = vsel %vm1838, %v1754, %v2088
  %2090 = vst [vmem:[#allocation2 + $0x100] sm:$0xff] %v2089
  %v2091 = vld [vmem:[#allocation2 + $0x148] sm:$0xff]
  %v2092 = vsel %vm1838, %v1756, %v2091
  %2093 = vst [vmem:[#allocation2 + $0x148] sm:$0xff] %v2092
  %v2094 = vld [vmem:[#allocation2 + $0x190] sm:$0xff]
  %v2095 = vsel %vm1838, %v1758, %v2094
  %2096 = vst [vmem:[#allocation2 + $0x190] sm:$0xff] %v2095
  %v2097 = vld [vmem:[#allocation2 + $0x1d8] sm:$0xff]
  %v2098 = vsel %vm1838, %v1760, %v2097
  %2099 = vst [vmem:[#allocation2 + $0x1d8] sm:$0xff] %v2098
  %v2100 = vld [vmem:[#allocation2 + $0x220] sm:$0xff]
  %v2101 = vsel %vm1838, %v1762, %v2100
  %2102 = vst [vmem:[#allocation2 + $0x220] sm:$0xff] %v2101
  %v2103 = vld [vmem:[#allocation2 + $0x268] sm:$0xff]
  %v2104 = vsel %vm1838, %v1764, %v2103
  %2105 = vst [vmem:[#allocation2 + $0x268] sm:$0xff] %v2104
  %v2106 = vld [vmem:[#allocation2 + $0x2b0] sm:$0xff]
  %v2107 = vsel %vm1838, %v1766, %v2106
  %2108 = vst [vmem:[#allocation2 + $0x2b0] sm:$0xff] %v2107
  %v2109 = vld [vmem:[#allocation2 + $0x2f8] sm:$0xff]
  %v2110 = vsel %vm1838, %v1768, %v2109
  %2111 = vst [vmem:[#allocation2 + $0x2f8] sm:$0xff] %v2110
  %v2112 = vld [vmem:[#allocation2 + $0x340] sm:$0xff]
  %v2113 = vsel %vm1838, %v1770, %v2112
  %2114 = vst [vmem:[#allocation2 + $0x340] sm:$0xff] %v2113
  %v2115 = vld [vmem:[#allocation2 + $0x388] sm:$0xff]
  %v2116 = vsel %vm1838, %v1772, %v2115
  %2117 = vst [vmem:[#allocation2 + $0x388] sm:$0xff] %v2116
  %v2118 = vld [vmem:[#allocation2 + $0x3d0] sm:$0xff]
  %v2119 = vsel %vm1838, %v1774, %v2118
  %2120 = vst [vmem:[#allocation2 + $0x3d0] sm:$0xff] %v2119
  %v2121 = vld [vmem:[#allocation2 + $0x418] sm:$0xff]
  %v2122 = vsel %vm1838, %v1776, %v2121
  %2123 = vst [vmem:[#allocation2 + $0x418] sm:$0xff] %v2122
  %v2124 = vld [vmem:[#allocation2 + $0x460] sm:$0xff]
  %v2125 = vsel %vm1838, %v2074, %v2124
  %2126 = vst [vmem:[#allocation2 + $0x460] sm:$0xff] %v2125
  %v2127 = vld [vmem:[#allocation2 + $0x4a8] sm:$0xff]
  %v2128 = vsel %vm1838, %v1778, %v2127
  %2129 = vst [vmem:[#allocation2 + $0x4a8] sm:$0xff] %v2128
  %v2130 = vld [vmem:[#allocation2 + $0x4f0] sm:$0xff]
  %v2131 = vsel %vm1838, %v1780, %v2130
  %2132 = vst [vmem:[#allocation2 + $0x4f0] sm:$0xff] %v2131
  %v2133 = vld [vmem:[#allocation2 + $0x538] sm:$0xff]
  %v2134 = vsel %vm1838, %v1782, %v2133
  %2135 = vst [vmem:[#allocation2 + $0x538] sm:$0xff] %v2134
  %v2136 = vld [vmem:[#allocation2 + $0x580] sm:$0xff]
  %v2137 = vsel %vm1838, %v1784, %v2136
  %2138 = vst [vmem:[#allocation2 + $0x580] sm:$0xff] %v2137
  %v2139 = vld [vmem:[#allocation2 + $0x5c8] sm:$0xff]
  %v2140 = vsel %vm1838, %v1786, %v2139
  %2141 = vst [vmem:[#allocation2 + $0x5c8] sm:$0xff] %v2140
  %v2142 = vld [vmem:[#allocation2 + $0x610] sm:$0xff]
  %v2143 = vsel %vm1838, %v1788, %v2142
  %2144 = vst [vmem:[#allocation2 + $0x610] sm:$0xff] %v2143
  %v2145 = vld [vmem:[#allocation2 + $0x658] sm:$0xff]
  %v2146 = vsel %vm1838, %v1790, %v2145
  %2147 = vst [vmem:[#allocation2 + $0x658] sm:$0xff] %v2146
  %v2148 = vld [vmem:[#allocation2 + $0x6a0] sm:$0xff]
  %v2149 = vsel %vm1838, %v1792, %v2148
  %2150 = vst [vmem:[#allocation2 + $0x6a0] sm:$0xff] %v2149
  %v2151 = vld [vmem:[#allocation2 + $0x6e8] sm:$0xff]
  %v2152 = vsel %vm1838, %v1794, %v2151
  %2153 = vst [vmem:[#allocation2 + $0x6e8] sm:$0xff] %v2152
  %v2154 = vld [vmem:[#allocation2 + $0x730] sm:$0xff]
  %v2155 = vsel %vm1838, %v1796, %v2154
  %2156 = vst [vmem:[#allocation2 + $0x730] sm:$0xff] %v2155
  %v2157 = vld [vmem:[#allocation2 + $0x778] sm:$0xff]
  %v2158 = vsel %vm1838, %v1798, %v2157
  %2159 = vst [vmem:[#allocation2 + $0x778] sm:$0xff] %v2158
  %v2160 = vld [vmem:[#allocation2 + $0x7c0] sm:$0xff]
  %v2161 = vsel %vm1838, %v1800, %v2160
  %2162 = vst [vmem:[#allocation2 + $0x7c0] sm:$0xff] %v2161
  %v2163 = vld [vmem:[#allocation2 + $0x808] sm:$0xff]
  %v2164 = vsel %vm1838, %v1802, %v2163
  %2165 = vst [vmem:[#allocation2 + $0x808] sm:$0xff] %v2164
  %v2166 = vld [vmem:[#allocation2 + $0x850] sm:$0xff]
  %v2167 = vsel %vm1838, %v1804, %v2166
  %2168 = vst [vmem:[#allocation2 + $0x850] sm:$0xff] %v2167
  %v2169 = vld [vmem:[#allocation2 + $0x898] sm:$0xff]
  %v2170 = vsel %vm1838, %v1806, %v2169
  %2171 = vst [vmem:[#allocation2 + $0x898] sm:$0xff] %v2170
  %v2172 = vld [vmem:[#allocation2 + $0x8e0] sm:$0xff]
  %v2173 = vsel %vm1838, %v2076, %v2172
  %2174 = vst [vmem:[#allocation2 + $0x8e0] sm:$0xff] %v2173
  %v2175 = vld [vmem:[#allocation2 + $0x30] sm:$0xff]
  %v2176 = vsel %vm1626, %v1396, %v2175
  %2177 = vst [vmem:[#allocation2 + $0x30] sm:$0xff] %v2176
  %v2178 = vld [vmem:[#allocation2 + $0x78] sm:$0xff]
  %v2179 = vsel %vm1626, %v1403, %v2178
  %2180 = vst [vmem:[#allocation2 + $0x78] sm:$0xff] %v2179
  %v2181 = vld [vmem:[#allocation2 + $0xc0] sm:$0xff]
  %v2182 = vsel %vm1626, %v1410, %v2181
  %2183 = vst [vmem:[#allocation2 + $0xc0] sm:$0xff] %v2182
  %v2184 = vld [vmem:[#allocation2 + $0x108] sm:$0xff]
  %v2185 = vsel %vm1626, %v1417, %v2184
  %2186 = vst [vmem:[#allocation2 + $0x108] sm:$0xff] %v2185
  %v2187 = vld [vmem:[#allocation2 + $0x150] sm:$0xff]
  %v2188 = vsel %vm1626, %v1424, %v2187
  %2189 = vst [vmem:[#allocation2 + $0x150] sm:$0xff] %v2188
  %v2190 = vld [vmem:[#allocation2 + $0x198] sm:$0xff]
  %v2191 = vsel %vm1626, %v1431, %v2190
  %2192 = vst [vmem:[#allocation2 + $0x198] sm:$0xff] %v2191
  %v2193 = vld [vmem:[#allocation2 + $0x1e0] sm:$0xff]
  %v2194 = vsel %vm1626, %v1438, %v2193
  %2195 = vst [vmem:[#allocation2 + $0x1e0] sm:$0xff] %v2194
  %v2196 = vld [vmem:[#allocation2 + $0x228] sm:$0xff]
  %v2197 = vsel %vm1626, %v1445, %v2196
  %2198 = vst [vmem:[#allocation2 + $0x228] sm:$0xff] %v2197
  %v2199 = vld [vmem:[#allocation2 + $0x270] sm:$0xff]
  %v2200 = vsel %vm1626, %v1452, %v2199
  %2201 = vst [vmem:[#allocation2 + $0x270] sm:$0xff] %v2200
  %v2202 = vld [vmem:[#allocation2 + $0x2b8] sm:$0xff]
  %v2203 = vsel %vm1626, %v1459, %v2202
  %2204 = vst [vmem:[#allocation2 + $0x2b8] sm:$0xff] %v2203
  %v2205 = vld [vmem:[#allocation2 + $0x300] sm:$0xff]
  %v2206 = vsel %vm1626, %v1466, %v2205
  %2207 = vst [vmem:[#allocation2 + $0x300] sm:$0xff] %v2206
  %v2208 = vld [vmem:[#allocation2 + $0x348] sm:$0xff]
  %v2209 = vsel %vm1626, %v1473, %v2208
  %2210 = vst [vmem:[#allocation2 + $0x348] sm:$0xff] %v2209
  %v2211 = vld [vmem:[#allocation2 + $0x390] sm:$0xff]
  %v2212 = vsel %vm1626, %v1480, %v2211
  %2213 = vst [vmem:[#allocation2 + $0x390] sm:$0xff] %v2212
  %v2214 = vld [vmem:[#allocation2 + $0x3d8] sm:$0xff]
  %v2215 = vsel %vm1626, %v1487, %v2214
  %2216 = vst [vmem:[#allocation2 + $0x3d8] sm:$0xff] %v2215
  %v2217 = vld [vmem:[#allocation2 + $0x420] sm:$0xff]
  %v2218 = vsel %vm1626, %v1935, %v2217
  %2219 = vst [vmem:[#allocation2 + $0x420] sm:$0xff] %v2218
  %v2220 = vld [vmem:[#allocation2 + $0x4b0] sm:$0xff]
  %v2221 = vsel %vm1626, %v1501, %v2220
  %2222 = vst [vmem:[#allocation2 + $0x4b0] sm:$0xff] %v2221
  %v2223 = vld [vmem:[#allocation2 + $0x4f8] sm:$0xff]
  %v2224 = vsel %vm1626, %v1508, %v2223
  %2225 = vst [vmem:[#allocation2 + $0x4f8] sm:$0xff] %v2224
  %v2226 = vld [vmem:[#allocation2 + $0x540] sm:$0xff]
  %v2227 = vsel %vm1626, %v1515, %v2226
  %2228 = vst [vmem:[#allocation2 + $0x540] sm:$0xff] %v2227
  %v2229 = vld [vmem:[#allocation2 + $0x588] sm:$0xff]
  %v2230 = vsel %vm1626, %v1522, %v2229
  %2231 = vst [vmem:[#allocation2 + $0x588] sm:$0xff] %v2230
  %v2232 = vld [vmem:[#allocation2 + $0x5d0] sm:$0xff]
  %v2233 = vsel %vm1626, %v1529, %v2232
  %2234 = vst [vmem:[#allocation2 + $0x5d0] sm:$0xff] %v2233
  %v2235 = vld [vmem:[#allocation2 + $0x618] sm:$0xff]
  %v2236 = vsel %vm1626, %v1536, %v2235
  %2237 = vst [vmem:[#allocation2 + $0x618] sm:$0xff] %v2236
  %v2238 = vld [vmem:[#allocation2 + $0x660] sm:$0xff]
  %v2239 = vsel %vm1626, %v1543, %v2238
  %2240 = vst [vmem:[#allocation2 + $0x660] sm:$0xff] %v2239
  %v2241 = vld [vmem:[#allocation2 + $0x6a8] sm:$0xff]
  %v2242 = vsel %vm1626, %v1550, %v2241
  %2243 = vst [vmem:[#allocation2 + $0x6a8] sm:$0xff] %v2242
  %v2244 = vld [vmem:[#allocation2 + $0x6f0] sm:$0xff]
  %v2245 = vsel %vm1626, %v1557, %v2244
  %2246 = vst [vmem:[#allocation2 + $0x6f0] sm:$0xff] %v2245
  %v2247 = vld [vmem:[#allocation2 + $0x738] sm:$0xff]
  %v2248 = vsel %vm1626, %v1564, %v2247
  %2249 = vst [vmem:[#allocation2 + $0x738] sm:$0xff] %v2248
  %v2250 = vld [vmem:[#allocation2 + $0x780] sm:$0xff]
  %v2251 = vsel %vm1626, %v1571, %v2250
  %2252 = vst [vmem:[#allocation2 + $0x780] sm:$0xff] %v2251
  %v2253 = vld [vmem:[#allocation2 + $0x7c8] sm:$0xff]
  %v2254 = vsel %vm1626, %v1578, %v2253
  %2255 = vst [vmem:[#allocation2 + $0x7c8] sm:$0xff] %v2254
  %v2256 = vld [vmem:[#allocation2 + $0x810] sm:$0xff]
  %v2257 = vsel %vm1626, %v1585, %v2256
  %2258 = vst [vmem:[#allocation2 + $0x810] sm:$0xff] %v2257
  %v2259 = vld [vmem:[#allocation2 + $0x858] sm:$0xff]
  %v2260 = vsel %vm1626, %v1592, %v2259
  %2261 = vst [vmem:[#allocation2 + $0x858] sm:$0xff] %v2260
  %v2262 = vld [vmem:[#allocation2 + $0x8a0] sm:$0xff]
  %v2263 = vsel %vm1626, %v1942, %v2262
  %2264 = vst [vmem:[#allocation2 + $0x8a0] sm:$0xff] %v2263
  %2265 = vst [vmem:[#allocation2 + $0x38] sm:$0xff] %v1064
  %2266 = vst [vmem:[#allocation2 + $0x80] sm:$0xff] %v1065
  %2267 = vst [vmem:[#allocation2 + $0xc8] sm:$0xff] %v1066
  %2268 = vst [vmem:[#allocation2 + $0x110] sm:$0xff] %v1067
  %2269 = vst [vmem:[#allocation2 + $0x158] sm:$0xff] %v1068
  %2270 = vst [vmem:[#allocation2 + $0x1a0] sm:$0xff] %v1069
  %2271 = vst [vmem:[#allocation2 + $0x1e8] sm:$0xff] %v1070
  %2272 = vst [vmem:[#allocation2 + $0x230] sm:$0xff] %v1071
  %2273 = vst [vmem:[#allocation2 + $0x278] sm:$0xff] %v1072
  %2274 = vst [vmem:[#allocation2 + $0x2c0] sm:$0xff] %v1073
  %2275 = vst [vmem:[#allocation2 + $0x308] sm:$0xff] %v1074
  %2276 = vst [vmem:[#allocation2 + $0x350] sm:$0xff] %v1075
  %2277 = vst [vmem:[#allocation2 + $0x398] sm:$0xff] %v1076
  %2278 = vst [vmem:[#allocation2 + $0x3e0] sm:$0xff] %v1077
  %2279 = vst [vmem:[#allocation2 + $0x428] sm:$0xff] %v1078
  %2280 = vst [vmem:[#allocation2 + $0x4b8] sm:$0xff] %v1080
  %2281 = vst [vmem:[#allocation2 + $0x500] sm:$0xff] %v1081
  %2282 = vst [vmem:[#allocation2 + $0x548] sm:$0xff] %v1082
  %2283 = vst [vmem:[#allocation2 + $0x590] sm:$0xff] %v1083
  %2284 = vst [vmem:[#allocation2 + $0x5d8] sm:$0xff] %v1084
  %2285 = vst [vmem:[#allocation2 + $0x620] sm:$0xff] %v1085
  %2286 = vst [vmem:[#allocation2 + $0x668] sm:$0xff] %v1086
  %2287 = vst [vmem:[#allocation2 + $0x6b0] sm:$0xff] %v1087
  %2288 = vst [vmem:[#allocation2 + $0x6f8] sm:$0xff] %v1088
  %2289 = vst [vmem:[#allocation2 + $0x740] sm:$0xff] %v1089
  %2290 = vst [vmem:[#allocation2 + $0x788] sm:$0xff] %v1090
  %2291 = vst [vmem:[#allocation2 + $0x7d0] sm:$0xff] %v1091
  %2292 = vst [vmem:[#allocation2 + $0x818] sm:$0xff] %v1092
  %2293 = vst [vmem:[#allocation2 + $0x860] sm:$0xff] %v1093
  %2294 = vst [vmem:[#allocation2 + $0x8a8] sm:$0xff] %v1094
  %v2295 = vld [vmem:[#allocation2 + $0x40] sm:$0xff]
  %v2296 = vsel %vm1838, %v1750, %v2295
  %2297 = vst [vmem:[#allocation2 + $0x40] sm:$0xff] %v2296
  %v2298 = vld [vmem:[#allocation2 + $0x88] sm:$0xff]
  %v2299 = vsel %vm1838, %v1752, %v2298
  %2300 = vst [vmem:[#allocation2 + $0x88] sm:$0xff] %v2299
  %v2301 = vld [vmem:[#allocation2 + $0xd0] sm:$0xff]
  %v2302 = vsel %vm1838, %v1754, %v2301
  %2303 = vst [vmem:[#allocation2 + $0xd0] sm:$0xff] %v2302
  %v2304 = vld [vmem:[#allocation2 + $0x118] sm:$0xff]
  %v2305 = vsel %vm1838, %v1756, %v2304
  %2306 = vst [vmem:[#allocation2 + $0x118] sm:$0xff] %v2305
  %v2307 = vld [vmem:[#allocation2 + $0x160] sm:$0xff]
  %v2308 = vsel %vm1838, %v1758, %v2307
  %2309 = vst [vmem:[#allocation2 + $0x160] sm:$0xff] %v2308
  %v2310 = vld [vmem:[#allocation2 + $0x1a8] sm:$0xff]
  %v2311 = vsel %vm1838, %v1760, %v2310
  %2312 = vst [vmem:[#allocation2 + $0x1a8] sm:$0xff] %v2311
  %v2313 = vld [vmem:[#allocation2 + $0x1f0] sm:$0xff]
  %v2314 = vsel %vm1838, %v1762, %v2313
  %2315 = vst [vmem:[#allocation2 + $0x1f0] sm:$0xff] %v2314
  %v2316 = vld [vmem:[#allocation2 + $0x238] sm:$0xff]
  %v2317 = vsel %vm1838, %v1764, %v2316
  %2318 = vst [vmem:[#allocation2 + $0x238] sm:$0xff] %v2317
  %v2319 = vld [vmem:[#allocation2 + $0x280] sm:$0xff]
  %v2320 = vsel %vm1838, %v1766, %v2319
  %2321 = vst [vmem:[#allocation2 + $0x280] sm:$0xff] %v2320
  %v2322 = vld [vmem:[#allocation2 + $0x2c8] sm:$0xff]
  %v2323 = vsel %vm1838, %v1768, %v2322
  %2324 = vst [vmem:[#allocation2 + $0x2c8] sm:$0xff] %v2323
  %v2325 = vld [vmem:[#allocation2 + $0x310] sm:$0xff]
  %v2326 = vsel %vm1838, %v1770, %v2325
  %2327 = vst [vmem:[#allocation2 + $0x310] sm:$0xff] %v2326
  %v2328 = vld [vmem:[#allocation2 + $0x358] sm:$0xff]
  %v2329 = vsel %vm1838, %v1772, %v2328
  %2330 = vst [vmem:[#allocation2 + $0x358] sm:$0xff] %v2329
  %v2331 = vld [vmem:[#allocation2 + $0x3a0] sm:$0xff]
  %v2332 = vsel %vm1838, %v1774, %v2331
  %2333 = vst [vmem:[#allocation2 + $0x3a0] sm:$0xff] %v2332
  %v2334 = vld [vmem:[#allocation2 + $0x3e8] sm:$0xff]
  %v2335 = vsel %vm1838, %v1776, %v2334
  %2336 = vst [vmem:[#allocation2 + $0x3e8] sm:$0xff] %v2335
  %v2337 = vld [vmem:[#allocation2 + $0x430] sm:$0xff]
  %v2338 = vsel %vm1838, %v2074, %v2337
  %2339 = vst [vmem:[#allocation2 + $0x430] sm:$0xff] %v2338
  %v2340 = vld [vmem:[#allocation2 + $0x4c0] sm:$0xff]
  %v2341 = vsel %vm1838, %v1780, %v2340
  %2342 = vst [vmem:[#allocation2 + $0x4c0] sm:$0xff] %v2341
  %v2343 = vld [vmem:[#allocation2 + $0x508] sm:$0xff]
  %v2344 = vsel %vm1838, %v1782, %v2343
  %2345 = vst [vmem:[#allocation2 + $0x508] sm:$0xff] %v2344
  %v2346 = vld [vmem:[#allocation2 + $0x550] sm:$0xff]
  %v2347 = vsel %vm1838, %v1784, %v2346
  %2348 = vst [vmem:[#allocation2 + $0x550] sm:$0xff] %v2347
  %v2349 = vld [vmem:[#allocation2 + $0x598] sm:$0xff]
  %v2350 = vsel %vm1838, %v1786, %v2349
  %2351 = vst [vmem:[#allocation2 + $0x598] sm:$0xff] %v2350
  %v2352 = vld [vmem:[#allocation2 + $0x5e0] sm:$0xff]
  %v2353 = vsel %vm1838, %v1788, %v2352
  %2354 = vst [vmem:[#allocation2 + $0x5e0] sm:$0xff] %v2353
  %v2355 = vld [vmem:[#allocation2 + $0x628] sm:$0xff]
  %v2356 = vsel %vm1838, %v1790, %v2355
  %2357 = vst [vmem:[#allocation2 + $0x628] sm:$0xff] %v2356
  %v2358 = vld [vmem:[#allocation2 + $0x670] sm:$0xff]
  %v2359 = vsel %vm1838, %v1792, %v2358
  %2360 = vst [vmem:[#allocation2 + $0x670] sm:$0xff] %v2359
  %v2361 = vld [vmem:[#allocation2 + $0x6b8] sm:$0xff]
  %v2362 = vsel %vm1838, %v1794, %v2361
  %2363 = vst [vmem:[#allocation2 + $0x6b8] sm:$0xff] %v2362
  %v2364 = vld [vmem:[#allocation2 + $0x700] sm:$0xff]
  %v2365 = vsel %vm1838, %v1796, %v2364
  %2366 = vst [vmem:[#allocation2 + $0x700] sm:$0xff] %v2365
  %v2367 = vld [vmem:[#allocation2 + $0x748] sm:$0xff]
  %v2368 = vsel %vm1838, %v1798, %v2367
  %2369 = vst [vmem:[#allocation2 + $0x748] sm:$0xff] %v2368
  %v2370 = vld [vmem:[#allocation2 + $0x790] sm:$0xff]
  %v2371 = vsel %vm1838, %v1800, %v2370
  %2372 = vst [vmem:[#allocation2 + $0x790] sm:$0xff] %v2371
  %v2373 = vld [vmem:[#allocation2 + $0x7d8] sm:$0xff]
  %v2374 = vsel %vm1838, %v1802, %v2373
  %2375 = vst [vmem:[#allocation2 + $0x7d8] sm:$0xff] %v2374
  %v2376 = vld [vmem:[#allocation2 + $0x820] sm:$0xff]
  %v2377 = vsel %vm1838, %v1804, %v2376
  %2378 = vst [vmem:[#allocation2 + $0x820] sm:$0xff] %v2377
  %v2379 = vld [vmem:[#allocation2 + $0x868] sm:$0xff]
  %v2380 = vsel %vm1838, %v1806, %v2379
  %2381 = vst [vmem:[#allocation2 + $0x868] sm:$0xff] %v2380
  %v2382 = vld [vmem:[#allocation2 + $0x8b0] sm:$0xff]
  %v2383 = vsel %vm1838, %v2076, %v2382
  %2384 = vst [vmem:[#allocation2 + $0x8b0] sm:$0xff] %v2383
  %v2385 = vld [vmem:[#allocation2] sm:$0xff]
  %v2386 = vld [vmem:[#allocation2 + $0x8] sm:$0xff]
  %v2387 = vld [vmem:[#allocation2 + $0x10] sm:$0xff]
  %v2388 = vld [vmem:[#allocation2 + $0x18] sm:$0xff]
  %v2389 = vld [vmem:[#allocation2 + $0x20] sm:$0xff]
  %v2390 = vld [vmem:[#allocation2 + $0x28] sm:$0xff]
  %v2391 = vld [vmem:[#allocation2 + $0x30] sm:$0xff]
  %v2392 = vld [vmem:[#allocation2 + $0x38] sm:$0xff]
  %v2393 = vld [vmem:[#allocation2 + $0x40] sm:$0xff]
  %v2394 = vld [vmem:[#allocation2 + $0x48] sm:$0xff]
  %v2395 = vld [vmem:[#allocation2 + $0x50] sm:$0xff]
  %v2396 = vld [vmem:[#allocation2 + $0x58] sm:$0xff]
  %v2397 = vld [vmem:[#allocation2 + $0x60] sm:$0xff]
  %v2398 = vld [vmem:[#allocation2 + $0x68] sm:$0xff]
  %v2399 = vld [vmem:[#allocation2 + $0x70] sm:$0xff]
  %v2400 = vld [vmem:[#allocation2 + $0x78] sm:$0xff]
  %v2401 = vld [vmem:[#allocation2 + $0x80] sm:$0xff]
  %v2402 = vld [vmem:[#allocation2 + $0x88] sm:$0xff]
  %v2403 = vld [vmem:[#allocation2 + $0x90] sm:$0xff]
  %v2404 = vld [vmem:[#allocation2 + $0x98] sm:$0xff]
  %v2405 = vld [vmem:[#allocation2 + $0xa0] sm:$0xff]
  %v2406 = vld [vmem:[#allocation2 + $0xa8] sm:$0xff]
  %v2407 = vld [vmem:[#allocation2 + $0xb0] sm:$0xff]
  %v2408 = vld [vmem:[#allocation2 + $0xb8] sm:$0xff]
  %v2409 = vld [vmem:[#allocation2 + $0xc0] sm:$0xff]
  %v2410 = vld [vmem:[#allocation2 + $0xc8] sm:$0xff]
  %v2411 = vld [vmem:[#allocation2 + $0xd0] sm:$0xff]
  %v2412 = vld [vmem:[#allocation2 + $0xd8] sm:$0xff]
  %v2413 = vld [vmem:[#allocation2 + $0xe0] sm:$0xff]
  %v2414 = vld [vmem:[#allocation2 + $0xe8] sm:$0xff]
  %v2415 = vld [vmem:[#allocation2 + $0xf0] sm:$0xff]
  %v2416 = vld [vmem:[#allocation2 + $0xf8] sm:$0xff]
  %v2417 = vld [vmem:[#allocation2 + $0x100] sm:$0xff]
  %v2418 = vld [vmem:[#allocation2 + $0x108] sm:$0xff]
  %v2419 = vld [vmem:[#allocation2 + $0x110] sm:$0xff]
  %v2420 = vld [vmem:[#allocation2 + $0x118] sm:$0xff]
  %v2421 = vld [vmem:[#allocation2 + $0x120] sm:$0xff]
  %v2422 = vld [vmem:[#allocation2 + $0x128] sm:$0xff]
  %v2423 = vld [vmem:[#allocation2 + $0x130] sm:$0xff]
  %v2424 = vld [vmem:[#allocation2 + $0x138] sm:$0xff]
  %v2425 = vld [vmem:[#allocation2 + $0x140] sm:$0xff]
  %v2426 = vld [vmem:[#allocation2 + $0x148] sm:$0xff]
  %v2427 = vld [vmem:[#allocation2 + $0x150] sm:$0xff]
  %v2428 = vld [vmem:[#allocation2 + $0x158] sm:$0xff]
  %v2429 = vld [vmem:[#allocation2 + $0x160] sm:$0xff]
  %v2430 = vld [vmem:[#allocation2 + $0x168] sm:$0xff]
  %v2431 = vld [vmem:[#allocation2 + $0x170] sm:$0xff]
  %v2432 = vld [vmem:[#allocation2 + $0x178] sm:$0xff]
  %v2433 = vld [vmem:[#allocation2 + $0x180] sm:$0xff]
  %v2434 = vld [vmem:[#allocation2 + $0x188] sm:$0xff]
  %v2435 = vld [vmem:[#allocation2 + $0x190] sm:$0xff]
  %v2436 = vld [vmem:[#allocation2 + $0x198] sm:$0xff]
  %v2437 = vld [vmem:[#allocation2 + $0x1a0] sm:$0xff]
  %v2438 = vld [vmem:[#allocation2 + $0x1a8] sm:$0xff]
  %v2439 = vld [vmem:[#allocation2 + $0x1b0] sm:$0xff]
  %v2440 = vld [vmem:[#allocation2 + $0x1b8] sm:$0xff]
  %v2441 = vld [vmem:[#allocation2 + $0x1c0] sm:$0xff]
  %v2442 = vld [vmem:[#allocation2 + $0x1c8] sm:$0xff]
  %v2443 = vld [vmem:[#allocation2 + $0x1d0] sm:$0xff]
  %v2444 = vld [vmem:[#allocation2 + $0x1d8] sm:$0xff]
  %v2445 = vld [vmem:[#allocation2 + $0x1e0] sm:$0xff]
  %v2446 = vld [vmem:[#allocation2 + $0x1e8] sm:$0xff]
  %v2447 = vld [vmem:[#allocation2 + $0x1f0] sm:$0xff]
  %v2448 = vld [vmem:[#allocation2 + $0x1f8] sm:$0xff]
  %v2449 = vld [vmem:[#allocation2 + $0x200] sm:$0xff]
  %v2450 = vld [vmem:[#allocation2 + $0x208] sm:$0xff]
  %v2451 = vld [vmem:[#allocation2 + $0x210] sm:$0xff]
  %v2452 = vld [vmem:[#allocation2 + $0x218] sm:$0xff]
  %v2453 = vld [vmem:[#allocation2 + $0x220] sm:$0xff]
  %v2454 = vld [vmem:[#allocation2 + $0x228] sm:$0xff]
  %v2455 = vld [vmem:[#allocation2 + $0x230] sm:$0xff]
  %v2456 = vld [vmem:[#allocation2 + $0x238] sm:$0xff]
  %v2457 = vld [vmem:[#allocation2 + $0x240] sm:$0xff]
  %v2458 = vld [vmem:[#allocation2 + $0x248] sm:$0xff]
  %v2459 = vld [vmem:[#allocation2 + $0x250] sm:$0xff]
  %v2460 = vld [vmem:[#allocation2 + $0x258] sm:$0xff]
  %v2461 = vld [vmem:[#allocation2 + $0x260] sm:$0xff]
  %v2462 = vld [vmem:[#allocation2 + $0x268] sm:$0xff]
  %v2463 = vld [vmem:[#allocation2 + $0x270] sm:$0xff]
  %v2464 = vld [vmem:[#allocation2 + $0x278] sm:$0xff]
  %v2465 = vld [vmem:[#allocation2 + $0x280] sm:$0xff]
  %v2466 = vld [vmem:[#allocation2 + $0x288] sm:$0xff]
  %v2467 = vld [vmem:[#allocation2 + $0x290] sm:$0xff]
  %v2468 = vld [vmem:[#allocation2 + $0x298] sm:$0xff]
  %v2469 = vld [vmem:[#allocation2 + $0x2a0] sm:$0xff]
  %v2470 = vld [vmem:[#allocation2 + $0x2a8] sm:$0xff]
  %v2471 = vld [vmem:[#allocation2 + $0x2b0] sm:$0xff]
  %v2472 = vld [vmem:[#allocation2 + $0x2b8] sm:$0xff]
  %v2473 = vld [vmem:[#allocation2 + $0x2c0] sm:$0xff]
  %v2474 = vld [vmem:[#allocation2 + $0x2c8] sm:$0xff]
  %v2475 = vld [vmem:[#allocation2 + $0x2d0] sm:$0xff]
  %v2476 = vld [vmem:[#allocation2 + $0x2d8] sm:$0xff]
  %v2477 = vld [vmem:[#allocation2 + $0x2e0] sm:$0xff]
  %v2478 = vld [vmem:[#allocation2 + $0x2e8] sm:$0xff]
  %v2479 = vld [vmem:[#allocation2 + $0x2f0] sm:$0xff]
  %v2480 = vld [vmem:[#allocation2 + $0x2f8] sm:$0xff]
  %v2481 = vld [vmem:[#allocation2 + $0x300] sm:$0xff]
  %v2482 = vld [vmem:[#allocation2 + $0x308] sm:$0xff]
  %v2483 = vld [vmem:[#allocation2 + $0x310] sm:$0xff]
  %v2484 = vld [vmem:[#allocation2 + $0x318] sm:$0xff]
  %v2485 = vld [vmem:[#allocation2 + $0x320] sm:$0xff]
  %v2486 = vld [vmem:[#allocation2 + $0x328] sm:$0xff]
  %v2487 = vld [vmem:[#allocation2 + $0x330] sm:$0xff]
  %v2488 = vld [vmem:[#allocation2 + $0x338] sm:$0xff]
  %v2489 = vld [vmem:[#allocation2 + $0x340] sm:$0xff]
  %v2490 = vld [vmem:[#allocation2 + $0x348] sm:$0xff]
  %v2491 = vld [vmem:[#allocation2 + $0x350] sm:$0xff]
  %v2492 = vld [vmem:[#allocation2 + $0x358] sm:$0xff]
  %v2493 = vld [vmem:[#allocation2 + $0x360] sm:$0xff]
  %v2494 = vld [vmem:[#allocation2 + $0x368] sm:$0xff]
  %v2495 = vld [vmem:[#allocation2 + $0x370] sm:$0xff]
  %v2496 = vld [vmem:[#allocation2 + $0x378] sm:$0xff]
  %v2497 = vld [vmem:[#allocation2 + $0x380] sm:$0xff]
  %v2498 = vld [vmem:[#allocation2 + $0x388] sm:$0xff]
  %v2499 = vld [vmem:[#allocation2 + $0x390] sm:$0xff]
  %v2500 = vld [vmem:[#allocation2 + $0x398] sm:$0xff]
  %v2501 = vld [vmem:[#allocation2 + $0x3a0] sm:$0xff]
  %v2502 = vld [vmem:[#allocation2 + $0x3a8] sm:$0xff]
  %v2503 = vld [vmem:[#allocation2 + $0x3b0] sm:$0xff]
  %v2504 = vld [vmem:[#allocation2 + $0x3b8] sm:$0xff]
  %v2505 = vld [vmem:[#allocation2 + $0x3c0] sm:$0xff]
  %v2506 = vld [vmem:[#allocation2 + $0x3c8] sm:$0xff]
  %v2507 = vld [vmem:[#allocation2 + $0x3d0] sm:$0xff]
  %v2508 = vld [vmem:[#allocation2 + $0x3d8] sm:$0xff]
  %v2509 = vld [vmem:[#allocation2 + $0x3e0] sm:$0xff]
  %v2510 = vld [vmem:[#allocation2 + $0x3e8] sm:$0xff]
  %v2511 = vld [vmem:[#allocation2 + $0x3f0] sm:$0xff]
  %v2512 = vld [vmem:[#allocation2 + $0x3f8] sm:$0xff]
  %v2513 = vld [vmem:[#allocation2 + $0x400] sm:$0xff]
  %v2514 = vld [vmem:[#allocation2 + $0x408] sm:$0xff]
  %v2515 = vld [vmem:[#allocation2 + $0x410] sm:$0xff]
  %v2516 = vld [vmem:[#allocation2 + $0x418] sm:$0xff]
  %v2517 = vld [vmem:[#allocation2 + $0x420] sm:$0xff]
  %v2518 = vld [vmem:[#allocation2 + $0x428] sm:$0xff]
  %v2519 = vld [vmem:[#allocation2 + $0x430] sm:$0xff]
  %v2520 = vld [vmem:[#allocation2 + $0x438] sm:$0xff]
  %v2521 = vld [vmem:[#allocation2 + $0x440] sm:$0xff]
  %v2522 = vld [vmem:[#allocation2 + $0x448] sm:$0xff]
  %v2523 = vld [vmem:[#allocation2 + $0x450] sm:$0xff]
  %v2524 = vld [vmem:[#allocation2 + $0x458] sm:$0xff]
  %v2525 = vld [vmem:[#allocation2 + $0x460] sm:$0xff]
  %v2526 = vld [vmem:[#allocation2 + $0x468] sm:$0xff]
  %v2527 = vld [vmem:[#allocation2 + $0x470] sm:$0xff]
  %v2528 = vld [vmem:[#allocation2 + $0x478] sm:$0xff]
  %v2529 = vld [vmem:[#allocation2 + $0x480] sm:$0xff]
  %v2530 = vld [vmem:[#allocation2 + $0x488] sm:$0xff]
  %v2531 = vld [vmem:[#allocation2 + $0x490] sm:$0xff]
  %v2532 = vld [vmem:[#allocation2 + $0x498] sm:$0xff]
  %v2533 = vld [vmem:[#allocation2 + $0x4a0] sm:$0xff]
  %v2534 = vld [vmem:[#allocation2 + $0x4a8] sm:$0xff]
  %v2535 = vld [vmem:[#allocation2 + $0x4b0] sm:$0xff]
  %v2536 = vld [vmem:[#allocation2 + $0x4b8] sm:$0xff]
  %v2537 = vld [vmem:[#allocation2 + $0x4c0] sm:$0xff]
  %v2538 = vld [vmem:[#allocation2 + $0x4c8] sm:$0xff]
  %v2539 = vld [vmem:[#allocation2 + $0x4d0] sm:$0xff]
  %v2540 = vld [vmem:[#allocation2 + $0x4d8] sm:$0xff]
  %v2541 = vld [vmem:[#allocation2 + $0x4e0] sm:$0xff]
  %v2542 = vld [vmem:[#allocation2 + $0x4e8] sm:$0xff]
  %v2543 = vld [vmem:[#allocation2 + $0x4f0] sm:$0xff]
  %v2544 = vld [vmem:[#allocation2 + $0x4f8] sm:$0xff]
  %v2545 = vld [vmem:[#allocation2 + $0x500] sm:$0xff]
  %v2546 = vld [vmem:[#allocation2 + $0x508] sm:$0xff]
  %v2547 = vld [vmem:[#allocation2 + $0x510] sm:$0xff]
  %v2548 = vld [vmem:[#allocation2 + $0x518] sm:$0xff]
  %v2549 = vld [vmem:[#allocation2 + $0x520] sm:$0xff]
  %v2550 = vld [vmem:[#allocation2 + $0x528] sm:$0xff]
  %v2551 = vld [vmem:[#allocation2 + $0x530] sm:$0xff]
  %v2552 = vld [vmem:[#allocation2 + $0x538] sm:$0xff]
  %v2553 = vld [vmem:[#allocation2 + $0x540] sm:$0xff]
  %v2554 = vld [vmem:[#allocation2 + $0x548] sm:$0xff]
  %v2555 = vld [vmem:[#allocation2 + $0x550] sm:$0xff]
  %v2556 = vld [vmem:[#allocation2 + $0x558] sm:$0xff]
  %v2557 = vld [vmem:[#allocation2 + $0x560] sm:$0xff]
  %v2558 = vld [vmem:[#allocation2 + $0x568] sm:$0xff]
  %v2559 = vld [vmem:[#allocation2 + $0x570] sm:$0xff]
  %v2560 = vld [vmem:[#allocation2 + $0x578] sm:$0xff]
  %v2561 = vld [vmem:[#allocation2 + $0x580] sm:$0xff]
  %v2562 = vld [vmem:[#allocation2 + $0x588] sm:$0xff]
  %v2563 = vld [vmem:[#allocation2 + $0x590] sm:$0xff]
  %v2564 = vld [vmem:[#allocation2 + $0x598] sm:$0xff]
  %v2565 = vld [vmem:[#allocation2 + $0x5a0] sm:$0xff]
  %v2566 = vld [vmem:[#allocation2 + $0x5a8] sm:$0xff]
  %v2567 = vld [vmem:[#allocation2 + $0x5b0] sm:$0xff]
  %v2568 = vld [vmem:[#allocation2 + $0x5b8] sm:$0xff]
  %v2569 = vld [vmem:[#allocation2 + $0x5c0] sm:$0xff]
  %v2570 = vld [vmem:[#allocation2 + $0x5c8] sm:$0xff]
  %v2571 = vld [vmem:[#allocation2 + $0x5d0] sm:$0xff]
  %v2572 = vld [vmem:[#allocation2 + $0x5d8] sm:$0xff]
  %v2573 = vld [vmem:[#allocation2 + $0x5e0] sm:$0xff]
  %v2574 = vld [vmem:[#allocation2 + $0x5e8] sm:$0xff]
  %v2575 = vld [vmem:[#allocation2 + $0x5f0] sm:$0xff]
  %v2576 = vld [vmem:[#allocation2 + $0x5f8] sm:$0xff]
  %v2577 = vld [vmem:[#allocation2 + $0x600] sm:$0xff]
  %v2578 = vld [vmem:[#allocation2 + $0x608] sm:$0xff]
  %v2579 = vld [vmem:[#allocation2 + $0x610] sm:$0xff]
  %v2580 = vld [vmem:[#allocation2 + $0x618] sm:$0xff]
  %v2581 = vld [vmem:[#allocation2 + $0x620] sm:$0xff]
  %v2582 = vld [vmem:[#allocation2 + $0x628] sm:$0xff]
  %v2583 = vld [vmem:[#allocation2 + $0x630] sm:$0xff]
  %v2584 = vld [vmem:[#allocation2 + $0x638] sm:$0xff]
  %v2585 = vld [vmem:[#allocation2 + $0x640] sm:$0xff]
  %v2586 = vld [vmem:[#allocation2 + $0x648] sm:$0xff]
  %v2587 = vld [vmem:[#allocation2 + $0x650] sm:$0xff]
  %v2588 = vld [vmem:[#allocation2 + $0x658] sm:$0xff]
  %v2589 = vld [vmem:[#allocation2 + $0x660] sm:$0xff]
  %v2590 = vld [vmem:[#allocation2 + $0x668] sm:$0xff]
  %v2591 = vld [vmem:[#allocation2 + $0x670] sm:$0xff]
  %v2592 = vld [vmem:[#allocation2 + $0x678] sm:$0xff]
  %v2593 = vld [vmem:[#allocation2 + $0x680] sm:$0xff]
  %v2594 = vld [vmem:[#allocation2 + $0x688] sm:$0xff]
  %v2595 = vld [vmem:[#allocation2 + $0x690] sm:$0xff]
  %v2596 = vld [vmem:[#allocation2 + $0x698] sm:$0xff]
  %v2597 = vld [vmem:[#allocation2 + $0x6a0] sm:$0xff]
  %v2598 = vld [vmem:[#allocation2 + $0x6a8] sm:$0xff]
  %v2599 = vld [vmem:[#allocation2 + $0x6b0] sm:$0xff]
  %v2600 = vld [vmem:[#allocation2 + $0x6b8] sm:$0xff]
  %v2601 = vld [vmem:[#allocation2 + $0x6c0] sm:$0xff]
  %v2602 = vld [vmem:[#allocation2 + $0x6c8] sm:$0xff]
  %v2603 = vld [vmem:[#allocation2 + $0x6d0] sm:$0xff]
  %v2604 = vld [vmem:[#allocation2 + $0x6d8] sm:$0xff]
  %v2605 = vld [vmem:[#allocation2 + $0x6e0] sm:$0xff]
  %v2606 = vld [vmem:[#allocation2 + $0x6e8] sm:$0xff]
  %v2607 = vld [vmem:[#allocation2 + $0x6f0] sm:$0xff]
  %v2608 = vld [vmem:[#allocation2 + $0x6f8] sm:$0xff]
  %v2609 = vld [vmem:[#allocation2 + $0x700] sm:$0xff]
  %v2610 = vld [vmem:[#allocation2 + $0x708] sm:$0xff]
  %v2611 = vld [vmem:[#allocation2 + $0x710] sm:$0xff]
  %v2612 = vld [vmem:[#allocation2 + $0x718] sm:$0xff]
  %v2613 = vld [vmem:[#allocation2 + $0x720] sm:$0xff]
  %v2614 = vld [vmem:[#allocation2 + $0x728] sm:$0xff]
  %v2615 = vld [vmem:[#allocation2 + $0x730] sm:$0xff]
  %v2616 = vld [vmem:[#allocation2 + $0x738] sm:$0xff]
  %v2617 = vld [vmem:[#allocation2 + $0x740] sm:$0xff]
  %v2618 = vld [vmem:[#allocation2 + $0x748] sm:$0xff]
  %v2619 = vld [vmem:[#allocation2 + $0x750] sm:$0xff]
  %v2620 = vld [vmem:[#allocation2 + $0x758] sm:$0xff]
  %v2621 = vld [vmem:[#allocation2 + $0x760] sm:$0xff]
  %v2622 = vld [vmem:[#allocation2 + $0x768] sm:$0xff]
  %v2623 = vld [vmem:[#allocation2 + $0x770] sm:$0xff]
  %v2624 = vld [vmem:[#allocation2 + $0x778] sm:$0xff]
  %v2625 = vld [vmem:[#allocation2 + $0x780] sm:$0xff]
  %v2626 = vld [vmem:[#allocation2 + $0x788] sm:$0xff]
  %v2627 = vld [vmem:[#allocation2 + $0x790] sm:$0xff]
  %v2628 = vld [vmem:[#allocation2 + $0x798] sm:$0xff]
  %v2629 = vld [vmem:[#allocation2 + $0x7a0] sm:$0xff]
  %v2630 = vld [vmem:[#allocation2 + $0x7a8] sm:$0xff]
  %v2631 = vld [vmem:[#allocation2 + $0x7b0] sm:$0xff]
  %v2632 = vld [vmem:[#allocation2 + $0x7b8] sm:$0xff]
  %v2633 = vld [vmem:[#allocation2 + $0x7c0] sm:$0xff]
  %v2634 = vld [vmem:[#allocation2 + $0x7c8] sm:$0xff]
  %v2635 = vld [vmem:[#allocation2 + $0x7d0] sm:$0xff]
  %v2636 = vld [vmem:[#allocation2 + $0x7d8] sm:$0xff]
  %v2637 = vld [vmem:[#allocation2 + $0x7e0] sm:$0xff]
  %v2638 = vld [vmem:[#allocation2 + $0x7e8] sm:$0xff]
  %v2639 = vld [vmem:[#allocation2 + $0x7f0] sm:$0xff]
  %v2640 = vld [vmem:[#allocation2 + $0x7f8] sm:$0xff]
  %v2641 = vld [vmem:[#allocation2 + $0x800] sm:$0xff]
  %v2642 = vld [vmem:[#allocation2 + $0x808] sm:$0xff]
  %v2643 = vld [vmem:[#allocation2 + $0x810] sm:$0xff]
  %v2644 = vld [vmem:[#allocation2 + $0x818] sm:$0xff]
  %v2645 = vld [vmem:[#allocation2 + $0x820] sm:$0xff]
  %v2646 = vld [vmem:[#allocation2 + $0x828] sm:$0xff]
  %v2647 = vld [vmem:[#allocation2 + $0x830] sm:$0xff]
  %v2648 = vld [vmem:[#allocation2 + $0x838] sm:$0xff]
  %v2649 = vld [vmem:[#allocation2 + $0x840] sm:$0xff]
  %v2650 = vld [vmem:[#allocation2 + $0x848] sm:$0xff]
  %v2651 = vld [vmem:[#allocation2 + $0x850] sm:$0xff]
  %v2652 = vld [vmem:[#allocation2 + $0x858] sm:$0xff]
  %v2653 = vld [vmem:[#allocation2 + $0x860] sm:$0xff]
  %v2654 = vld [vmem:[#allocation2 + $0x868] sm:$0xff]
  %v2655 = vld [vmem:[#allocation2 + $0x870] sm:$0xff]
  %v2656 = vld [vmem:[#allocation2 + $0x878] sm:$0xff]
  %v2657 = vld [vmem:[#allocation2 + $0x880] sm:$0xff]
  %v2658 = vld [vmem:[#allocation2 + $0x888] sm:$0xff]
  %v2659 = vld [vmem:[#allocation2 + $0x890] sm:$0xff]
  %v2660 = vld [vmem:[#allocation2 + $0x898] sm:$0xff]
  %v2661 = vld [vmem:[#allocation2 + $0x8a0] sm:$0xff]
  %v2662 = vld [vmem:[#allocation2 + $0x8a8] sm:$0xff]
  %v2663 = vld [vmem:[#allocation2 + $0x8b0] sm:$0xff]
  %v2664 = vld [vmem:[#allocation2 + $0x8b8] sm:$0xff]
  %v2665 = vld [vmem:[#allocation2 + $0x8c0] sm:$0xff]
  %v2666 = vld [vmem:[#allocation2 + $0x8c8] sm:$0xff]
  %v2667 = vld [vmem:[#allocation2 + $0x8d0] sm:$0xff]
  %v2668 = vld [vmem:[#allocation2 + $0x8d8] sm:$0xff]
  %v2669 = vld [vmem:[#allocation2 + $0x8e0] sm:$0xff]
  %v2670 = vld [vmem:[#allocation2 + $0x8e8] sm:$0xff]
  %v2671 = vld [vmem:[#allocation2 + $0x8f0] sm:$0xff]
  %v2672 = vld [vmem:[#allocation2 + $0x8f8] sm:$0xff]
  %v2673 = vld [vmem:[%s2] sm:$0xf]
  %v2674 = vld [vmem:[%s2 + $0x4] sm:$0xf]
  %v2675 = vld [vmem:[%s2 + $0x8] sm:$0xf]
  %v2676 = vld [vmem:[%s2 + $0xc] sm:$0xf]
  %v2677 = vld [vmem:[%s2 + $0x10] sm:$0xf]
  %v2678 = vld [vmem:[%s2 + $0x14] sm:$0xf]
  %v2679 = vld [vmem:[%s2 + $0x18] sm:$0xf]
  %v2680 = vld [vmem:[%s2 + $0x1c] sm:$0xf]
  %v2681 = vld [vmem:[%s2 + $0x20] sm:$0xf]
  %v2682 = vld [vmem:[%s2 + $0x24] sm:$0xf]
  %v2683 = vld [vmem:[%s2 + $0x28] sm:$0xf]
  %v2684 = vld [vmem:[%s2 + $0x2c] sm:$0xf]
  %v2685 = vld [vmem:[%s2 + $0x30] sm:$0xf]
  %v2686 = vld [vmem:[%s2 + $0x34] sm:$0xf]
  %v2687 = vld [vmem:[%s2 + $0x38] sm:$0xf]
  %v2688 = vld [vmem:[%s2 + $0x3c] sm:$0xf]
  %v2689 = vld [vmem:[%s2 + $0x40] sm:$0xf]
  %v2690 = vld [vmem:[%s2 + $0x44] sm:$0xf]
  %v2691 = vld [vmem:[%s2 + $0x48] sm:$0xf]
  %v2692 = vld [vmem:[%s2 + $0x4c] sm:$0xf]
  %v2693 = vld [vmem:[%s2 + $0x50] sm:$0xf]
  %v2694 = vld [vmem:[%s2 + $0x54] sm:$0xf]
  %v2695 = vld [vmem:[%s2 + $0x58] sm:$0xf]
  %v2696 = vld [vmem:[%s2 + $0x5c] sm:$0xf]
  %v2697 = vld [vmem:[%s2 + $0x60] sm:$0xf]
  %v2698 = vld [vmem:[%s2 + $0x64] sm:$0xf]
  %v2699 = vld [vmem:[%s2 + $0x68] sm:$0xf]
  %v2700 = vld [vmem:[%s2 + $0x6c] sm:$0xf]
  %v2701 = vld [vmem:[%s2 + $0x70] sm:$0xf]
  %v2702 = vld [vmem:[%s2 + $0x74] sm:$0xf]
  %v2703 = vld [vmem:[%s2 + $0x78] sm:$0xf]
  %v2704 = vld [vmem:[%s2 + $0x7c] sm:$0xf]
  %v2705 = vld [vmem:[%s2 + $0x80] sm:$0xf]
  %v2706 = vld [vmem:[%s2 + $0x84] sm:$0xf]
  %v2707 = vld [vmem:[%s2 + $0x88] sm:$0xf]
  %v2708 = vld [vmem:[%s2 + $0x8c] sm:$0xf]
  %v2709 = vld [vmem:[%s2 + $0x90] sm:$0xf]
  %v2710 = vld [vmem:[%s2 + $0x94] sm:$0xf]
  %v2711 = vld [vmem:[%s2 + $0x98] sm:$0xf]
  %v2712 = vld [vmem:[%s2 + $0x9c] sm:$0xf]
  %v2713 = vld [vmem:[%s2 + $0xa0] sm:$0xf]
  %v2714 = vld [vmem:[%s2 + $0xa4] sm:$0xf]
  %v2715 = vld [vmem:[%s2 + $0xa8] sm:$0xf]
  %v2716 = vld [vmem:[%s2 + $0xac] sm:$0xf]
  %v2717 = vld [vmem:[%s2 + $0xb0] sm:$0xf]
  %v2718 = vld [vmem:[%s2 + $0xb4] sm:$0xf]
  %v2719 = vld [vmem:[%s2 + $0xb8] sm:$0xf]
  %v2720 = vld [vmem:[%s2 + $0xbc] sm:$0xf]
  %v2721 = vld [vmem:[%s2 + $0xc0] sm:$0xf]
  %v2722 = vld [vmem:[%s2 + $0xc4] sm:$0xf]
  %v2723 = vld [vmem:[%s2 + $0xc8] sm:$0xf]
  %v2724 = vld [vmem:[%s2 + $0xcc] sm:$0xf]
  %v2725 = vld [vmem:[%s2 + $0xd0] sm:$0xf]
  %v2726 = vld [vmem:[%s2 + $0xd4] sm:$0xf]
  %v2727 = vld [vmem:[%s2 + $0xd8] sm:$0xf]
  %v2728 = vld [vmem:[%s2 + $0xdc] sm:$0xf]
  %v2729 = vld [vmem:[%s2 + $0xe0] sm:$0xf]
  %v2730 = vld [vmem:[%s2 + $0xe4] sm:$0xf]
  %v2731 = vld [vmem:[%s2 + $0xe8] sm:$0xf]
  %v2732 = vld [vmem:[%s2 + $0xec] sm:$0xf]
  %v2733 = vld [vmem:[%s2 + $0xf0] sm:$0xf]
  %v2734 = vld [vmem:[%s2 + $0xf4] sm:$0xf]
  %v2735 = vld [vmem:[%s2 + $0xf8] sm:$0xf]
  %v2736 = vld [vmem:[%s2 + $0xfc] sm:$0xf]
  %v2737 = vld [vmem:[%s2 + $0x100] sm:$0xf]
  %v2738 = vld [vmem:[%s2 + $0x104] sm:$0xf]
  %v2739 = vld [vmem:[%s2 + $0x108] sm:$0xf]
  %v2740 = vld [vmem:[%s2 + $0x10c] sm:$0xf]
  %v2741 = vld [vmem:[%s2 + $0x110] sm:$0xf]
  %v2742 = vld [vmem:[%s2 + $0x114] sm:$0xf]
  %v2743 = vld [vmem:[%s2 + $0x118] sm:$0xf]
  %v2744 = vld [vmem:[%s2 + $0x11c] sm:$0xf]
  %v2745 = vld [vmem:[%s2 + $0x120] sm:$0xf]
  %v2746 = vld [vmem:[%s2 + $0x124] sm:$0xf]
  %v2747 = vld [vmem:[%s2 + $0x128] sm:$0xf]
  %v2748 = vld [vmem:[%s2 + $0x12c] sm:$0xf]
  %v2749 = vld [vmem:[%s2 + $0x130] sm:$0xf]
  %v2750 = vld [vmem:[%s2 + $0x134] sm:$0xf]
  %v2751 = vld [vmem:[%s2 + $0x138] sm:$0xf]
  %v2752 = vld [vmem:[%s2 + $0x13c] sm:$0xf]
  %v2753 = vld [vmem:[%s2 + $0x140] sm:$0xf]
  %v2754 = vld [vmem:[%s2 + $0x144] sm:$0xf]
  %v2755 = vld [vmem:[%s2 + $0x148] sm:$0xf]
  %v2756 = vld [vmem:[%s2 + $0x14c] sm:$0xf]
  %v2757 = vld [vmem:[%s2 + $0x150] sm:$0xf]
  %v2758 = vld [vmem:[%s2 + $0x154] sm:$0xf]
  %v2759 = vld [vmem:[%s2 + $0x158] sm:$0xf]
  %v2760 = vld [vmem:[%s2 + $0x15c] sm:$0xf]
  %v2761 = vld [vmem:[%s2 + $0x160] sm:$0xf]
  %v2762 = vld [vmem:[%s2 + $0x164] sm:$0xf]
  %v2763 = vld [vmem:[%s2 + $0x168] sm:$0xf]
  %v2764 = vld [vmem:[%s2 + $0x16c] sm:$0xf]
  %v2765 = vld [vmem:[%s2 + $0x170] sm:$0xf]
  %v2766 = vld [vmem:[%s2 + $0x174] sm:$0xf]
  %v2767 = vld [vmem:[%s2 + $0x178] sm:$0xf]
  %v2768 = vld [vmem:[%s2 + $0x17c] sm:$0xf]
  %v2769 = vld [vmem:[%s2 + $0x180] sm:$0xf]
  %v2770 = vld [vmem:[%s2 + $0x184] sm:$0xf]
  %v2771 = vld [vmem:[%s2 + $0x188] sm:$0xf]
  %v2772 = vld [vmem:[%s2 + $0x18c] sm:$0xf]
  %v2773 = vld [vmem:[%s2 + $0x190] sm:$0xf]
  %v2774 = vld [vmem:[%s2 + $0x194] sm:$0xf]
  %v2775 = vld [vmem:[%s2 + $0x198] sm:$0xf]
  %v2776 = vld [vmem:[%s2 + $0x19c] sm:$0xf]
  %v2777 = vld [vmem:[%s2 + $0x1a0] sm:$0xf]
  %v2778 = vld [vmem:[%s2 + $0x1a4] sm:$0xf]
  %v2779 = vld [vmem:[%s2 + $0x1a8] sm:$0xf]
  %v2780 = vld [vmem:[%s2 + $0x1ac] sm:$0xf]
  %v2781 = vld [vmem:[%s2 + $0x1b0] sm:$0xf]
  %v2782 = vld [vmem:[%s2 + $0x1b4] sm:$0xf]
  %v2783 = vld [vmem:[%s2 + $0x1b8] sm:$0xf]
  %v2784 = vld [vmem:[%s2 + $0x1bc] sm:$0xf]
  %v2785 = vld [vmem:[%s2 + $0x1c0] sm:$0xf]
  %v2786 = vld [vmem:[%s2 + $0x1c4] sm:$0xf]
  %v2787 = vld [vmem:[%s2 + $0x1c8] sm:$0xf]
  %v2788 = vld [vmem:[%s2 + $0x1cc] sm:$0xf]
  %v2789 = vld [vmem:[%s2 + $0x1d0] sm:$0xf]
  %v2790 = vld [vmem:[%s2 + $0x1d4] sm:$0xf]
  %v2791 = vld [vmem:[%s2 + $0x1d8] sm:$0xf]
  %v2792 = vld [vmem:[%s2 + $0x1dc] sm:$0xf]
  %v2793 = vld [vmem:[%s2 + $0x1e0] sm:$0xf]
  %v2794 = vld [vmem:[%s2 + $0x1e4] sm:$0xf]
  %v2795 = vld [vmem:[%s2 + $0x1e8] sm:$0xf]
  %v2796 = vld [vmem:[%s2 + $0x1ec] sm:$0xf]
  %v2797 = vld [vmem:[%s2 + $0x1f0] sm:$0xf]
  %v2798 = vld [vmem:[%s2 + $0x1f4] sm:$0xf]
  %v2799 = vld [vmem:[%s2 + $0x1f8] sm:$0xf]
  %v2800 = vld [vmem:[%s2 + $0x1fc] sm:$0xf]
  %v2801 = vld [vmem:[%s2 + $0x200] sm:$0xf]
  %v2802 = vld [vmem:[%s2 + $0x204] sm:$0xf]
  %v2803 = vld [vmem:[%s2 + $0x208] sm:$0xf]
  %v2804 = vld [vmem:[%s2 + $0x20c] sm:$0xf]
  %v2805 = vld [vmem:[%s2 + $0x210] sm:$0xf]
  %v2806 = vld [vmem:[%s2 + $0x214] sm:$0xf]
  %v2807 = vld [vmem:[%s2 + $0x218] sm:$0xf]
  %v2808 = vld [vmem:[%s2 + $0x21c] sm:$0xf]
  %v2809 = vld [vmem:[%s2 + $0x220] sm:$0xf]
  %v2810 = vld [vmem:[%s2 + $0x224] sm:$0xf]
  %v2811 = vld [vmem:[%s2 + $0x228] sm:$0xf]
  %v2812 = vld [vmem:[%s2 + $0x22c] sm:$0xf]
  %v2813 = vld [vmem:[%s2 + $0x230] sm:$0xf]
  %v2814 = vld [vmem:[%s2 + $0x234] sm:$0xf]
  %v2815 = vld [vmem:[%s2 + $0x238] sm:$0xf]
  %v2816 = vld [vmem:[%s2 + $0x23c] sm:$0xf]
  %v2961 = vunpack.c.l.b16 %v2673
  %v2962 = vunpack.c.l.b16 %v2674
  %v2963 = vunpack.c.l.b16 %v2675
  %v2964 = vunpack.c.l.b16 %v2676
  %v2965 = vunpack.c.l.b16 %v2677
  %v2966 = vunpack.c.l.b16 %v2678
  %v2967 = vunpack.c.l.b16 %v2679
  %v2968 = vunpack.c.l.b16 %v2680
  %v2969 = vunpack.c.l.b16 %v2681
  %v2970 = vunpack.c.l.b16 %v2682
  %v2971 = vunpack.c.l.b16 %v2683
  %v2972 = vunpack.c.l.b16 %v2684
  %v2973 = vunpack.c.l.b16 %v2685
  %v2974 = vunpack.c.l.b16 %v2686
  %v2975 = vunpack.c.l.b16 %v2687
  %v2976 = vunpack.c.l.b16 %v2688
  %v2977 = vunpack.c.l.b16 %v2689
  %v2978 = vunpack.c.l.b16 %v2690
  %v2979 = vunpack.c.l.b16 %v2691
  %v2980 = vunpack.c.l.b16 %v2692
  %v2981 = vunpack.c.l.b16 %v2693
  %v2982 = vunpack.c.l.b16 %v2694
  %v2983 = vunpack.c.l.b16 %v2695
  %v2984 = vunpack.c.l.b16 %v2696
  %v2985 = vunpack.c.l.b16 %v2697
  %v2986 = vunpack.c.l.b16 %v2698
  %v2987 = vunpack.c.l.b16 %v2699
  %v2988 = vunpack.c.l.b16 %v2700
  %v2989 = vunpack.c.l.b16 %v2701
  %v2990 = vunpack.c.l.b16 %v2702
  %v2991 = vunpack.c.l.b16 %v2703
  %v2992 = vunpack.c.l.b16 %v2704
  %v2993 = vunpack.c.l.b16 %v2705
  %v2994 = vunpack.c.l.b16 %v2706
  %v2995 = vunpack.c.l.b16 %v2707
  %v2996 = vunpack.c.l.b16 %v2708
  %v2997 = vunpack.c.l.b16 %v2709
  %v2998 = vunpack.c.l.b16 %v2710
  %v2999 = vunpack.c.l.b16 %v2711
  %v3000 = vunpack.c.l.b16 %v2712
  %v3001 = vunpack.c.l.b16 %v2713
  %v3002 = vunpack.c.l.b16 %v2714
  %v3003 = vunpack.c.l.b16 %v2715
  %v3004 = vunpack.c.l.b16 %v2716
  %v3005 = vunpack.c.l.b16 %v2717
  %v3006 = vunpack.c.l.b16 %v2718
  %v3007 = vunpack.c.l.b16 %v2719
  %v3008 = vunpack.c.l.b16 %v2720
  %v3009 = vunpack.c.l.b16 %v2721
  %v3010 = vunpack.c.l.b16 %v2722
  %v3011 = vunpack.c.l.b16 %v2723
  %v3012 = vunpack.c.l.b16 %v2724
  %v3013 = vunpack.c.l.b16 %v2725
  %v3014 = vunpack.c.l.b16 %v2726
  %v3015 = vunpack.c.l.b16 %v2727
  %v3016 = vunpack.c.l.b16 %v2728
  %v3017 = vunpack.c.l.b16 %v2729
  %v3018 = vunpack.c.l.b16 %v2730
  %v3019 = vunpack.c.l.b16 %v2731
  %v3020 = vunpack.c.l.b16 %v2732
  %v3021 = vunpack.c.l.b16 %v2733
  %v3022 = vunpack.c.l.b16 %v2734
  %v3023 = vunpack.c.l.b16 %v2735
  %v3024 = vunpack.c.l.b16 %v2736
  %v3025 = vunpack.c.l.b16 %v2737
  %v3026 = vunpack.c.l.b16 %v2738
  %v3027 = vunpack.c.l.b16 %v2739
  %v3028 = vunpack.c.l.b16 %v2740
  %v3029 = vunpack.c.l.b16 %v2741
  %v3030 = vunpack.c.l.b16 %v2742
  %v3031 = vunpack.c.l.b16 %v2743
  %v3032 = vunpack.c.l.b16 %v2744
  %v3033 = vunpack.c.l.b16 %v2745
  %v3034 = vunpack.c.l.b16 %v2746
  %v3035 = vunpack.c.l.b16 %v2747
  %v3036 = vunpack.c.l.b16 %v2748
  %v3037 = vunpack.c.l.b16 %v2749
  %v3038 = vunpack.c.l.b16 %v2750
  %v3039 = vunpack.c.l.b16 %v2751
  %v3040 = vunpack.c.l.b16 %v2752
  %v3041 = vunpack.c.l.b16 %v2753
  %v3042 = vunpack.c.l.b16 %v2754
  %v3043 = vunpack.c.l.b16 %v2755
  %v3044 = vunpack.c.l.b16 %v2756
  %v3045 = vunpack.c.l.b16 %v2757
  %v3046 = vunpack.c.l.b16 %v2758
  %v3047 = vunpack.c.l.b16 %v2759
  %v3048 = vunpack.c.l.b16 %v2760
  %v3049 = vunpack.c.l.b16 %v2761
  %v3050 = vunpack.c.l.b16 %v2762
  %v3051 = vunpack.c.l.b16 %v2763
  %v3052 = vunpack.c.l.b16 %v2764
  %v3053 = vunpack.c.l.b16 %v2765
  %v3054 = vunpack.c.l.b16 %v2766
  %v3055 = vunpack.c.l.b16 %v2767
  %v3056 = vunpack.c.l.b16 %v2768
  %v3057 = vunpack.c.l.b16 %v2769
  %v3058 = vunpack.c.l.b16 %v2770
  %v3059 = vunpack.c.l.b16 %v2771
  %v3060 = vunpack.c.l.b16 %v2772
  %v3061 = vunpack.c.l.b16 %v2773
  %v3062 = vunpack.c.l.b16 %v2774
  %v3063 = vunpack.c.l.b16 %v2775
  %v3064 = vunpack.c.l.b16 %v2776
  %v3065 = vunpack.c.l.b16 %v2777
  %v3066 = vunpack.c.l.b16 %v2778
  %v3067 = vunpack.c.l.b16 %v2779
  %v3068 = vunpack.c.l.b16 %v2780
  %v3069 = vunpack.c.l.b16 %v2781
  %v3070 = vunpack.c.l.b16 %v2782
  %v3071 = vunpack.c.l.b16 %v2783
  %v3072 = vunpack.c.l.b16 %v2784
  %v3073 = vunpack.c.l.b16 %v2785
  %v3074 = vunpack.c.l.b16 %v2786
  %v3075 = vunpack.c.l.b16 %v2787
  %v3076 = vunpack.c.l.b16 %v2788
  %v3077 = vunpack.c.l.b16 %v2789
  %v3078 = vunpack.c.l.b16 %v2790
  %v3079 = vunpack.c.l.b16 %v2791
  %v3080 = vunpack.c.l.b16 %v2792
  %v3081 = vunpack.c.l.b16 %v2793
  %v3082 = vunpack.c.l.b16 %v2794
  %v3083 = vunpack.c.l.b16 %v2795
  %v3084 = vunpack.c.l.b16 %v2796
  %v3085 = vunpack.c.l.b16 %v2797
  %v3086 = vunpack.c.l.b16 %v2798
  %v3087 = vunpack.c.l.b16 %v2799
  %v3088 = vunpack.c.l.b16 %v2800
  %v3089 = vunpack.c.l.b16 %v2801
  %v3090 = vunpack.c.l.b16 %v2802
  %v3091 = vunpack.c.l.b16 %v2803
  %v3092 = vunpack.c.l.b16 %v2804
  %v3093 = vunpack.c.l.b16 %v2805
  %v3094 = vunpack.c.l.b16 %v2806
  %v3095 = vunpack.c.l.b16 %v2807
  %v3096 = vunpack.c.l.b16 %v2808
  %v3097 = vunpack.c.l.b16 %v2809
  %v3098 = vunpack.c.l.b16 %v2810
  %v3099 = vunpack.c.l.b16 %v2811
  %v3100 = vunpack.c.l.b16 %v2812
  %v3101 = vunpack.c.l.b16 %v2813
  %v3102 = vunpack.c.l.b16 %v2814
  %v3103 = vunpack.c.l.b16 %v2815
  %v3104 = vunpack.c.l.b16 %v2816
  %v3105 = vpack.c.b16 %v2962, %v2961
  %v3106 = vpack.c.b16 %v2964, %v2963
  %v3107 = vpack.c.b16 %v2966, %v2965
  %v3108 = vpack.c.b16 %v2968, %v2967
  %v3109 = vpack.c.b16 %v2970, %v2969
  %v3110 = vpack.c.b16 %v2972, %v2971
  %v3111 = vpack.c.b16 %v2974, %v2973
  %v3112 = vpack.c.b16 %v2976, %v2975
  %v3113 = vpack.c.b16 %v2978, %v2977
  %v3114 = vpack.c.b16 %v2980, %v2979
  %v3115 = vpack.c.b16 %v2982, %v2981
  %v3116 = vpack.c.b16 %v2984, %v2983
  %v3117 = vpack.c.b16 %v2986, %v2985
  %v3118 = vpack.c.b16 %v2988, %v2987
  %v3119 = vpack.c.b16 %v2990, %v2989
  %v3120 = vpack.c.b16 %v2992, %v2991
  %v3121 = vpack.c.b16 %v2994, %v2993
  %v3122 = vpack.c.b16 %v2996, %v2995
  %v3123 = vpack.c.b16 %v2998, %v2997
  %v3124 = vpack.c.b16 %v3000, %v2999
  %v3125 = vpack.c.b16 %v3002, %v3001
  %v3126 = vpack.c.b16 %v3004, %v3003
  %v3127 = vpack.c.b16 %v3006, %v3005
  %v3128 = vpack.c.b16 %v3008, %v3007
  %v3129 = vpack.c.b16 %v3010, %v3009
  %v3130 = vpack.c.b16 %v3012, %v3011
  %v3131 = vpack.c.b16 %v3014, %v3013
  %v3132 = vpack.c.b16 %v3016, %v3015
  %v3133 = vpack.c.b16 %v3018, %v3017
  %v3134 = vpack.c.b16 %v3020, %v3019
  %v3135 = vpack.c.b16 %v3022, %v3021
  %v3136 = vpack.c.b16 %v3024, %v3023
  %v3137 = vpack.c.b16 %v3026, %v3025
  %v3138 = vpack.c.b16 %v3028, %v3027
  %v3139 = vpack.c.b16 %v3030, %v3029
  %v3140 = vpack.c.b16 %v3032, %v3031
  %v3141 = vpack.c.b16 %v3034, %v3033
  %v3142 = vpack.c.b16 %v3036, %v3035
  %v3143 = vpack.c.b16 %v3038, %v3037
  %v3144 = vpack.c.b16 %v3040, %v3039
  %v3145 = vpack.c.b16 %v3042, %v3041
  %v3146 = vpack.c.b16 %v3044, %v3043
  %v3147 = vpack.c.b16 %v3046, %v3045
  %v3148 = vpack.c.b16 %v3048, %v3047
  %v3149 = vpack.c.b16 %v3050, %v3049
  %v3150 = vpack.c.b16 %v3052, %v3051
  %v3151 = vpack.c.b16 %v3054, %v3053
  %v3152 = vpack.c.b16 %v3056, %v3055
  %v3153 = vpack.c.b16 %v3058, %v3057
  %v3154 = vpack.c.b16 %v3060, %v3059
  %v3155 = vpack.c.b16 %v3062, %v3061
  %v3156 = vpack.c.b16 %v3064, %v3063
  %v3157 = vpack.c.b16 %v3066, %v3065
  %v3158 = vpack.c.b16 %v3068, %v3067
  %v3159 = vpack.c.b16 %v3070, %v3069
  %v3160 = vpack.c.b16 %v3072, %v3071
  %v3161 = vpack.c.b16 %v3074, %v3073
  %v3162 = vpack.c.b16 %v3076, %v3075
  %v3163 = vpack.c.b16 %v3078, %v3077
  %v3164 = vpack.c.b16 %v3080, %v3079
  %v3165 = vpack.c.b16 %v3082, %v3081
  %v3166 = vpack.c.b16 %v3084, %v3083
  %v3167 = vpack.c.b16 %v3086, %v3085
  %v3168 = vpack.c.b16 %v3088, %v3087
  %v3169 = vpack.c.b16 %v3090, %v3089
  %v3170 = vpack.c.b16 %v3092, %v3091
  %v3171 = vpack.c.b16 %v3094, %v3093
  %v3172 = vpack.c.b16 %v3096, %v3095
  %v3173 = vpack.c.b16 %v3098, %v3097
  %v3174 = vpack.c.b16 %v3100, %v3099
  %v3175 = vpack.c.b16 %v3102, %v3101
  %v3176 = vpack.c.b16 %v3104, %v3103
  %3249 = vmatprep.subr.bf16.mxu0 0
  %3250 = vmatpush1.bf16.msra.mxu0 %v3105
  %3251 = vmatprep.subr.bf16.mxu0 0
  %3252 = vmatpush1.bf16.msra.mxu0 %v3106
  %3253 = vmatprep.subr.bf16.mxu0 0
  %3254 = vmatpush1.bf16.msra.mxu0 %v3107
  %3255 = vmatprep.subr.bf16.mxu0 0
  %3256 = vmatpush1.bf16.msra.mxu0 %v3108
  %3257 = vmatprep.subr.bf16.mxu0 0
  %3258 = vmatpush1.bf16.msra.mxu0 %v3109
  %3259 = vmatprep.subr.bf16.mxu0 0
  %3260 = vmatpush1.bf16.msra.mxu0 %v3110
  %3261 = vmatprep.subr.bf16.mxu0 0
  %3262 = vmatpush1.bf16.msra.mxu0 %v3111
  %3263 = vmatprep.subr.bf16.mxu0 0
  %3264 = vmatpush1.bf16.msra.mxu0 %v3112
  %3265 = vmatprep.subr.bf16.mxu0 0
  %3266 = vmatpush1.bf16.msra.mxu0 %v3113
  %3267 = vmatprep.subr.bf16.mxu0 0
  %3268 = vmatpush1.bf16.msra.mxu0 %v3114
  %3269 = vmatprep.subr.bf16.mxu0 0
  %3270 = vmatpush1.bf16.msra.mxu0 %v3115
  %3271 = vmatprep.subr.bf16.mxu0 0
  %3272 = vmatpush1.bf16.msra.mxu0 %v3116
  %3273 = vmatprep.subr.bf16.mxu0 0
  %3274 = vmatpush1.bf16.msra.mxu0 %v3117
  %3275 = vmatprep.subr.bf16.mxu0 0
  %3276 = vmatpush1.bf16.msra.mxu0 %v3118
  %3277 = vmatprep.subr.bf16.mxu0 0
  %3278 = vmatpush1.bf16.msra.mxu0 %v3119
  %3279 = vmatprep.subr.bf16.mxu0 0
  %3280 = vmatpush1.bf16.msra.mxu0 %v3120
  %3281 = vmatprep.mubr.bf16.mxu0 %v2386
  %3282 = vmatmul.mubr.bf16.gmra.mrb[0].mxu0 %v2385
  %v3283 = vpop.f32.mrb[0].mxu0
  %v3284 = vadd.f32 0.0, %v3283
  %v3285 = vpop.f32.mrb[0].mxu0
  %v3286 = vpop.f32.mrb[0].mxu0
  %v3287 = vadd.f32 0.0, %v3286
  %v3288 = vpop.f32.mrb[0].mxu0
  %3289 = vmatprep.mubr.bf16.mxu0 %v2395
  %3290 = vmatmul.mubr.bf16.gmra.mrb[0].mxu0 %v2394
  %v3291 = vpop.f32.mrb[0].mxu0
  %v3292 = vadd.f32 0.0, %v3291
  %v3293 = vpop.f32.mrb[0].mxu0
  %v3294 = vpop.f32.mrb[0].mxu0
  %v3295 = vadd.f32 0.0, %v3294
  %v3296 = vpop.f32.mrb[0].mxu0
  %3297 = vmatprep.mubr.bf16.mxu0 %v2404
  %3298 = vmatmul.mubr.bf16.gmra.mrb[0].mxu0 %v2403
  %v3299 = vpop.f32.mrb[0].mxu0
  %v3300 = vadd.f32 0.0, %v3299
  %v3301 = vpop.f32.mrb[0].mxu0
  %v3302 = vpop.f32.mrb[0].mxu0
  %v3303 = vadd.f32 0.0, %v3302
  %v3304 = vpop.f32.mrb[0].mxu0
  %3305 = vmatprep.mubr.bf16.mxu0 %v2413
  %3306 = vmatmul.mubr.bf16.gmra.mrb[0].mxu0 %v2412
  %v3307 = vpop.f32.mrb[0].mxu0
  %v3308 = vadd.f32 0.0, %v3307
  %v3309 = vpop.f32.mrb[0].mxu0
  %v3310 = vpop.f32.mrb[0].mxu0
  %v3311 = vadd.f32 0.0, %v3310
  %v3312 = vpop.f32.mrb[0].mxu0
  %3313 = vmatprep.mubr.bf16.mxu0 %v2422
  %3314 = vmatmul.mubr.bf16.gmra.mrb[0].mxu0 %v2421
  %v3315 = vpop.f32.mrb[0].mxu0
  %v3316 = vadd.f32 0.0, %v3315
  %v3317 = vpop.f32.mrb[0].mxu0
  %v3318 = vpop.f32.mrb[0].mxu0
  %v3319 = vadd.f32 0.0, %v3318
  %v3320 = vpop.f32.mrb[0].mxu0
  %3321 = vmatprep.mubr.bf16.mxu0 %v2431
  %3322 = vmatmul.mubr.bf16.gmra.mrb[0].mxu0 %v2430
  %v3323 = vpop.f32.mrb[0].mxu0
  %v3324 = vadd.f32 0.0, %v3323
  %v3325 = vpop.f32.mrb[0].mxu0
  %v3326 = vpop.f32.mrb[0].mxu0
  %v3327 = vadd.f32 0.0, %v3326
  %v3328 = vpop.f32.mrb[0].mxu0
  %3329 = vmatprep.mubr.bf16.mxu0 %v2440
  %3330 = vmatmul.mubr.bf16.gmra.mrb[0].mxu0 %v2439
  %v3331 = vpop.f32.mrb[0].mxu0
  %v3332 = vadd.f32 0.0, %v3331
  %v3333 = vpop.f32.mrb[0].mxu0
  %v3334 = vpop.f32.mrb[0].mxu0
  %v3335 = vadd.f32 0.0, %v3334
  %v3336 = vpop.f32.mrb[0].mxu0
  %3337 = vmatprep.mubr.bf16.mxu0 %v2449
  %3338 = vmatmul.mubr.bf16.gmra.mrb[0].mxu0 %v2448
  %v3339 = vpop.f32.mrb[0].mxu0
  %v3340 = vadd.f32 0.0, %v3339
  %v3341 = vpop.f32.mrb[0].mxu0
  %v3342 = vpop.f32.mrb[0].mxu0
  %v3343 = vadd.f32 0.0, %v3342
  %v3344 = vpop.f32.mrb[0].mxu0
  %3345 = vmatprep.mubr.bf16.mxu0 %v2458
  %3346 = vmatmul.mubr.bf16.gmra.mrb[0].mxu0 %v2457
  %v3347 = vpop.f32.mrb[0].mxu0
  %v3348 = vadd.f32 0.0, %v3347
  %v3349 = vpop.f32.mrb[0].mxu0
  %v3350 = vpop.f32.mrb[0].mxu0
  %v3351 = vadd.f32 0.0, %v3350
  %v3352 = vpop.f32.mrb[0].mxu0
  %3353 = vmatprep.mubr.bf16.mxu0 %v2467
  %3354 = vmatmul.mubr.bf16.gmra.mrb[0].mxu0 %v2466
  %v3355 = vpop.f32.mrb[0].mxu0
  %v3356 = vadd.f32 0.0, %v3355
  %v3357 = vpop.f32.mrb[0].mxu0
  %v3358 = vpop.f32.mrb[0].mxu0
  %v3359 = vadd.f32 0.0, %v3358
  %v3360 = vpop.f32.mrb[0].mxu0
  %3361 = vmatprep.mubr.bf16.mxu0 %v2476
  %3362 = vmatmul.mubr.bf16.gmra.mrb[0].mxu0 %v2475
  %v3363 = vpop.f32.mrb[0].mxu0
  %v3364 = vadd.f32 0.0, %v3363
  %v3365 = vpop.f32.mrb[0].mxu0
  %v3366 = vpop.f32.mrb[0].mxu0
  %v3367 = vadd.f32 0.0, %v3366
  %v3368 = vpop.f32.mrb[0].mxu0
  %3369 = vmatprep.mubr.bf16.mxu0 %v2485
  %3370 = vmatmul.mubr.bf16.gmra.mrb[0].mxu0 %v2484
  %v3371 = vpop.f32.mrb[0].mxu0
  %v3372 = vadd.f32 0.0, %v3371
  %v3373 = vpop.f32.mrb[0].mxu0
  %v3374 = vpop.f32.mrb[0].mxu0
  %v3375 = vadd.f32 0.0, %v3374
  %v3376 = vpop.f32.mrb[0].mxu0
  %3377 = vmatprep.mubr.bf16.mxu0 %v2494
  %3378 = vmatmul.mubr.bf16.gmra.mrb[0].mxu0 %v2493
  %v3379 = vpop.f32.mrb[0].mxu0
  %v3380 = vadd.f32 0.0, %v3379
  %v3381 = vpop.f32.mrb[0].mxu0
  %v3382 = vpop.f32.mrb[0].mxu0
  %v3383 = vadd.f32 0.0, %v3382
  %v3384 = vpop.f32.mrb[0].mxu0
  %3385 = vmatprep.mubr.bf16.mxu0 %v2503
  %3386 = vmatmul.mubr.bf16.gmra.mrb[0].mxu0 %v2502
  %v3387 = vpop.f32.mrb[0].mxu0
  %v3388 = vadd.f32 0.0, %v3387
  %v3389 = vpop.f32.mrb[0].mxu0
  %v3390 = vpop.f32.mrb[0].mxu0
  %v3391 = vadd.f32 0.0, %v3390
  %v3392 = vpop.f32.mrb[0].mxu0
  %3393 = vmatprep.mubr.bf16.mxu0 %v2512
  %3394 = vmatmul.mubr.bf16.gmra.mrb[0].mxu0 %v2511
  %v3395 = vpop.f32.mrb[0].mxu0
  %v3396 = vadd.f32 0.0, %v3395
  %v3397 = vpop.f32.mrb[0].mxu0
  %v3398 = vpop.f32.mrb[0].mxu0
  %v3399 = vadd.f32 0.0, %v3398
  %v3400 = vpop.f32.mrb[0].mxu0
  %3401 = vmatprep.mubr.bf16.mxu0 %v2521
  %3402 = vmatmul.mubr.bf16.gmra.mrb[0].mxu0 %v2520
  %v3403 = vpop.f32.mrb[0].mxu0
  %v3404 = vadd.f32 0.0, %v3403
  %v3405 = vpop.f32.mrb[0].mxu0
  %v3406 = vpop.f32.mrb[0].mxu0
  %v3407 = vadd.f32 0.0, %v3406
  %v3408 = vpop.f32.mrb[0].mxu0
  %3409 = vmatprep.mubr.bf16.mxu0 %v2530
  %3410 = vmatmul.mubr.bf16.gmra.mrb[0].mxu0 %v2529
  %v3411 = vpop.f32.mrb[0].mxu0
  %v3412 = vadd.f32 0.0, %v3411
  %v3413 = vpop.f32.mrb[0].mxu0
  %v3414 = vpop.f32.mrb[0].mxu0
  %v3415 = vadd.f32 0.0, %v3414
  %v3416 = vpop.f32.mrb[0].mxu0
  %3417 = vmatprep.mubr.bf16.mxu0 %v2539
  %3418 = vmatmul.mubr.bf16.gmra.mrb[0].mxu0 %v2538
  %v3419 = vpop.f32.mrb[0].mxu0
  %v3420 = vadd.f32 0.0, %v3419
  %v3421 = vpop.f32.mrb[0].mxu0
  %v3422 = vpop.f32.mrb[0].mxu0
  %v3423 = vadd.f32 0.0, %v3422
  %v3424 = vpop.f32.mrb[0].mxu0
  %3425 = vmatprep.mubr.bf16.mxu0 %v2548
  %3426 = vmatmul.mubr.bf16.gmra.mrb[0].mxu0 %v2547
  %v3427 = vpop.f32.mrb[0].mxu0
  %v3428 = vadd.f32 0.0, %v3427
  %v3429 = vpop.f32.mrb[0].mxu0
  %v3430 = vpop.f32.mrb[0].mxu0
  %v3431 = vadd.f32 0.0, %v3430
  %v3432 = vpop.f32.mrb[0].mxu0
  %3433 = vmatprep.mubr.bf16.mxu0 %v2557
  %3434 = vmatmul.mubr.bf16.gmra.mrb[0].mxu0 %v2556
  %v3435 = vpop.f32.mrb[0].mxu0
  %v3436 = vadd.f32 0.0, %v3435
  %v3437 = vpop.f32.mrb[0].mxu0
  %v3438 = vpop.f32.mrb[0].mxu0
  %v3439 = vadd.f32 0.0, %v3438
  %v3440 = vpop.f32.mrb[0].mxu0
  %3441 = vmatprep.mubr.bf16.mxu0 %v2566
  %3442 = vmatmul.mubr.bf16.gmra.mrb[0].mxu0 %v2565
  %v3443 = vpop.f32.mrb[0].mxu0
  %v3444 = vadd.f32 0.0, %v3443
  %v3445 = vpop.f32.mrb[0].mxu0
  %v3446 = vpop.f32.mrb[0].mxu0
  %v3447 = vadd.f32 0.0, %v3446
  %v3448 = vpop.f32.mrb[0].mxu0
  %3449 = vmatprep.mubr.bf16.mxu0 %v2575
  %3450 = vmatmul.mubr.bf16.gmra.mrb[0].mxu0 %v2574
  %v3451 = vpop.f32.mrb[0].mxu0
  %v3452 = vadd.f32 0.0, %v3451
  %v3453 = vpop.f32.mrb[0].mxu0
  %v3454 = vpop.f32.mrb[0].mxu0
  %v3455 = vadd.f32 0.0, %v3454
  %v3456 = vpop.f32.mrb[0].mxu0
  %3457 = vmatprep.mubr.bf16.mxu0 %v2584
  %3458 = vmatmul.mubr.bf16.gmra.mrb[0].mxu0 %v2583
  %v3459 = vpop.f32.mrb[0].mxu0
  %v3460 = vadd.f32 0.0, %v3459
  %v3461 = vpop.f32.mrb[0].mxu0
  %v3462 = vpop.f32.mrb[0].mxu0
  %v3463 = vadd.f32 0.0, %v3462
  %v3464 = vpop.f32.mrb[0].mxu0
  %3465 = vmatprep.mubr.bf16.mxu0 %v2593
  %3466 = vmatmul.mubr.bf16.gmra.mrb[0].mxu0 %v2592
  %v3467 = vpop.f32.mrb[0].mxu0
  %v3468 = vadd.f32 0.0, %v3467
  %v3469 = vpop.f32.mrb[0].mxu0
  %v3470 = vpop.f32.mrb[0].mxu0
  %v3471 = vadd.f32 0.0, %v3470
  %v3472 = vpop.f32.mrb[0].mxu0
  %3473 = vmatprep.mubr.bf16.mxu0 %v2602
  %3474 = vmatmul.mubr.bf16.gmra.mrb[0].mxu0 %v2601
  %v3475 = vpop.f32.mrb[0].mxu0
  %v3476 = vadd.f32 0.0, %v3475
  %v3477 = vpop.f32.mrb[0].mxu0
  %v3478 = vpop.f32.mrb[0].mxu0
  %v3479 = vadd.f32 0.0, %v3478
  %v3480 = vpop.f32.mrb[0].mxu0
  %3481 = vmatprep.mubr.bf16.mxu0 %v2611
  %3482 = vmatmul.mubr.bf16.gmra.mrb[0].mxu0 %v2610
  %v3483 = vpop.f32.mrb[0].mxu0
  %v3484 = vadd.f32 0.0, %v3483
  %v3485 = vpop.f32.mrb[0].mxu0
  %v3486 = vpop.f32.mrb[0].mxu0
  %v3487 = vadd.f32 0.0, %v3486
  %v3488 = vpop.f32.mrb[0].mxu0
  %3489 = vmatprep.mubr.bf16.mxu0 %v2620
  %3490 = vmatmul.mubr.bf16.gmra.mrb[0].mxu0 %v2619
  %v3491 = vpop.f32.mrb[0].mxu0
  %v3492 = vadd.f32 0.0, %v3491
  %v3493 = vpop.f32.mrb[0].mxu0
  %v3494 = vpop.f32.mrb[0].mxu0
  %v3495 = vadd.f32 0.0, %v3494
  %v3496 = vpop.f32.mrb[0].mxu0
  %3497 = vmatprep.mubr.bf16.mxu0 %v2629
  %3498 = vmatmul.mubr.bf16.gmra.mrb[0].mxu0 %v2628
  %v3499 = vpop.f32.mrb[0].mxu0
  %v3500 = vadd.f32 0.0, %v3499
  %v3501 = vpop.f32.mrb[0].mxu0
  %v3502 = vpop.f32.mrb[0].mxu0
  %v3503 = vadd.f32 0.0, %v3502
  %v3504 = vpop.f32.mrb[0].mxu0
  %3505 = vmatprep.mubr.bf16.mxu0 %v2638
  %3506 = vmatmul.mubr.bf16.gmra.mrb[0].mxu0 %v2637
  %v3507 = vpop.f32.mrb[0].mxu0
  %v3508 = vadd.f32 0.0, %v3507
  %v3509 = vpop.f32.mrb[0].mxu0
  %v3510 = vpop.f32.mrb[0].mxu0
  %v3511 = vadd.f32 0.0, %v3510
  %v3512 = vpop.f32.mrb[0].mxu0
  %3513 = vmatprep.mubr.bf16.mxu0 %v2647
  %3514 = vmatmul.mubr.bf16.gmra.mrb[0].mxu0 %v2646
  %v3515 = vpop.f32.mrb[0].mxu0
  %v3516 = vadd.f32 0.0, %v3515
  %v3517 = vpop.f32.mrb[0].mxu0
  %v3518 = vpop.f32.mrb[0].mxu0
  %v3519 = vadd.f32 0.0, %v3518
  %v3520 = vpop.f32.mrb[0].mxu0
  %3521 = vmatprep.mubr.bf16.mxu0 %v2656
  %3522 = vmatmul.mubr.bf16.gmra.mrb[0].mxu0 %v2655
  %v3523 = vpop.f32.mrb[0].mxu0
  %v3524 = vadd.f32 0.0, %v3523
  %v3525 = vpop.f32.mrb[0].mxu0
  %v3526 = vpop.f32.mrb[0].mxu0
  %v3527 = vadd.f32 0.0, %v3526
  %v3528 = vpop.f32.mrb[0].mxu0
  %3529 = vmatprep.mubr.bf16.mxu0 %v2665
  %3530 = vmatmul.mubr.bf16.gmra.mrb[0].mxu0 %v2664
  %v3531 = vpop.f32.mrb[0].mxu0
  %v3532 = vadd.f32 0.0, %v3531
  %v3533 = vpop.f32.mrb[0].mxu0
  %v3534 = vpop.f32.mrb[0].mxu0
  %v3535 = vadd.f32 0.0, %v3534
  %v3536 = vpop.f32.mrb[0].mxu0
  %3537 = vdwg.mxu0
  %3538 = vmatprep.subr.bf16.mxu0 0
  %3539 = vmatpush1.bf16.msra.mxu0 %v3121
  %3540 = vmatprep.subr.bf16.mxu0 0
  %3541 = vmatpush1.bf16.msra.mxu0 %v3122
  %3542 = vmatprep.subr.bf16.mxu0 0
  %3543 = vmatpush1.bf16.msra.mxu0 %v3123
  %3544 = vmatprep.subr.bf16.mxu0 0
  %3545 = vmatpush1.bf16.msra.mxu0 %v3124
  %3546 = vmatprep.subr.bf16.mxu0 0
  %3547 = vmatpush1.bf16.msra.mxu0 %v3125
  %3548 = vmatprep.subr.bf16.mxu0 0
  %3549 = vmatpush1.bf16.msra.mxu0 %v3126
  %3550 = vmatprep.subr.bf16.mxu0 0
  %3551 = vmatpush1.bf16.msra.mxu0 %v3127
  %3552 = vmatprep.subr.bf16.mxu0 0
  %3553 = vmatpush1.bf16.msra.mxu0 %v3128
  %3554 = vmatprep.subr.bf16.mxu0 0
  %3555 = vmatpush1.bf16.msra.mxu0 %v3129
  %3556 = vmatprep.subr.bf16.mxu0 0
  %3557 = vmatpush1.bf16.msra.mxu0 %v3130
  %3558 = vmatprep.subr.bf16.mxu0 0
  %3559 = vmatpush1.bf16.msra.mxu0 %v3131
  %3560 = vmatprep.subr.bf16.mxu0 0
  %3561 = vmatpush1.bf16.msra.mxu0 %v3132
  %3562 = vmatprep.subr.bf16.mxu0 0
  %3563 = vmatpush1.bf16.msra.mxu0 %v3133
  %3564 = vmatprep.subr.bf16.mxu0 0
  %3565 = vmatpush1.bf16.msra.mxu0 %v3134
  %3566 = vmatprep.subr.bf16.mxu0 0
  %3567 = vmatpush1.bf16.msra.mxu0 %v3135
  %3568 = vmatprep.subr.bf16.mxu0 0
  %3569 = vmatpush1.bf16.msra.mxu0 %v3136
  %3570 = vmatprep.mubr.bf16.mxu0 %v2388
  %3571 = vmatmul.mubr.bf16.gmra.mrb[0].mxu0 %v2387
  %v3572 = vpop.f32.mrb[0].mxu0
  %v3573 = vadd.f32 %v3284, %v3572
  %v3574 = vpop.f32.mrb[0].mxu0
  %v3575 = vpop.f32.mrb[0].mxu0
  %v3576 = vadd.f32 %v3287, %v3575
  %v3577 = vpop.f32.mrb[0].mxu0
  %3578 = vmatprep.mubr.bf16.mxu0 %v2397
  %3579 = vmatmul.mubr.bf16.gmra.mrb[0].mxu0 %v2396
  %v3580 = vpop.f32.mrb[0].mxu0
  %v3581 = vadd.f32 %v3292, %v3580
  %v3582 = vpop.f32.mrb[0].mxu0
  %v3583 = vpop.f32.mrb[0].mxu0
  %v3584 = vadd.f32 %v3295, %v3583
  %v3585 = vpop.f32.mrb[0].mxu0
  %3586 = vmatprep.mubr.bf16.mxu0 %v2406
  %3587 = vmatmul.mubr.bf16.gmra.mrb[0].mxu0 %v2405
  %v3588 = vpop.f32.mrb[0].mxu0
  %v3589 = vadd.f32 %v3300, %v3588
  %v3590 = vpop.f32.mrb[0].mxu0
  %v3591 = vpop.f32.mrb[0].mxu0
  %v3592 = vadd.f32 %v3303, %v3591
  %v3593 = vpop.f32.mrb[0].mxu0
  %3594 = vmatprep.mubr.bf16.mxu0 %v2415
  %3595 = vmatmul.mubr.bf16.gmra.mrb[0].mxu0 %v2414
  %v3596 = vpop.f32.mrb[0].mxu0
  %v3597 = vadd.f32 %v3308, %v3596
  %v3598 = vpop.f32.mrb[0].mxu0
  %v3599 = vpop.f32.mrb[0].mxu0
  %v3600 = vadd.f32 %v3311, %v3599
  %v3601 = vpop.f32.mrb[0].mxu0
  %3602 = vmatprep.mubr.bf16.mxu0 %v2424
  %3603 = vmatmul.mubr.bf16.gmra.mrb[0].mxu0 %v2423
  %v3604 = vpop.f32.mrb[0].mxu0
  %v3605 = vadd.f32 %v3316, %v3604
  %v3606 = vpop.f32.mrb[0].mxu0
  %v3607 = vpop.f32.mrb[0].mxu0
  %v3608 = vadd.f32 %v3319, %v3607
  %v3609 = vpop.f32.mrb[0].mxu0
  %3610 = vmatprep.mubr.bf16.mxu0 %v2433
  %3611 = vmatmul.mubr.bf16.gmra.mrb[0].mxu0 %v2432
  %v3612 = vpop.f32.mrb[0].mxu0
  %v3613 = vadd.f32 %v3324, %v3612
  %v3614 = vpop.f32.mrb[0].mxu0
  %v3615 = vpop.f32.mrb[0].mxu0
  %v3616 = vadd.f32 %v3327, %v3615
  %v3617 = vpop.f32.mrb[0].mxu0
  %3618 = vmatprep.mubr.bf16.mxu0 %v2442
  %3619 = vmatmul.mubr.bf16.gmra.mrb[0].mxu0 %v2441
  %v3620 = vpop.f32.mrb[0].mxu0
  %v3621 = vadd.f32 %v3332, %v3620
  %v3622 = vpop.f32.mrb[0].mxu0
  %v3623 = vpop.f32.mrb[0].mxu0
  %v3624 = vadd.f32 %v3335, %v3623
  %v3625 = vpop.f32.mrb[0].mxu0
  %3626 = vmatprep.mubr.bf16.mxu0 %v2451
  %3627 = vmatmul.mubr.bf16.gmra.mrb[0].mxu0 %v2450
  %v3628 = vpop.f32.mrb[0].mxu0
  %v3629 = vadd.f32 %v3340, %v3628
  %v3630 = vpop.f32.mrb[0].mxu0
  %v3631 = vpop.f32.mrb[0].mxu0
  %v3632 = vadd.f32 %v3343, %v3631
  %v3633 = vpop.f32.mrb[0].mxu0
  %3634 = vmatprep.mubr.bf16.mxu0 %v2460
  %3635 = vmatmul.mubr.bf16.gmra.mrb[0].mxu0 %v2459
  %v3636 = vpop.f32.mrb[0].mxu0
  %v3637 = vadd.f32 %v3348, %v3636
  %v3638 = vpop.f32.mrb[0].mxu0
  %v3639 = vpop.f32.mrb[0].mxu0
  %v3640 = vadd.f32 %v3351, %v3639
  %v3641 = vpop.f32.mrb[0].mxu0
  %3642 = vmatprep.mubr.bf16.mxu0 %v2469
  %3643 = vmatmul.mubr.bf16.gmra.mrb[0].mxu0 %v2468
  %v3644 = vpop.f32.mrb[0].mxu0
  %v3645 = vadd.f32 %v3356, %v3644
  %v3646 = vpop.f32.mrb[0].mxu0
  %v3647 = vpop.f32.mrb[0].mxu0
  %v3648 = vadd.f32 %v3359, %v3647
  %v3649 = vpop.f32.mrb[0].mxu0
  %3650 = vmatprep.mubr.bf16.mxu0 %v2478
  %3651 = vmatmul.mubr.bf16.gmra.mrb[0].mxu0 %v2477
  %v3652 = vpop.f32.mrb[0].mxu0
  %v3653 = vadd.f32 %v3364, %v3652
  %v3654 = vpop.f32.mrb[0].mxu0
  %v3655 = vpop.f32.mrb[0].mxu0
  %v3656 = vadd.f32 %v3367, %v3655
  %v3657 = vpop.f32.mrb[0].mxu0
  %3658 = vmatprep.mubr.bf16.mxu0 %v2487
  %3659 = vmatmul.mubr.bf16.gmra.mrb[0].mxu0 %v2486
  %v3660 = vpop.f32.mrb[0].mxu0
  %v3661 = vadd.f32 %v3372, %v3660
  %v3662 = vpop.f32.mrb[0].mxu0
  %v3663 = vpop.f32.mrb[0].mxu0
  %v3664 = vadd.f32 %v3375, %v3663
  %v3665 = vpop.f32.mrb[0].mxu0
  %3666 = vmatprep.mubr.bf16.mxu0 %v2496
  %3667 = vmatmul.mubr.bf16.gmra.mrb[0].mxu0 %v2495
  %v3668 = vpop.f32.mrb[0].mxu0
  %v3669 = vadd.f32 %v3380, %v3668
  %v3670 = vpop.f32.mrb[0].mxu0
  %v3671 = vpop.f32.mrb[0].mxu0
  %v3672 = vadd.f32 %v3383, %v3671
  %v3673 = vpop.f32.mrb[0].mxu0
  %3674 = vmatprep.mubr.bf16.mxu0 %v2505
  %3675 = vmatmul.mubr.bf16.gmra.mrb[0].mxu0 %v2504
  %v3676 = vpop.f32.mrb[0].mxu0
  %v3677 = vadd.f32 %v3388, %v3676
  %v3678 = vpop.f32.mrb[0].mxu0
  %v3679 = vpop.f32.mrb[0].mxu0
  %v3680 = vadd.f32 %v3391, %v3679
  %v3681 = vpop.f32.mrb[0].mxu0
  %3682 = vmatprep.mubr.bf16.mxu0 %v2514
  %3683 = vmatmul.mubr.bf16.gmra.mrb[0].mxu0 %v2513
  %v3684 = vpop.f32.mrb[0].mxu0
  %v3685 = vadd.f32 %v3396, %v3684
  %v3686 = vpop.f32.mrb[0].mxu0
  %v3687 = vpop.f32.mrb[0].mxu0
  %v3688 = vadd.f32 %v3399, %v3687
  %v3689 = vpop.f32.mrb[0].mxu0
  %3690 = vmatprep.mubr.bf16.mxu0 %v2523
  %3691 = vmatmul.mubr.bf16.gmra.mrb[0].mxu0 %v2522
  %v3692 = vpop.f32.mrb[0].mxu0
  %v3693 = vadd.f32 %v3404, %v3692
  %v3694 = vpop.f32.mrb[0].mxu0
  %v3695 = vpop.f32.mrb[0].mxu0
  %v3696 = vadd.f32 %v3407, %v3695
  %v3697 = vpop.f32.mrb[0].mxu0
  %3698 = vmatprep.mubr.bf16.mxu0 %v2532
  %3699 = vmatmul.mubr.bf16.gmra.mrb[0].mxu0 %v2531
  %v3700 = vpop.f32.mrb[0].mxu0
  %v3701 = vadd.f32 %v3412, %v3700
  %v3702 = vpop.f32.mrb[0].mxu0
  %v3703 = vpop.f32.mrb[0].mxu0
  %v3704 = vadd.f32 %v3415, %v3703
  %v3705 = vpop.f32.mrb[0].mxu0
  %3706 = vmatprep.mubr.bf16.mxu0 %v2541
  %3707 = vmatmul.mubr.bf16.gmra.mrb[0].mxu0 %v2540
  %v3708 = vpop.f32.mrb[0].mxu0
  %v3709 = vadd.f32 %v3420, %v3708
  %v3710 = vpop.f32.mrb[0].mxu0
  %v3711 = vpop.f32.mrb[0].mxu0
  %v3712 = vadd.f32 %v3423, %v3711
  %v3713 = vpop.f32.mrb[0].mxu0
  %3714 = vmatprep.mubr.bf16.mxu0 %v2550
  %3715 = vmatmul.mubr.bf16.gmra.mrb[0].mxu0 %v2549
  %v3716 = vpop.f32.mrb[0].mxu0
  %v3717 = vadd.f32 %v3428, %v3716
  %v3718 = vpop.f32.mrb[0].mxu0
  %v3719 = vpop.f32.mrb[0].mxu0
  %v3720 = vadd.f32 %v3431, %v3719
  %v3721 = vpop.f32.mrb[0].mxu0
  %3722 = vmatprep.mubr.bf16.mxu0 %v2559
  %3723 = vmatmul.mubr.bf16.gmra.mrb[0].mxu0 %v2558
  %v3724 = vpop.f32.mrb[0].mxu0
  %v3725 = vadd.f32 %v3436, %v3724
  %v3726 = vpop.f32.mrb[0].mxu0
  %v3727 = vpop.f32.mrb[0].mxu0
  %v3728 = vadd.f32 %v3439, %v3727
  %v3729 = vpop.f32.mrb[0].mxu0
  %3730 = vmatprep.mubr.bf16.mxu0 %v2568
  %3731 = vmatmul.mubr.bf16.gmra.mrb[0].mxu0 %v2567
  %v3732 = vpop.f32.mrb[0].mxu0
  %v3733 = vadd.f32 %v3444, %v3732
  %v3734 = vpop.f32.mrb[0].mxu0
  %v3735 = vpop.f32.mrb[0].mxu0
  %v3736 = vadd.f32 %v3447, %v3735
  %v3737 = vpop.f32.mrb[0].mxu0
  %3738 = vmatprep.mubr.bf16.mxu0 %v2577
  %3739 = vmatmul.mubr.bf16.gmra.mrb[0].mxu0 %v2576
  %v3740 = vpop.f32.mrb[0].mxu0
  %v3741 = vadd.f32 %v3452, %v3740
  %v3742 = vpop.f32.mrb[0].mxu0
  %v3743 = vpop.f32.mrb[0].mxu0
  %v3744 = vadd.f32 %v3455, %v3743
  %v3745 = vpop.f32.mrb[0].mxu0
  %3746 = vmatprep.mubr.bf16.mxu0 %v2586
  %3747 = vmatmul.mubr.bf16.gmra.mrb[0].mxu0 %v2585
  %v3748 = vpop.f32.mrb[0].mxu0
  %v3749 = vadd.f32 %v3460, %v3748
  %v3750 = vpop.f32.mrb[0].mxu0
  %v3751 = vpop.f32.mrb[0].mxu0
  %v3752 = vadd.f32 %v3463, %v3751
  %v3753 = vpop.f32.mrb[0].mxu0
  %3754 = vmatprep.mubr.bf16.mxu0 %v2595
  %3755 = vmatmul.mubr.bf16.gmra.mrb[0].mxu0 %v2594
  %v3756 = vpop.f32.mrb[0].mxu0
  %v3757 = vadd.f32 %v3468, %v3756
  %v3758 = vpop.f32.mrb[0].mxu0
  %v3759 = vpop.f32.mrb[0].mxu0
  %v3760 = vadd.f32 %v3471, %v3759
  %v3761 = vpop.f32.mrb[0].mxu0
  %3762 = vmatprep.mubr.bf16.mxu0 %v2604
  %3763 = vmatmul.mubr.bf16.gmra.mrb[0].mxu0 %v2603
  %v3764 = vpop.f32.mrb[0].mxu0
  %v3765 = vadd.f32 %v3476, %v3764
  %v3766 = vpop.f32.mrb[0].mxu0
  %v3767 = vpop.f32.mrb[0].mxu0
  %v3768 = vadd.f32 %v3479, %v3767
  %v3769 = vpop.f32.mrb[0].mxu0
  %3770 = vmatprep.mubr.bf16.mxu0 %v2613
  %3771 = vmatmul.mubr.bf16.gmra.mrb[0].mxu0 %v2612
  %v3772 = vpop.f32.mrb[0].mxu0
  %v3773 = vadd.f32 %v3484, %v3772
  %v3774 = vpop.f32.mrb[0].mxu0
  %v3775 = vpop.f32.mrb[0].mxu0
  %v3776 = vadd.f32 %v3487, %v3775
  %v3777 = vpop.f32.mrb[0].mxu0
  %3778 = vmatprep.mubr.bf16.mxu0 %v2622
  %3779 = vmatmul.mubr.bf16.gmra.mrb[0].mxu0 %v2621
  %v3780 = vpop.f32.mrb[0].mxu0
  %v3781 = vadd.f32 %v3492, %v3780
  %v3782 = vpop.f32.mrb[0].mxu0
  %v3783 = vpop.f32.mrb[0].mxu0
  %v3784 = vadd.f32 %v3495, %v3783
  %v3785 = vpop.f32.mrb[0].mxu0
  %3786 = vmatprep.mubr.bf16.mxu0 %v2631
  %3787 = vmatmul.mubr.bf16.gmra.mrb[0].mxu0 %v2630
  %v3788 = vpop.f32.mrb[0].mxu0
  %v3789 = vadd.f32 %v3500, %v3788
  %v3790 = vpop.f32.mrb[0].mxu0
  %v3791 = vpop.f32.mrb[0].mxu0
  %v3792 = vadd.f32 %v3503, %v3791
  %v3793 = vpop.f32.mrb[0].mxu0
  %3794 = vmatprep.mubr.bf16.mxu0 %v2640
  %3795 = vmatmul.mubr.bf16.gmra.mrb[0].mxu0 %v2639
  %v3796 = vpop.f32.mrb[0].mxu0
  %v3797 = vadd.f32 %v3508, %v3796
  %v3798 = vpop.f32.mrb[0].mxu0
  %v3799 = vpop.f32.mrb[0].mxu0
  %v3800 = vadd.f32 %v3511, %v3799
  %v3801 = vpop.f32.mrb[0].mxu0
  %3802 = vmatprep.mubr.bf16.mxu0 %v2649
  %3803 = vmatmul.mubr.bf16.gmra.mrb[0].mxu0 %v2648
  %v3804 = vpop.f32.mrb[0].mxu0
  %v3805 = vadd.f32 %v3516, %v3804
  %v3806 = vpop.f32.mrb[0].mxu0
  %v3807 = vpop.f32.mrb[0].mxu0
  %v3808 = vadd.f32 %v3519, %v3807
  %v3809 = vpop.f32.mrb[0].mxu0
  %3810 = vmatprep.mubr.bf16.mxu0 %v2658
  %3811 = vmatmul.mubr.bf16.gmra.mrb[0].mxu0 %v2657
  %v3812 = vpop.f32.mrb[0].mxu0
  %v3813 = vadd.f32 %v3524, %v3812
  %v3814 = vpop.f32.mrb[0].mxu0
  %v3815 = vpop.f32.mrb[0].mxu0
  %v3816 = vadd.f32 %v3527, %v3815
  %v3817 = vpop.f32.mrb[0].mxu0
  %3818 = vmatprep.mubr.bf16.mxu0 %v2667
  %3819 = vmatmul.mubr.bf16.gmra.mrb[0].mxu0 %v2666
  %v3820 = vpop.f32.mrb[0].mxu0
  %v3821 = vadd.f32 %v3532, %v3820
  %v3822 = vpop.f32.mrb[0].mxu0
  %v3823 = vpop.f32.mrb[0].mxu0
  %v3824 = vadd.f32 %v3535, %v3823
  %v3825 = vpop.f32.mrb[0].mxu0
  %3826 = vdwg.mxu0
  %3827 = vmatprep.subr.bf16.mxu0 0
  %3828 = vmatpush1.bf16.msra.mxu0 %v3137
  %3829 = vmatprep.subr.bf16.mxu0 0
  %3830 = vmatpush1.bf16.msra.mxu0 %v3138
  %3831 = vmatprep.subr.bf16.mxu0 0
  %3832 = vmatpush1.bf16.msra.mxu0 %v3139
  %3833 = vmatprep.subr.bf16.mxu0 0
  %3834 = vmatpush1.bf16.msra.mxu0 %v3140
  %3835 = vmatprep.subr.bf16.mxu0 0
  %3836 = vmatpush1.bf16.msra.mxu0 %v3141
  %3837 = vmatprep.subr.bf16.mxu0 0
  %3838 = vmatpush1.bf16.msra.mxu0 %v3142
  %3839 = vmatprep.subr.bf16.mxu0 0
  %3840 = vmatpush1.bf16.msra.mxu0 %v3143
  %3841 = vmatprep.subr.bf16.mxu0 0
  %3842 = vmatpush1.bf16.msra.mxu0 %v3144
  %3843 = vmatprep.subr.bf16.mxu0 0
  %3844 = vmatpush1.bf16.msra.mxu0 %v3145
  %3845 = vmatprep.subr.bf16.mxu0 0
  %3846 = vmatpush1.bf16.msra.mxu0 %v3146
  %3847 = vmatprep.subr.bf16.mxu0 0
  %3848 = vmatpush1.bf16.msra.mxu0 %v3147
  %3849 = vmatprep.subr.bf16.mxu0 0
  %3850 = vmatpush1.bf16.msra.mxu0 %v3148
  %3851 = vmatprep.subr.bf16.mxu0 0
  %3852 = vmatpush1.bf16.msra.mxu0 %v3149
  %3853 = vmatprep.subr.bf16.mxu0 0
  %3854 = vmatpush1.bf16.msra.mxu0 %v3150
  %3855 = vmatprep.subr.bf16.mxu0 0
  %3856 = vmatpush1.bf16.msra.mxu0 %v3151
  %3857 = vmatprep.subr.bf16.mxu0 0
  %3858 = vmatpush1.bf16.msra.mxu0 %v3152
  %3859 = vmatprep.mubr.bf16.mxu0 %v2390
  %3860 = vmatmul.mubr.bf16.gmra.mrb[0].mxu0 %v2389
  %v3861 = vpop.f32.mrb[0].mxu0
  %v3862 = vadd.f32 %v3573, %v3861
  %v3863 = vpop.f32.mrb[0].mxu0
  %v3864 = vpop.f32.mrb[0].mxu0
  %v3865 = vadd.f32 %v3576, %v3864
  %v3866 = vpop.f32.mrb[0].mxu0
  %3867 = vmatprep.mubr.bf16.mxu0 %v2399
  %3868 = vmatmul.mubr.bf16.gmra.mrb[0].mxu0 %v2398
  %v3869 = vpop.f32.mrb[0].mxu0
  %v3870 = vadd.f32 %v3581, %v3869
  %v3871 = vpop.f32.mrb[0].mxu0
  %v3872 = vpop.f32.mrb[0].mxu0
  %v3873 = vadd.f32 %v3584, %v3872
  %v3874 = vpop.f32.mrb[0].mxu0
  %3875 = vmatprep.mubr.bf16.mxu0 %v2408
  %3876 = vmatmul.mubr.bf16.gmra.mrb[0].mxu0 %v2407
  %v3877 = vpop.f32.mrb[0].mxu0
  %v3878 = vadd.f32 %v3589, %v3877
  %v3879 = vpop.f32.mrb[0].mxu0
  %v3880 = vpop.f32.mrb[0].mxu0
  %v3881 = vadd.f32 %v3592, %v3880
  %v3882 = vpop.f32.mrb[0].mxu0
  %3883 = vmatprep.mubr.bf16.mxu0 %v2417
  %3884 = vmatmul.mubr.bf16.gmra.mrb[0].mxu0 %v2416
  %v3885 = vpop.f32.mrb[0].mxu0
  %v3886 = vadd.f32 %v3597, %v3885
  %v3887 = vpop.f32.mrb[0].mxu0
  %v3888 = vpop.f32.mrb[0].mxu0
  %v3889 = vadd.f32 %v3600, %v3888
  %v3890 = vpop.f32.mrb[0].mxu0
  %3891 = vmatprep.mubr.bf16.mxu0 %v2426
  %3892 = vmatmul.mubr.bf16.gmra.mrb[0].mxu0 %v2425
  %v3893 = vpop.f32.mrb[0].mxu0
  %v3894 = vadd.f32 %v3605, %v3893
  %v3895 = vpop.f32.mrb[0].mxu0
  %v3896 = vpop.f32.mrb[0].mxu0
  %v3897 = vadd.f32 %v3608, %v3896
  %v3898 = vpop.f32.mrb[0].mxu0
  %3899 = vmatprep.mubr.bf16.mxu0 %v2435
  %3900 = vmatmul.mubr.bf16.gmra.mrb[0].mxu0 %v2434
  %v3901 = vpop.f32.mrb[0].mxu0
  %v3902 = vadd.f32 %v3613, %v3901
  %v3903 = vpop.f32.mrb[0].mxu0
  %v3904 = vpop.f32.mrb[0].mxu0
  %v3905 = vadd.f32 %v3616, %v3904
  %v3906 = vpop.f32.mrb[0].mxu0
  %3907 = vmatprep.mubr.bf16.mxu0 %v2444
  %3908 = vmatmul.mubr.bf16.gmra.mrb[0].mxu0 %v2443
  %v3909 = vpop.f32.mrb[0].mxu0
  %v3910 = vadd.f32 %v3621, %v3909
  %v3911 = vpop.f32.mrb[0].mxu0
  %v3912 = vpop.f32.mrb[0].mxu0
  %v3913 = vadd.f32 %v3624, %v3912
  %v3914 = vpop.f32.mrb[0].mxu0
  %3915 = vmatprep.mubr.bf16.mxu0 %v2453
  %3916 = vmatmul.mubr.bf16.gmra.mrb[0].mxu0 %v2452
  %v3917 = vpop.f32.mrb[0].mxu0
  %v3918 = vadd.f32 %v3629, %v3917
  %v3919 = vpop.f32.mrb[0].mxu0
  %v3920 = vpop.f32.mrb[0].mxu0
  %v3921 = vadd.f32 %v3632, %v3920
  %v3922 = vpop.f32.mrb[0].mxu0
  %3923 = vmatprep.mubr.bf16.mxu0 %v2462
  %3924 = vmatmul.mubr.bf16.gmra.mrb[0].mxu0 %v2461
  %v3925 = vpop.f32.mrb[0].mxu0
  %v3926 = vadd.f32 %v3637, %v3925
  %v3927 = vpop.f32.mrb[0].mxu0
  %v3928 = vpop.f32.mrb[0].mxu0
  %v3929 = vadd.f32 %v3640, %v3928
  %v3930 = vpop.f32.mrb[0].mxu0
  %3931 = vmatprep.mubr.bf16.mxu0 %v2471
  %3932 = vmatmul.mubr.bf16.gmra.mrb[0].mxu0 %v2470
  %v3933 = vpop.f32.mrb[0].mxu0
  %v3934 = vadd.f32 %v3645, %v3933
  %v3935 = vpop.f32.mrb[0].mxu0
  %v3936 = vpop.f32.mrb[0].mxu0
  %v3937 = vadd.f32 %v3648, %v3936
  %v3938 = vpop.f32.mrb[0].mxu0
  %3939 = vmatprep.mubr.bf16.mxu0 %v2480
  %3940 = vmatmul.mubr.bf16.gmra.mrb[0].mxu0 %v2479
  %v3941 = vpop.f32.mrb[0].mxu0
  %v3942 = vadd.f32 %v3653, %v3941
  %v3943 = vpop.f32.mrb[0].mxu0
  %v3944 = vpop.f32.mrb[0].mxu0
  %v3945 = vadd.f32 %v3656, %v3944
  %v3946 = vpop.f32.mrb[0].mxu0
  %3947 = vmatprep.mubr.bf16.mxu0 %v2489
  %3948 = vmatmul.mubr.bf16.gmra.mrb[0].mxu0 %v2488
  %v3949 = vpop.f32.mrb[0].mxu0
  %v3950 = vadd.f32 %v3661, %v3949
  %v3951 = vpop.f32.mrb[0].mxu0
  %v3952 = vpop.f32.mrb[0].mxu0
  %v3953 = vadd.f32 %v3664, %v3952
  %v3954 = vpop.f32.mrb[0].mxu0
  %3955 = vmatprep.mubr.bf16.mxu0 %v2498
  %3956 = vmatmul.mubr.bf16.gmra.mrb[0].mxu0 %v2497
  %v3957 = vpop.f32.mrb[0].mxu0
  %v3958 = vadd.f32 %v3669, %v3957
  %v3959 = vpop.f32.mrb[0].mxu0
  %v3960 = vpop.f32.mrb[0].mxu0
  %v3961 = vadd.f32 %v3672, %v3960
  %v3962 = vpop.f32.mrb[0].mxu0
  %3963 = vmatprep.mubr.bf16.mxu0 %v2507
  %3964 = vmatmul.mubr.bf16.gmra.mrb[0].mxu0 %v2506
  %v3965 = vpop.f32.mrb[0].mxu0
  %v3966 = vadd.f32 %v3677, %v3965
  %v3967 = vpop.f32.mrb[0].mxu0
  %v3968 = vpop.f32.mrb[0].mxu0
  %v3969 = vadd.f32 %v3680, %v3968
  %v3970 = vpop.f32.mrb[0].mxu0
  %3971 = vmatprep.mubr.bf16.mxu0 %v2516
  %3972 = vmatmul.mubr.bf16.gmra.mrb[0].mxu0 %v2515
  %v3973 = vpop.f32.mrb[0].mxu0
  %v3974 = vadd.f32 %v3685, %v3973
  %v3975 = vpop.f32.mrb[0].mxu0
  %v3976 = vpop.f32.mrb[0].mxu0
  %v3977 = vadd.f32 %v3688, %v3976
  %v3978 = vpop.f32.mrb[0].mxu0
  %3979 = vmatprep.mubr.bf16.mxu0 %v2525
  %3980 = vmatmul.mubr.bf16.gmra.mrb[0].mxu0 %v2524
  %v3981 = vpop.f32.mrb[0].mxu0
  %v3982 = vadd.f32 %v3693, %v3981
  %v3983 = vpop.f32.mrb[0].mxu0
  %v3984 = vpop.f32.mrb[0].mxu0
  %v3985 = vadd.f32 %v3696, %v3984
  %v3986 = vpop.f32.mrb[0].mxu0
  %3987 = vmatprep.mubr.bf16.mxu0 %v2534
  %3988 = vmatmul.mubr.bf16.gmra.mrb[0].mxu0 %v2533
  %v3989 = vpop.f32.mrb[0].mxu0
  %v3990 = vadd.f32 %v3701, %v3989
  %v3991 = vpop.f32.mrb[0].mxu0
  %v3992 = vpop.f32.mrb[0].mxu0
  %v3993 = vadd.f32 %v3704, %v3992
  %v3994 = vpop.f32.mrb[0].mxu0
  %3995 = vmatprep.mubr.bf16.mxu0 %v2543
  %3996 = vmatmul.mubr.bf16.gmra.mrb[0].mxu0 %v2542
  %v3997 = vpop.f32.mrb[0].mxu0
  %v3998 = vadd.f32 %v3709, %v3997
  %v3999 = vpop.f32.mrb[0].mxu0
  %v4000 = vpop.f32.mrb[0].mxu0
  %v4001 = vadd.f32 %v3712, %v4000
  %v4002 = vpop.f32.mrb[0].mxu0
  %4003 = vmatprep.mubr.bf16.mxu0 %v2552
  %4004 = vmatmul.mubr.bf16.gmra.mrb[0].mxu0 %v2551
  %v4005 = vpop.f32.mrb[0].mxu0
  %v4006 = vadd.f32 %v3717, %v4005
  %v4007 = vpop.f32.mrb[0].mxu0
  %v4008 = vpop.f32.mrb[0].mxu0
  %v4009 = vadd.f32 %v3720, %v4008
  %v4010 = vpop.f32.mrb[0].mxu0
  %4011 = vmatprep.mubr.bf16.mxu0 %v2561
  %4012 = vmatmul.mubr.bf16.gmra.mrb[0].mxu0 %v2560
  %v4013 = vpop.f32.mrb[0].mxu0
  %v4014 = vadd.f32 %v3725, %v4013
  %v4015 = vpop.f32.mrb[0].mxu0
  %v4016 = vpop.f32.mrb[0].mxu0
  %v4017 = vadd.f32 %v3728, %v4016
  %v4018 = vpop.f32.mrb[0].mxu0
  %4019 = vmatprep.mubr.bf16.mxu0 %v2570
  %4020 = vmatmul.mubr.bf16.gmra.mrb[0].mxu0 %v2569
  %v4021 = vpop.f32.mrb[0].mxu0
  %v4022 = vadd.f32 %v3733, %v4021
  %v4023 = vpop.f32.mrb[0].mxu0
  %v4024 = vpop.f32.mrb[0].mxu0
  %v4025 = vadd.f32 %v3736, %v4024
  %v4026 = vpop.f32.mrb[0].mxu0
  %4027 = vmatprep.mubr.bf16.mxu0 %v2579
  %4028 = vmatmul.mubr.bf16.gmra.mrb[0].mxu0 %v2578
  %v4029 = vpop.f32.mrb[0].mxu0
  %v4030 = vadd.f32 %v3741, %v4029
  %v4031 = vpop.f32.mrb[0].mxu0
  %v4032 = vpop.f32.mrb[0].mxu0
  %v4033 = vadd.f32 %v3744, %v4032
  %v4034 = vpop.f32.mrb[0].mxu0
  %4035 = vmatprep.mubr.bf16.mxu0 %v2588
  %4036 = vmatmul.mubr.bf16.gmra.mrb[0].mxu0 %v2587
  %v4037 = vpop.f32.mrb[0].mxu0
  %v4038 = vadd.f32 %v3749, %v4037
  %v4039 = vpop.f32.mrb[0].mxu0
  %v4040 = vpop.f32.mrb[0].mxu0
  %v4041 = vadd.f32 %v3752, %v4040
  %v4042 = vpop.f32.mrb[0].mxu0
  %4043 = vmatprep.mubr.bf16.mxu0 %v2597
  %4044 = vmatmul.mubr.bf16.gmra.mrb[0].mxu0 %v2596
  %v4045 = vpop.f32.mrb[0].mxu0
  %v4046 = vadd.f32 %v3757, %v4045
  %v4047 = vpop.f32.mrb[0].mxu0
  %v4048 = vpop.f32.mrb[0].mxu0
  %v4049 = vadd.f32 %v3760, %v4048
  %v4050 = vpop.f32.mrb[0].mxu0
  %4051 = vmatprep.mubr.bf16.mxu0 %v2606
  %4052 = vmatmul.mubr.bf16.gmra.mrb[0].mxu0 %v2605
  %v4053 = vpop.f32.mrb[0].mxu0
  %v4054 = vadd.f32 %v3765, %v4053
  %v4055 = vpop.f32.mrb[0].mxu0
  %v4056 = vpop.f32.mrb[0].mxu0
  %v4057 = vadd.f32 %v3768, %v4056
  %v4058 = vpop.f32.mrb[0].mxu0
  %4059 = vmatprep.mubr.bf16.mxu0 %v2615
  %4060 = vmatmul.mubr.bf16.gmra.mrb[0].mxu0 %v2614
  %v4061 = vpop.f32.mrb[0].mxu0
  %v4062 = vadd.f32 %v3773, %v4061
  %v4063 = vpop.f32.mrb[0].mxu0
  %v4064 = vpop.f32.mrb[0].mxu0
  %v4065 = vadd.f32 %v3776, %v4064
  %v4066 = vpop.f32.mrb[0].mxu0
  %4067 = vmatprep.mubr.bf16.mxu0 %v2624
  %4068 = vmatmul.mubr.bf16.gmra.mrb[0].mxu0 %v2623
  %v4069 = vpop.f32.mrb[0].mxu0
  %v4070 = vadd.f32 %v3781, %v4069
  %v4071 = vpop.f32.mrb[0].mxu0
  %v4072 = vpop.f32.mrb[0].mxu0
  %v4073 = vadd.f32 %v3784, %v4072
  %v4074 = vpop.f32.mrb[0].mxu0
  %4075 = vmatprep.mubr.bf16.mxu0 %v2633
  %4076 = vmatmul.mubr.bf16.gmra.mrb[0].mxu0 %v2632
  %v4077 = vpop.f32.mrb[0].mxu0
  %v4078 = vadd.f32 %v3789, %v4077
  %v4079 = vpop.f32.mrb[0].mxu0
  %v4080 = vpop.f32.mrb[0].mxu0
  %v4081 = vadd.f32 %v3792, %v4080
  %v4082 = vpop.f32.mrb[0].mxu0
  %4083 = vmatprep.mubr.bf16.mxu0 %v2642
  %4084 = vmatmul.mubr.bf16.gmra.mrb[0].mxu0 %v2641
  %v4085 = vpop.f32.mrb[0].mxu0
  %v4086 = vadd.f32 %v3797, %v4085
  %v4087 = vpop.f32.mrb[0].mxu0
  %v4088 = vpop.f32.mrb[0].mxu0
  %v4089 = vadd.f32 %v3800, %v4088
  %v4090 = vpop.f32.mrb[0].mxu0
  %4091 = vmatprep.mubr.bf16.mxu0 %v2651
  %4092 = vmatmul.mubr.bf16.gmra.mrb[0].mxu0 %v2650
  %v4093 = vpop.f32.mrb[0].mxu0
  %v4094 = vadd.f32 %v3805, %v4093
  %v4095 = vpop.f32.mrb[0].mxu0
  %v4096 = vpop.f32.mrb[0].mxu0
  %v4097 = vadd.f32 %v3808, %v4096
  %v4098 = vpop.f32.mrb[0].mxu0
  %4099 = vmatprep.mubr.bf16.mxu0 %v2660
  %4100 = vmatmul.mubr.bf16.gmra.mrb[0].mxu0 %v2659
  %v4101 = vpop.f32.mrb[0].mxu0
  %v4102 = vadd.f32 %v3813, %v4101
  %v4103 = vpop.f32.mrb[0].mxu0
  %v4104 = vpop.f32.mrb[0].mxu0
  %v4105 = vadd.f32 %v3816, %v4104
  %v4106 = vpop.f32.mrb[0].mxu0
  %4107 = vmatprep.mubr.bf16.mxu0 %v2669
  %4108 = vmatmul.mubr.bf16.gmra.mrb[0].mxu0 %v2668
  %v4109 = vpop.f32.mrb[0].mxu0
  %v4110 = vadd.f32 %v3821, %v4109
  %v4111 = vpop.f32.mrb[0].mxu0
  %v4112 = vpop.f32.mrb[0].mxu0
  %v4113 = vadd.f32 %v3824, %v4112
  %v4114 = vpop.f32.mrb[0].mxu0
  %4115 = vdwg.mxu0
  %4116 = vmatprep.subr.bf16.mxu0 0
  %4117 = vmatpush1.bf16.msra.mxu0 %v3153
  %4118 = vmatprep.subr.bf16.mxu0 0
  %4119 = vmatpush1.bf16.msra.mxu0 %v3154
  %4120 = vmatprep.subr.bf16.mxu0 0
  %4121 = vmatpush1.bf16.msra.mxu0 %v3155
  %4122 = vmatprep.subr.bf16.mxu0 0
  %4123 = vmatpush1.bf16.msra.mxu0 %v3156
  %4124 = vmatprep.subr.bf16.mxu0 0
  %4125 = vmatpush1.bf16.msra.mxu0 %v3157
  %4126 = vmatprep.subr.bf16.mxu0 0
  %4127 = vmatpush1.bf16.msra.mxu0 %v3158
  %4128 = vmatprep.subr.bf16.mxu0 0
  %4129 = vmatpush1.bf16.msra.mxu0 %v3159
  %4130 = vmatprep.subr.bf16.mxu0 0
  %4131 = vmatpush1.bf16.msra.mxu0 %v3160
  %4132 = vmatprep.subr.bf16.mxu0 0
  %4133 = vmatpush1.bf16.msra.mxu0 %v3161
  %4134 = vmatprep.subr.bf16.mxu0 0
  %4135 = vmatpush1.bf16.msra.mxu0 %v3162
  %4136 = vmatprep.subr.bf16.mxu0 0
  %4137 = vmatpush1.bf16.msra.mxu0 %v3163
  %4138 = vmatprep.subr.bf16.mxu0 0
  %4139 = vmatpush1.bf16.msra.mxu0 %v3164
  %4140 = vmatprep.subr.bf16.mxu0 0
  %4141 = vmatpush1.bf16.msra.mxu0 %v3165
  %4142 = vmatprep.subr.bf16.mxu0 0
  %4143 = vmatpush1.bf16.msra.mxu0 %v3166
  %4144 = vmatprep.subr.bf16.mxu0 0
  %4145 = vmatpush1.bf16.msra.mxu0 %v3167
  %4146 = vmatprep.subr.bf16.mxu0 0
  %4147 = vmatpush1.bf16.msra.mxu0 %v3168
  %4148 = vmatprep.mubr.bf16.mxu0 %v2392
  %4149 = vmatmul.mubr.bf16.gmra.mrb[0].mxu0 %v2391
  %v4150 = vpop.f32.mrb[0].mxu0
  %v4151 = vadd.f32 %v3862, %v4150
  %v4152 = vpop.f32.mrb[0].mxu0
  %v4153 = vpop.f32.mrb[0].mxu0
  %v4154 = vadd.f32 %v3865, %v4153
  %v4155 = vpop.f32.mrb[0].mxu0
  %4156 = vmatprep.mubr.bf16.mxu0 %v2401
  %4157 = vmatmul.mubr.bf16.gmra.mrb[0].mxu0 %v2400
  %v4158 = vpop.f32.mrb[0].mxu0
  %v4159 = vadd.f32 %v3870, %v4158
  %v4160 = vpop.f32.mrb[0].mxu0
  %v4161 = vpop.f32.mrb[0].mxu0
  %v4162 = vadd.f32 %v3873, %v4161
  %v4163 = vpop.f32.mrb[0].mxu0
  %4164 = vmatprep.mubr.bf16.mxu0 %v2410
  %4165 = vmatmul.mubr.bf16.gmra.mrb[0].mxu0 %v2409
  %v4166 = vpop.f32.mrb[0].mxu0
  %v4167 = vadd.f32 %v3878, %v4166
  %v4168 = vpop.f32.mrb[0].mxu0
  %v4169 = vpop.f32.mrb[0].mxu0
  %v4170 = vadd.f32 %v3881, %v4169
  %v4171 = vpop.f32.mrb[0].mxu0
  %4172 = vmatprep.mubr.bf16.mxu0 %v2419
  %4173 = vmatmul.mubr.bf16.gmra.mrb[0].mxu0 %v2418
  %v4174 = vpop.f32.mrb[0].mxu0
  %v4175 = vadd.f32 %v3886, %v4174
  %v4176 = vpop.f32.mrb[0].mxu0
  %v4177 = vpop.f32.mrb[0].mxu0
  %v4178 = vadd.f32 %v3889, %v4177
  %v4179 = vpop.f32.mrb[0].mxu0
  %4180 = vmatprep.mubr.bf16.mxu0 %v2428
  %4181 = vmatmul.mubr.bf16.gmra.mrb[0].mxu0 %v2427
  %v4182 = vpop.f32.mrb[0].mxu0
  %v4183 = vadd.f32 %v3894, %v4182
  %v4184 = vpop.f32.mrb[0].mxu0
  %v4185 = vpop.f32.mrb[0].mxu0
  %v4186 = vadd.f32 %v3897, %v4185
  %v4187 = vpop.f32.mrb[0].mxu0
  %4188 = vmatprep.mubr.bf16.mxu0 %v2437
  %4189 = vmatmul.mubr.bf16.gmra.mrb[0].mxu0 %v2436
  %v4190 = vpop.f32.mrb[0].mxu0
  %v4191 = vadd.f32 %v3902, %v4190
  %v4192 = vpop.f32.mrb[0].mxu0
  %v4193 = vpop.f32.mrb[0].mxu0
  %v4194 = vadd.f32 %v3905, %v4193
  %v4195 = vpop.f32.mrb[0].mxu0
  %4196 = vmatprep.mubr.bf16.mxu0 %v2446
  %4197 = vmatmul.mubr.bf16.gmra.mrb[0].mxu0 %v2445
  %v4198 = vpop.f32.mrb[0].mxu0
  %v4199 = vadd.f32 %v3910, %v4198
  %v4200 = vpop.f32.mrb[0].mxu0
  %v4201 = vpop.f32.mrb[0].mxu0
  %v4202 = vadd.f32 %v3913, %v4201
  %v4203 = vpop.f32.mrb[0].mxu0
  %4204 = vmatprep.mubr.bf16.mxu0 %v2455
  %4205 = vmatmul.mubr.bf16.gmra.mrb[0].mxu0 %v2454
  %v4206 = vpop.f32.mrb[0].mxu0
  %v4207 = vadd.f32 %v3918, %v4206
  %v4208 = vpop.f32.mrb[0].mxu0
  %v4209 = vpop.f32.mrb[0].mxu0
  %v4210 = vadd.f32 %v3921, %v4209
  %v4211 = vpop.f32.mrb[0].mxu0
  %4212 = vmatprep.mubr.bf16.mxu0 %v2464
  %4213 = vmatmul.mubr.bf16.gmra.mrb[0].mxu0 %v2463
  %v4214 = vpop.f32.mrb[0].mxu0
  %v4215 = vadd.f32 %v3926, %v4214
  %v4216 = vpop.f32.mrb[0].mxu0
  %v4217 = vpop.f32.mrb[0].mxu0
  %v4218 = vadd.f32 %v3929, %v4217
  %v4219 = vpop.f32.mrb[0].mxu0
  %4220 = vmatprep.mubr.bf16.mxu0 %v2473
  %4221 = vmatmul.mubr.bf16.gmra.mrb[0].mxu0 %v2472
  %v4222 = vpop.f32.mrb[0].mxu0
  %v4223 = vadd.f32 %v3934, %v4222
  %v4224 = vpop.f32.mrb[0].mxu0
  %v4225 = vpop.f32.mrb[0].mxu0
  %v4226 = vadd.f32 %v3937, %v4225
  %v4227 = vpop.f32.mrb[0].mxu0
  %4228 = vmatprep.mubr.bf16.mxu0 %v2482
  %4229 = vmatmul.mubr.bf16.gmra.mrb[0].mxu0 %v2481
  %v4230 = vpop.f32.mrb[0].mxu0
  %v4231 = vadd.f32 %v3942, %v4230
  %v4232 = vpop.f32.mrb[0].mxu0
  %v4233 = vpop.f32.mrb[0].mxu0
  %v4234 = vadd.f32 %v3945, %v4233
  %v4235 = vpop.f32.mrb[0].mxu0
  %4236 = vmatprep.mubr.bf16.mxu0 %v2491
  %4237 = vmatmul.mubr.bf16.gmra.mrb[0].mxu0 %v2490
  %v4238 = vpop.f32.mrb[0].mxu0
  %v4239 = vadd.f32 %v3950, %v4238
  %v4240 = vpop.f32.mrb[0].mxu0
  %v4241 = vpop.f32.mrb[0].mxu0
  %v4242 = vadd.f32 %v3953, %v4241
  %v4243 = vpop.f32.mrb[0].mxu0
  %4244 = vmatprep.mubr.bf16.mxu0 %v2500
  %4245 = vmatmul.mubr.bf16.gmra.mrb[0].mxu0 %v2499
  %v4246 = vpop.f32.mrb[0].mxu0
  %v4247 = vadd.f32 %v3958, %v4246
  %v4248 = vpop.f32.mrb[0].mxu0
  %v4249 = vpop.f32.mrb[0].mxu0
  %v4250 = vadd.f32 %v3961, %v4249
  %v4251 = vpop.f32.mrb[0].mxu0
  %4252 = vmatprep.mubr.bf16.mxu0 %v2509
  %4253 = vmatmul.mubr.bf16.gmra.mrb[0].mxu0 %v2508
  %v4254 = vpop.f32.mrb[0].mxu0
  %v4255 = vadd.f32 %v3966, %v4254
  %v4256 = vpop.f32.mrb[0].mxu0
  %v4257 = vpop.f32.mrb[0].mxu0
  %v4258 = vadd.f32 %v3969, %v4257
  %v4259 = vpop.f32.mrb[0].mxu0
  %4260 = vmatprep.mubr.bf16.mxu0 %v2518
  %4261 = vmatmul.mubr.bf16.gmra.mrb[0].mxu0 %v2517
  %v4262 = vpop.f32.mrb[0].mxu0
  %v4263 = vadd.f32 %v3974, %v4262
  %v4264 = vpop.f32.mrb[0].mxu0
  %v4265 = vpop.f32.mrb[0].mxu0
  %v4266 = vadd.f32 %v3977, %v4265
  %v4267 = vpop.f32.mrb[0].mxu0
  %4268 = vmatprep.mubr.bf16.mxu0 %v2527
  %4269 = vmatmul.mubr.bf16.gmra.mrb[0].mxu0 %v2526
  %v4270 = vpop.f32.mrb[0].mxu0
  %v4271 = vadd.f32 %v3982, %v4270
  %v4272 = vpop.f32.mrb[0].mxu0
  %v4273 = vpop.f32.mrb[0].mxu0
  %v4274 = vadd.f32 %v3985, %v4273
  %v4275 = vpop.f32.mrb[0].mxu0
  %4276 = vmatprep.mubr.bf16.mxu0 %v2536
  %4277 = vmatmul.mubr.bf16.gmra.mrb[0].mxu0 %v2535
  %v4278 = vpop.f32.mrb[0].mxu0
  %v4279 = vadd.f32 %v3990, %v4278
  %v4280 = vpop.f32.mrb[0].mxu0
  %v4281 = vpop.f32.mrb[0].mxu0
  %v4282 = vadd.f32 %v3993, %v4281
  %v4283 = vpop.f32.mrb[0].mxu0
  %4284 = vmatprep.mubr.bf16.mxu0 %v2545
  %4285 = vmatmul.mubr.bf16.gmra.mrb[0].mxu0 %v2544
  %v4286 = vpop.f32.mrb[0].mxu0
  %v4287 = vadd.f32 %v3998, %v4286
  %v4288 = vpop.f32.mrb[0].mxu0
  %v4289 = vpop.f32.mrb[0].mxu0
  %v4290 = vadd.f32 %v4001, %v4289
  %v4291 = vpop.f32.mrb[0].mxu0
  %4292 = vmatprep.mubr.bf16.mxu0 %v2554
  %4293 = vmatmul.mubr.bf16.gmra.mrb[0].mxu0 %v2553
  %v4294 = vpop.f32.mrb[0].mxu0
  %v4295 = vadd.f32 %v4006, %v4294
  %v4296 = vpop.f32.mrb[0].mxu0
  %v4297 = vpop.f32.mrb[0].mxu0
  %v4298 = vadd.f32 %v4009, %v4297
  %v4299 = vpop.f32.mrb[0].mxu0
  %4300 = vmatprep.mubr.bf16.mxu0 %v2563
  %4301 = vmatmul.mubr.bf16.gmra.mrb[0].mxu0 %v2562
  %v4302 = vpop.f32.mrb[0].mxu0
  %v4303 = vadd.f32 %v4014, %v4302
  %v4304 = vpop.f32.mrb[0].mxu0
  %v4305 = vpop.f32.mrb[0].mxu0
  %v4306 = vadd.f32 %v4017, %v4305
  %v4307 = vpop.f32.mrb[0].mxu0
  %4308 = vmatprep.mubr.bf16.mxu0 %v2572
  %4309 = vmatmul.mubr.bf16.gmra.mrb[0].mxu0 %v2571
  %v4310 = vpop.f32.mrb[0].mxu0
  %v4311 = vadd.f32 %v4022, %v4310
  %v4312 = vpop.f32.mrb[0].mxu0
  %v4313 = vpop.f32.mrb[0].mxu0
  %v4314 = vadd.f32 %v4025, %v4313
  %v4315 = vpop.f32.mrb[0].mxu0
  %4316 = vmatprep.mubr.bf16.mxu0 %v2581
  %4317 = vmatmul.mubr.bf16.gmra.mrb[0].mxu0 %v2580
  %v4318 = vpop.f32.mrb[0].mxu0
  %v4319 = vadd.f32 %v4030, %v4318
  %v4320 = vpop.f32.mrb[0].mxu0
  %v4321 = vpop.f32.mrb[0].mxu0
  %v4322 = vadd.f32 %v4033, %v4321
  %v4323 = vpop.f32.mrb[0].mxu0
  %4324 = vmatprep.mubr.bf16.mxu0 %v2590
  %4325 = vmatmul.mubr.bf16.gmra.mrb[0].mxu0 %v2589
  %v4326 = vpop.f32.mrb[0].mxu0
  %v4327 = vadd.f32 %v4038, %v4326
  %v4328 = vpop.f32.mrb[0].mxu0
  %v4329 = vpop.f32.mrb[0].mxu0
  %v4330 = vadd.f32 %v4041, %v4329
  %v4331 = vpop.f32.mrb[0].mxu0
  %4332 = vmatprep.mubr.bf16.mxu0 %v2599
  %4333 = vmatmul.mubr.bf16.gmra.mrb[0].mxu0 %v2598
  %v4334 = vpop.f32.mrb[0].mxu0
  %v4335 = vadd.f32 %v4046, %v4334
  %v4336 = vpop.f32.mrb[0].mxu0
  %v4337 = vpop.f32.mrb[0].mxu0
  %v4338 = vadd.f32 %v4049, %v4337
  %v4339 = vpop.f32.mrb[0].mxu0
  %4340 = vmatprep.mubr.bf16.mxu0 %v2608
  %4341 = vmatmul.mubr.bf16.gmra.mrb[0].mxu0 %v2607
  %v4342 = vpop.f32.mrb[0].mxu0
  %v4343 = vadd.f32 %v4054, %v4342
  %v4344 = vpop.f32.mrb[0].mxu0
  %v4345 = vpop.f32.mrb[0].mxu0
  %v4346 = vadd.f32 %v4057, %v4345
  %v4347 = vpop.f32.mrb[0].mxu0
  %4348 = vmatprep.mubr.bf16.mxu0 %v2617
  %4349 = vmatmul.mubr.bf16.gmra.mrb[0].mxu0 %v2616
  %v4350 = vpop.f32.mrb[0].mxu0
  %v4351 = vadd.f32 %v4062, %v4350
  %v4352 = vpop.f32.mrb[0].mxu0
  %v4353 = vpop.f32.mrb[0].mxu0
  %v4354 = vadd.f32 %v4065, %v4353
  %v4355 = vpop.f32.mrb[0].mxu0
  %4356 = vmatprep.mubr.bf16.mxu0 %v2626
  %4357 = vmatmul.mubr.bf16.gmra.mrb[0].mxu0 %v2625
  %v4358 = vpop.f32.mrb[0].mxu0
  %v4359 = vadd.f32 %v4070, %v4358
  %v4360 = vpop.f32.mrb[0].mxu0
  %v4361 = vpop.f32.mrb[0].mxu0
  %v4362 = vadd.f32 %v4073, %v4361
  %v4363 = vpop.f32.mrb[0].mxu0
  %4364 = vmatprep.mubr.bf16.mxu0 %v2635
  %4365 = vmatmul.mubr.bf16.gmra.mrb[0].mxu0 %v2634
  %v4366 = vpop.f32.mrb[0].mxu0
  %v4367 = vadd.f32 %v4078, %v4366
  %v4368 = vpop.f32.mrb[0].mxu0
  %v4369 = vpop.f32.mrb[0].mxu0
  %v4370 = vadd.f32 %v4081, %v4369
  %v4371 = vpop.f32.mrb[0].mxu0
  %4372 = vmatprep.mubr.bf16.mxu0 %v2644
  %4373 = vmatmul.mubr.bf16.gmra.mrb[0].mxu0 %v2643
  %v4374 = vpop.f32.mrb[0].mxu0
  %v4375 = vadd.f32 %v4086, %v4374
  %v4376 = vpop.f32.mrb[0].mxu0
  %v4377 = vpop.f32.mrb[0].mxu0
  %v4378 = vadd.f32 %v4089, %v4377
  %v4379 = vpop.f32.mrb[0].mxu0
  %4380 = vmatprep.mubr.bf16.mxu0 %v2653
  %4381 = vmatmul.mubr.bf16.gmra.mrb[0].mxu0 %v2652
  %v4382 = vpop.f32.mrb[0].mxu0
  %v4383 = vadd.f32 %v4094, %v4382
  %v4384 = vpop.f32.mrb[0].mxu0
  %v4385 = vpop.f32.mrb[0].mxu0
  %v4386 = vadd.f32 %v4097, %v4385
  %v4387 = vpop.f32.mrb[0].mxu0
  %4388 = vmatprep.mubr.bf16.mxu0 %v2662
  %4389 = vmatmul.mubr.bf16.gmra.mrb[0].mxu0 %v2661
  %v4390 = vpop.f32.mrb[0].mxu0
  %v4391 = vadd.f32 %v4102, %v4390
  %v4392 = vpop.f32.mrb[0].mxu0
  %v4393 = vpop.f32.mrb[0].mxu0
  %v4394 = vadd.f32 %v4105, %v4393
  %v4395 = vpop.f32.mrb[0].mxu0
  %4396 = vmatprep.mubr.bf16.mxu0 %v2671
  %4397 = vmatmul.mubr.bf16.gmra.mrb[0].mxu0 %v2670
  %v4398 = vpop.f32.mrb[0].mxu0
  %v4399 = vadd.f32 %v4110, %v4398
  %v4400 = vpop.f32.mrb[0].mxu0
  %v4401 = vpop.f32.mrb[0].mxu0
  %v4402 = vadd.f32 %v4113, %v4401
  %v4403 = vpop.f32.mrb[0].mxu0
  %4404 = vdwg.mxu0
  %4405 = vmatprep.subr.bf16.mxu0 0
  %4406 = vmatpush1.bf16.msra.mxu0 %v3169
  %4407 = vmatprep.subr.bf16.mxu0 0
  %4408 = vmatpush1.bf16.msra.mxu0 %v3170
  %4409 = vmatprep.subr.bf16.mxu0 0
  %4410 = vmatpush1.bf16.msra.mxu0 %v3171
  %4411 = vmatprep.subr.bf16.mxu0 0
  %4412 = vmatpush1.bf16.msra.mxu0 %v3172
  %4413 = vmatprep.subr.bf16.mxu0 0
  %4414 = vmatpush1.bf16.msra.mxu0 %v3173
  %4415 = vmatprep.subr.bf16.mxu0 0
  %4416 = vmatpush1.bf16.msra.mxu0 %v3174
  %4417 = vmatprep.subr.bf16.mxu0 0
  %4418 = vmatpush1.bf16.msra.mxu0 %v3175
  %4419 = vmatprep.subr.bf16.mxu0 0
  %4420 = vmatpush1.bf16.msra.mxu0 %v3176
  %4421 = vmatprep.subr.bf16.mxu0 0
  %4422 = vmatpush1.bf16.msra.mxu0 0
  %4423 = vmatprep.subr.bf16.mxu0 0
  %4424 = vmatpush1.bf16.msra.mxu0 0
  %4425 = vmatprep.subr.bf16.mxu0 0
  %4426 = vmatpush1.bf16.msra.mxu0 0
  %4427 = vmatprep.subr.bf16.mxu0 0
  %4428 = vmatpush1.bf16.msra.mxu0 0
  %4429 = vmatprep.subr.bf16.mxu0 0
  %4430 = vmatpush1.bf16.msra.mxu0 0
  %4431 = vmatprep.subr.bf16.mxu0 0
  %4432 = vmatpush1.bf16.msra.mxu0 0
  %4433 = vmatprep.subr.bf16.mxu0 0
  %4434 = vmatpush1.bf16.msra.mxu0 0
  %4435 = vmatprep.subr.bf16.mxu0 0
  %4436 = vmatpush1.bf16.msra.mxu0 0
  %4437 = vmatprep.mubr.bf16.mxu0 0
  %4438 = vmatmul.mubr.bf16.gmra.mrb[0].mxu0 %v2393
  %v4439 = vpop.f32.mrb[0].mxu0
  %v4440 = vadd.f32 %v4151, %v4439
  %v4441 = vpop.f32.mrb[0].mxu0
  %v4442 = vpop.f32.mrb[0].mxu0
  %v4443 = vadd.f32 %v4154, %v4442
  %v4444 = vpop.f32.mrb[0].mxu0
  %4445 = vmatprep.mubr.bf16.mxu0 0
  %4446 = vmatmul.mubr.bf16.gmra.mrb[0].mxu0 %v2402
  %v4447 = vpop.f32.mrb[0].mxu0
  %v4448 = vadd.f32 %v4159, %v4447
  %v4449 = vpop.f32.mrb[0].mxu0
  %v4450 = vpop.f32.mrb[0].mxu0
  %v4451 = vadd.f32 %v4162, %v4450
  %v4452 = vpop.f32.mrb[0].mxu0
  %4453 = vmatprep.mubr.bf16.mxu0 0
  %4454 = vmatmul.mubr.bf16.gmra.mrb[0].mxu0 %v2411
  %v4455 = vpop.f32.mrb[0].mxu0
  %v4456 = vadd.f32 %v4167, %v4455
  %v4457 = vpop.f32.mrb[0].mxu0
  %v4458 = vpop.f32.mrb[0].mxu0
  %v4459 = vadd.f32 %v4170, %v4458
  %v4460 = vpop.f32.mrb[0].mxu0
  %4461 = vmatprep.mubr.bf16.mxu0 0
  %4462 = vmatmul.mubr.bf16.gmra.mrb[0].mxu0 %v2420
  %v4463 = vpop.f32.mrb[0].mxu0
  %v4464 = vadd.f32 %v4175, %v4463
  %v4465 = vpop.f32.mrb[0].mxu0
  %v4466 = vpop.f32.mrb[0].mxu0
  %v4467 = vadd.f32 %v4178, %v4466
  %v4468 = vpop.f32.mrb[0].mxu0
  %4469 = vmatprep.mubr.bf16.mxu0 0
  %4470 = vmatmul.mubr.bf16.gmra.mrb[0].mxu0 %v2429
  %v4471 = vpop.f32.mrb[0].mxu0
  %v4472 = vadd.f32 %v4183, %v4471
  %v4473 = vpop.f32.mrb[0].mxu0
  %v4474 = vpop.f32.mrb[0].mxu0
  %v4475 = vadd.f32 %v4186, %v4474
  %v4476 = vpop.f32.mrb[0].mxu0
  %4477 = vmatprep.mubr.bf16.mxu0 0
  %4478 = vmatmul.mubr.bf16.gmra.mrb[0].mxu0 %v2438
  %v4479 = vpop.f32.mrb[0].mxu0
  %v4480 = vadd.f32 %v4191, %v4479
  %v4481 = vpop.f32.mrb[0].mxu0
  %v4482 = vpop.f32.mrb[0].mxu0
  %v4483 = vadd.f32 %v4194, %v4482
  %v4484 = vpop.f32.mrb[0].mxu0
  %4485 = vmatprep.mubr.bf16.mxu0 0
  %4486 = vmatmul.mubr.bf16.gmra.mrb[0].mxu0 %v2447
  %v4487 = vpop.f32.mrb[0].mxu0
  %v4488 = vadd.f32 %v4199, %v4487
  %v4489 = vpop.f32.mrb[0].mxu0
  %v4490 = vpop.f32.mrb[0].mxu0
  %v4491 = vadd.f32 %v4202, %v4490
  %v4492 = vpop.f32.mrb[0].mxu0
  %4493 = vmatprep.mubr.bf16.mxu0 0
  %4494 = vmatmul.mubr.bf16.gmra.mrb[0].mxu0 %v2456
  %v4495 = vpop.f32.mrb[0].mxu0
  %v4496 = vadd.f32 %v4207, %v4495
  %v4497 = vpop.f32.mrb[0].mxu0
  %v4498 = vpop.f32.mrb[0].mxu0
  %v4499 = vadd.f32 %v4210, %v4498
  %v4500 = vpop.f32.mrb[0].mxu0
  %4501 = vmatprep.mubr.bf16.mxu0 0
  %4502 = vmatmul.mubr.bf16.gmra.mrb[0].mxu0 %v2465
  %v4503 = vpop.f32.mrb[0].mxu0
  %v4504 = vadd.f32 %v4215, %v4503
  %v4505 = vpop.f32.mrb[0].mxu0
  %v4506 = vpop.f32.mrb[0].mxu0
  %v4507 = vadd.f32 %v4218, %v4506
  %v4508 = vpop.f32.mrb[0].mxu0
  %4509 = vmatprep.mubr.bf16.mxu0 0
  %4510 = vmatmul.mubr.bf16.gmra.mrb[0].mxu0 %v2474
  %v4511 = vpop.f32.mrb[0].mxu0
  %v4512 = vadd.f32 %v4223, %v4511
  %v4513 = vpop.f32.mrb[0].mxu0
  %v4514 = vpop.f32.mrb[0].mxu0
  %v4515 = vadd.f32 %v4226, %v4514
  %v4516 = vpop.f32.mrb[0].mxu0
  %4517 = vmatprep.mubr.bf16.mxu0 0
  %4518 = vmatmul.mubr.bf16.gmra.mrb[0].mxu0 %v2483
  %v4519 = vpop.f32.mrb[0].mxu0
  %v4520 = vadd.f32 %v4231, %v4519
  %v4521 = vpop.f32.mrb[0].mxu0
  %v4522 = vpop.f32.mrb[0].mxu0
  %v4523 = vadd.f32 %v4234, %v4522
  %v4524 = vpop.f32.mrb[0].mxu0
  %4525 = vmatprep.mubr.bf16.mxu0 0
  %4526 = vmatmul.mubr.bf16.gmra.mrb[0].mxu0 %v2492
  %v4527 = vpop.f32.mrb[0].mxu0
  %v4528 = vadd.f32 %v4239, %v4527
  %v4529 = vpop.f32.mrb[0].mxu0
  %v4530 = vpop.f32.mrb[0].mxu0
  %v4531 = vadd.f32 %v4242, %v4530
  %v4532 = vpop.f32.mrb[0].mxu0
  %4533 = vmatprep.mubr.bf16.mxu0 0
  %4534 = vmatmul.mubr.bf16.gmra.mrb[0].mxu0 %v2501
  %v4535 = vpop.f32.mrb[0].mxu0
  %v4536 = vadd.f32 %v4247, %v4535
  %v4537 = vpop.f32.mrb[0].mxu0
  %v4538 = vpop.f32.mrb[0].mxu0
  %v4539 = vadd.f32 %v4250, %v4538
  %v4540 = vpop.f32.mrb[0].mxu0
  %4541 = vmatprep.mubr.bf16.mxu0 0
  %4542 = vmatmul.mubr.bf16.gmra.mrb[0].mxu0 %v2510
  %v4543 = vpop.f32.mrb[0].mxu0
  %v4544 = vadd.f32 %v4255, %v4543
  %v4545 = vpop.f32.mrb[0].mxu0
  %v4546 = vpop.f32.mrb[0].mxu0
  %v4547 = vadd.f32 %v4258, %v4546
  %v4548 = vpop.f32.mrb[0].mxu0
  %4549 = vmatprep.mubr.bf16.mxu0 0
  %4550 = vmatmul.mubr.bf16.gmra.mrb[0].mxu0 %v2519
  %v4551 = vpop.f32.mrb[0].mxu0
  %v4552 = vadd.f32 %v4263, %v4551
  %v4553 = vpop.f32.mrb[0].mxu0
  %v4554 = vpop.f32.mrb[0].mxu0
  %v4555 = vadd.f32 %v4266, %v4554
  %v4556 = vpop.f32.mrb[0].mxu0
  %4557 = vmatprep.mubr.bf16.mxu0 0
  %4558 = vmatmul.mubr.bf16.gmra.mrb[0].mxu0 %v2528
  %v4559 = vpop.f32.mrb[0].mxu0
  %v4560 = vadd.f32 %v4271, %v4559
  %v4561 = vpop.f32.mrb[0].mxu0
  %v4562 = vpop.f32.mrb[0].mxu0
  %v4563 = vadd.f32 %v4274, %v4562
  %v4564 = vpop.f32.mrb[0].mxu0
  %4565 = vmatprep.mubr.bf16.mxu0 0
  %4566 = vmatmul.mubr.bf16.gmra.mrb[0].mxu0 %v2537
  %v4567 = vpop.f32.mrb[0].mxu0
  %v4568 = vadd.f32 %v4279, %v4567
  %v4569 = vpop.f32.mrb[0].mxu0
  %v4570 = vpop.f32.mrb[0].mxu0
  %v4571 = vadd.f32 %v4282, %v4570
  %v4572 = vpop.f32.mrb[0].mxu0
  %4573 = vmatprep.mubr.bf16.mxu0 0
  %4574 = vmatmul.mubr.bf16.gmra.mrb[0].mxu0 %v2546
  %v4575 = vpop.f32.mrb[0].mxu0
  %v4576 = vadd.f32 %v4287, %v4575
  %v4577 = vpop.f32.mrb[0].mxu0
  %v4578 = vpop.f32.mrb[0].mxu0
  %v4579 = vadd.f32 %v4290, %v4578
  %v4580 = vpop.f32.mrb[0].mxu0
  %4581 = vmatprep.mubr.bf16.mxu0 0
  %4582 = vmatmul.mubr.bf16.gmra.mrb[0].mxu0 %v2555
  %v4583 = vpop.f32.mrb[0].mxu0
  %v4584 = vadd.f32 %v4295, %v4583
  %v4585 = vpop.f32.mrb[0].mxu0
  %v4586 = vpop.f32.mrb[0].mxu0
  %v4587 = vadd.f32 %v4298, %v4586
  %v4588 = vpop.f32.mrb[0].mxu0
  %4589 = vmatprep.mubr.bf16.mxu0 0
  %4590 = vmatmul.mubr.bf16.gmra.mrb[0].mxu0 %v2564
  %v4591 = vpop.f32.mrb[0].mxu0
  %v4592 = vadd.f32 %v4303, %v4591
  %v4593 = vpop.f32.mrb[0].mxu0
  %v4594 = vpop.f32.mrb[0].mxu0
  %v4595 = vadd.f32 %v4306, %v4594
  %v4596 = vpop.f32.mrb[0].mxu0
  %4597 = vmatprep.mubr.bf16.mxu0 0
  %4598 = vmatmul.mubr.bf16.gmra.mrb[0].mxu0 %v2573
  %v4599 = vpop.f32.mrb[0].mxu0
  %v4600 = vadd.f32 %v4311, %v4599
  %v4601 = vpop.f32.mrb[0].mxu0
  %v4602 = vpop.f32.mrb[0].mxu0
  %v4603 = vadd.f32 %v4314, %v4602
  %v4604 = vpop.f32.mrb[0].mxu0
  %4605 = vmatprep.mubr.bf16.mxu0 0
  %4606 = vmatmul.mubr.bf16.gmra.mrb[0].mxu0 %v2582
  %v4607 = vpop.f32.mrb[0].mxu0
  %v4608 = vadd.f32 %v4319, %v4607
  %v4609 = vpop.f32.mrb[0].mxu0
  %v4610 = vpop.f32.mrb[0].mxu0
  %v4611 = vadd.f32 %v4322, %v4610
  %v4612 = vpop.f32.mrb[0].mxu0
  %4613 = vmatprep.mubr.bf16.mxu0 0
  %4614 = vmatmul.mubr.bf16.gmra.mrb[0].mxu0 %v2591
  %v4615 = vpop.f32.mrb[0].mxu0
  %v4616 = vadd.f32 %v4327, %v4615
  %v4617 = vpop.f32.mrb[0].mxu0
  %v4618 = vpop.f32.mrb[0].mxu0
  %v4619 = vadd.f32 %v4330, %v4618
  %v4620 = vpop.f32.mrb[0].mxu0
  %4621 = vmatprep.mubr.bf16.mxu0 0
  %4622 = vmatmul.mubr.bf16.gmra.mrb[0].mxu0 %v2600
  %v4623 = vpop.f32.mrb[0].mxu0
  %v4624 = vadd.f32 %v4335, %v4623
  %v4625 = vpop.f32.mrb[0].mxu0
  %v4626 = vpop.f32.mrb[0].mxu0
  %v4627 = vadd.f32 %v4338, %v4626
  %v4628 = vpop.f32.mrb[0].mxu0
  %4629 = vmatprep.mubr.bf16.mxu0 0
  %4630 = vmatmul.mubr.bf16.gmra.mrb[0].mxu0 %v2609
  %v4631 = vpop.f32.mrb[0].mxu0
  %v4632 = vadd.f32 %v4343, %v4631
  %v4633 = vpop.f32.mrb[0].mxu0
  %v4634 = vpop.f32.mrb[0].mxu0
  %v4635 = vadd.f32 %v4346, %v4634
  %v4636 = vpop.f32.mrb[0].mxu0
  %4637 = vmatprep.mubr.bf16.mxu0 0
  %4638 = vmatmul.mubr.bf16.gmra.mrb[0].mxu0 %v2618
  %v4639 = vpop.f32.mrb[0].mxu0
  %v4640 = vadd.f32 %v4351, %v4639
  %v4641 = vpop.f32.mrb[0].mxu0
  %v4642 = vpop.f32.mrb[0].mxu0
  %v4643 = vadd.f32 %v4354, %v4642
  %v4644 = vpop.f32.mrb[0].mxu0
  %4645 = vmatprep.mubr.bf16.mxu0 0
  %4646 = vmatmul.mubr.bf16.gmra.mrb[0].mxu0 %v2627
  %v4647 = vpop.f32.mrb[0].mxu0
  %v4648 = vadd.f32 %v4359, %v4647
  %v4649 = vpop.f32.mrb[0].mxu0
  %v4650 = vpop.f32.mrb[0].mxu0
  %v4651 = vadd.f32 %v4362, %v4650
  %v4652 = vpop.f32.mrb[0].mxu0
  %4653 = vmatprep.mubr.bf16.mxu0 0
  %4654 = vmatmul.mubr.bf16.gmra.mrb[0].mxu0 %v2636
  %v4655 = vpop.f32.mrb[0].mxu0
  %v4656 = vadd.f32 %v4367, %v4655
  %v4657 = vpop.f32.mrb[0].mxu0
  %v4658 = vpop.f32.mrb[0].mxu0
  %v4659 = vadd.f32 %v4370, %v4658
  %v4660 = vpop.f32.mrb[0].mxu0
  %4661 = vmatprep.mubr.bf16.mxu0 0
  %4662 = vmatmul.mubr.bf16.gmra.mrb[0].mxu0 %v2645
  %v4663 = vpop.f32.mrb[0].mxu0
  %v4664 = vadd.f32 %v4375, %v4663
  %v4665 = vpop.f32.mrb[0].mxu0
  %v4666 = vpop.f32.mrb[0].mxu0
  %v4667 = vadd.f32 %v4378, %v4666
  %v4668 = vpop.f32.mrb[0].mxu0
  %4669 = vmatprep.mubr.bf16.mxu0 0
  %4670 = vmatmul.mubr.bf16.gmra.mrb[0].mxu0 %v2654
  %v4671 = vpop.f32.mrb[0].mxu0
  %v4672 = vadd.f32 %v4383, %v4671
  %v4673 = vpop.f32.mrb[0].mxu0
  %v4674 = vpop.f32.mrb[0].mxu0
  %v4675 = vadd.f32 %v4386, %v4674
  %v4676 = vpop.f32.mrb[0].mxu0
  %4677 = vmatprep.mubr.bf16.mxu0 0
  %4678 = vmatmul.mubr.bf16.gmra.mrb[0].mxu0 %v2663
  %v4679 = vpop.f32.mrb[0].mxu0
  %v4680 = vadd.f32 %v4391, %v4679
  %v4681 = vpop.f32.mrb[0].mxu0
  %v4682 = vpop.f32.mrb[0].mxu0
  %v4683 = vadd.f32 %v4394, %v4682
  %v4684 = vpop.f32.mrb[0].mxu0
  %4685 = vmatprep.mubr.bf16.mxu0 0
  %4686 = vmatmul.mubr.bf16.gmra.mrb[0].mxu0 %v2672
  %v4687 = vpop.f32.mrb[0].mxu0
  %v4688 = vadd.f32 %v4399, %v4687
  %v4689 = vpop.f32.mrb[0].mxu0
  %v4690 = vpop.f32.mrb[0].mxu0
  %v4691 = vadd.f32 %v4402, %v4690
  %v4692 = vpop.f32.mrb[0].mxu0
  %4693 = vdwg.mxu0
  %v4694 = vld [vmem:[%s6] sm:$0x1]
  %v4695 = vld [vmem:[%s7] sm:$0x1]
  %v4696 = vadd.f32 %v4440, %v4443
  %v4697 = vadd.f32 %v4696, %v4448
  %v4698 = vadd.f32 %v4697, %v4451
  %v4699 = vadd.f32 %v4698, %v4456
  %v4700 = vadd.f32 %v4699, %v4459
  %v4701 = vadd.f32 %v4700, %v4464
  %v4702 = vadd.f32 %v4701, %v4467
  %v4703 = vadd.f32 %v4702, %v4472
  %v4704 = vadd.f32 %v4703, %v4475
  %v4705 = vadd.f32 %v4704, %v4480
  %v4706 = vadd.f32 %v4705, %v4483
  %v4707 = vadd.f32 %v4706, %v4488
  %v4708 = vadd.f32 %v4707, %v4491
  %v4709 = vadd.f32 %v4708, %v4496
  %v4710 = vadd.f32 %v4709, %v4499
  %v4711 = vadd.f32 %v4710, %v4504
  %v4712 = vadd.f32 %v4711, %v4507
  %v4713 = vadd.f32 %v4712, %v4512
  %v4714 = vadd.f32 %v4713, %v4515
  %v4715 = vadd.f32 %v4714, %v4520
  %v4716 = vadd.f32 %v4715, %v4523
  %v4717 = vadd.f32 %v4716, %v4528
  %v4718 = vadd.f32 %v4717, %v4531
  %v4719 = vadd.f32 %v4718, %v4536
  %v4720 = vadd.f32 %v4719, %v4539
  %v4721 = vadd.f32 %v4720, %v4544
  %v4722 = vadd.f32 %v4721, %v4547
  %v4723 = vadd.f32 %v4722, %v4552
  %v4724 = vadd.f32 %v4723, %v4555
  %v4725 = vadd.f32 %v4724, %v4560
  %v4726 = vadd.f32 %v4725, %v4563
  %v4727 = vadd.f32 %v4726, %v4568
  %v4728 = vadd.f32 %v4727, %v4571
  %v4729 = vadd.f32 %v4728, %v4576
  %v4730 = vadd.f32 %v4729, %v4579
  %v4731 = vadd.f32 %v4730, %v4584
  %v4732 = vadd.f32 %v4731, %v4587
  %v4733 = vadd.f32 %v4732, %v4592
  %v4734 = vadd.f32 %v4733, %v4595
  %v4735 = vadd.f32 %v4734, %v4600
  %v4736 = vadd.f32 %v4735, %v4603
  %v4737 = vadd.f32 %v4736, %v4608
  %v4738 = vadd.f32 %v4737, %v4611
  %v4739 = vadd.f32 %v4738, %v4616
  %v4740 = vadd.f32 %v4739, %v4619
  %v4741 = vadd.f32 %v4740, %v4624
  %v4742 = vadd.f32 %v4741, %v4627
  %v4743 = vadd.f32 %v4742, %v4632
  %v4744 = vadd.f32 %v4743, %v4635
  %v4745 = vadd.f32 %v4744, %v4640
  %v4746 = vadd.f32 %v4745, %v4643
  %v4747 = vadd.f32 %v4746, %v4648
  %v4748 = vadd.f32 %v4747, %v4651
  %v4749 = vadd.f32 %v4748, %v4656
  %v4750 = vadd.f32 %v4749, %v4659
  %v4751 = vadd.f32 %v4750, %v4664
  %v4752 = vadd.f32 %v4751, %v4667
  %v4753 = vadd.f32 %v4752, %v4672
  %v4754 = vadd.f32 %v4753, %v4675
  %v4755 = vadd.f32 %v4754, %v4680
  %v4756 = vadd.f32 %v4755, %v4683
  %v4757 = vadd.f32 %v4756, %v4688
  %v4758 = vadd.f32 %v4757, %v4691
  %v4759 = vrot.slane %v4758, 4
  %v4760 = vadd.f32 %v4758, %v4759
  %v4761 = vrot.slane %v4760, 2
  %v4762 = vadd.f32 %v4760, %v4761
  %v4763 = vrot.slane %v4762, 1
  %v4764 = vadd.f32 %v4762, %v4763
  %v4765 = vmul.f32 %v4440, %v4440
  %v4766 = vmul.f32 %v4443, %v4443
  %v4767 = vmul.f32 %v4448, %v4448
  %v4768 = vmul.f32 %v4451, %v4451
  %v4769 = vmul.f32 %v4456, %v4456
  %v4770 = vmul.f32 %v4459, %v4459
  %v4771 = vmul.f32 %v4464, %v4464
  %v4772 = vmul.f32 %v4467, %v4467
  %v4773 = vmul.f32 %v4472, %v4472
  %v4774 = vmul.f32 %v4475, %v4475
  %v4775 = vmul.f32 %v4480, %v4480
  %v4776 = vmul.f32 %v4483, %v4483
  %v4777 = vmul.f32 %v4488, %v4488
  %v4778 = vmul.f32 %v4491, %v4491
  %v4779 = vmul.f32 %v4496, %v4496
  %v4780 = vmul.f32 %v4499, %v4499
  %v4781 = vmul.f32 %v4504, %v4504
  %v4782 = vmul.f32 %v4507, %v4507
  %v4783 = vmul.f32 %v4512, %v4512
  %v4784 = vmul.f32 %v4515, %v4515
  %v4785 = vmul.f32 %v4520, %v4520
  %v4786 = vmul.f32 %v4523, %v4523
  %v4787 = vmul.f32 %v4528, %v4528
  %v4788 = vmul.f32 %v4531, %v4531
  %v4789 = vmul.f32 %v4536, %v4536
  %v4790 = vmul.f32 %v4539, %v4539
  %v4791 = vmul.f32 %v4544, %v4544
  %v4792 = vmul.f32 %v4547, %v4547
  %v4793 = vmul.f32 %v4552, %v4552
  %v4794 = vmul.f32 %v4555, %v4555
  %v4795 = vmul.f32 %v4560, %v4560
  %v4796 = vmul.f32 %v4563, %v4563
  %v4797 = vmul.f32 %v4568, %v4568
  %v4798 = vmul.f32 %v4571, %v4571
  %v4799 = vmul.f32 %v4576, %v4576
  %v4800 = vmul.f32 %v4579, %v4579
  %v4801 = vmul.f32 %v4584, %v4584
  %v4802 = vmul.f32 %v4587, %v4587
  %v4803 = vmul.f32 %v4592, %v4592
  %v4804 = vmul.f32 %v4595, %v4595
  %v4805 = vmul.f32 %v4600, %v4600
  %v4806 = vmul.f32 %v4603, %v4603
  %v4807 = vmul.f32 %v4608, %v4608
  %v4808 = vmul.f32 %v4611, %v4611
  %v4809 = vmul.f32 %v4616, %v4616
  %v4810 = vmul.f32 %v4619, %v4619
  %v4811 = vmul.f32 %v4624, %v4624
  %v4812 = vmul.f32 %v4627, %v4627
  %v4813 = vmul.f32 %v4632, %v4632
  %v4814 = vmul.f32 %v4635, %v4635
  %v4815 = vmul.f32 %v4640, %v4640
  %v4816 = vmul.f32 %v4643, %v4643
  %v4817 = vmul.f32 %v4648, %v4648
  %v4818 = vmul.f32 %v4651, %v4651
  %v4819 = vmul.f32 %v4656, %v4656
  %v4820 = vmul.f32 %v4659, %v4659
  %v4821 = vmul.f32 %v4664, %v4664
  %v4822 = vmul.f32 %v4667, %v4667
  %v4823 = vmul.f32 %v4672, %v4672
  %v4824 = vmul.f32 %v4675, %v4675
  %v4825 = vmul.f32 %v4680, %v4680
  %v4826 = vmul.f32 %v4683, %v4683
  %v4827 = vmul.f32 %v4688, %v4688
  %v4828 = vmul.f32 %v4691, %v4691
  %v4829 = vadd.f32 %v4765, %v4766
  %v4830 = vadd.f32 %v4829, %v4767
  %v4831 = vadd.f32 %v4830, %v4768
  %v4832 = vadd.f32 %v4831, %v4769
  %v4833 = vadd.f32 %v4832, %v4770
  %v4834 = vadd.f32 %v4833, %v4771
  %v4835 = vadd.f32 %v4834, %v4772
  %v4836 = vadd.f32 %v4835, %v4773
  %v4837 = vadd.f32 %v4836, %v4774
  %v4838 = vadd.f32 %v4837, %v4775
  %v4839 = vadd.f32 %v4838, %v4776
  %v4840 = vadd.f32 %v4839, %v4777
  %v4841 = vadd.f32 %v4840, %v4778
  %v4842 = vadd.f32 %v4841, %v4779
  %v4843 = vadd.f32 %v4842, %v4780
  %v4844 = vadd.f32 %v4843, %v4781
  %v4845 = vadd.f32 %v4844, %v4782
  %v4846 = vadd.f32 %v4845, %v4783
  %v4847 = vadd.f32 %v4846, %v4784
  %v4848 = vadd.f32 %v4847, %v4785
  %v4849 = vadd.f32 %v4848, %v4786
  %v4850 = vadd.f32 %v4849, %v4787
  %v4851 = vadd.f32 %v4850, %v4788
  %v4852 = vadd.f32 %v4851, %v4789
  %v4853 = vadd.f32 %v4852, %v4790
  %v4854 = vadd.f32 %v4853, %v4791
  %v4855 = vadd.f32 %v4854, %v4792
  %v4856 = vadd.f32 %v4855, %v4793
  %v4857 = vadd.f32 %v4856, %v4794
  %v4858 = vadd.f32 %v4857, %v4795
  %v4859 = vadd.f32 %v4858, %v4796
  %v4860 = vadd.f32 %v4859, %v4797
  %v4861 = vadd.f32 %v4860, %v4798
  %v4862 = vadd.f32 %v4861, %v4799
  %v4863 = vadd.f32 %v4862, %v4800
  %v4864 = vadd.f32 %v4863, %v4801
  %v4865 = vadd.f32 %v4864, %v4802
  %v4866 = vadd.f32 %v4865, %v4803
  %v4867 = vadd.f32 %v4866, %v4804
  %v4868 = vadd.f32 %v4867, %v4805
  %v4869 = vadd.f32 %v4868, %v4806
  %v4870 = vadd.f32 %v4869, %v4807
  %v4871 = vadd.f32 %v4870, %v4808
  %v4872 = vadd.f32 %v4871, %v4809
  %v4873 = vadd.f32 %v4872, %v4810
  %v4874 = vadd.f32 %v4873, %v4811
  %v4875 = vadd.f32 %v4874, %v4812
  %v4876 = vadd.f32 %v4875, %v4813
  %v4877 = vadd.f32 %v4876, %v4814
  %v4878 = vadd.f32 %v4877, %v4815
  %v4879 = vadd.f32 %v4878, %v4816
  %v4880 = vadd.f32 %v4879, %v4817
  %v4881 = vadd.f32 %v4880, %v4818
  %v4882 = vadd.f32 %v4881, %v4819
  %v4883 = vadd.f32 %v4882, %v4820
  %v4884 = vadd.f32 %v4883, %v4821
  %v4885 = vadd.f32 %v4884, %v4822
  %v4886 = vadd.f32 %v4885, %v4823
  %v4887 = vadd.f32 %v4886, %v4824
  %v4888 = vadd.f32 %v4887, %v4825
  %v4889 = vadd.f32 %v4888, %v4826
  %v4890 = vadd.f32 %v4889, %v4827
  %v4891 = vadd.f32 %v4890, %v4828
  %v4892 = vrot.slane %v4891, 4
  %v4893 = vadd.f32 %v4891, %v4892
  %v4894 = vrot.slane %v4893, 2
  %v4895 = vadd.f32 %v4893, %v4894
  %v4896 = vrot.slane %v4895, 1
  %v4897 = vadd.f32 %v4895, %v4896
  %v4898 = vmul.f32 %v4764, 0.001953125
  %v4899 = vmul.f32 %v4897, 0.001953125
  %v4900 = vmul.f32 %v4898, %v4898
  %v4901 = vsub.f32 %v4899, %v4900
  %v4902 = vmax.f32 %v4901, 0.0
  %v4903 = vadd.f32 %v4902, 1e-05
  %v4904 = vrsqrt.pop %v4903
  %v4905 = vmul.f32 %v4694, %v4904
  %v4906 = vmul.f32 %v4898, %v4905
  %v4907 = vsub.f32 %v4695, %v4906
  %v4909 = vlaneseq
  %v4910 = vshrl.u32 %v4909, 7
  %v4911 = vsub.s32 0, %v4910
  %v4912 = vrot.slane %v4905, %v4911
  %v4914 = vmul.f32 %v4440, %v4912
  %v4915 = vmul.f32 %v4443, %v4912
  %v4916 = vmul.f32 %v4448, %v4912
  %v4917 = vmul.f32 %v4451, %v4912
  %v4918 = vmul.f32 %v4456, %v4912
  %v4919 = vmul.f32 %v4459, %v4912
  %v4920 = vmul.f32 %v4464, %v4912
  %v4921 = vmul.f32 %v4467, %v4912
  %v4922 = vmul.f32 %v4472, %v4912
  %v4923 = vmul.f32 %v4475, %v4912
  %v4924 = vmul.f32 %v4480, %v4912
  %v4925 = vmul.f32 %v4483, %v4912
  %v4926 = vmul.f32 %v4488, %v4912
  %v4927 = vmul.f32 %v4491, %v4912
  %v4928 = vmul.f32 %v4496, %v4912
  %v4929 = vmul.f32 %v4499, %v4912
  %v4930 = vmul.f32 %v4504, %v4912
  %v4931 = vmul.f32 %v4507, %v4912
  %v4932 = vmul.f32 %v4512, %v4912
  %v4933 = vmul.f32 %v4515, %v4912
  %v4934 = vmul.f32 %v4520, %v4912
  %v4935 = vmul.f32 %v4523, %v4912
  %v4936 = vmul.f32 %v4528, %v4912
  %v4937 = vmul.f32 %v4531, %v4912
  %v4938 = vmul.f32 %v4536, %v4912
  %v4939 = vmul.f32 %v4539, %v4912
  %v4940 = vmul.f32 %v4544, %v4912
  %v4941 = vmul.f32 %v4547, %v4912
  %v4942 = vmul.f32 %v4552, %v4912
  %v4943 = vmul.f32 %v4555, %v4912
  %v4944 = vmul.f32 %v4560, %v4912
  %v4945 = vmul.f32 %v4563, %v4912
  %v4946 = vmul.f32 %v4568, %v4912
  %v4947 = vmul.f32 %v4571, %v4912
  %v4948 = vmul.f32 %v4576, %v4912
  %v4949 = vmul.f32 %v4579, %v4912
  %v4950 = vmul.f32 %v4584, %v4912
  %v4951 = vmul.f32 %v4587, %v4912
  %v4952 = vmul.f32 %v4592, %v4912
  %v4953 = vmul.f32 %v4595, %v4912
  %v4954 = vmul.f32 %v4600, %v4912
  %v4955 = vmul.f32 %v4603, %v4912
  %v4956 = vmul.f32 %v4608, %v4912
  %v4957 = vmul.f32 %v4611, %v4912
  %v4958 = vmul.f32 %v4616, %v4912
  %v4959 = vmul.f32 %v4619, %v4912
  %v4960 = vmul.f32 %v4624, %v4912
  %v4961 = vmul.f32 %v4627, %v4912
  %v4962 = vmul.f32 %v4632, %v4912
  %v4963 = vmul.f32 %v4635, %v4912
  %v4964 = vmul.f32 %v4640, %v4912
  %v4965 = vmul.f32 %v4643, %v4912
  %v4966 = vmul.f32 %v4648, %v4912
  %v4967 = vmul.f32 %v4651, %v4912
  %v4968 = vmul.f32 %v4656, %v4912
  %v4969 = vmul.f32 %v4659, %v4912
  %v4970 = vmul.f32 %v4664, %v4912
  %v4971 = vmul.f32 %v4667, %v4912
  %v4972 = vmul.f32 %v4672, %v4912
  %v4973 = vmul.f32 %v4675, %v4912
  %v4974 = vmul.f32 %v4680, %v4912
  %v4975 = vmul.f32 %v4683, %v4912
  %v4976 = vmul.f32 %v4688, %v4912
  %v4977 = vmul.f32 %v4691, %v4912
  %v4979 = vlaneseq
  %v4980 = vshrl.u32 %v4979, 7
  %v4981 = vsub.s32 0, %v4980
  %v4982 = vrot.slane %v4907, %v4981
  %v4984 = vadd.f32 %v4914, %v4982
  %v4985 = vadd.f32 %v4915, %v4982
  %v4986 = vadd.f32 %v4916, %v4982
  %v4987 = vadd.f32 %v4917, %v4982
  %v4988 = vadd.f32 %v4918, %v4982
  %v4989 = vadd.f32 %v4919, %v4982
  %v4990 = vadd.f32 %v4920, %v4982
  %v4991 = vadd.f32 %v4921, %v4982
  %v4992 = vadd.f32 %v4922, %v4982
  %v4993 = vadd.f32 %v4923, %v4982
  %v4994 = vadd.f32 %v4924, %v4982
  %v4995 = vadd.f32 %v4925, %v4982
  %v4996 = vadd.f32 %v4926, %v4982
  %v4997 = vadd.f32 %v4927, %v4982
  %v4998 = vadd.f32 %v4928, %v4982
  %v4999 = vadd.f32 %v4929, %v4982
  %v5000 = vadd.f32 %v4930, %v4982
  %v5001 = vadd.f32 %v4931, %v4982
  %v5002 = vadd.f32 %v4932, %v4982
  %v5003 = vadd.f32 %v4933, %v4982
  %v5004 = vadd.f32 %v4934, %v4982
  %v5005 = vadd.f32 %v4935, %v4982
  %v5006 = vadd.f32 %v4936, %v4982
  %v5007 = vadd.f32 %v4937, %v4982
  %v5008 = vadd.f32 %v4938, %v4982
  %v5009 = vadd.f32 %v4939, %v4982
  %v5010 = vadd.f32 %v4940, %v4982
  %v5011 = vadd.f32 %v4941, %v4982
  %v5012 = vadd.f32 %v4942, %v4982
  %v5013 = vadd.f32 %v4943, %v4982
  %v5014 = vadd.f32 %v4944, %v4982
  %v5015 = vadd.f32 %v4945, %v4982
  %v5016 = vadd.f32 %v4946, %v4982
  %v5017 = vadd.f32 %v4947, %v4982
  %v5018 = vadd.f32 %v4948, %v4982
  %v5019 = vadd.f32 %v4949, %v4982
  %v5020 = vadd.f32 %v4950, %v4982
  %v5021 = vadd.f32 %v4951, %v4982
  %v5022 = vadd.f32 %v4952, %v4982
  %v5023 = vadd.f32 %v4953, %v4982
  %v5024 = vadd.f32 %v4954, %v4982
  %v5025 = vadd.f32 %v4955, %v4982
  %v5026 = vadd.f32 %v4956, %v4982
  %v5027 = vadd.f32 %v4957, %v4982
  %v5028 = vadd.f32 %v4958, %v4982
  %v5029 = vadd.f32 %v4959, %v4982
  %v5030 = vadd.f32 %v4960, %v4982
  %v5031 = vadd.f32 %v4961, %v4982
  %v5032 = vadd.f32 %v4962, %v4982
  %v5033 = vadd.f32 %v4963, %v4982
  %v5034 = vadd.f32 %v4964, %v4982
  %v5035 = vadd.f32 %v4965, %v4982
  %v5036 = vadd.f32 %v4966, %v4982
  %v5037 = vadd.f32 %v4967, %v4982
  %v5038 = vadd.f32 %v4968, %v4982
  %v5039 = vadd.f32 %v4969, %v4982
  %v5040 = vadd.f32 %v4970, %v4982
  %v5041 = vadd.f32 %v4971, %v4982
  %v5042 = vadd.f32 %v4972, %v4982
  %v5043 = vadd.f32 %v4973, %v4982
  %v5044 = vadd.f32 %v4974, %v4982
  %v5045 = vadd.f32 %v4975, %v4982
  %v5046 = vadd.f32 %v4976, %v4982
  %v5047 = vadd.f32 %v4977, %v4982
  %v5048 = vmax.f32 %v4984, 0.0
  %v5049 = vmax.f32 %v4985, 0.0
  %v5050 = vmax.f32 %v4986, 0.0
  %v5051 = vmax.f32 %v4987, 0.0
  %v5052 = vmax.f32 %v4988, 0.0
  %v5053 = vmax.f32 %v4989, 0.0
  %v5054 = vmax.f32 %v4990, 0.0
  %v5055 = vmax.f32 %v4991, 0.0
  %v5056 = vmax.f32 %v4992, 0.0
  %v5057 = vmax.f32 %v4993, 0.0
  %v5058 = vmax.f32 %v4994, 0.0
  %v5059 = vmax.f32 %v4995, 0.0
  %v5060 = vmax.f32 %v4996, 0.0
  %v5061 = vmax.f32 %v4997, 0.0
  %v5062 = vmax.f32 %v4998, 0.0
  %v5063 = vmax.f32 %v4999, 0.0
  %v5064 = vmax.f32 %v5000, 0.0
  %v5065 = vmax.f32 %v5001, 0.0
  %v5066 = vmax.f32 %v5002, 0.0
  %v5067 = vmax.f32 %v5003, 0.0
  %v5068 = vmax.f32 %v5004, 0.0
  %v5069 = vmax.f32 %v5005, 0.0
  %v5070 = vmax.f32 %v5006, 0.0
  %v5071 = vmax.f32 %v5007, 0.0
  %v5072 = vmax.f32 %v5008, 0.0
  %v5073 = vmax.f32 %v5009, 0.0
  %v5074 = vmax.f32 %v5010, 0.0
  %v5075 = vmax.f32 %v5011, 0.0
  %v5076 = vmax.f32 %v5012, 0.0
  %v5077 = vmax.f32 %v5013, 0.0
  %v5078 = vmax.f32 %v5014, 0.0
  %v5079 = vmax.f32 %v5015, 0.0
  %v5080 = vmax.f32 %v5016, 0.0
  %v5081 = vmax.f32 %v5017, 0.0
  %v5082 = vmax.f32 %v5018, 0.0
  %v5083 = vmax.f32 %v5019, 0.0
  %v5084 = vmax.f32 %v5020, 0.0
  %v5085 = vmax.f32 %v5021, 0.0
  %v5086 = vmax.f32 %v5022, 0.0
  %v5087 = vmax.f32 %v5023, 0.0
  %v5088 = vmax.f32 %v5024, 0.0
  %v5089 = vmax.f32 %v5025, 0.0
  %v5090 = vmax.f32 %v5026, 0.0
  %v5091 = vmax.f32 %v5027, 0.0
  %v5092 = vmax.f32 %v5028, 0.0
  %v5093 = vmax.f32 %v5029, 0.0
  %v5094 = vmax.f32 %v5030, 0.0
  %v5095 = vmax.f32 %v5031, 0.0
  %v5096 = vmax.f32 %v5032, 0.0
  %v5097 = vmax.f32 %v5033, 0.0
  %v5098 = vmax.f32 %v5034, 0.0
  %v5099 = vmax.f32 %v5035, 0.0
  %v5100 = vmax.f32 %v5036, 0.0
  %v5101 = vmax.f32 %v5037, 0.0
  %v5102 = vmax.f32 %v5038, 0.0
  %v5103 = vmax.f32 %v5039, 0.0
  %v5104 = vmax.f32 %v5040, 0.0
  %v5105 = vmax.f32 %v5041, 0.0
  %v5106 = vmax.f32 %v5042, 0.0
  %v5107 = vmax.f32 %v5043, 0.0
  %v5108 = vmax.f32 %v5044, 0.0
  %v5109 = vmax.f32 %v5045, 0.0
  %v5110 = vmax.f32 %v5046, 0.0
  %v5111 = vmax.f32 %v5047, 0.0
  %v5112 = vpack.c.bf16 %v5049, %v5048
  %v5113 = vpack.c.bf16 %v5051, %v5050
  %v5114 = vpack.c.bf16 %v5053, %v5052
  %v5115 = vpack.c.bf16 %v5055, %v5054
  %v5116 = vpack.c.bf16 %v5057, %v5056
  %v5117 = vpack.c.bf16 %v5059, %v5058
  %v5118 = vpack.c.bf16 %v5061, %v5060
  %v5119 = vpack.c.bf16 %v5063, %v5062
  %v5120 = vpack.c.bf16 %v5065, %v5064
  %v5121 = vpack.c.bf16 %v5067, %v5066
  %v5122 = vpack.c.bf16 %v5069, %v5068
  %v5123 = vpack.c.bf16 %v5071, %v5070
  %v5124 = vpack.c.bf16 %v5073, %v5072
  %v5125 = vpack.c.bf16 %v5075, %v5074
  %v5126 = vpack.c.bf16 %v5077, %v5076
  %v5127 = vpack.c.bf16 %v5079, %v5078
  %v5128 = vpack.c.bf16 %v5081, %v5080
  %v5129 = vpack.c.bf16 %v5083, %v5082
  %v5130 = vpack.c.bf16 %v5085, %v5084
  %v5131 = vpack.c.bf16 %v5087, %v5086
  %v5132 = vpack.c.bf16 %v5089, %v5088
  %v5133 = vpack.c.bf16 %v5091, %v5090
  %v5134 = vpack.c.bf16 %v5093, %v5092
  %v5135 = vpack.c.bf16 %v5095, %v5094
  %v5136 = vpack.c.bf16 %v5097, %v5096
  %v5137 = vpack.c.bf16 %v5099, %v5098
  %v5138 = vpack.c.bf16 %v5101, %v5100
  %v5139 = vpack.c.bf16 %v5103, %v5102
  %v5140 = vpack.c.bf16 %v5105, %v5104
  %v5141 = vpack.c.bf16 %v5107, %v5106
  %v5142 = vpack.c.bf16 %v5109, %v5108
  %v5143 = vpack.c.bf16 %v5111, %v5110
  %v5144 = vld [vmem:[%s3] sm:$0xf]
  %v5145 = vld [vmem:[%s3 + $0x4] sm:$0xf]
  %v5146 = vld [vmem:[%s3 + $0x8] sm:$0xf]
  %v5147 = vld [vmem:[%s3 + $0xc] sm:$0xf]
  %v5148 = vld [vmem:[%s3 + $0x10] sm:$0xf]
  %v5149 = vld [vmem:[%s3 + $0x14] sm:$0xf]
  %v5150 = vld [vmem:[%s3 + $0x18] sm:$0xf]
  %v5151 = vld [vmem:[%s3 + $0x1c] sm:$0xf]
  %v5152 = vld [vmem:[%s3 + $0x20] sm:$0xf]
  %v5153 = vld [vmem:[%s3 + $0x24] sm:$0xf]
  %v5154 = vld [vmem:[%s3 + $0x28] sm:$0xf]
  %v5155 = vld [vmem:[%s3 + $0x2c] sm:$0xf]
  %v5156 = vld [vmem:[%s3 + $0x30] sm:$0xf]
  %v5157 = vld [vmem:[%s3 + $0x34] sm:$0xf]
  %v5158 = vld [vmem:[%s3 + $0x38] sm:$0xf]
  %v5159 = vld [vmem:[%s3 + $0x3c] sm:$0xf]
  %v5176 = vunpack.c.l.b16 %v5144
  %v5177 = vunpack.c.l.b16 %v5145
  %v5178 = vunpack.c.l.b16 %v5146
  %v5179 = vunpack.c.l.b16 %v5147
  %v5180 = vunpack.c.l.b16 %v5148
  %v5181 = vunpack.c.l.b16 %v5149
  %v5182 = vunpack.c.l.b16 %v5150
  %v5183 = vunpack.c.l.b16 %v5151
  %v5184 = vunpack.c.l.b16 %v5152
  %v5185 = vunpack.c.l.b16 %v5153
  %v5186 = vunpack.c.l.b16 %v5154
  %v5187 = vunpack.c.l.b16 %v5155
  %v5188 = vunpack.c.l.b16 %v5156
  %v5189 = vunpack.c.l.b16 %v5157
  %v5190 = vunpack.c.l.b16 %v5158
  %v5191 = vunpack.c.l.b16 %v5159
  %v5192 = vpack.c.b16 %v5177, %v5176
  %v5193 = vpack.c.b16 %v5179, %v5178
  %v5194 = vpack.c.b16 %v5181, %v5180
  %v5195 = vpack.c.b16 %v5183, %v5182
  %v5196 = vpack.c.b16 %v5185, %v5184
  %v5197 = vpack.c.b16 %v5187, %v5186
  %v5198 = vpack.c.b16 %v5189, %v5188
  %v5199 = vpack.c.b16 %v5191, %v5190
  %5208 = vmatprep.subr.bf16.mxu0 0
  %5209 = vmatpush1.bf16.msra.mxu0 %v5192
  %5210 = vmatprep.subr.bf16.mxu0 0
  %5211 = vmatpush1.bf16.msra.mxu0 %v5193
  %5212 = vmatprep.subr.bf16.mxu0 0
  %5213 = vmatpush1.bf16.msra.mxu0 %v5194
  %5214 = vmatprep.subr.bf16.mxu0 0
  %5215 = vmatpush1.bf16.msra.mxu0 %v5195
  %5216 = vmatprep.subr.bf16.mxu0 0
  %5217 = vmatpush1.bf16.msra.mxu0 %v5196
  %5218 = vmatprep.subr.bf16.mxu0 0
  %5219 = vmatpush1.bf16.msra.mxu0 %v5197
  %5220 = vmatprep.subr.bf16.mxu0 0
  %5221 = vmatpush1.bf16.msra.mxu0 %v5198
  %5222 = vmatprep.subr.bf16.mxu0 0
  %5223 = vmatpush1.bf16.msra.mxu0 %v5199
  %5224 = vmatprep.subr.bf16.mxu0 0
  %5225 = vmatpush1.bf16.msra.mxu0 0
  %5226 = vmatprep.subr.bf16.mxu0 0
  %5227 = vmatpush1.bf16.msra.mxu0 0
  %5228 = vmatprep.subr.bf16.mxu0 0
  %5229 = vmatpush1.bf16.msra.mxu0 0
  %5230 = vmatprep.subr.bf16.mxu0 0
  %5231 = vmatpush1.bf16.msra.mxu0 0
  %5232 = vmatprep.subr.bf16.mxu0 0
  %5233 = vmatpush1.bf16.msra.mxu0 0
  %5234 = vmatprep.subr.bf16.mxu0 0
  %5235 = vmatpush1.bf16.msra.mxu0 0
  %5236 = vmatprep.subr.bf16.mxu0 0
  %5237 = vmatpush1.bf16.msra.mxu0 0
  %5238 = vmatprep.subr.bf16.mxu0 0
  %5239 = vmatpush1.bf16.msra.mxu0 0
  %5240 = vmatprep.mubr.bf16.mxu0 0
  %5241 = vmatmul.mubr.bf16.gmra.mrb[0].mxu0 %v5112
  %v5242 = vpop.f32.mrb[0].mxu0
  %v5243 = vadd.f32 0.0, %v5242
  %v5244 = vpop.f32.mrb[0].mxu0
  %v5245 = vpop.f32.mrb[0].mxu0
  %v5246 = vadd.f32 0.0, %v5245
  %v5247 = vpop.f32.mrb[0].mxu0
  %5248 = vmatprep.mubr.bf16.mxu0 0
  %5249 = vmatmul.mubr.bf16.gmra.mrb[0].mxu0 %v5113
  %v5250 = vpop.f32.mrb[0].mxu0
  %v5251 = vadd.f32 0.0, %v5250
  %v5252 = vpop.f32.mrb[0].mxu0
  %v5253 = vpop.f32.mrb[0].mxu0
  %v5254 = vadd.f32 0.0, %v5253
  %v5255 = vpop.f32.mrb[0].mxu0
  %5256 = vmatprep.mubr.bf16.mxu0 0
  %5257 = vmatmul.mubr.bf16.gmra.mrb[0].mxu0 %v5114
  %v5258 = vpop.f32.mrb[0].mxu0
  %v5259 = vadd.f32 0.0, %v5258
  %v5260 = vpop.f32.mrb[0].mxu0
  %v5261 = vpop.f32.mrb[0].mxu0
  %v5262 = vadd.f32 0.0, %v5261
  %v5263 = vpop.f32.mrb[0].mxu0
  %5264 = vmatprep.mubr.bf16.mxu0 0
  %5265 = vmatmul.mubr.bf16.gmra.mrb[0].mxu0 %v5115
  %v5266 = vpop.f32.mrb[0].mxu0
  %v5267 = vadd.f32 0.0, %v5266
  %v5268 = vpop.f32.mrb[0].mxu0
  %v5269 = vpop.f32.mrb[0].mxu0
  %v5270 = vadd.f32 0.0, %v5269
  %v5271 = vpop.f32.mrb[0].mxu0
  %5272 = vmatprep.mubr.bf16.mxu0 0
  %5273 = vmatmul.mubr.bf16.gmra.mrb[0].mxu0 %v5116
  %v5274 = vpop.f32.mrb[0].mxu0
  %v5275 = vadd.f32 0.0, %v5274
  %v5276 = vpop.f32.mrb[0].mxu0
  %v5277 = vpop.f32.mrb[0].mxu0
  %v5278 = vadd.f32 0.0, %v5277
  %v5279 = vpop.f32.mrb[0].mxu0
  %5280 = vmatprep.mubr.bf16.mxu0 0
  %5281 = vmatmul.mubr.bf16.gmra.mrb[0].mxu0 %v5117
  %v5282 = vpop.f32.mrb[0].mxu0
  %v5283 = vadd.f32 0.0, %v5282
  %v5284 = vpop.f32.mrb[0].mxu0
  %v5285 = vpop.f32.mrb[0].mxu0
  %v5286 = vadd.f32 0.0, %v5285
  %v5287 = vpop.f32.mrb[0].mxu0
  %5288 = vmatprep.mubr.bf16.mxu0 0
  %5289 = vmatmul.mubr.bf16.gmra.mrb[0].mxu0 %v5118
  %v5290 = vpop.f32.mrb[0].mxu0
  %v5291 = vadd.f32 0.0, %v5290
  %v5292 = vpop.f32.mrb[0].mxu0
  %v5293 = vpop.f32.mrb[0].mxu0
  %v5294 = vadd.f32 0.0, %v5293
  %v5295 = vpop.f32.mrb[0].mxu0
  %5296 = vmatprep.mubr.bf16.mxu0 0
  %5297 = vmatmul.mubr.bf16.gmra.mrb[0].mxu0 %v5119
  %v5298 = vpop.f32.mrb[0].mxu0
  %v5299 = vadd.f32 0.0, %v5298
  %v5300 = vpop.f32.mrb[0].mxu0
  %v5301 = vpop.f32.mrb[0].mxu0
  %v5302 = vadd.f32 0.0, %v5301
  %v5303 = vpop.f32.mrb[0].mxu0
  %5304 = vmatprep.mubr.bf16.mxu0 0
  %5305 = vmatmul.mubr.bf16.gmra.mrb[0].mxu0 %v5120
  %v5306 = vpop.f32.mrb[0].mxu0
  %v5307 = vadd.f32 0.0, %v5306
  %v5308 = vpop.f32.mrb[0].mxu0
  %v5309 = vpop.f32.mrb[0].mxu0
  %v5310 = vadd.f32 0.0, %v5309
  %v5311 = vpop.f32.mrb[0].mxu0
  %5312 = vmatprep.mubr.bf16.mxu0 0
  %5313 = vmatmul.mubr.bf16.gmra.mrb[0].mxu0 %v5121
  %v5314 = vpop.f32.mrb[0].mxu0
  %v5315 = vadd.f32 0.0, %v5314
  %v5316 = vpop.f32.mrb[0].mxu0
  %v5317 = vpop.f32.mrb[0].mxu0
  %v5318 = vadd.f32 0.0, %v5317
  %v5319 = vpop.f32.mrb[0].mxu0
  %5320 = vmatprep.mubr.bf16.mxu0 0
  %5321 = vmatmul.mubr.bf16.gmra.mrb[0].mxu0 %v5122
  %v5322 = vpop.f32.mrb[0].mxu0
  %v5323 = vadd.f32 0.0, %v5322
  %v5324 = vpop.f32.mrb[0].mxu0
  %v5325 = vpop.f32.mrb[0].mxu0
  %v5326 = vadd.f32 0.0, %v5325
  %v5327 = vpop.f32.mrb[0].mxu0
  %5328 = vmatprep.mubr.bf16.mxu0 0
  %5329 = vmatmul.mubr.bf16.gmra.mrb[0].mxu0 %v5123
  %v5330 = vpop.f32.mrb[0].mxu0
  %v5331 = vadd.f32 0.0, %v5330
  %v5332 = vpop.f32.mrb[0].mxu0
  %v5333 = vpop.f32.mrb[0].mxu0
  %v5334 = vadd.f32 0.0, %v5333
  %v5335 = vpop.f32.mrb[0].mxu0
  %5336 = vmatprep.mubr.bf16.mxu0 0
  %5337 = vmatmul.mubr.bf16.gmra.mrb[0].mxu0 %v5124
  %v5338 = vpop.f32.mrb[0].mxu0
  %v5339 = vadd.f32 0.0, %v5338
  %v5340 = vpop.f32.mrb[0].mxu0
  %v5341 = vpop.f32.mrb[0].mxu0
  %v5342 = vadd.f32 0.0, %v5341
  %v5343 = vpop.f32.mrb[0].mxu0
  %5344 = vmatprep.mubr.bf16.mxu0 0
  %5345 = vmatmul.mubr.bf16.gmra.mrb[0].mxu0 %v5125
  %v5346 = vpop.f32.mrb[0].mxu0
  %v5347 = vadd.f32 0.0, %v5346
  %v5348 = vpop.f32.mrb[0].mxu0
  %v5349 = vpop.f32.mrb[0].mxu0
  %v5350 = vadd.f32 0.0, %v5349
  %v5351 = vpop.f32.mrb[0].mxu0
  %5352 = vmatprep.mubr.bf16.mxu0 0
  %5353 = vmatmul.mubr.bf16.gmra.mrb[0].mxu0 %v5126
  %v5354 = vpop.f32.mrb[0].mxu0
  %v5355 = vadd.f32 0.0, %v5354
  %v5356 = vpop.f32.mrb[0].mxu0
  %v5357 = vpop.f32.mrb[0].mxu0
  %v5358 = vadd.f32 0.0, %v5357
  %v5359 = vpop.f32.mrb[0].mxu0
  %5360 = vmatprep.mubr.bf16.mxu0 0
  %5361 = vmatmul.mubr.bf16.gmra.mrb[0].mxu0 %v5127
  %v5362 = vpop.f32.mrb[0].mxu0
  %v5363 = vadd.f32 0.0, %v5362
  %v5364 = vpop.f32.mrb[0].mxu0
  %v5365 = vpop.f32.mrb[0].mxu0
  %v5366 = vadd.f32 0.0, %v5365
  %v5367 = vpop.f32.mrb[0].mxu0
  %5368 = vmatprep.mubr.bf16.mxu0 0
  %5369 = vmatmul.mubr.bf16.gmra.mrb[0].mxu0 %v5128
  %v5370 = vpop.f32.mrb[0].mxu0
  %v5371 = vadd.f32 0.0, %v5370
  %v5372 = vpop.f32.mrb[0].mxu0
  %v5373 = vpop.f32.mrb[0].mxu0
  %v5374 = vadd.f32 0.0, %v5373
  %v5375 = vpop.f32.mrb[0].mxu0
  %5376 = vmatprep.mubr.bf16.mxu0 0
  %5377 = vmatmul.mubr.bf16.gmra.mrb[0].mxu0 %v5129
  %v5378 = vpop.f32.mrb[0].mxu0
  %v5379 = vadd.f32 0.0, %v5378
  %v5380 = vpop.f32.mrb[0].mxu0
  %v5381 = vpop.f32.mrb[0].mxu0
  %v5382 = vadd.f32 0.0, %v5381
  %v5383 = vpop.f32.mrb[0].mxu0
  %5384 = vmatprep.mubr.bf16.mxu0 0
  %5385 = vmatmul.mubr.bf16.gmra.mrb[0].mxu0 %v5130
  %v5386 = vpop.f32.mrb[0].mxu0
  %v5387 = vadd.f32 0.0, %v5386
  %v5388 = vpop.f32.mrb[0].mxu0
  %v5389 = vpop.f32.mrb[0].mxu0
  %v5390 = vadd.f32 0.0, %v5389
  %v5391 = vpop.f32.mrb[0].mxu0
  %5392 = vmatprep.mubr.bf16.mxu0 0
  %5393 = vmatmul.mubr.bf16.gmra.mrb[0].mxu0 %v5131
  %v5394 = vpop.f32.mrb[0].mxu0
  %v5395 = vadd.f32 0.0, %v5394
  %v5396 = vpop.f32.mrb[0].mxu0
  %v5397 = vpop.f32.mrb[0].mxu0
  %v5398 = vadd.f32 0.0, %v5397
  %v5399 = vpop.f32.mrb[0].mxu0
  %5400 = vmatprep.mubr.bf16.mxu0 0
  %5401 = vmatmul.mubr.bf16.gmra.mrb[0].mxu0 %v5132
  %v5402 = vpop.f32.mrb[0].mxu0
  %v5403 = vadd.f32 0.0, %v5402
  %v5404 = vpop.f32.mrb[0].mxu0
  %v5405 = vpop.f32.mrb[0].mxu0
  %v5406 = vadd.f32 0.0, %v5405
  %v5407 = vpop.f32.mrb[0].mxu0
  %5408 = vmatprep.mubr.bf16.mxu0 0
  %5409 = vmatmul.mubr.bf16.gmra.mrb[0].mxu0 %v5133
  %v5410 = vpop.f32.mrb[0].mxu0
  %v5411 = vadd.f32 0.0, %v5410
  %v5412 = vpop.f32.mrb[0].mxu0
  %v5413 = vpop.f32.mrb[0].mxu0
  %v5414 = vadd.f32 0.0, %v5413
  %v5415 = vpop.f32.mrb[0].mxu0
  %5416 = vmatprep.mubr.bf16.mxu0 0
  %5417 = vmatmul.mubr.bf16.gmra.mrb[0].mxu0 %v5134
  %v5418 = vpop.f32.mrb[0].mxu0
  %v5419 = vadd.f32 0.0, %v5418
  %v5420 = vpop.f32.mrb[0].mxu0
  %v5421 = vpop.f32.mrb[0].mxu0
  %v5422 = vadd.f32 0.0, %v5421
  %v5423 = vpop.f32.mrb[0].mxu0
  %5424 = vmatprep.mubr.bf16.mxu0 0
  %5425 = vmatmul.mubr.bf16.gmra.mrb[0].mxu0 %v5135
  %v5426 = vpop.f32.mrb[0].mxu0
  %v5427 = vadd.f32 0.0, %v5426
  %v5428 = vpop.f32.mrb[0].mxu0
  %v5429 = vpop.f32.mrb[0].mxu0
  %v5430 = vadd.f32 0.0, %v5429
  %v5431 = vpop.f32.mrb[0].mxu0
  %5432 = vmatprep.mubr.bf16.mxu0 0
  %5433 = vmatmul.mubr.bf16.gmra.mrb[0].mxu0 %v5136
  %v5434 = vpop.f32.mrb[0].mxu0
  %v5435 = vadd.f32 0.0, %v5434
  %v5436 = vpop.f32.mrb[0].mxu0
  %v5437 = vpop.f32.mrb[0].mxu0
  %v5438 = vadd.f32 0.0, %v5437
  %v5439 = vpop.f32.mrb[0].mxu0
  %5440 = vmatprep.mubr.bf16.mxu0 0
  %5441 = vmatmul.mubr.bf16.gmra.mrb[0].mxu0 %v5137
  %v5442 = vpop.f32.mrb[0].mxu0
  %v5443 = vadd.f32 0.0, %v5442
  %v5444 = vpop.f32.mrb[0].mxu0
  %v5445 = vpop.f32.mrb[0].mxu0
  %v5446 = vadd.f32 0.0, %v5445
  %v5447 = vpop.f32.mrb[0].mxu0
  %5448 = vmatprep.mubr.bf16.mxu0 0
  %5449 = vmatmul.mubr.bf16.gmra.mrb[0].mxu0 %v5138
  %v5450 = vpop.f32.mrb[0].mxu0
  %v5451 = vadd.f32 0.0, %v5450
  %v5452 = vpop.f32.mrb[0].mxu0
  %v5453 = vpop.f32.mrb[0].mxu0
  %v5454 = vadd.f32 0.0, %v5453
  %v5455 = vpop.f32.mrb[0].mxu0
  %5456 = vmatprep.mubr.bf16.mxu0 0
  %5457 = vmatmul.mubr.bf16.gmra.mrb[0].mxu0 %v5139
  %v5458 = vpop.f32.mrb[0].mxu0
  %v5459 = vadd.f32 0.0, %v5458
  %v5460 = vpop.f32.mrb[0].mxu0
  %v5461 = vpop.f32.mrb[0].mxu0
  %v5462 = vadd.f32 0.0, %v5461
  %v5463 = vpop.f32.mrb[0].mxu0
  %5464 = vmatprep.mubr.bf16.mxu0 0
  %5465 = vmatmul.mubr.bf16.gmra.mrb[0].mxu0 %v5140
  %v5466 = vpop.f32.mrb[0].mxu0
  %v5467 = vadd.f32 0.0, %v5466
  %v5468 = vpop.f32.mrb[0].mxu0
  %v5469 = vpop.f32.mrb[0].mxu0
  %v5470 = vadd.f32 0.0, %v5469
  %v5471 = vpop.f32.mrb[0].mxu0
  %5472 = vmatprep.mubr.bf16.mxu0 0
  %5473 = vmatmul.mubr.bf16.gmra.mrb[0].mxu0 %v5141
  %v5474 = vpop.f32.mrb[0].mxu0
  %v5475 = vadd.f32 0.0, %v5474
  %v5476 = vpop.f32.mrb[0].mxu0
  %v5477 = vpop.f32.mrb[0].mxu0
  %v5478 = vadd.f32 0.0, %v5477
  %v5479 = vpop.f32.mrb[0].mxu0
  %5480 = vmatprep.mubr.bf16.mxu0 0
  %5481 = vmatmul.mubr.bf16.gmra.mrb[0].mxu0 %v5142
  %v5482 = vpop.f32.mrb[0].mxu0
  %v5483 = vadd.f32 0.0, %v5482
  %v5484 = vpop.f32.mrb[0].mxu0
  %v5485 = vpop.f32.mrb[0].mxu0
  %v5486 = vadd.f32 0.0, %v5485
  %v5487 = vpop.f32.mrb[0].mxu0
  %5488 = vmatprep.mubr.bf16.mxu0 0
  %5489 = vmatmul.mubr.bf16.gmra.mrb[0].mxu0 %v5143
  %v5490 = vpop.f32.mrb[0].mxu0
  %v5491 = vadd.f32 0.0, %v5490
  %v5492 = vpop.f32.mrb[0].mxu0
  %v5493 = vpop.f32.mrb[0].mxu0
  %v5494 = vadd.f32 0.0, %v5493
  %v5495 = vpop.f32.mrb[0].mxu0
  %5496 = vdwg.mxu0
  %v5497 = vld [vmem:[%s8] sm:$0x1]
  %v5498 = vld [vmem:[%s9] sm:$0x1]
  %v5499 = vadd.f32 %v5243, %v5246
  %v5500 = vadd.f32 %v5499, %v5251
  %v5501 = vadd.f32 %v5500, %v5254
  %v5502 = vadd.f32 %v5501, %v5259
  %v5503 = vadd.f32 %v5502, %v5262
  %v5504 = vadd.f32 %v5503, %v5267
  %v5505 = vadd.f32 %v5504, %v5270
  %v5506 = vadd.f32 %v5505, %v5275
  %v5507 = vadd.f32 %v5506, %v5278
  %v5508 = vadd.f32 %v5507, %v5283
  %v5509 = vadd.f32 %v5508, %v5286
  %v5510 = vadd.f32 %v5509, %v5291
  %v5511 = vadd.f32 %v5510, %v5294
  %v5512 = vadd.f32 %v5511, %v5299
  %v5513 = vadd.f32 %v5512, %v5302
  %v5514 = vadd.f32 %v5513, %v5307
  %v5515 = vadd.f32 %v5514, %v5310
  %v5516 = vadd.f32 %v5515, %v5315
  %v5517 = vadd.f32 %v5516, %v5318
  %v5518 = vadd.f32 %v5517, %v5323
  %v5519 = vadd.f32 %v5518, %v5326
  %v5520 = vadd.f32 %v5519, %v5331
  %v5521 = vadd.f32 %v5520, %v5334
  %v5522 = vadd.f32 %v5521, %v5339
  %v5523 = vadd.f32 %v5522, %v5342
  %v5524 = vadd.f32 %v5523, %v5347
  %v5525 = vadd.f32 %v5524, %v5350
  %v5526 = vadd.f32 %v5525, %v5355
  %v5527 = vadd.f32 %v5526, %v5358
  %v5528 = vadd.f32 %v5527, %v5363
  %v5529 = vadd.f32 %v5528, %v5366
  %v5530 = vadd.f32 %v5529, %v5371
  %v5531 = vadd.f32 %v5530, %v5374
  %v5532 = vadd.f32 %v5531, %v5379
  %v5533 = vadd.f32 %v5532, %v5382
  %v5534 = vadd.f32 %v5533, %v5387
  %v5535 = vadd.f32 %v5534, %v5390
  %v5536 = vadd.f32 %v5535, %v5395
  %v5537 = vadd.f32 %v5536, %v5398
  %v5538 = vadd.f32 %v5537, %v5403
  %v5539 = vadd.f32 %v5538, %v5406
  %v5540 = vadd.f32 %v5539, %v5411
  %v5541 = vadd.f32 %v5540, %v5414
  %v5542 = vadd.f32 %v5541, %v5419
  %v5543 = vadd.f32 %v5542, %v5422
  %v5544 = vadd.f32 %v5543, %v5427
  %v5545 = vadd.f32 %v5544, %v5430
  %v5546 = vadd.f32 %v5545, %v5435
  %v5547 = vadd.f32 %v5546, %v5438
  %v5548 = vadd.f32 %v5547, %v5443
  %v5549 = vadd.f32 %v5548, %v5446
  %v5550 = vadd.f32 %v5549, %v5451
  %v5551 = vadd.f32 %v5550, %v5454
  %v5552 = vadd.f32 %v5551, %v5459
  %v5553 = vadd.f32 %v5552, %v5462
  %v5554 = vadd.f32 %v5553, %v5467
  %v5555 = vadd.f32 %v5554, %v5470
  %v5556 = vadd.f32 %v5555, %v5475
  %v5557 = vadd.f32 %v5556, %v5478
  %v5558 = vadd.f32 %v5557, %v5483
  %v5559 = vadd.f32 %v5558, %v5486
  %v5560 = vadd.f32 %v5559, %v5491
  %v5561 = vadd.f32 %v5560, %v5494
  %v5562 = vrot.slane %v5561, 4
  %v5563 = vadd.f32 %v5561, %v5562
  %v5564 = vrot.slane %v5563, 2
  %v5565 = vadd.f32 %v5563, %v5564
  %v5566 = vrot.slane %v5565, 1
  %v5567 = vadd.f32 %v5565, %v5566
  %v5568 = vmul.f32 %v5243, %v5243
  %v5569 = vmul.f32 %v5246, %v5246
  %v5570 = vmul.f32 %v5251, %v5251
  %v5571 = vmul.f32 %v5254, %v5254
  %v5572 = vmul.f32 %v5259, %v5259
  %v5573 = vmul.f32 %v5262, %v5262
  %v5574 = vmul.f32 %v5267, %v5267
  %v5575 = vmul.f32 %v5270, %v5270
  %v5576 = vmul.f32 %v5275, %v5275
  %v5577 = vmul.f32 %v5278, %v5278
  %v5578 = vmul.f32 %v5283, %v5283
  %v5579 = vmul.f32 %v5286, %v5286
  %v5580 = vmul.f32 %v5291, %v5291
  %v5581 = vmul.f32 %v5294, %v5294
  %v5582 = vmul.f32 %v5299, %v5299
  %v5583 = vmul.f32 %v5302, %v5302
  %v5584 = vmul.f32 %v5307, %v5307
  %v5585 = vmul.f32 %v5310, %v5310
  %v5586 = vmul.f32 %v5315, %v5315
  %v5587 = vmul.f32 %v5318, %v5318
  %v5588 = vmul.f32 %v5323, %v5323
  %v5589 = vmul.f32 %v5326, %v5326
  %v5590 = vmul.f32 %v5331, %v5331
  %v5591 = vmul.f32 %v5334, %v5334
  %v5592 = vmul.f32 %v5339, %v5339
  %v5593 = vmul.f32 %v5342, %v5342
  %v5594 = vmul.f32 %v5347, %v5347
  %v5595 = vmul.f32 %v5350, %v5350
  %v5596 = vmul.f32 %v5355, %v5355
  %v5597 = vmul.f32 %v5358, %v5358
  %v5598 = vmul.f32 %v5363, %v5363
  %v5599 = vmul.f32 %v5366, %v5366
  %v5600 = vmul.f32 %v5371, %v5371
  %v5601 = vmul.f32 %v5374, %v5374
  %v5602 = vmul.f32 %v5379, %v5379
  %v5603 = vmul.f32 %v5382, %v5382
  %v5604 = vmul.f32 %v5387, %v5387
  %v5605 = vmul.f32 %v5390, %v5390
  %v5606 = vmul.f32 %v5395, %v5395
  %v5607 = vmul.f32 %v5398, %v5398
  %v5608 = vmul.f32 %v5403, %v5403
  %v5609 = vmul.f32 %v5406, %v5406
  %v5610 = vmul.f32 %v5411, %v5411
  %v5611 = vmul.f32 %v5414, %v5414
  %v5612 = vmul.f32 %v5419, %v5419
  %v5613 = vmul.f32 %v5422, %v5422
  %v5614 = vmul.f32 %v5427, %v5427
  %v5615 = vmul.f32 %v5430, %v5430
  %v5616 = vmul.f32 %v5435, %v5435
  %v5617 = vmul.f32 %v5438, %v5438
  %v5618 = vmul.f32 %v5443, %v5443
  %v5619 = vmul.f32 %v5446, %v5446
  %v5620 = vmul.f32 %v5451, %v5451
  %v5621 = vmul.f32 %v5454, %v5454
  %v5622 = vmul.f32 %v5459, %v5459
  %v5623 = vmul.f32 %v5462, %v5462
  %v5624 = vmul.f32 %v5467, %v5467
  %v5625 = vmul.f32 %v5470, %v5470
  %v5626 = vmul.f32 %v5475, %v5475
  %v5627 = vmul.f32 %v5478, %v5478
  %v5628 = vmul.f32 %v5483, %v5483
  %v5629 = vmul.f32 %v5486, %v5486
  %v5630 = vmul.f32 %v5491, %v5491
  %v5631 = vmul.f32 %v5494, %v5494
  %v5632 = vadd.f32 %v5568, %v5569
  %v5633 = vadd.f32 %v5632, %v5570
  %v5634 = vadd.f32 %v5633, %v5571
  %v5635 = vadd.f32 %v5634, %v5572
  %v5636 = vadd.f32 %v5635, %v5573
  %v5637 = vadd.f32 %v5636, %v5574
  %v5638 = vadd.f32 %v5637, %v5575
  %v5639 = vadd.f32 %v5638, %v5576
  %v5640 = vadd.f32 %v5639, %v5577
  %v5641 = vadd.f32 %v5640, %v5578
  %v5642 = vadd.f32 %v5641, %v5579
  %v5643 = vadd.f32 %v5642, %v5580
  %v5644 = vadd.f32 %v5643, %v5581
  %v5645 = vadd.f32 %v5644, %v5582
  %v5646 = vadd.f32 %v5645, %v5583
  %v5647 = vadd.f32 %v5646, %v5584
  %v5648 = vadd.f32 %v5647, %v5585
  %v5649 = vadd.f32 %v5648, %v5586
  %v5650 = vadd.f32 %v5649, %v5587
  %v5651 = vadd.f32 %v5650, %v5588
  %v5652 = vadd.f32 %v5651, %v5589
  %v5653 = vadd.f32 %v5652, %v5590
  %v5654 = vadd.f32 %v5653, %v5591
  %v5655 = vadd.f32 %v5654, %v5592
  %v5656 = vadd.f32 %v5655, %v5593
  %v5657 = vadd.f32 %v5656, %v5594
  %v5658 = vadd.f32 %v5657, %v5595
  %v5659 = vadd.f32 %v5658, %v5596
  %v5660 = vadd.f32 %v5659, %v5597
  %v5661 = vadd.f32 %v5660, %v5598
  %v5662 = vadd.f32 %v5661, %v5599
  %v5663 = vadd.f32 %v5662, %v5600
  %v5664 = vadd.f32 %v5663, %v5601
  %v5665 = vadd.f32 %v5664, %v5602
  %v5666 = vadd.f32 %v5665, %v5603
  %v5667 = vadd.f32 %v5666, %v5604
  %v5668 = vadd.f32 %v5667, %v5605
  %v5669 = vadd.f32 %v5668, %v5606
  %v5670 = vadd.f32 %v5669, %v5607
  %v5671 = vadd.f32 %v5670, %v5608
  %v5672 = vadd.f32 %v5671, %v5609
  %v5673 = vadd.f32 %v5672, %v5610
  %v5674 = vadd.f32 %v5673, %v5611
  %v5675 = vadd.f32 %v5674, %v5612
  %v5676 = vadd.f32 %v5675, %v5613
  %v5677 = vadd.f32 %v5676, %v5614
  %v5678 = vadd.f32 %v5677, %v5615
  %v5679 = vadd.f32 %v5678, %v5616
  %v5680 = vadd.f32 %v5679, %v5617
  %v5681 = vadd.f32 %v5680, %v5618
  %v5682 = vadd.f32 %v5681, %v5619
  %v5683 = vadd.f32 %v5682, %v5620
  %v5684 = vadd.f32 %v5683, %v5621
  %v5685 = vadd.f32 %v5684, %v5622
  %v5686 = vadd.f32 %v5685, %v5623
  %v5687 = vadd.f32 %v5686, %v5624
  %v5688 = vadd.f32 %v5687, %v5625
  %v5689 = vadd.f32 %v5688, %v5626
  %v5690 = vadd.f32 %v5689, %v5627
  %v5691 = vadd.f32 %v5690, %v5628
  %v5692 = vadd.f32 %v5691, %v5629
  %v5693 = vadd.f32 %v5692, %v5630
  %v5694 = vadd.f32 %v5693, %v5631
  %v5695 = vrot.slane %v5694, 4
  %v5696 = vadd.f32 %v5694, %v5695
  %v5697 = vrot.slane %v5696, 2
  %v5698 = vadd.f32 %v5696, %v5697
  %v5699 = vrot.slane %v5698, 1
  %v5700 = vadd.f32 %v5698, %v5699
  %v5701 = vmul.f32 %v5567, 0.001953125
  %v5702 = vmul.f32 %v5700, 0.001953125
  %v5703 = vmul.f32 %v5701, %v5701
  %v5704 = vsub.f32 %v5702, %v5703
  %v5705 = vmax.f32 %v5704, 0.0
  %v5706 = vadd.f32 %v5705, 1e-05
  %v5707 = vrsqrt.pop %v5706
  %v5708 = vmul.f32 %v5497, %v5707
  %v5709 = vmul.f32 %v5701, %v5708
  %v5710 = vsub.f32 %v5498, %v5709
  %v5712 = vlaneseq
  %v5713 = vshrl.u32 %v5712, 7
  %v5714 = vsub.s32 0, %v5713
  %v5715 = vrot.slane %v5708, %v5714
  %v5717 = vmul.f32 %v5243, %v5715
  %v5718 = vmul.f32 %v5246, %v5715
  %v5719 = vmul.f32 %v5251, %v5715
  %v5720 = vmul.f32 %v5254, %v5715
  %v5721 = vmul.f32 %v5259, %v5715
  %v5722 = vmul.f32 %v5262, %v5715
  %v5723 = vmul.f32 %v5267, %v5715
  %v5724 = vmul.f32 %v5270, %v5715
  %v5725 = vmul.f32 %v5275, %v5715
  %v5726 = vmul.f32 %v5278, %v5715
  %v5727 = vmul.f32 %v5283, %v5715
  %v5728 = vmul.f32 %v5286, %v5715
  %v5729 = vmul.f32 %v5291, %v5715
  %v5730 = vmul.f32 %v5294, %v5715
  %v5731 = vmul.f32 %v5299, %v5715
  %v5732 = vmul.f32 %v5302, %v5715
  %v5733 = vmul.f32 %v5307, %v5715
  %v5734 = vmul.f32 %v5310, %v5715
  %v5735 = vmul.f32 %v5315, %v5715
  %v5736 = vmul.f32 %v5318, %v5715
  %v5737 = vmul.f32 %v5323, %v5715
  %v5738 = vmul.f32 %v5326, %v5715
  %v5739 = vmul.f32 %v5331, %v5715
  %v5740 = vmul.f32 %v5334, %v5715
  %v5741 = vmul.f32 %v5339, %v5715
  %v5742 = vmul.f32 %v5342, %v5715
  %v5743 = vmul.f32 %v5347, %v5715
  %v5744 = vmul.f32 %v5350, %v5715
  %v5745 = vmul.f32 %v5355, %v5715
  %v5746 = vmul.f32 %v5358, %v5715
  %v5747 = vmul.f32 %v5363, %v5715
  %v5748 = vmul.f32 %v5366, %v5715
  %v5749 = vmul.f32 %v5371, %v5715
  %v5750 = vmul.f32 %v5374, %v5715
  %v5751 = vmul.f32 %v5379, %v5715
  %v5752 = vmul.f32 %v5382, %v5715
  %v5753 = vmul.f32 %v5387, %v5715
  %v5754 = vmul.f32 %v5390, %v5715
  %v5755 = vmul.f32 %v5395, %v5715
  %v5756 = vmul.f32 %v5398, %v5715
  %v5757 = vmul.f32 %v5403, %v5715
  %v5758 = vmul.f32 %v5406, %v5715
  %v5759 = vmul.f32 %v5411, %v5715
  %v5760 = vmul.f32 %v5414, %v5715
  %v5761 = vmul.f32 %v5419, %v5715
  %v5762 = vmul.f32 %v5422, %v5715
  %v5763 = vmul.f32 %v5427, %v5715
  %v5764 = vmul.f32 %v5430, %v5715
  %v5765 = vmul.f32 %v5435, %v5715
  %v5766 = vmul.f32 %v5438, %v5715
  %v5767 = vmul.f32 %v5443, %v5715
  %v5768 = vmul.f32 %v5446, %v5715
  %v5769 = vmul.f32 %v5451, %v5715
  %v5770 = vmul.f32 %v5454, %v5715
  %v5771 = vmul.f32 %v5459, %v5715
  %v5772 = vmul.f32 %v5462, %v5715
  %v5773 = vmul.f32 %v5467, %v5715
  %v5774 = vmul.f32 %v5470, %v5715
  %v5775 = vmul.f32 %v5475, %v5715
  %v5776 = vmul.f32 %v5478, %v5715
  %v5777 = vmul.f32 %v5483, %v5715
  %v5778 = vmul.f32 %v5486, %v5715
  %v5779 = vmul.f32 %v5491, %v5715
  %v5780 = vmul.f32 %v5494, %v5715
  %v5782 = vlaneseq
  %v5783 = vshrl.u32 %v5782, 7
  %v5784 = vsub.s32 0, %v5783
  %v5785 = vrot.slane %v5710, %v5784
  %v5787 = vadd.f32 %v5717, %v5785
  %v5788 = vadd.f32 %v5718, %v5785
  %v5789 = vadd.f32 %v5719, %v5785
  %v5790 = vadd.f32 %v5720, %v5785
  %v5791 = vadd.f32 %v5721, %v5785
  %v5792 = vadd.f32 %v5722, %v5785
  %v5793 = vadd.f32 %v5723, %v5785
  %v5794 = vadd.f32 %v5724, %v5785
  %v5795 = vadd.f32 %v5725, %v5785
  %v5796 = vadd.f32 %v5726, %v5785
  %v5797 = vadd.f32 %v5727, %v5785
  %v5798 = vadd.f32 %v5728, %v5785
  %v5799 = vadd.f32 %v5729, %v5785
  %v5800 = vadd.f32 %v5730, %v5785
  %v5801 = vadd.f32 %v5731, %v5785
  %v5802 = vadd.f32 %v5732, %v5785
  %v5803 = vadd.f32 %v5733, %v5785
  %v5804 = vadd.f32 %v5734, %v5785
  %v5805 = vadd.f32 %v5735, %v5785
  %v5806 = vadd.f32 %v5736, %v5785
  %v5807 = vadd.f32 %v5737, %v5785
  %v5808 = vadd.f32 %v5738, %v5785
  %v5809 = vadd.f32 %v5739, %v5785
  %v5810 = vadd.f32 %v5740, %v5785
  %v5811 = vadd.f32 %v5741, %v5785
  %v5812 = vadd.f32 %v5742, %v5785
  %v5813 = vadd.f32 %v5743, %v5785
  %v5814 = vadd.f32 %v5744, %v5785
  %v5815 = vadd.f32 %v5745, %v5785
  %v5816 = vadd.f32 %v5746, %v5785
  %v5817 = vadd.f32 %v5747, %v5785
  %v5818 = vadd.f32 %v5748, %v5785
  %v5819 = vadd.f32 %v5749, %v5785
  %v5820 = vadd.f32 %v5750, %v5785
  %v5821 = vadd.f32 %v5751, %v5785
  %v5822 = vadd.f32 %v5752, %v5785
  %v5823 = vadd.f32 %v5753, %v5785
  %v5824 = vadd.f32 %v5754, %v5785
  %v5825 = vadd.f32 %v5755, %v5785
  %v5826 = vadd.f32 %v5756, %v5785
  %v5827 = vadd.f32 %v5757, %v5785
  %v5828 = vadd.f32 %v5758, %v5785
  %v5829 = vadd.f32 %v5759, %v5785
  %v5830 = vadd.f32 %v5760, %v5785
  %v5831 = vadd.f32 %v5761, %v5785
  %v5832 = vadd.f32 %v5762, %v5785
  %v5833 = vadd.f32 %v5763, %v5785
  %v5834 = vadd.f32 %v5764, %v5785
  %v5835 = vadd.f32 %v5765, %v5785
  %v5836 = vadd.f32 %v5766, %v5785
  %v5837 = vadd.f32 %v5767, %v5785
  %v5838 = vadd.f32 %v5768, %v5785
  %v5839 = vadd.f32 %v5769, %v5785
  %v5840 = vadd.f32 %v5770, %v5785
  %v5841 = vadd.f32 %v5771, %v5785
  %v5842 = vadd.f32 %v5772, %v5785
  %v5843 = vadd.f32 %v5773, %v5785
  %v5844 = vadd.f32 %v5774, %v5785
  %v5845 = vadd.f32 %v5775, %v5785
  %v5846 = vadd.f32 %v5776, %v5785
  %v5847 = vadd.f32 %v5777, %v5785
  %v5848 = vadd.f32 %v5778, %v5785
  %v5849 = vadd.f32 %v5779, %v5785
  %v5850 = vadd.f32 %v5780, %v5785
  %v5851 = vld [vmem:[%s0] sm:$0xf]
  %v5852 = vld [vmem:[%s0 + $0x4] sm:$0xf]
  %v5853 = vld [vmem:[%s0 + $0x8] sm:$0xf]
  %v5854 = vld [vmem:[%s0 + $0xc] sm:$0xf]
  %v5855 = vld [vmem:[%s0 + $0x10] sm:$0xf]
  %v5856 = vld [vmem:[%s0 + $0x14] sm:$0xf]
  %v5857 = vld [vmem:[%s0 + $0x18] sm:$0xf]
  %v5858 = vld [vmem:[%s0 + $0x1c] sm:$0xf]
  %v5859 = vld [vmem:[%s0 + $0x20] sm:$0xf]
  %v5860 = vld [vmem:[%s0 + $0x24] sm:$0xf]
  %v5861 = vld [vmem:[%s0 + $0x28] sm:$0xf]
  %v5862 = vld [vmem:[%s0 + $0x2c] sm:$0xf]
  %v5863 = vld [vmem:[%s0 + $0x30] sm:$0xf]
  %v5864 = vld [vmem:[%s0 + $0x34] sm:$0xf]
  %v5865 = vld [vmem:[%s0 + $0x38] sm:$0xf]
  %v5866 = vld [vmem:[%s0 + $0x3c] sm:$0xf]
  %v5867 = vld [vmem:[%s0 + $0x40] sm:$0xf]
  %v5868 = vld [vmem:[%s0 + $0x44] sm:$0xf]
  %v5869 = vld [vmem:[%s0 + $0x48] sm:$0xf]
  %v5870 = vld [vmem:[%s0 + $0x4c] sm:$0xf]
  %v5871 = vld [vmem:[%s0 + $0x50] sm:$0xf]
  %v5872 = vld [vmem:[%s0 + $0x54] sm:$0xf]
  %v5873 = vld [vmem:[%s0 + $0x58] sm:$0xf]
  %v5874 = vld [vmem:[%s0 + $0x5c] sm:$0xf]
  %v5875 = vld [vmem:[%s0 + $0x60] sm:$0xf]
  %v5876 = vld [vmem:[%s0 + $0x64] sm:$0xf]
  %v5877 = vld [vmem:[%s0 + $0x68] sm:$0xf]
  %v5878 = vld [vmem:[%s0 + $0x6c] sm:$0xf]
  %v5879 = vld [vmem:[%s0 + $0x70] sm:$0xf]
  %v5880 = vld [vmem:[%s0 + $0x74] sm:$0xf]
  %v5881 = vld [vmem:[%s0 + $0x78] sm:$0xf]
  %v5882 = vld [vmem:[%s0 + $0x7c] sm:$0xf]
  %v5883 = vld [vmem:[%s0 + $0x80] sm:$0xf]
  %v5884 = vld [vmem:[%s0 + $0x84] sm:$0xf]
  %v5885 = vld [vmem:[%s0 + $0x88] sm:$0xf]
  %v5886 = vld [vmem:[%s0 + $0x8c] sm:$0xf]
  %v5887 = vld [vmem:[%s0 + $0x90] sm:$0xf]
  %v5888 = vld [vmem:[%s0 + $0x94] sm:$0xf]
  %v5889 = vld [vmem:[%s0 + $0x98] sm:$0xf]
  %v5890 = vld [vmem:[%s0 + $0x9c] sm:$0xf]
  %v5891 = vld [vmem:[%s0 + $0xa0] sm:$0xf]
  %v5892 = vld [vmem:[%s0 + $0xa4] sm:$0xf]
  %v5893 = vld [vmem:[%s0 + $0xa8] sm:$0xf]
  %v5894 = vld [vmem:[%s0 + $0xac] sm:$0xf]
  %v5895 = vld [vmem:[%s0 + $0xb0] sm:$0xf]
  %v5896 = vld [vmem:[%s0 + $0xb4] sm:$0xf]
  %v5897 = vld [vmem:[%s0 + $0xb8] sm:$0xf]
  %v5898 = vld [vmem:[%s0 + $0xbc] sm:$0xf]
  %v5899 = vld [vmem:[%s0 + $0xc0] sm:$0xf]
  %v5900 = vld [vmem:[%s0 + $0xc4] sm:$0xf]
  %v5901 = vld [vmem:[%s0 + $0xc8] sm:$0xf]
  %v5902 = vld [vmem:[%s0 + $0xcc] sm:$0xf]
  %v5903 = vld [vmem:[%s0 + $0xd0] sm:$0xf]
  %v5904 = vld [vmem:[%s0 + $0xd4] sm:$0xf]
  %v5905 = vld [vmem:[%s0 + $0xd8] sm:$0xf]
  %v5906 = vld [vmem:[%s0 + $0xdc] sm:$0xf]
  %v5907 = vld [vmem:[%s0 + $0xe0] sm:$0xf]
  %v5908 = vld [vmem:[%s0 + $0xe4] sm:$0xf]
  %v5909 = vld [vmem:[%s0 + $0xe8] sm:$0xf]
  %v5910 = vld [vmem:[%s0 + $0xec] sm:$0xf]
  %v5911 = vld [vmem:[%s0 + $0xf0] sm:$0xf]
  %v5912 = vld [vmem:[%s0 + $0xf4] sm:$0xf]
  %v5913 = vld [vmem:[%s0 + $0xf8] sm:$0xf]
  %v5914 = vld [vmem:[%s0 + $0xfc] sm:$0xf]
  %v5915 = vunpack.c.l.bf16 %v5851
  %v5916 = vunpack.c.l.bf16 %v5852
  %v5917 = vunpack.c.l.bf16 %v5853
  %v5918 = vunpack.c.l.bf16 %v5854
  %v5919 = vunpack.c.l.bf16 %v5855
  %v5920 = vunpack.c.l.bf16 %v5856
  %v5921 = vunpack.c.l.bf16 %v5857
  %v5922 = vunpack.c.l.bf16 %v5858
  %v5923 = vunpack.c.l.bf16 %v5859
  %v5924 = vunpack.c.l.bf16 %v5860
  %v5925 = vunpack.c.l.bf16 %v5861
  %v5926 = vunpack.c.l.bf16 %v5862
  %v5927 = vunpack.c.l.bf16 %v5863
  %v5928 = vunpack.c.l.bf16 %v5864
  %v5929 = vunpack.c.l.bf16 %v5865
  %v5930 = vunpack.c.l.bf16 %v5866
  %v5931 = vunpack.c.l.bf16 %v5867
  %v5932 = vunpack.c.l.bf16 %v5868
  %v5933 = vunpack.c.l.bf16 %v5869
  %v5934 = vunpack.c.l.bf16 %v5870
  %v5935 = vunpack.c.l.bf16 %v5871
  %v5936 = vunpack.c.l.bf16 %v5872
  %v5937 = vunpack.c.l.bf16 %v5873
  %v5938 = vunpack.c.l.bf16 %v5874
  %v5939 = vunpack.c.l.bf16 %v5875
  %v5940 = vunpack.c.l.bf16 %v5876
  %v5941 = vunpack.c.l.bf16 %v5877
  %v5942 = vunpack.c.l.bf16 %v5878
  %v5943 = vunpack.c.l.bf16 %v5879
  %v5944 = vunpack.c.l.bf16 %v5880
  %v5945 = vunpack.c.l.bf16 %v5881
  %v5946 = vunpack.c.l.bf16 %v5882
  %v5947 = vunpack.c.l.bf16 %v5883
  %v5948 = vunpack.c.l.bf16 %v5884
  %v5949 = vunpack.c.l.bf16 %v5885
  %v5950 = vunpack.c.l.bf16 %v5886
  %v5951 = vunpack.c.l.bf16 %v5887
  %v5952 = vunpack.c.l.bf16 %v5888
  %v5953 = vunpack.c.l.bf16 %v5889
  %v5954 = vunpack.c.l.bf16 %v5890
  %v5955 = vunpack.c.l.bf16 %v5891
  %v5956 = vunpack.c.l.bf16 %v5892
  %v5957 = vunpack.c.l.bf16 %v5893
  %v5958 = vunpack.c.l.bf16 %v5894
  %v5959 = vunpack.c.l.bf16 %v5895
  %v5960 = vunpack.c.l.bf16 %v5896
  %v5961 = vunpack.c.l.bf16 %v5897
  %v5962 = vunpack.c.l.bf16 %v5898
  %v5963 = vunpack.c.l.bf16 %v5899
  %v5964 = vunpack.c.l.bf16 %v5900
  %v5965 = vunpack.c.l.bf16 %v5901
  %v5966 = vunpack.c.l.bf16 %v5902
  %v5967 = vunpack.c.l.bf16 %v5903
  %v5968 = vunpack.c.l.bf16 %v5904
  %v5969 = vunpack.c.l.bf16 %v5905
  %v5970 = vunpack.c.l.bf16 %v5906
  %v5971 = vunpack.c.l.bf16 %v5907
  %v5972 = vunpack.c.l.bf16 %v5908
  %v5973 = vunpack.c.l.bf16 %v5909
  %v5974 = vunpack.c.l.bf16 %v5910
  %v5975 = vunpack.c.l.bf16 %v5911
  %v5976 = vunpack.c.l.bf16 %v5912
  %v5977 = vunpack.c.l.bf16 %v5913
  %v5978 = vunpack.c.l.bf16 %v5914
  %v5979 = vadd.f32 %v5787, %v5915
  %v5980 = vadd.f32 %v5788, %v5916
  %v5981 = vadd.f32 %v5789, %v5917
  %v5982 = vadd.f32 %v5790, %v5918
  %v5983 = vadd.f32 %v5791, %v5919
  %v5984 = vadd.f32 %v5792, %v5920
  %v5985 = vadd.f32 %v5793, %v5921
  %v5986 = vadd.f32 %v5794, %v5922
  %v5987 = vadd.f32 %v5795, %v5923
  %v5988 = vadd.f32 %v5796, %v5924
  %v5989 = vadd.f32 %v5797, %v5925
  %v5990 = vadd.f32 %v5798, %v5926
  %v5991 = vadd.f32 %v5799, %v5927
  %v5992 = vadd.f32 %v5800, %v5928
  %v5993 = vadd.f32 %v5801, %v5929
  %v5994 = vadd.f32 %v5802, %v5930
  %v5995 = vadd.f32 %v5803, %v5931
  %v5996 = vadd.f32 %v5804, %v5932
  %v5997 = vadd.f32 %v5805, %v5933
  %v5998 = vadd.f32 %v5806, %v5934
  %v5999 = vadd.f32 %v5807, %v5935
  %v6000 = vadd.f32 %v5808, %v5936
  %v6001 = vadd.f32 %v5809, %v5937
  %v6002 = vadd.f32 %v5810, %v5938
  %v6003 = vadd.f32 %v5811, %v5939
  %v6004 = vadd.f32 %v5812, %v5940
  %v6005 = vadd.f32 %v5813, %v5941
  %v6006 = vadd.f32 %v5814, %v5942
  %v6007 = vadd.f32 %v5815, %v5943
  %v6008 = vadd.f32 %v5816, %v5944
  %v6009 = vadd.f32 %v5817, %v5945
  %v6010 = vadd.f32 %v5818, %v5946
  %v6011 = vadd.f32 %v5819, %v5947
  %v6012 = vadd.f32 %v5820, %v5948
  %v6013 = vadd.f32 %v5821, %v5949
  %v6014 = vadd.f32 %v5822, %v5950
  %v6015 = vadd.f32 %v5823, %v5951
  %v6016 = vadd.f32 %v5824, %v5952
  %v6017 = vadd.f32 %v5825, %v5953
  %v6018 = vadd.f32 %v5826, %v5954
  %v6019 = vadd.f32 %v5827, %v5955
  %v6020 = vadd.f32 %v5828, %v5956
  %v6021 = vadd.f32 %v5829, %v5957
  %v6022 = vadd.f32 %v5830, %v5958
  %v6023 = vadd.f32 %v5831, %v5959
  %v6024 = vadd.f32 %v5832, %v5960
  %v6025 = vadd.f32 %v5833, %v5961
  %v6026 = vadd.f32 %v5834, %v5962
  %v6027 = vadd.f32 %v5835, %v5963
  %v6028 = vadd.f32 %v5836, %v5964
  %v6029 = vadd.f32 %v5837, %v5965
  %v6030 = vadd.f32 %v5838, %v5966
  %v6031 = vadd.f32 %v5839, %v5967
  %v6032 = vadd.f32 %v5840, %v5968
  %v6033 = vadd.f32 %v5841, %v5969
  %v6034 = vadd.f32 %v5842, %v5970
  %v6035 = vadd.f32 %v5843, %v5971
  %v6036 = vadd.f32 %v5844, %v5972
  %v6037 = vadd.f32 %v5845, %v5973
  %v6038 = vadd.f32 %v5846, %v5974
  %v6039 = vadd.f32 %v5847, %v5975
  %v6040 = vadd.f32 %v5848, %v5976
  %v6041 = vadd.f32 %v5849, %v5977
  %v6042 = vadd.f32 %v5850, %v5978
  %v6043 = vmax.f32 %v5979, 0.0
  %v6044 = vmax.f32 %v5980, 0.0
  %v6045 = vmax.f32 %v5981, 0.0
  %v6046 = vmax.f32 %v5982, 0.0
  %v6047 = vmax.f32 %v5983, 0.0
  %v6048 = vmax.f32 %v5984, 0.0
  %v6049 = vmax.f32 %v5985, 0.0
  %v6050 = vmax.f32 %v5986, 0.0
  %v6051 = vmax.f32 %v5987, 0.0
  %v6052 = vmax.f32 %v5988, 0.0
  %v6053 = vmax.f32 %v5989, 0.0
  %v6054 = vmax.f32 %v5990, 0.0
  %v6055 = vmax.f32 %v5991, 0.0
  %v6056 = vmax.f32 %v5992, 0.0
  %v6057 = vmax.f32 %v5993, 0.0
  %v6058 = vmax.f32 %v5994, 0.0
  %v6059 = vmax.f32 %v5995, 0.0
  %v6060 = vmax.f32 %v5996, 0.0
  %v6061 = vmax.f32 %v5997, 0.0
  %v6062 = vmax.f32 %v5998, 0.0
  %v6063 = vmax.f32 %v5999, 0.0
  %v6064 = vmax.f32 %v6000, 0.0
  %v6065 = vmax.f32 %v6001, 0.0
  %v6066 = vmax.f32 %v6002, 0.0
  %v6067 = vmax.f32 %v6003, 0.0
  %v6068 = vmax.f32 %v6004, 0.0
  %v6069 = vmax.f32 %v6005, 0.0
  %v6070 = vmax.f32 %v6006, 0.0
  %v6071 = vmax.f32 %v6007, 0.0
  %v6072 = vmax.f32 %v6008, 0.0
  %v6073 = vmax.f32 %v6009, 0.0
  %v6074 = vmax.f32 %v6010, 0.0
  %v6075 = vmax.f32 %v6011, 0.0
  %v6076 = vmax.f32 %v6012, 0.0
  %v6077 = vmax.f32 %v6013, 0.0
  %v6078 = vmax.f32 %v6014, 0.0
  %v6079 = vmax.f32 %v6015, 0.0
  %v6080 = vmax.f32 %v6016, 0.0
  %v6081 = vmax.f32 %v6017, 0.0
  %v6082 = vmax.f32 %v6018, 0.0
  %v6083 = vmax.f32 %v6019, 0.0
  %v6084 = vmax.f32 %v6020, 0.0
  %v6085 = vmax.f32 %v6021, 0.0
  %v6086 = vmax.f32 %v6022, 0.0
  %v6087 = vmax.f32 %v6023, 0.0
  %v6088 = vmax.f32 %v6024, 0.0
  %v6089 = vmax.f32 %v6025, 0.0
  %v6090 = vmax.f32 %v6026, 0.0
  %v6091 = vmax.f32 %v6027, 0.0
  %v6092 = vmax.f32 %v6028, 0.0
  %v6093 = vmax.f32 %v6029, 0.0
  %v6094 = vmax.f32 %v6030, 0.0
  %v6095 = vmax.f32 %v6031, 0.0
  %v6096 = vmax.f32 %v6032, 0.0
  %v6097 = vmax.f32 %v6033, 0.0
  %v6098 = vmax.f32 %v6034, 0.0
  %v6099 = vmax.f32 %v6035, 0.0
  %v6100 = vmax.f32 %v6036, 0.0
  %v6101 = vmax.f32 %v6037, 0.0
  %v6102 = vmax.f32 %v6038, 0.0
  %v6103 = vmax.f32 %v6039, 0.0
  %v6104 = vmax.f32 %v6040, 0.0
  %v6105 = vmax.f32 %v6041, 0.0
  %v6106 = vmax.f32 %v6042, 0.0
  %6107 = vst [vmem:[%s10] sm:$0xff] %v6043
  %6108 = vst [vmem:[%s10 + $0x8] sm:$0xff] %v6044
  %6109 = vst [vmem:[%s10 + $0x10] sm:$0xff] %v6045
  %6110 = vst [vmem:[%s10 + $0x18] sm:$0xff] %v6046
  %6111 = vst [vmem:[%s10 + $0x20] sm:$0xff] %v6047
  %6112 = vst [vmem:[%s10 + $0x28] sm:$0xff] %v6048
  %6113 = vst [vmem:[%s10 + $0x30] sm:$0xff] %v6049
  %6114 = vst [vmem:[%s10 + $0x38] sm:$0xff] %v6050
  %6115 = vst [vmem:[%s10 + $0x40] sm:$0xff] %v6051
  %6116 = vst [vmem:[%s10 + $0x48] sm:$0xff] %v6052
  %6117 = vst [vmem:[%s10 + $0x50] sm:$0xff] %v6053
  %6118 = vst [vmem:[%s10 + $0x58] sm:$0xff] %v6054
  %6119 = vst [vmem:[%s10 + $0x60] sm:$0xff] %v6055
  %6120 = vst [vmem:[%s10 + $0x68] sm:$0xff] %v6056
  %6121 = vst [vmem:[%s10 + $0x70] sm:$0xff] %v6057
  %6122 = vst [vmem:[%s10 + $0x78] sm:$0xff] %v6058
  %6123 = vst [vmem:[%s10 + $0x80] sm:$0xff] %v6059
  %6124 = vst [vmem:[%s10 + $0x88] sm:$0xff] %v6060
  %6125 = vst [vmem:[%s10 + $0x90] sm:$0xff] %v6061
  %6126 = vst [vmem:[%s10 + $0x98] sm:$0xff] %v6062
  %6127 = vst [vmem:[%s10 + $0xa0] sm:$0xff] %v6063
  %6128 = vst [vmem:[%s10 + $0xa8] sm:$0xff] %v6064
  %6129 = vst [vmem:[%s10 + $0xb0] sm:$0xff] %v6065
  %6130 = vst [vmem:[%s10 + $0xb8] sm:$0xff] %v6066
  %6131 = vst [vmem:[%s10 + $0xc0] sm:$0xff] %v6067
  %6132 = vst [vmem:[%s10 + $0xc8] sm:$0xff] %v6068
  %6133 = vst [vmem:[%s10 + $0xd0] sm:$0xff] %v6069
  %6134 = vst [vmem:[%s10 + $0xd8] sm:$0xff] %v6070
  %6135 = vst [vmem:[%s10 + $0xe0] sm:$0xff] %v6071
  %6136 = vst [vmem:[%s10 + $0xe8] sm:$0xff] %v6072
  %6137 = vst [vmem:[%s10 + $0xf0] sm:$0xff] %v6073
  %6138 = vst [vmem:[%s10 + $0xf8] sm:$0xff] %v6074
  %6139 = vst [vmem:[%s10 + $0x100] sm:$0xff] %v6075
  %6140 = vst [vmem:[%s10 + $0x108] sm:$0xff] %v6076
  %6141 = vst [vmem:[%s10 + $0x110] sm:$0xff] %v6077
  %6142 = vst [vmem:[%s10 + $0x118] sm:$0xff] %v6078
  %6143 = vst [vmem:[%s10 + $0x120] sm:$0xff] %v6079
  %6144 = vst [vmem:[%s10 + $0x128] sm:$0xff] %v6080
  %6145 = vst [vmem:[%s10 + $0x130] sm:$0xff] %v6081
  %6146 = vst [vmem:[%s10 + $0x138] sm:$0xff] %v6082
  %6147 = vst [vmem:[%s10 + $0x140] sm:$0xff] %v6083
  %6148 = vst [vmem:[%s10 + $0x148] sm:$0xff] %v6084
  %6149 = vst [vmem:[%s10 + $0x150] sm:$0xff] %v6085
  %6150 = vst [vmem:[%s10 + $0x158] sm:$0xff] %v6086
  %6151 = vst [vmem:[%s10 + $0x160] sm:$0xff] %v6087
  %6152 = vst [vmem:[%s10 + $0x168] sm:$0xff] %v6088
  %6153 = vst [vmem:[%s10 + $0x170] sm:$0xff] %v6089
  %6154 = vst [vmem:[%s10 + $0x178] sm:$0xff] %v6090
  %6155 = vst [vmem:[%s10 + $0x180] sm:$0xff] %v6091
  %6156 = vst [vmem:[%s10 + $0x188] sm:$0xff] %v6092
  %6157 = vst [vmem:[%s10 + $0x190] sm:$0xff] %v6093
  %6158 = vst [vmem:[%s10 + $0x198] sm:$0xff] %v6094
  %6159 = vst [vmem:[%s10 + $0x1a0] sm:$0xff] %v6095
  %6160 = vst [vmem:[%s10 + $0x1a8] sm:$0xff] %v6096
  %6161 = vst [vmem:[%s10 + $0x1b0] sm:$0xff] %v6097
  %6162 = vst [vmem:[%s10 + $0x1b8] sm:$0xff] %v6098
  %6163 = vst [vmem:[%s10 + $0x1c0] sm:$0xff] %v6099
  %6164 = vst [vmem:[%s10 + $0x1c8] sm:$0xff] %v6100
  %6165 = vst [vmem:[%s10 + $0x1d0] sm:$0xff] %v6101
  %6166 = vst [vmem:[%s10 + $0x1d8] sm:$0xff] %v6102
  %6167 = vst [vmem:[%s10 + $0x1e0] sm:$0xff] %v6103
  %6168 = vst [vmem:[%s10 + $0x1e8] sm:$0xff] %v6104
  %6169 = vst [vmem:[%s10 + $0x1f0] sm:$0xff] %v6105
  %6170 = vst [vmem:[%s10 + $0x1f8] sm:$0xff] %v6106
  // Predicated region
  $region42: #{bottleneck_pallas.1} parent=0 // pred_check
    _
  $region43: #{bottleneck_pallas.1} parent=0 // pred_check_branch
    %6172 = sbr.rel (0) target = $region45
  $region44: #{bottleneck_pallas.1} parent=0 // pred_region
    _
  $region45: #{bottleneck_pallas.1} parent=0 // pred_fallthru
    _
  // Predicated region
  $region46: #{bottleneck_pallas.1} parent=0 // pred_check
    _
  $region47: #{bottleneck_pallas.1} parent=0 // pred_check_branch
    %6174 = sbr.rel (0) target = $region49
  $region48: #{bottleneck_pallas.1} parent=0 // pred_region
    _
  $region49: #{bottleneck_pallas.1} parent=0 // pred_fallthru
    _

</llo_original>
